<compile_context>
chip_gen: v6e
topology: v6e:2x2x1
jax: 0.10.0
libtpu: 0.0.40
codegen_flags: <defaults>
</compile_context>

<pallas_src>
import functools

import jax
import jax.numpy as jnp
from jax.experimental import pallas as pl
from jax.experimental.pallas import tpu as pltpu


# ---------------------------------------------------------------------------
# model hyper-parameters (small, consistent with the PyTorch module)
# ---------------------------------------------------------------------------
CANDIDATE_NUM = 50
USER_NUM = 20
HISTORY_NUM = 8          # T
EMBED_DIM = 16           # E
DYNAMIC_DIM = 8          # D (AUGRU hidden)
ATT_HIDDEN = (32, 32)    # AttentionLayer hidden_dim_list
DNN_HIDDEN = (32, 16)    # DIEN hidden_dim
BATCH = 8                # B

BN_EPS = 1e-5
SLAB_COLS = 128          # lane-dense slab width


# ---------------------------------------------------------------------------
# static layout of the packed weight slab: name -> (row_offset, rows, cols)
# (row allocations rounded up to 8 so every static slice is sublane-aligned)
# ---------------------------------------------------------------------------
def _build_layout():
    E, D = EMBED_DIM, DYNAMIC_DIM
    a0, a1 = ATT_HIDDEN
    h0, h1 = DNN_HIDDEN
    entries = [
        # GRU: per-gate weights (avoid lane slicing of fused 3E gates)
        ("wih_r", E, E), ("wih_z", E, E), ("wih_n", E, E),
        ("whh_r", E, E), ("whh_z", E, E), ("whh_n", E, E),
        ("gru_br", 1, E), ("gru_bz", 1, E), ("gru_bni", 1, E), ("gru_bnh", 1, E),
        # Attention: W1 split by concat block [hs, cand, hs-cand, hs*cand]
        ("att_w1h", E, a0), ("att_w1c", E, a0), ("att_w1p", E, a0),
        ("att_b1", 1, a0), ("att_a1", 1, 1),
        ("att_w2", a0, a1), ("att_b2", 1, a1), ("att_a2", 1, 1),
        ("att_w3", a1, 1), ("att_b3", 1, 1),
        # AUGRU: x-part / h-part split of each gate weight
        ("aug_wr_x", E, D), ("aug_wu_x", E, D), ("aug_wh_x", E, D),
        ("aug_wr_h", D, D), ("aug_wu_h", D, D), ("aug_wh_h", D, D),
        ("aug_br", 1, D), ("aug_bu", 1, D), ("aug_bh", 1, D),
        # DNN: W1 split by concat block [user, cand, h_aug]
        ("dnn_w1_u", E, h0), ("dnn_w1_c", E, h0), ("dnn_w1_a", D, h0),
        ("dnn_b1", 1, h0), ("bn1_g", 1, h0), ("bn1_b", 1, h0), ("dnn_a1", 1, 1),
        ("dnn_w2", h0, h1), ("dnn_b2", 1, h1), ("bn2_g", 1, h1), ("bn2_b", 1, h1),
        ("dnn_a2", 1, 1),
        ("dnn_w3", h1, 1), ("dnn_b3", 1, 1),
    ]
    layout = {}
    off = 0
    for name, r, c in entries:
        layout[name] = (off, r, c)
        off += ((r + 7) // 8) * 8
    return layout, off


LAYOUT, SLAB_ROWS = _build_layout()


def _prelu(x, a):
    # nn.PReLU(): max(0, x) + a * min(0, x)
    return jnp.where(x >= 0, x, a * x)


def _batchnorm_train(x, gamma, beta):
    # nn.BatchNorm1d in training mode: batch mean + biased batch variance
    mean = jnp.mean(x, axis=0, keepdims=True)
    var = jnp.mean((x - mean) ** 2, axis=0, keepdims=True)
    return (x - mean) * jax.lax.rsqrt(var + BN_EPS) * gamma + beta


# ---------------------------------------------------------------------------
# the fused kernel
# ---------------------------------------------------------------------------
def dien_kernel(user_ref, cand_ref, recent_ref, slab_ref, out_ref):
    E, D, T = EMBED_DIM, DYNAMIC_DIM, HISTORY_NUM

    user = user_ref[...]        # (B, E)
    cand = cand_ref[...]        # (B, E)
    recent = recent_ref[...]    # (T*B, E), step-major rows [t*B : (t+1)*B]
    B = user.shape[0]

    dot = functools.partial(jnp.dot, preferred_element_type=jnp.float32)

    def w(name):
        off, r, c = LAYOUT[name]
        return slab_ref[off:off + r, :c]

    # ---------- GRU interest extractor ----------
    # hoisted input projections for all T at once (bias b_hr/b_hz fused in)
    gi_r = dot(recent, w("wih_r")) + w("gru_br")      # (T*B, E)
    gi_z = dot(recent, w("wih_z")) + w("gru_bz")
    gi_n = dot(recent, w("wih_n")) + w("gru_bni")
    whh_r, whh_z, whh_n = w("whh_r"), w("whh_z"), w("whh_n")
    b_nh = w("gru_bnh")

    h = jnp.zeros((B, E), jnp.float32)
    h_list = []
    for t in range(T):                                # unrolled, only h-deps inside
        lo = t * B
        gh_r = dot(h, whh_r)
        gh_z = dot(h, whh_z)
        gh_n = dot(h, whh_n) + b_nh
        r = jax.nn.sigmoid(gi_r[lo:lo + B] + gh_r)
        z = jax.nn.sigmoid(gi_z[lo:lo + B] + gh_z)
        n = jnp.tanh(gi_n[lo:lo + B] + r * gh_n)
        h = (1.0 - z) * n + z * h
        h_list.append(h)
    h_all = jnp.concatenate(h_list, axis=0)           # (T*B, E), step-major

    # ---------- attention MLP, all T in one batched pass ----------
    # unit @ W1 = hs@(Wa+Wc) + (hs*cand)@Wd + [cand@(Wb-Wc) + b1]
    cand_bias = dot(cand, w("att_w1c")) + w("att_b1")            # (B, a0)
    cand_all = jnp.concatenate([cand] * T, axis=0)               # (T*B, E)
    cand_bias_all = jnp.concatenate([cand_bias] * T, axis=0)     # (T*B, a0)
    a1 = _prelu(dot(h_all, w("att_w1h"))
                + dot(h_all * cand_all, w("att_w1p"))
                + cand_bias_all, w("att_a1"))
    a2 = _prelu(dot(a1, w("att_w2")) + w("att_b2"), w("att_a2"))
    att_all = jax.nn.sigmoid(dot(a2, w("att_w3")) + w("att_b3"))  # (T*B, 1)

    # ---------- AUGRU interest-evolving ----------
    # hoisted x-projections for all T
    xr = dot(h_all, w("aug_wr_x")) + w("aug_br")      # (T*B, D)
    xu = dot(h_all, w("aug_wu_x")) + w("aug_bu")
    xh = dot(h_all, w("aug_wh_x")) + w("aug_bh")
    wr_h, wu_h, wh_h = w("aug_wr_h"), w("aug_wu_h"), w("aug_wh_h")

    h_aug = jnp.zeros((B, D), jnp.float32)
    for t in range(T):
        lo = t * B
        r_g = jax.nn.sigmoid(xr[lo:lo + B] + dot(h_aug, wr_h))
        u_g = jax.nn.sigmoid(xu[lo:lo + B] + dot(h_aug, wu_h))
        h_hat = jnp.tanh(xh[lo:lo + B] + dot(r_g * h_aug, wh_h))
        u_g = att_all[lo:lo + B] * u_g
        h_aug = (1.0 - u_g) * h_aug + u_g * h_hat

    # ---------- final DNN (split W1 avoids the lane concat) ----------
    x = (dot(user, w("dnn_w1_u")) + dot(cand, w("dnn_w1_c"))
         + dot(h_aug, w("dnn_w1_a")) + w("dnn_b1"))
    x = _batchnorm_train(x, w("bn1_g"), w("bn1_b"))
    x = _prelu(x, w("dnn_a1"))

    x = dot(x, w("dnn_w2")) + w("dnn_b2")
    x = _batchnorm_train(x, w("bn2_g"), w("bn2_b"))
    x = _prelu(x, w("dnn_a2"))

    out_ref[...] = dot(x, w("dnn_w3")) + w("dnn_b3")  # (B, 1)


# ---------------------------------------------------------------------------
# parameters
# ---------------------------------------------------------------------------
def init_params(key):
    keys = iter(jax.random.split(key, 64))

    def u(shape, scale=0.1):
        return jax.random.uniform(next(keys), shape, jnp.float32, -scale, scale)

    E, D, T = EMBED_DIM, DYNAMIC_DIM, HISTORY_NUM
    a0, a1 = ATT_HIDDEN
    h0, h1 = DNN_HIDDEN

    p = {}
    # embedding tables
    p["user_embedding"] = u((USER_NUM, E))
    p["candidate_embedding"] = u((CANDIDATE_NUM, E))
    p["recent_embeddings"] = u((T, CANDIDATE_NUM, E))   # one table per history slot

    # GRU (gates ordered r, z, n like torch), stored as (in, 3*hidden)
    p["gru_wih"] = u((E, 3 * E))
    p["gru_whh"] = u((E, 3 * E))
    p["gru_bih"] = u((1, 3 * E))
    p["gru_bhh"] = u((1, 3 * E))

    # AttentionLayer MLP
    p["att_w1"] = u((4 * E, a0)); p["att_b1"] = u((1, a0))
    p["att_a1"] = jnp.full((1, 1), 0.25, jnp.float32)
    p["att_w2"] = u((a0, a1)); p["att_b2"] = u((1, a1))
    p["att_a2"] = jnp.full((1, 1), 0.25, jnp.float32)
    p["att_w3"] = u((a1, 1)); p["att_b3"] = u((1, 1))

    # AUGRU cell (in_dim = E + D)
    p["aug_wr"] = u((E + D, D)); p["aug_br"] = u((1, D))
    p["aug_wu"] = u((E + D, D)); p["aug_bu"] = u((1, D))
    p["aug_wh"] = u((D + E, D)); p["aug_bh"] = u((1, D))

    # final DNN
    din = 2 * E + D
    p["dnn_w1"] = u((din, h0)); p["dnn_b1"] = u((1, h0))
    p["bn1_g"] = jnp.ones((1, h0), jnp.float32); p["bn1_b"] = jnp.zeros((1, h0), jnp.float32)
    p["dnn_a1"] = jnp.full((1, 1), 0.25, jnp.float32)
    p["dnn_w2"] = u((h0, h1)); p["dnn_b2"] = u((1, h1))
    p["bn2_g"] = jnp.ones((1, h1), jnp.float32); p["bn2_b"] = jnp.zeros((1, h1), jnp.float32)
    p["dnn_a2"] = jnp.full((1, 1), 0.25, jnp.float32)
    p["dnn_w3"] = u((h1, 1)); p["dnn_b3"] = u((1, 1))
    return p


def pack_params(params):
    """One-time restructuring of all non-embedding weights into a single
    lane-dense (SLAB_ROWS, 128) f32 slab matching LAYOUT."""
    E, D = EMBED_DIM, DYNAMIC_DIM
    wih, whh = params["gru_wih"], params["gru_whh"]
    bih, bhh = params["gru_bih"], params["gru_bhh"]
    w1 = params["att_w1"]
    dw1 = params["dnn_w1"]

    vals = {
        # GRU per-gate splits (r, z, n) with r/z biases fused
        "wih_r": wih[:, :E], "wih_z": wih[:, E:2 * E], "wih_n": wih[:, 2 * E:],
        "whh_r": whh[:, :E], "whh_z": whh[:, E:2 * E], "whh_n": whh[:, 2 * E:],
        "gru_br": bih[:, :E] + bhh[:, :E],
        "gru_bz": bih[:, E:2 * E] + bhh[:, E:2 * E],
        "gru_bni": bih[:, 2 * E:], "gru_bnh": bhh[:, 2 * E:],
        # attention W1 split over concat [hs, cand, hs-cand, hs*cand]
        "att_w1h": w1[:E] + w1[2 * E:3 * E],
        "att_w1c": w1[E:2 * E] - w1[2 * E:3 * E],
        "att_w1p": w1[3 * E:],
        "att_b1": params["att_b1"], "att_a1": params["att_a1"],
        "att_w2": params["att_w2"], "att_b2": params["att_b2"], "att_a2": params["att_a2"],
        "att_w3": params["att_w3"], "att_b3": params["att_b3"],
        # AUGRU x/h splits (reset/update: cat([x, h]); h_hat: cat([r*h, x]))
        "aug_wr_x": params["aug_wr"][:E], "aug_wr_h": params["aug_wr"][E:],
        "aug_wu_x": params["aug_wu"][:E], "aug_wu_h": params["aug_wu"][E:],
        "aug_wh_h": params["aug_wh"][:D], "aug_wh_x": params["aug_wh"][D:],
        "aug_br": params["aug_br"], "aug_bu": params["aug_bu"], "aug_bh": params["aug_bh"],
        # DNN W1 split over concat [user, cand, h_aug]
        "dnn_w1_u": dw1[:E], "dnn_w1_c": dw1[E:2 * E], "dnn_w1_a": dw1[2 * E:],
        "dnn_b1": params["dnn_b1"], "bn1_g": params["bn1_g"], "bn1_b": params["bn1_b"],
        "dnn_a1": params["dnn_a1"],
        "dnn_w2": params["dnn_w2"], "dnn_b2": params["dnn_b2"],
        "bn2_g": params["bn2_g"], "bn2_b": params["bn2_b"], "dnn_a2": params["dnn_a2"],
        "dnn_w3": params["dnn_w3"], "dnn_b3": params["dnn_b3"],
    }

    slab = jnp.zeros((SLAB_ROWS, SLAB_COLS), jnp.float32)
    for name, (off, r, c) in LAYOUT.items():
        v = jnp.asarray(vals[name], jnp.float32).reshape(r, c)
        slab = slab.at[off:off + r, :c].set(v)
    return slab


# ---------------------------------------------------------------------------
# forward wrapper
# ---------------------------------------------------------------------------
def dien_forward(weight_slab, embed_params, user_features, candidate_features,
                 recent_features):
    """user_features: (B, >=1) int, candidate_features: (B, >=1) int,
    recent_features: (B, T) int.  Returns (B, 1) float32."""
    B = user_features.shape[0]
    T = HISTORY_NUM

    # ---- embedding lookups (plain JAX glue; data-dependent gather) ----
    user_ids = user_features[:, 0].astype(jnp.int32)
    cand_ids = candidate_features[:, 0].astype(jnp.int32)
    user_emb = embed_params["user_embedding"][user_ids]            # (B, E)
    cand_emb = embed_params["candidate_embedding"][cand_ids]       # (B, E)
    recent_ids = recent_features.astype(jnp.int32)                 # (B, T)
    # step-major layout (T*B, E): rows [t*B:(t+1)*B] are step t
    recent_tbe = jnp.concatenate(
        [embed_params["recent_embeddings"][t][recent_ids[:, t]] for t in range(T)],
        axis=0)

    vmem = pl.BlockSpec(memory_space=pltpu.MemorySpace.VMEM)
    out = pl.pallas_call(
        dien_kernel,
        out_shape=jax.ShapeDtypeStruct((B, 1), jnp.float32),
        in_specs=[vmem, vmem, vmem, vmem],
        out_specs=vmem,
    )(user_emb, cand_emb, recent_tbe, weight_slab)
    return out


if __name__ == "__main__":
    key = jax.random.PRNGKey(0)
    k_param, k_u, k_c, k_r = jax.random.split(key, 4)

    params = init_params(k_param)
    weight_slab = pack_params(params)      # one-time parameter packing

    user_features = jax.random.randint(k_u, (BATCH, 1), 0, USER_NUM, jnp.int32)
    candidate_features = jax.random.randint(k_c, (BATCH, 1), 0, CANDIDATE_NUM, jnp.int32)
    recent_features = jax.random.randint(k_r, (BATCH, HISTORY_NUM), 0, CANDIDATE_NUM, jnp.int32)

    out = dien_forward(weight_slab, params, user_features, candidate_features,
                       recent_features)
    jax.block_until_ready(out)
    assert out.shape == (BATCH, 1) and out.dtype == jnp.float32
    print("KERNEL_OK")
</pallas_src>

<mosaic_0001>
module attributes {stable_mosaic.version = 11 : i64} {
  func.func @dien_kernel(%arg0: memref<8x16xf32, #tpu.memory_space<vmem>>, %arg1: memref<8x16xf32, #tpu.memory_space<vmem>>, %arg2: memref<64x16xf32, #tpu.memory_space<vmem>>, %arg3: memref<536x128xf32, #tpu.memory_space<vmem>>, %arg4: memref<8x1xf32, #tpu.memory_space<vmem>>) attributes {dimension_semantics = [], scalar_prefetch = 0 : i64, scratch_operands = 0 : i64, tpu.core_type = #tpu.core_type<tc>} {
    %c0 = arith.constant 0 : index
    %c0_0 = arith.constant 0 : index
    %0 = vector.load %arg0[%c0, %c0_0] : memref<8x16xf32, #tpu.memory_space<vmem>>, vector<8x16xf32>
    %c0_1 = arith.constant 0 : index
    %c0_2 = arith.constant 0 : index
    %1 = vector.load %arg1[%c0_1, %c0_2] : memref<8x16xf32, #tpu.memory_space<vmem>>, vector<8x16xf32>
    %c0_3 = arith.constant 0 : index
    %c0_4 = arith.constant 0 : index
    %2 = vector.load %arg2[%c0_3, %c0_4] : memref<64x16xf32, #tpu.memory_space<vmem>>, vector<64x16xf32>
    %c0_5 = arith.constant 0 : index
    %c0_6 = arith.constant 0 : index
    %3 = vector.load %arg3[%c0_5, %c0_6] : memref<536x128xf32, #tpu.memory_space<vmem>>, vector<16x16xf32>
    %cst = arith.constant dense<0.000000e+00> : vector<64x16xf32>
    %4 = tpu.matmul %2, %3, %cst {dimension_numbers = #tpu.dot_dimension_numbers<[1], [0], [0], [1], [0, 0, 1, 1], [], []>} : vector<64x16xf32>, vector<16x16xf32>, vector<64x16xf32> -> vector<64x16xf32>
    %c96 = arith.constant 96 : index
    %c0_7 = arith.constant 0 : index
    %5 = vector.load %arg3[%c96, %c0_7] : memref<536x128xf32, #tpu.memory_space<vmem>>, vector<1x16xf32>
    %6 = vector.broadcast %5 : vector<1x16xf32> to vector<64x16xf32>
    %7 = arith.addf %4, %6 : vector<64x16xf32>
    %c16 = arith.constant 16 : index
    %c0_8 = arith.constant 0 : index
    %8 = vector.load %arg3[%c16, %c0_8] : memref<536x128xf32, #tpu.memory_space<vmem>>, vector<16x16xf32>
    %cst_9 = arith.constant dense<0.000000e+00> : vector<64x16xf32>
    %9 = tpu.matmul %2, %8, %cst_9 {dimension_numbers = #tpu.dot_dimension_numbers<[1], [0], [0], [1], [0, 0, 1, 1], [], []>} : vector<64x16xf32>, vector<16x16xf32>, vector<64x16xf32> -> vector<64x16xf32>
    %c104 = arith.constant 104 : index
    %c0_10 = arith.constant 0 : index
    %10 = vector.load %arg3[%c104, %c0_10] : memref<536x128xf32, #tpu.memory_space<vmem>>, vector<1x16xf32>
    %11 = vector.broadcast %10 : vector<1x16xf32> to vector<64x16xf32>
    %12 = arith.addf %9, %11 : vector<64x16xf32>
    %c32 = arith.constant 32 : index
    %c0_11 = arith.constant 0 : index
    %13 = vector.load %arg3[%c32, %c0_11] : memref<536x128xf32, #tpu.memory_space<vmem>>, vector<16x16xf32>
    %cst_12 = arith.constant dense<0.000000e+00> : vector<64x16xf32>
    %14 = tpu.matmul %2, %13, %cst_12 {dimension_numbers = #tpu.dot_dimension_numbers<[1], [0], [0], [1], [0, 0, 1, 1], [], []>} : vector<64x16xf32>, vector<16x16xf32>, vector<64x16xf32> -> vector<64x16xf32>
    %c112 = arith.constant 112 : index
    %c0_13 = arith.constant 0 : index
    %15 = vector.load %arg3[%c112, %c0_13] : memref<536x128xf32, #tpu.memory_space<vmem>>, vector<1x16xf32>
    %16 = vector.broadcast %15 : vector<1x16xf32> to vector<64x16xf32>
    %17 = arith.addf %14, %16 : vector<64x16xf32>
    %c48 = arith.constant 48 : index
    %c0_14 = arith.constant 0 : index
    %18 = vector.load %arg3[%c48, %c0_14] : memref<536x128xf32, #tpu.memory_space<vmem>>, vector<16x16xf32>
    %c64 = arith.constant 64 : index
    %c0_15 = arith.constant 0 : index
    %19 = vector.load %arg3[%c64, %c0_15] : memref<536x128xf32, #tpu.memory_space<vmem>>, vector<16x16xf32>
    %c80 = arith.constant 80 : index
    %c0_16 = arith.constant 0 : index
    %20 = vector.load %arg3[%c80, %c0_16] : memref<536x128xf32, #tpu.memory_space<vmem>>, vector<16x16xf32>
    %c120 = arith.constant 120 : index
    %c0_17 = arith.constant 0 : index
    %21 = vector.load %arg3[%c120, %c0_17] : memref<536x128xf32, #tpu.memory_space<vmem>>, vector<1x16xf32>
    %cst_18 = arith.constant 0.000000e+00 : f32
    %22 = vector.broadcast %cst_18 : f32 to vector<8x16xf32>
    %cst_19 = arith.constant dense<0.000000e+00> : vector<8x16xf32>
    %23 = tpu.matmul %22, %18, %cst_19 {dimension_numbers = #tpu.dot_dimension_numbers<[1], [0], [0], [1], [0, 0, 1, 1], [], []>} : vector<8x16xf32>, vector<16x16xf32>, vector<8x16xf32> -> vector<8x16xf32>
    %cst_20 = arith.constant dense<0.000000e+00> : vector<8x16xf32>
    %24 = tpu.matmul %22, %19, %cst_20 {dimension_numbers = #tpu.dot_dimension_numbers<[1], [0], [0], [1], [0, 0, 1, 1], [], []>} : vector<8x16xf32>, vector<16x16xf32>, vector<8x16xf32> -> vector<8x16xf32>
    %cst_21 = arith.constant dense<0.000000e+00> : vector<8x16xf32>
    %25 = tpu.matmul %22, %20, %cst_21 {dimension_numbers = #tpu.dot_dimension_numbers<[1], [0], [0], [1], [0, 0, 1, 1], [], []>} : vector<8x16xf32>, vector<16x16xf32>, vector<8x16xf32> -> vector<8x16xf32>
    %26 = vector.broadcast %21 : vector<1x16xf32> to vector<8x16xf32>
    %27 = arith.addf %25, %26 : vector<8x16xf32>
    %28 = vector.extract_strided_slice %7 {offsets = [0, 0], sizes = [8, 16], strides = [1, 1]} : vector<64x16xf32> to vector<8x16xf32>
    %29 = arith.addf %28, %23 : vector<8x16xf32>
    %30 = arith.negf %29 : vector<8x16xf32>
    %31 = math.exp %30 : vector<8x16xf32>
    %cst_22 = arith.constant 1.000000e+00 : f32
    %32 = vector.broadcast %cst_22 : f32 to vector<8x16xf32>
    %33 = arith.addf %32, %31 : vector<8x16xf32>
    %34 = arith.divf %32, %33 : vector<8x16xf32>
    %35 = vector.extract_strided_slice %12 {offsets = [0, 0], sizes = [8, 16], strides = [1, 1]} : vector<64x16xf32> to vector<8x16xf32>
    %36 = arith.addf %35, %24 : vector<8x16xf32>
    %37 = arith.negf %36 : vector<8x16xf32>
    %38 = math.exp %37 : vector<8x16xf32>
    %cst_23 = arith.constant 1.000000e+00 : f32
    %39 = vector.broadcast %cst_23 : f32 to vector<8x16xf32>
    %40 = arith.addf %39, %38 : vector<8x16xf32>
    %41 = arith.divf %39, %40 : vector<8x16xf32>
    %42 = vector.extract_strided_slice %17 {offsets = [0, 0], sizes = [8, 16], strides = [1, 1]} : vector<64x16xf32> to vector<8x16xf32>
    %43 = arith.mulf %34, %27 : vector<8x16xf32>
    %44 = arith.addf %42, %43 : vector<8x16xf32>
    %45 = math.tanh %44 : vector<8x16xf32>
    %cst_24 = arith.constant 1.000000e+00 : f32
    %46 = vector.broadcast %cst_24 : f32 to vector<8x16xf32>
    %47 = arith.subf %46, %41 : vector<8x16xf32>
    %48 = arith.mulf %47, %45 : vector<8x16xf32>
    %49 = arith.mulf %41, %22 : vector<8x16xf32>
    %50 = arith.addf %48, %49 : vector<8x16xf32>
    %cst_25 = arith.constant dense<0.000000e+00> : vector<8x16xf32>
    %51 = tpu.matmul %50, %18, %cst_25 {dimension_numbers = #tpu.dot_dimension_numbers<[1], [0], [0], [1], [0, 0, 1, 1], [], []>} : vector<8x16xf32>, vector<16x16xf32>, vector<8x16xf32> -> vector<8x16xf32>
    %cst_26 = arith.constant dense<0.000000e+00> : vector<8x16xf32>
    %52 = tpu.matmul %50, %19, %cst_26 {dimension_numbers = #tpu.dot_dimension_numbers<[1], [0], [0], [1], [0, 0, 1, 1], [], []>} : vector<8x16xf32>, vector<16x16xf32>, vector<8x16xf32> -> vector<8x16xf32>
    %cst_27 = arith.constant dense<0.000000e+00> : vector<8x16xf32>
    %53 = tpu.matmul %50, %20, %cst_27 {dimension_numbers = #tpu.dot_dimension_numbers<[1], [0], [0], [1], [0, 0, 1, 1], [], []>} : vector<8x16xf32>, vector<16x16xf32>, vector<8x16xf32> -> vector<8x16xf32>
    %54 = vector.broadcast %21 : vector<1x16xf32> to vector<8x16xf32>
    %55 = arith.addf %53, %54 : vector<8x16xf32>
    %56 = vector.extract_strided_slice %7 {offsets = [8, 0], sizes = [8, 16], strides = [1, 1]} : vector<64x16xf32> to vector<8x16xf32>
    %57 = arith.addf %56, %51 : vector<8x16xf32>
    %58 = arith.negf %57 : vector<8x16xf32>
    %59 = math.exp %58 : vector<8x16xf32>
    %cst_28 = arith.constant 1.000000e+00 : f32
    %60 = vector.broadcast %cst_28 : f32 to vector<8x16xf32>
    %61 = arith.addf %60, %59 : vector<8x16xf32>
    %62 = arith.divf %60, %61 : vector<8x16xf32>
    %63 = vector.extract_strided_slice %12 {offsets = [8, 0], sizes = [8, 16], strides = [1, 1]} : vector<64x16xf32> to vector<8x16xf32>
    %64 = arith.addf %63, %52 : vector<8x16xf32>
    %65 = arith.negf %64 : vector<8x16xf32>
    %66 = math.exp %65 : vector<8x16xf32>
    %cst_29 = arith.constant 1.000000e+00 : f32
    %67 = vector.broadcast %cst_29 : f32 to vector<8x16xf32>
    %68 = arith.addf %67, %66 : vector<8x16xf32>
    %69 = arith.divf %67, %68 : vector<8x16xf32>
    %70 = vector.extract_strided_slice %17 {offsets = [8, 0], sizes = [8, 16], strides = [1, 1]} : vector<64x16xf32> to vector<8x16xf32>
    %71 = arith.mulf %62, %55 : vector<8x16xf32>
    %72 = arith.addf %70, %71 : vector<8x16xf32>
    %73 = math.tanh %72 : vector<8x16xf32>
    %cst_30 = arith.constant 1.000000e+00 : f32
    %74 = vector.broadcast %cst_30 : f32 to vector<8x16xf32>
    %75 = arith.subf %74, %69 : vector<8x16xf32>
    %76 = arith.mulf %75, %73 : vector<8x16xf32>
    %77 = arith.mulf %69, %50 : vector<8x16xf32>
    %78 = arith.addf %76, %77 : vector<8x16xf32>
    %cst_31 = arith.constant dense<0.000000e+00> : vector<8x16xf32>
    %79 = tpu.matmul %78, %18, %cst_31 {dimension_numbers = #tpu.dot_dimension_numbers<[1], [0], [0], [1], [0, 0, 1, 1], [], []>} : vector<8x16xf32>, vector<16x16xf32>, vector<8x16xf32> -> vector<8x16xf32>
    %cst_32 = arith.constant dense<0.000000e+00> : vector<8x16xf32>
    %80 = tpu.matmul %78, %19, %cst_32 {dimension_numbers = #tpu.dot_dimension_numbers<[1], [0], [0], [1], [0, 0, 1, 1], [], []>} : vector<8x16xf32>, vector<16x16xf32>, vector<8x16xf32> -> vector<8x16xf32>
    %cst_33 = arith.constant dense<0.000000e+00> : vector<8x16xf32>
    %81 = tpu.matmul %78, %20, %cst_33 {dimension_numbers = #tpu.dot_dimension_numbers<[1], [0], [0], [1], [0, 0, 1, 1], [], []>} : vector<8x16xf32>, vector<16x16xf32>, vector<8x16xf32> -> vector<8x16xf32>
    %82 = vector.broadcast %21 : vector<1x16xf32> to vector<8x16xf32>
    %83 = arith.addf %81, %82 : vector<8x16xf32>
    %84 = vector.extract_strided_slice %7 {offsets = [16, 0], sizes = [8, 16], strides = [1, 1]} : vector<64x16xf32> to vector<8x16xf32>
    %85 = arith.addf %84, %79 : vector<8x16xf32>
    %86 = arith.negf %85 : vector<8x16xf32>
    %87 = math.exp %86 : vector<8x16xf32>
    %cst_34 = arith.constant 1.000000e+00 : f32
    %88 = vector.broadcast %cst_34 : f32 to vector<8x16xf32>
    %89 = arith.addf %88, %87 : vector<8x16xf32>
    %90 = arith.divf %88, %89 : vector<8x16xf32>
    %91 = vector.extract_strided_slice %12 {offsets = [16, 0], sizes = [8, 16], strides = [1, 1]} : vector<64x16xf32> to vector<8x16xf32>
    %92 = arith.addf %91, %80 : vector<8x16xf32>
    %93 = arith.negf %92 : vector<8x16xf32>
    %94 = math.exp %93 : vector<8x16xf32>
    %cst_35 = arith.constant 1.000000e+00 : f32
    %95 = vector.broadcast %cst_35 : f32 to vector<8x16xf32>
    %96 = arith.addf %95, %94 : vector<8x16xf32>
    %97 = arith.divf %95, %96 : vector<8x16xf32>
    %98 = vector.extract_strided_slice %17 {offsets = [16, 0], sizes = [8, 16], strides = [1, 1]} : vector<64x16xf32> to vector<8x16xf32>
    %99 = arith.mulf %90, %83 : vector<8x16xf32>
    %100 = arith.addf %98, %99 : vector<8x16xf32>
    %101 = math.tanh %100 : vector<8x16xf32>
    %cst_36 = arith.constant 1.000000e+00 : f32
    %102 = vector.broadcast %cst_36 : f32 to vector<8x16xf32>
    %103 = arith.subf %102, %97 : vector<8x16xf32>
    %104 = arith.mulf %103, %101 : vector<8x16xf32>
    %105 = arith.mulf %97, %78 : vector<8x16xf32>
    %106 = arith.addf %104, %105 : vector<8x16xf32>
    %cst_37 = arith.constant dense<0.000000e+00> : vector<8x16xf32>
    %107 = tpu.matmul %106, %18, %cst_37 {dimension_numbers = #tpu.dot_dimension_numbers<[1], [0], [0], [1], [0, 0, 1, 1], [], []>} : vector<8x16xf32>, vector<16x16xf32>, vector<8x16xf32> -> vector<8x16xf32>
    %cst_38 = arith.constant dense<0.000000e+00> : vector<8x16xf32>
    %108 = tpu.matmul %106, %19, %cst_38 {dimension_numbers = #tpu.dot_dimension_numbers<[1], [0], [0], [1], [0, 0, 1, 1], [], []>} : vector<8x16xf32>, vector<16x16xf32>, vector<8x16xf32> -> vector<8x16xf32>
    %cst_39 = arith.constant dense<0.000000e+00> : vector<8x16xf32>
    %109 = tpu.matmul %106, %20, %cst_39 {dimension_numbers = #tpu.dot_dimension_numbers<[1], [0], [0], [1], [0, 0, 1, 1], [], []>} : vector<8x16xf32>, vector<16x16xf32>, vector<8x16xf32> -> vector<8x16xf32>
    %110 = vector.broadcast %21 : vector<1x16xf32> to vector<8x16xf32>
    %111 = arith.addf %109, %110 : vector<8x16xf32>
    %112 = vector.extract_strided_slice %7 {offsets = [24, 0], sizes = [8, 16], strides = [1, 1]} : vector<64x16xf32> to vector<8x16xf32>
    %113 = arith.addf %112, %107 : vector<8x16xf32>
    %114 = arith.negf %113 : vector<8x16xf32>
    %115 = math.exp %114 : vector<8x16xf32>
    %cst_40 = arith.constant 1.000000e+00 : f32
    %116 = vector.broadcast %cst_40 : f32 to vector<8x16xf32>
    %117 = arith.addf %116, %115 : vector<8x16xf32>
    %118 = arith.divf %116, %117 : vector<8x16xf32>
    %119 = vector.extract_strided_slice %12 {offsets = [24, 0], sizes = [8, 16], strides = [1, 1]} : vector<64x16xf32> to vector<8x16xf32>
    %120 = arith.addf %119, %108 : vector<8x16xf32>
    %121 = arith.negf %120 : vector<8x16xf32>
    %122 = math.exp %121 : vector<8x16xf32>
    %cst_41 = arith.constant 1.000000e+00 : f32
    %123 = vector.broadcast %cst_41 : f32 to vector<8x16xf32>
    %124 = arith.addf %123, %122 : vector<8x16xf32>
    %125 = arith.divf %123, %124 : vector<8x16xf32>
    %126 = vector.extract_strided_slice %17 {offsets = [24, 0], sizes = [8, 16], strides = [1, 1]} : vector<64x16xf32> to vector<8x16xf32>
    %127 = arith.mulf %118, %111 : vector<8x16xf32>
    %128 = arith.addf %126, %127 : vector<8x16xf32>
    %129 = math.tanh %128 : vector<8x16xf32>
    %cst_42 = arith.constant 1.000000e+00 : f32
    %130 = vector.broadcast %cst_42 : f32 to vector<8x16xf32>
    %131 = arith.subf %130, %125 : vector<8x16xf32>
    %132 = arith.mulf %131, %129 : vector<8x16xf32>
    %133 = arith.mulf %125, %106 : vector<8x16xf32>
    %134 = arith.addf %132, %133 : vector<8x16xf32>
    %cst_43 = arith.constant dense<0.000000e+00> : vector<8x16xf32>
    %135 = tpu.matmul %134, %18, %cst_43 {dimension_numbers = #tpu.dot_dimension_numbers<[1], [0], [0], [1], [0, 0, 1, 1], [], []>} : vector<8x16xf32>, vector<16x16xf32>, vector<8x16xf32> -> vector<8x16xf32>
    %cst_44 = arith.constant dense<0.000000e+00> : vector<8x16xf32>
    %136 = tpu.matmul %134, %19, %cst_44 {dimension_numbers = #tpu.dot_dimension_numbers<[1], [0], [0], [1], [0, 0, 1, 1], [], []>} : vector<8x16xf32>, vector<16x16xf32>, vector<8x16xf32> -> vector<8x16xf32>
    %cst_45 = arith.constant dense<0.000000e+00> : vector<8x16xf32>
    %137 = tpu.matmul %134, %20, %cst_45 {dimension_numbers = #tpu.dot_dimension_numbers<[1], [0], [0], [1], [0, 0, 1, 1], [], []>} : vector<8x16xf32>, vector<16x16xf32>, vector<8x16xf32> -> vector<8x16xf32>
    %138 = vector.broadcast %21 : vector<1x16xf32> to vector<8x16xf32>
    %139 = arith.addf %137, %138 : vector<8x16xf32>
    %140 = vector.extract_strided_slice %7 {offsets = [32, 0], sizes = [8, 16], strides = [1, 1]} : vector<64x16xf32> to vector<8x16xf32>
    %141 = arith.addf %140, %135 : vector<8x16xf32>
    %142 = arith.negf %141 : vector<8x16xf32>
    %143 = math.exp %142 : vector<8x16xf32>
    %cst_46 = arith.constant 1.000000e+00 : f32
    %144 = vector.broadcast %cst_46 : f32 to vector<8x16xf32>
    %145 = arith.addf %144, %143 : vector<8x16xf32>
    %146 = arith.divf %144, %145 : vector<8x16xf32>
    %147 = vector.extract_strided_slice %12 {offsets = [32, 0], sizes = [8, 16], strides = [1, 1]} : vector<64x16xf32> to vector<8x16xf32>
    %148 = arith.addf %147, %136 : vector<8x16xf32>
    %149 = arith.negf %148 : vector<8x16xf32>
    %150 = math.exp %149 : vector<8x16xf32>
    %cst_47 = arith.constant 1.000000e+00 : f32
    %151 = vector.broadcast %cst_47 : f32 to vector<8x16xf32>
    %152 = arith.addf %151, %150 : vector<8x16xf32>
    %153 = arith.divf %151, %152 : vector<8x16xf32>
    %154 = vector.extract_strided_slice %17 {offsets = [32, 0], sizes = [8, 16], strides = [1, 1]} : vector<64x16xf32> to vector<8x16xf32>
    %155 = arith.mulf %146, %139 : vector<8x16xf32>
    %156 = arith.addf %154, %155 : vector<8x16xf32>
    %157 = math.tanh %156 : vector<8x16xf32>
    %cst_48 = arith.constant 1.000000e+00 : f32
    %158 = vector.broadcast %cst_48 : f32 to vector<8x16xf32>
    %159 = arith.subf %158, %153 : vector<8x16xf32>
    %160 = arith.mulf %159, %157 : vector<8x16xf32>
    %161 = arith.mulf %153, %134 : vector<8x16xf32>
    %162 = arith.addf %160, %161 : vector<8x16xf32>
    %cst_49 = arith.constant dense<0.000000e+00> : vector<8x16xf32>
    %163 = tpu.matmul %162, %18, %cst_49 {dimension_numbers = #tpu.dot_dimension_numbers<[1], [0], [0], [1], [0, 0, 1, 1], [], []>} : vector<8x16xf32>, vector<16x16xf32>, vector<8x16xf32> -> vector<8x16xf32>
    %cst_50 = arith.constant dense<0.000000e+00> : vector<8x16xf32>
    %164 = tpu.matmul %162, %19, %cst_50 {dimension_numbers = #tpu.dot_dimension_numbers<[1], [0], [0], [1], [0, 0, 1, 1], [], []>} : vector<8x16xf32>, vector<16x16xf32>, vector<8x16xf32> -> vector<8x16xf32>
    %cst_51 = arith.constant dense<0.000000e+00> : vector<8x16xf32>
    %165 = tpu.matmul %162, %20, %cst_51 {dimension_numbers = #tpu.dot_dimension_numbers<[1], [0], [0], [1], [0, 0, 1, 1], [], []>} : vector<8x16xf32>, vector<16x16xf32>, vector<8x16xf32> -> vector<8x16xf32>
    %166 = vector.broadcast %21 : vector<1x16xf32> to vector<8x16xf32>
    %167 = arith.addf %165, %166 : vector<8x16xf32>
    %168 = vector.extract_strided_slice %7 {offsets = [40, 0], sizes = [8, 16], strides = [1, 1]} : vector<64x16xf32> to vector<8x16xf32>
    %169 = arith.addf %168, %163 : vector<8x16xf32>
    %170 = arith.negf %169 : vector<8x16xf32>
    %171 = math.exp %170 : vector<8x16xf32>
    %cst_52 = arith.constant 1.000000e+00 : f32
    %172 = vector.broadcast %cst_52 : f32 to vector<8x16xf32>
    %173 = arith.addf %172, %171 : vector<8x16xf32>
    %174 = arith.divf %172, %173 : vector<8x16xf32>
    %175 = vector.extract_strided_slice %12 {offsets = [40, 0], sizes = [8, 16], strides = [1, 1]} : vector<64x16xf32> to vector<8x16xf32>
    %176 = arith.addf %175, %164 : vector<8x16xf32>
    %177 = arith.negf %176 : vector<8x16xf32>
    %178 = math.exp %177 : vector<8x16xf32>
    %cst_53 = arith.constant 1.000000e+00 : f32
    %179 = vector.broadcast %cst_53 : f32 to vector<8x16xf32>
    %180 = arith.addf %179, %178 : vector<8x16xf32>
    %181 = arith.divf %179, %180 : vector<8x16xf32>
    %182 = vector.extract_strided_slice %17 {offsets = [40, 0], sizes = [8, 16], strides = [1, 1]} : vector<64x16xf32> to vector<8x16xf32>
    %183 = arith.mulf %174, %167 : vector<8x16xf32>
    %184 = arith.addf %182, %183 : vector<8x16xf32>
    %185 = math.tanh %184 : vector<8x16xf32>
    %cst_54 = arith.constant 1.000000e+00 : f32
    %186 = vector.broadcast %cst_54 : f32 to vector<8x16xf32>
    %187 = arith.subf %186, %181 : vector<8x16xf32>
    %188 = arith.mulf %187, %185 : vector<8x16xf32>
    %189 = arith.mulf %181, %162 : vector<8x16xf32>
    %190 = arith.addf %188, %189 : vector<8x16xf32>
    %cst_55 = arith.constant dense<0.000000e+00> : vector<8x16xf32>
    %191 = tpu.matmul %190, %18, %cst_55 {dimension_numbers = #tpu.dot_dimension_numbers<[1], [0], [0], [1], [0, 0, 1, 1], [], []>} : vector<8x16xf32>, vector<16x16xf32>, vector<8x16xf32> -> vector<8x16xf32>
    %cst_56 = arith.constant dense<0.000000e+00> : vector<8x16xf32>
    %192 = tpu.matmul %190, %19, %cst_56 {dimension_numbers = #tpu.dot_dimension_numbers<[1], [0], [0], [1], [0, 0, 1, 1], [], []>} : vector<8x16xf32>, vector<16x16xf32>, vector<8x16xf32> -> vector<8x16xf32>
    %cst_57 = arith.constant dense<0.000000e+00> : vector<8x16xf32>
    %193 = tpu.matmul %190, %20, %cst_57 {dimension_numbers = #tpu.dot_dimension_numbers<[1], [0], [0], [1], [0, 0, 1, 1], [], []>} : vector<8x16xf32>, vector<16x16xf32>, vector<8x16xf32> -> vector<8x16xf32>
    %194 = vector.broadcast %21 : vector<1x16xf32> to vector<8x16xf32>
    %195 = arith.addf %193, %194 : vector<8x16xf32>
    %196 = vector.extract_strided_slice %7 {offsets = [48, 0], sizes = [8, 16], strides = [1, 1]} : vector<64x16xf32> to vector<8x16xf32>
    %197 = arith.addf %196, %191 : vector<8x16xf32>
    %198 = arith.negf %197 : vector<8x16xf32>
    %199 = math.exp %198 : vector<8x16xf32>
    %cst_58 = arith.constant 1.000000e+00 : f32
    %200 = vector.broadcast %cst_58 : f32 to vector<8x16xf32>
    %201 = arith.addf %200, %199 : vector<8x16xf32>
    %202 = arith.divf %200, %201 : vector<8x16xf32>
    %203 = vector.extract_strided_slice %12 {offsets = [48, 0], sizes = [8, 16], strides = [1, 1]} : vector<64x16xf32> to vector<8x16xf32>
    %204 = arith.addf %203, %192 : vector<8x16xf32>
    %205 = arith.negf %204 : vector<8x16xf32>
    %206 = math.exp %205 : vector<8x16xf32>
    %cst_59 = arith.constant 1.000000e+00 : f32
    %207 = vector.broadcast %cst_59 : f32 to vector<8x16xf32>
    %208 = arith.addf %207, %206 : vector<8x16xf32>
    %209 = arith.divf %207, %208 : vector<8x16xf32>
    %210 = vector.extract_strided_slice %17 {offsets = [48, 0], sizes = [8, 16], strides = [1, 1]} : vector<64x16xf32> to vector<8x16xf32>
    %211 = arith.mulf %202, %195 : vector<8x16xf32>
    %212 = arith.addf %210, %211 : vector<8x16xf32>
    %213 = math.tanh %212 : vector<8x16xf32>
    %cst_60 = arith.constant 1.000000e+00 : f32
    %214 = vector.broadcast %cst_60 : f32 to vector<8x16xf32>
    %215 = arith.subf %214, %209 : vector<8x16xf32>
    %216 = arith.mulf %215, %213 : vector<8x16xf32>
    %217 = arith.mulf %209, %190 : vector<8x16xf32>
    %218 = arith.addf %216, %217 : vector<8x16xf32>
    %cst_61 = arith.constant dense<0.000000e+00> : vector<8x16xf32>
    %219 = tpu.matmul %218, %18, %cst_61 {dimension_numbers = #tpu.dot_dimension_numbers<[1], [0], [0], [1], [0, 0, 1, 1], [], []>} : vector<8x16xf32>, vector<16x16xf32>, vector<8x16xf32> -> vector<8x16xf32>
    %cst_62 = arith.constant dense<0.000000e+00> : vector<8x16xf32>
    %220 = tpu.matmul %218, %19, %cst_62 {dimension_numbers = #tpu.dot_dimension_numbers<[1], [0], [0], [1], [0, 0, 1, 1], [], []>} : vector<8x16xf32>, vector<16x16xf32>, vector<8x16xf32> -> vector<8x16xf32>
    %cst_63 = arith.constant dense<0.000000e+00> : vector<8x16xf32>
    %221 = tpu.matmul %218, %20, %cst_63 {dimension_numbers = #tpu.dot_dimension_numbers<[1], [0], [0], [1], [0, 0, 1, 1], [], []>} : vector<8x16xf32>, vector<16x16xf32>, vector<8x16xf32> -> vector<8x16xf32>
    %222 = vector.broadcast %21 : vector<1x16xf32> to vector<8x16xf32>
    %223 = arith.addf %221, %222 : vector<8x16xf32>
    %224 = vector.extract_strided_slice %7 {offsets = [56, 0], sizes = [8, 16], strides = [1, 1]} : vector<64x16xf32> to vector<8x16xf32>
    %225 = arith.addf %224, %219 : vector<8x16xf32>
    %226 = arith.negf %225 : vector<8x16xf32>
    %227 = math.exp %226 : vector<8x16xf32>
    %cst_64 = arith.constant 1.000000e+00 : f32
    %228 = vector.broadcast %cst_64 : f32 to vector<8x16xf32>
    %229 = arith.addf %228, %227 : vector<8x16xf32>
    %230 = arith.divf %228, %229 : vector<8x16xf32>
    %231 = vector.extract_strided_slice %12 {offsets = [56, 0], sizes = [8, 16], strides = [1, 1]} : vector<64x16xf32> to vector<8x16xf32>
    %232 = arith.addf %231, %220 : vector<8x16xf32>
    %233 = arith.negf %232 : vector<8x16xf32>
    %234 = math.exp %233 : vector<8x16xf32>
    %cst_65 = arith.constant 1.000000e+00 : f32
    %235 = vector.broadcast %cst_65 : f32 to vector<8x16xf32>
    %236 = arith.addf %235, %234 : vector<8x16xf32>
    %237 = arith.divf %235, %236 : vector<8x16xf32>
    %238 = vector.extract_strided_slice %17 {offsets = [56, 0], sizes = [8, 16], strides = [1, 1]} : vector<64x16xf32> to vector<8x16xf32>
    %239 = arith.mulf %230, %223 : vector<8x16xf32>
    %240 = arith.addf %238, %239 : vector<8x16xf32>
    %241 = math.tanh %240 : vector<8x16xf32>
    %cst_66 = arith.constant 1.000000e+00 : f32
    %242 = vector.broadcast %cst_66 : f32 to vector<8x16xf32>
    %243 = arith.subf %242, %237 : vector<8x16xf32>
    %244 = arith.mulf %243, %241 : vector<8x16xf32>
    %245 = arith.mulf %237, %218 : vector<8x16xf32>
    %246 = arith.addf %244, %245 : vector<8x16xf32>
    %247 = tpu.concatenate %50, %78, %106, %134, %162, %190, %218, %246 in 0 : vector<8x16xf32>, vector<8x16xf32>, vector<8x16xf32>, vector<8x16xf32>, vector<8x16xf32>, vector<8x16xf32>, vector<8x16xf32>, vector<8x16xf32> -> vector<64x16xf32>
    %c144 = arith.constant 144 : index
    %c0_67 = arith.constant 0 : index
    %248 = vector.load %arg3[%c144, %c0_67] : memref<536x128xf32, #tpu.memory_space<vmem>>, vector<16x32xf32>
    %cst_68 = arith.constant dense<0.000000e+00> : vector<8x32xf32>
    %249 = tpu.matmul %1, %248, %cst_68 {dimension_numbers = #tpu.dot_dimension_numbers<[1], [0], [0], [1], [0, 0, 1, 1], [], []>} : vector<8x16xf32>, vector<16x32xf32>, vector<8x32xf32> -> vector<8x32xf32>
    %c176 = arith.constant 176 : index
    %c0_69 = arith.constant 0 : index
    %250 = vector.load %arg3[%c176, %c0_69] : memref<536x128xf32, #tpu.memory_space<vmem>>, vector<1x32xf32>
    %251 = vector.broadcast %250 : vector<1x32xf32> to vector<8x32xf32>
    %252 = arith.addf %249, %251 : vector<8x32xf32>
    %253 = tpu.concatenate %1, %1, %1, %1, %1, %1, %1, %1 in 0 : vector<8x16xf32>, vector<8x16xf32>, vector<8x16xf32>, vector<8x16xf32>, vector<8x16xf32>, vector<8x16xf32>, vector<8x16xf32>, vector<8x16xf32> -> vector<64x16xf32>
    %254 = tpu.concatenate %252, %252, %252, %252, %252, %252, %252, %252 in 0 : vector<8x32xf32>, vector<8x32xf32>, vector<8x32xf32>, vector<8x32xf32>, vector<8x32xf32>, vector<8x32xf32>, vector<8x32xf32>, vector<8x32xf32> -> vector<64x32xf32>
    %c128 = arith.constant 128 : index
    %c0_70 = arith.constant 0 : index
    %255 = vector.load %arg3[%c128, %c0_70] : memref<536x128xf32, #tpu.memory_space<vmem>>, vector<16x32xf32>
    %cst_71 = arith.constant dense<0.000000e+00> : vector<64x32xf32>
    %256 = tpu.matmul %247, %255, %cst_71 {dimension_numbers = #tpu.dot_dimension_numbers<[1], [0], [0], [1], [0, 0, 1, 1], [], []>} : vector<64x16xf32>, vector<16x32xf32>, vector<64x32xf32> -> vector<64x32xf32>
    %257 = arith.mulf %247, %253 : vector<64x16xf32>
    %c160 = arith.constant 160 : index
    %c0_72 = arith.constant 0 : index
    %258 = vector.load %arg3[%c160, %c0_72] : memref<536x128xf32, #tpu.memory_space<vmem>>, vector<16x32xf32>
    %cst_73 = arith.constant dense<0.000000e+00> : vector<64x32xf32>
    %259 = tpu.matmul %257, %258, %cst_73 {dimension_numbers = #tpu.dot_dimension_numbers<[1], [0], [0], [1], [0, 0, 1, 1], [], []>} : vector<64x16xf32>, vector<16x32xf32>, vector<64x32xf32> -> vector<64x32xf32>
    %260 = arith.addf %256, %259 : vector<64x32xf32>
    %261 = arith.addf %260, %254 : vector<64x32xf32>
    %c184 = arith.constant 184 : index
    %c0_74 = arith.constant 0 : index
    %262 = vector.load %arg3[%c184, %c0_74] : memref<536x128xf32, #tpu.memory_space<vmem>>, vector<1x1xf32>
    %cst_75 = arith.constant 0.000000e+00 : f32
    %263 = vector.broadcast %cst_75 : f32 to vector<64x32xf32>
    %264 = arith.cmpf oge, %261, %263 : vector<64x32xf32>
    %265 = vector.broadcast %262 : vector<1x1xf32> to vector<64x32xf32>
    %266 = arith.mulf %265, %261 : vector<64x32xf32>
    %267 = arith.select %264, %261, %266 : vector<64x32xi1>, vector<64x32xf32>
    %c192 = arith.constant 192 : index
    %c0_76 = arith.constant 0 : index
    %268 = vector.load %arg3[%c192, %c0_76] : memref<536x128xf32, #tpu.memory_space<vmem>>, vector<32x32xf32>
    %cst_77 = arith.constant dense<0.000000e+00> : vector<64x32xf32>
    %269 = tpu.matmul %267, %268, %cst_77 {dimension_numbers = #tpu.dot_dimension_numbers<[1], [0], [0], [1], [0, 0, 1, 1], [], []>} : vector<64x32xf32>, vector<32x32xf32>, vector<64x32xf32> -> vector<64x32xf32>
    %c224 = arith.constant 224 : index
    %c0_78 = arith.constant 0 : index
    %270 = vector.load %arg3[%c224, %c0_78] : memref<536x128xf32, #tpu.memory_space<vmem>>, vector<1x32xf32>
    %271 = vector.broadcast %270 : vector<1x32xf32> to vector<64x32xf32>
    %272 = arith.addf %269, %271 : vector<64x32xf32>
    %c232 = arith.constant 232 : index
    %c0_79 = arith.constant 0 : index
    %273 = vector.load %arg3[%c232, %c0_79] : memref<536x128xf32, #tpu.memory_space<vmem>>, vector<1x1xf32>
    %cst_80 = arith.constant 0.000000e+00 : f32
    %274 = vector.broadcast %cst_80 : f32 to vector<64x32xf32>
    %275 = arith.cmpf oge, %272, %274 : vector<64x32xf32>
    %276 = vector.broadcast %273 : vector<1x1xf32> to vector<64x32xf32>
    %277 = arith.mulf %276, %272 : vector<64x32xf32>
    %278 = arith.select %275, %272, %277 : vector<64x32xi1>, vector<64x32xf32>
    %c240 = arith.constant 240 : index
    %c0_81 = arith.constant 0 : index
    %279 = vector.load %arg3[%c240, %c0_81] : memref<536x128xf32, #tpu.memory_space<vmem>>, vector<32x1xf32>
    %cst_82 = arith.constant dense<0.000000e+00> : vector<64x1xf32>
    %280 = tpu.matmul %278, %279, %cst_82 {dimension_numbers = #tpu.dot_dimension_numbers<[1], [0], [0], [1], [0, 0, 1, 1], [], []>} : vector<64x32xf32>, vector<32x1xf32>, vector<64x1xf32> -> vector<64x1xf32>
    %c272 = arith.constant 272 : index
    %c0_83 = arith.constant 0 : index
    %281 = vector.load %arg3[%c272, %c0_83] : memref<536x128xf32, #tpu.memory_space<vmem>>, vector<1x1xf32>
    %282 = vector.broadcast %281 : vector<1x1xf32> to vector<64x1xf32>
    %283 = arith.addf %280, %282 : vector<64x1xf32>
    %284 = arith.negf %283 : vector<64x1xf32>
    %285 = math.exp %284 : vector<64x1xf32>
    %cst_84 = arith.constant 1.000000e+00 : f32
    %286 = vector.broadcast %cst_84 : f32 to vector<64x1xf32>
    %287 = arith.addf %286, %285 : vector<64x1xf32>
    %288 = arith.divf %286, %287 : vector<64x1xf32>
    %c280 = arith.constant 280 : index
    %c0_85 = arith.constant 0 : index
    %289 = vector.load %arg3[%c280, %c0_85] : memref<536x128xf32, #tpu.memory_space<vmem>>, vector<16x8xf32>
    %cst_86 = arith.constant dense<0.000000e+00> : vector<64x8xf32>
    %290 = tpu.matmul %247, %289, %cst_86 {dimension_numbers = #tpu.dot_dimension_numbers<[1], [0], [0], [1], [0, 0, 1, 1], [], []>} : vector<64x16xf32>, vector<16x8xf32>, vector<64x8xf32> -> vector<64x8xf32>
    %c352 = arith.constant 352 : index
    %c0_87 = arith.constant 0 : index
    %291 = vector.load %arg3[%c352, %c0_87] : memref<536x128xf32, #tpu.memory_space<vmem>>, vector<1x8xf32>
    %292 = vector.broadcast %291 : vector<1x8xf32> to vector<64x8xf32>
    %293 = arith.addf %290, %292 : vector<64x8xf32>
    %c296 = arith.constant 296 : index
    %c0_88 = arith.constant 0 : index
    %294 = vector.load %arg3[%c296, %c0_88] : memref<536x128xf32, #tpu.memory_space<vmem>>, vector<16x8xf32>
    %cst_89 = arith.constant dense<0.000000e+00> : vector<64x8xf32>
    %295 = tpu.matmul %247, %294, %cst_89 {dimension_numbers = #tpu.dot_dimension_numbers<[1], [0], [0], [1], [0, 0, 1, 1], [], []>} : vector<64x16xf32>, vector<16x8xf32>, vector<64x8xf32> -> vector<64x8xf32>
    %c360 = arith.constant 360 : index
    %c0_90 = arith.constant 0 : index
    %296 = vector.load %arg3[%c360, %c0_90] : memref<536x128xf32, #tpu.memory_space<vmem>>, vector<1x8xf32>
    %297 = vector.broadcast %296 : vector<1x8xf32> to vector<64x8xf32>
    %298 = arith.addf %295, %297 : vector<64x8xf32>
    %c312 = arith.constant 312 : index
    %c0_91 = arith.constant 0 : index
    %299 = vector.load %arg3[%c312, %c0_91] : memref<536x128xf32, #tpu.memory_space<vmem>>, vector<16x8xf32>
    %cst_92 = arith.constant dense<0.000000e+00> : vector<64x8xf32>
    %300 = tpu.matmul %247, %299, %cst_92 {dimension_numbers = #tpu.dot_dimension_numbers<[1], [0], [0], [1], [0, 0, 1, 1], [], []>} : vector<64x16xf32>, vector<16x8xf32>, vector<64x8xf32> -> vector<64x8xf32>
    %c368 = arith.constant 368 : index
    %c0_93 = arith.constant 0 : index
    %301 = vector.load %arg3[%c368, %c0_93] : memref<536x128xf32, #tpu.memory_space<vmem>>, vector<1x8xf32>
    %302 = vector.broadcast %301 : vector<1x8xf32> to vector<64x8xf32>
    %303 = arith.addf %300, %302 : vector<64x8xf32>
    %c328 = arith.constant 328 : index
    %c0_94 = arith.constant 0 : index
    %304 = vector.load %arg3[%c328, %c0_94] : memref<536x128xf32, #tpu.memory_space<vmem>>, vector<8x8xf32>
    %c336 = arith.constant 336 : index
    %c0_95 = arith.constant 0 : index
    %305 = vector.load %arg3[%c336, %c0_95] : memref<536x128xf32, #tpu.memory_space<vmem>>, vector<8x8xf32>
    %c344 = arith.constant 344 : index
    %c0_96 = arith.constant 0 : index
    %306 = vector.load %arg3[%c344, %c0_96] : memref<536x128xf32, #tpu.memory_space<vmem>>, vector<8x8xf32>
    %cst_97 = arith.constant 0.000000e+00 : f32
    %307 = vector.broadcast %cst_97 : f32 to vector<8x8xf32>
    %308 = vector.extract_strided_slice %293 {offsets = [0, 0], sizes = [8, 8], strides = [1, 1]} : vector<64x8xf32> to vector<8x8xf32>
    %cst_98 = arith.constant dense<0.000000e+00> : vector<8x8xf32>
    %309 = tpu.matmul %307, %304, %cst_98 {dimension_numbers = #tpu.dot_dimension_numbers<[1], [0], [0], [1], [0, 0, 1, 1], [], []>} : vector<8x8xf32>, vector<8x8xf32>, vector<8x8xf32> -> vector<8x8xf32>
    %310 = arith.addf %308, %309 : vector<8x8xf32>
    %311 = arith.negf %310 : vector<8x8xf32>
    %312 = math.exp %311 : vector<8x8xf32>
    %cst_99 = arith.constant 1.000000e+00 : f32
    %313 = vector.broadcast %cst_99 : f32 to vector<8x8xf32>
    %314 = arith.addf %313, %312 : vector<8x8xf32>
    %315 = arith.divf %313, %314 : vector<8x8xf32>
    %316 = vector.extract_strided_slice %298 {offsets = [0, 0], sizes = [8, 8], strides = [1, 1]} : vector<64x8xf32> to vector<8x8xf32>
    %cst_100 = arith.constant dense<0.000000e+00> : vector<8x8xf32>
    %317 = tpu.matmul %307, %305, %cst_100 {dimension_numbers = #tpu.dot_dimension_numbers<[1], [0], [0], [1], [0, 0, 1, 1], [], []>} : vector<8x8xf32>, vector<8x8xf32>, vector<8x8xf32> -> vector<8x8xf32>
    %318 = arith.addf %316, %317 : vector<8x8xf32>
    %319 = arith.negf %318 : vector<8x8xf32>
    %320 = math.exp %319 : vector<8x8xf32>
    %cst_101 = arith.constant 1.000000e+00 : f32
    %321 = vector.broadcast %cst_101 : f32 to vector<8x8xf32>
    %322 = arith.addf %321, %320 : vector<8x8xf32>
    %323 = arith.divf %321, %322 : vector<8x8xf32>
    %324 = vector.extract_strided_slice %303 {offsets = [0, 0], sizes = [8, 8], strides = [1, 1]} : vector<64x8xf32> to vector<8x8xf32>
    %325 = arith.mulf %315, %307 : vector<8x8xf32>
    %cst_102 = arith.constant dense<0.000000e+00> : vector<8x8xf32>
    %326 = tpu.matmul %325, %306, %cst_102 {dimension_numbers = #tpu.dot_dimension_numbers<[1], [0], [0], [1], [0, 0, 1, 1], [], []>} : vector<8x8xf32>, vector<8x8xf32>, vector<8x8xf32> -> vector<8x8xf32>
    %327 = arith.addf %324, %326 : vector<8x8xf32>
    %328 = math.tanh %327 : vector<8x8xf32>
    %329 = vector.extract_strided_slice %288 {offsets = [0, 0], sizes = [8, 1], strides = [1, 1]} : vector<64x1xf32> to vector<8x1xf32>
    %330 = vector.broadcast %329 : vector<8x1xf32> to vector<8x8xf32>
    %331 = arith.mulf %330, %323 : vector<8x8xf32>
    %cst_103 = arith.constant 1.000000e+00 : f32
    %332 = vector.broadcast %cst_103 : f32 to vector<8x8xf32>
    %333 = arith.subf %332, %331 : vector<8x8xf32>
    %334 = arith.mulf %333, %307 : vector<8x8xf32>
    %335 = arith.mulf %331, %328 : vector<8x8xf32>
    %336 = arith.addf %334, %335 : vector<8x8xf32>
    %337 = vector.extract_strided_slice %293 {offsets = [8, 0], sizes = [8, 8], strides = [1, 1]} : vector<64x8xf32> to vector<8x8xf32>
    %cst_104 = arith.constant dense<0.000000e+00> : vector<8x8xf32>
    %338 = tpu.matmul %336, %304, %cst_104 {dimension_numbers = #tpu.dot_dimension_numbers<[1], [0], [0], [1], [0, 0, 1, 1], [], []>} : vector<8x8xf32>, vector<8x8xf32>, vector<8x8xf32> -> vector<8x8xf32>
    %339 = arith.addf %337, %338 : vector<8x8xf32>
    %340 = arith.negf %339 : vector<8x8xf32>
    %341 = math.exp %340 : vector<8x8xf32>
    %cst_105 = arith.constant 1.000000e+00 : f32
    %342 = vector.broadcast %cst_105 : f32 to vector<8x8xf32>
    %343 = arith.addf %342, %341 : vector<8x8xf32>
    %344 = arith.divf %342, %343 : vector<8x8xf32>
    %345 = vector.extract_strided_slice %298 {offsets = [8, 0], sizes = [8, 8], strides = [1, 1]} : vector<64x8xf32> to vector<8x8xf32>
    %cst_106 = arith.constant dense<0.000000e+00> : vector<8x8xf32>
    %346 = tpu.matmul %336, %305, %cst_106 {dimension_numbers = #tpu.dot_dimension_numbers<[1], [0], [0], [1], [0, 0, 1, 1], [], []>} : vector<8x8xf32>, vector<8x8xf32>, vector<8x8xf32> -> vector<8x8xf32>
    %347 = arith.addf %345, %346 : vector<8x8xf32>
    %348 = arith.negf %347 : vector<8x8xf32>
    %349 = math.exp %348 : vector<8x8xf32>
    %cst_107 = arith.constant 1.000000e+00 : f32
    %350 = vector.broadcast %cst_107 : f32 to vector<8x8xf32>
    %351 = arith.addf %350, %349 : vector<8x8xf32>
    %352 = arith.divf %350, %351 : vector<8x8xf32>
    %353 = vector.extract_strided_slice %303 {offsets = [8, 0], sizes = [8, 8], strides = [1, 1]} : vector<64x8xf32> to vector<8x8xf32>
    %354 = arith.mulf %344, %336 : vector<8x8xf32>
    %cst_108 = arith.constant dense<0.000000e+00> : vector<8x8xf32>
    %355 = tpu.matmul %354, %306, %cst_108 {dimension_numbers = #tpu.dot_dimension_numbers<[1], [0], [0], [1], [0, 0, 1, 1], [], []>} : vector<8x8xf32>, vector<8x8xf32>, vector<8x8xf32> -> vector<8x8xf32>
    %356 = arith.addf %353, %355 : vector<8x8xf32>
    %357 = math.tanh %356 : vector<8x8xf32>
    %358 = vector.extract_strided_slice %288 {offsets = [8, 0], sizes = [8, 1], strides = [1, 1]} : vector<64x1xf32> to vector<8x1xf32>
    %359 = vector.broadcast %358 : vector<8x1xf32> to vector<8x8xf32>
    %360 = arith.mulf %359, %352 : vector<8x8xf32>
    %cst_109 = arith.constant 1.000000e+00 : f32
    %361 = vector.broadcast %cst_109 : f32 to vector<8x8xf32>
    %362 = arith.subf %361, %360 : vector<8x8xf32>
    %363 = arith.mulf %362, %336 : vector<8x8xf32>
    %364 = arith.mulf %360, %357 : vector<8x8xf32>
    %365 = arith.addf %363, %364 : vector<8x8xf32>
    %366 = vector.extract_strided_slice %293 {offsets = [16, 0], sizes = [8, 8], strides = [1, 1]} : vector<64x8xf32> to vector<8x8xf32>
    %cst_110 = arith.constant dense<0.000000e+00> : vector<8x8xf32>
    %367 = tpu.matmul %365, %304, %cst_110 {dimension_numbers = #tpu.dot_dimension_numbers<[1], [0], [0], [1], [0, 0, 1, 1], [], []>} : vector<8x8xf32>, vector<8x8xf32>, vector<8x8xf32> -> vector<8x8xf32>
    %368 = arith.addf %366, %367 : vector<8x8xf32>
    %369 = arith.negf %368 : vector<8x8xf32>
    %370 = math.exp %369 : vector<8x8xf32>
    %cst_111 = arith.constant 1.000000e+00 : f32
    %371 = vector.broadcast %cst_111 : f32 to vector<8x8xf32>
    %372 = arith.addf %371, %370 : vector<8x8xf32>
    %373 = arith.divf %371, %372 : vector<8x8xf32>
    %374 = vector.extract_strided_slice %298 {offsets = [16, 0], sizes = [8, 8], strides = [1, 1]} : vector<64x8xf32> to vector<8x8xf32>
    %cst_112 = arith.constant dense<0.000000e+00> : vector<8x8xf32>
    %375 = tpu.matmul %365, %305, %cst_112 {dimension_numbers = #tpu.dot_dimension_numbers<[1], [0], [0], [1], [0, 0, 1, 1], [], []>} : vector<8x8xf32>, vector<8x8xf32>, vector<8x8xf32> -> vector<8x8xf32>
    %376 = arith.addf %374, %375 : vector<8x8xf32>
    %377 = arith.negf %376 : vector<8x8xf32>
    %378 = math.exp %377 : vector<8x8xf32>
    %cst_113 = arith.constant 1.000000e+00 : f32
    %379 = vector.broadcast %cst_113 : f32 to vector<8x8xf32>
    %380 = arith.addf %379, %378 : vector<8x8xf32>
    %381 = arith.divf %379, %380 : vector<8x8xf32>
    %382 = vector.extract_strided_slice %303 {offsets = [16, 0], sizes = [8, 8], strides = [1, 1]} : vector<64x8xf32> to vector<8x8xf32>
    %383 = arith.mulf %373, %365 : vector<8x8xf32>
    %cst_114 = arith.constant dense<0.000000e+00> : vector<8x8xf32>
    %384 = tpu.matmul %383, %306, %cst_114 {dimension_numbers = #tpu.dot_dimension_numbers<[1], [0], [0], [1], [0, 0, 1, 1], [], []>} : vector<8x8xf32>, vector<8x8xf32>, vector<8x8xf32> -> vector<8x8xf32>
    %385 = arith.addf %382, %384 : vector<8x8xf32>
    %386 = math.tanh %385 : vector<8x8xf32>
    %387 = vector.extract_strided_slice %288 {offsets = [16, 0], sizes = [8, 1], strides = [1, 1]} : vector<64x1xf32> to vector<8x1xf32>
    %388 = vector.broadcast %387 : vector<8x1xf32> to vector<8x8xf32>
    %389 = arith.mulf %388, %381 : vector<8x8xf32>
    %cst_115 = arith.constant 1.000000e+00 : f32
    %390 = vector.broadcast %cst_115 : f32 to vector<8x8xf32>
    %391 = arith.subf %390, %389 : vector<8x8xf32>
    %392 = arith.mulf %391, %365 : vector<8x8xf32>
    %393 = arith.mulf %389, %386 : vector<8x8xf32>
    %394 = arith.addf %392, %393 : vector<8x8xf32>
    %395 = vector.extract_strided_slice %293 {offsets = [24, 0], sizes = [8, 8], strides = [1, 1]} : vector<64x8xf32> to vector<8x8xf32>
    %cst_116 = arith.constant dense<0.000000e+00> : vector<8x8xf32>
    %396 = tpu.matmul %394, %304, %cst_116 {dimension_numbers = #tpu.dot_dimension_numbers<[1], [0], [0], [1], [0, 0, 1, 1], [], []>} : vector<8x8xf32>, vector<8x8xf32>, vector<8x8xf32> -> vector<8x8xf32>
    %397 = arith.addf %395, %396 : vector<8x8xf32>
    %398 = arith.negf %397 : vector<8x8xf32>
    %399 = math.exp %398 : vector<8x8xf32>
    %cst_117 = arith.constant 1.000000e+00 : f32
    %400 = vector.broadcast %cst_117 : f32 to vector<8x8xf32>
    %401 = arith.addf %400, %399 : vector<8x8xf32>
    %402 = arith.divf %400, %401 : vector<8x8xf32>
    %403 = vector.extract_strided_slice %298 {offsets = [24, 0], sizes = [8, 8], strides = [1, 1]} : vector<64x8xf32> to vector<8x8xf32>
    %cst_118 = arith.constant dense<0.000000e+00> : vector<8x8xf32>
    %404 = tpu.matmul %394, %305, %cst_118 {dimension_numbers = #tpu.dot_dimension_numbers<[1], [0], [0], [1], [0, 0, 1, 1], [], []>} : vector<8x8xf32>, vector<8x8xf32>, vector<8x8xf32> -> vector<8x8xf32>
    %405 = arith.addf %403, %404 : vector<8x8xf32>
    %406 = arith.negf %405 : vector<8x8xf32>
    %407 = math.exp %406 : vector<8x8xf32>
    %cst_119 = arith.constant 1.000000e+00 : f32
    %408 = vector.broadcast %cst_119 : f32 to vector<8x8xf32>
    %409 = arith.addf %408, %407 : vector<8x8xf32>
    %410 = arith.divf %408, %409 : vector<8x8xf32>
    %411 = vector.extract_strided_slice %303 {offsets = [24, 0], sizes = [8, 8], strides = [1, 1]} : vector<64x8xf32> to vector<8x8xf32>
    %412 = arith.mulf %402, %394 : vector<8x8xf32>
    %cst_120 = arith.constant dense<0.000000e+00> : vector<8x8xf32>
    %413 = tpu.matmul %412, %306, %cst_120 {dimension_numbers = #tpu.dot_dimension_numbers<[1], [0], [0], [1], [0, 0, 1, 1], [], []>} : vector<8x8xf32>, vector<8x8xf32>, vector<8x8xf32> -> vector<8x8xf32>
    %414 = arith.addf %411, %413 : vector<8x8xf32>
    %415 = math.tanh %414 : vector<8x8xf32>
    %416 = vector.extract_strided_slice %288 {offsets = [24, 0], sizes = [8, 1], strides = [1, 1]} : vector<64x1xf32> to vector<8x1xf32>
    %417 = vector.broadcast %416 : vector<8x1xf32> to vector<8x8xf32>
    %418 = arith.mulf %417, %410 : vector<8x8xf32>
    %cst_121 = arith.constant 1.000000e+00 : f32
    %419 = vector.broadcast %cst_121 : f32 to vector<8x8xf32>
    %420 = arith.subf %419, %418 : vector<8x8xf32>
    %421 = arith.mulf %420, %394 : vector<8x8xf32>
    %422 = arith.mulf %418, %415 : vector<8x8xf32>
    %423 = arith.addf %421, %422 : vector<8x8xf32>
    %424 = vector.extract_strided_slice %293 {offsets = [32, 0], sizes = [8, 8], strides = [1, 1]} : vector<64x8xf32> to vector<8x8xf32>
    %cst_122 = arith.constant dense<0.000000e+00> : vector<8x8xf32>
    %425 = tpu.matmul %423, %304, %cst_122 {dimension_numbers = #tpu.dot_dimension_numbers<[1], [0], [0], [1], [0, 0, 1, 1], [], []>} : vector<8x8xf32>, vector<8x8xf32>, vector<8x8xf32> -> vector<8x8xf32>
    %426 = arith.addf %424, %425 : vector<8x8xf32>
    %427 = arith.negf %426 : vector<8x8xf32>
    %428 = math.exp %427 : vector<8x8xf32>
    %cst_123 = arith.constant 1.000000e+00 : f32
    %429 = vector.broadcast %cst_123 : f32 to vector<8x8xf32>
    %430 = arith.addf %429, %428 : vector<8x8xf32>
    %431 = arith.divf %429, %430 : vector<8x8xf32>
    %432 = vector.extract_strided_slice %298 {offsets = [32, 0], sizes = [8, 8], strides = [1, 1]} : vector<64x8xf32> to vector<8x8xf32>
    %cst_124 = arith.constant dense<0.000000e+00> : vector<8x8xf32>
    %433 = tpu.matmul %423, %305, %cst_124 {dimension_numbers = #tpu.dot_dimension_numbers<[1], [0], [0], [1], [0, 0, 1, 1], [], []>} : vector<8x8xf32>, vector<8x8xf32>, vector<8x8xf32> -> vector<8x8xf32>
    %434 = arith.addf %432, %433 : vector<8x8xf32>
    %435 = arith.negf %434 : vector<8x8xf32>
    %436 = math.exp %435 : vector<8x8xf32>
    %cst_125 = arith.constant 1.000000e+00 : f32
    %437 = vector.broadcast %cst_125 : f32 to vector<8x8xf32>
    %438 = arith.addf %437, %436 : vector<8x8xf32>
    %439 = arith.divf %437, %438 : vector<8x8xf32>
    %440 = vector.extract_strided_slice %303 {offsets = [32, 0], sizes = [8, 8], strides = [1, 1]} : vector<64x8xf32> to vector<8x8xf32>
    %441 = arith.mulf %431, %423 : vector<8x8xf32>
    %cst_126 = arith.constant dense<0.000000e+00> : vector<8x8xf32>
    %442 = tpu.matmul %441, %306, %cst_126 {dimension_numbers = #tpu.dot_dimension_numbers<[1], [0], [0], [1], [0, 0, 1, 1], [], []>} : vector<8x8xf32>, vector<8x8xf32>, vector<8x8xf32> -> vector<8x8xf32>
    %443 = arith.addf %440, %442 : vector<8x8xf32>
    %444 = math.tanh %443 : vector<8x8xf32>
    %445 = vector.extract_strided_slice %288 {offsets = [32, 0], sizes = [8, 1], strides = [1, 1]} : vector<64x1xf32> to vector<8x1xf32>
    %446 = vector.broadcast %445 : vector<8x1xf32> to vector<8x8xf32>
    %447 = arith.mulf %446, %439 : vector<8x8xf32>
    %cst_127 = arith.constant 1.000000e+00 : f32
    %448 = vector.broadcast %cst_127 : f32 to vector<8x8xf32>
    %449 = arith.subf %448, %447 : vector<8x8xf32>
    %450 = arith.mulf %449, %423 : vector<8x8xf32>
    %451 = arith.mulf %447, %444 : vector<8x8xf32>
    %452 = arith.addf %450, %451 : vector<8x8xf32>
    %453 = vector.extract_strided_slice %293 {offsets = [40, 0], sizes = [8, 8], strides = [1, 1]} : vector<64x8xf32> to vector<8x8xf32>
    %cst_128 = arith.constant dense<0.000000e+00> : vector<8x8xf32>
    %454 = tpu.matmul %452, %304, %cst_128 {dimension_numbers = #tpu.dot_dimension_numbers<[1], [0], [0], [1], [0, 0, 1, 1], [], []>} : vector<8x8xf32>, vector<8x8xf32>, vector<8x8xf32> -> vector<8x8xf32>
    %455 = arith.addf %453, %454 : vector<8x8xf32>
    %456 = arith.negf %455 : vector<8x8xf32>
    %457 = math.exp %456 : vector<8x8xf32>
    %cst_129 = arith.constant 1.000000e+00 : f32
    %458 = vector.broadcast %cst_129 : f32 to vector<8x8xf32>
    %459 = arith.addf %458, %457 : vector<8x8xf32>
    %460 = arith.divf %458, %459 : vector<8x8xf32>
    %461 = vector.extract_strided_slice %298 {offsets = [40, 0], sizes = [8, 8], strides = [1, 1]} : vector<64x8xf32> to vector<8x8xf32>
    %cst_130 = arith.constant dense<0.000000e+00> : vector<8x8xf32>
    %462 = tpu.matmul %452, %305, %cst_130 {dimension_numbers = #tpu.dot_dimension_numbers<[1], [0], [0], [1], [0, 0, 1, 1], [], []>} : vector<8x8xf32>, vector<8x8xf32>, vector<8x8xf32> -> vector<8x8xf32>
    %463 = arith.addf %461, %462 : vector<8x8xf32>
    %464 = arith.negf %463 : vector<8x8xf32>
    %465 = math.exp %464 : vector<8x8xf32>
    %cst_131 = arith.constant 1.000000e+00 : f32
    %466 = vector.broadcast %cst_131 : f32 to vector<8x8xf32>
    %467 = arith.addf %466, %465 : vector<8x8xf32>
    %468 = arith.divf %466, %467 : vector<8x8xf32>
    %469 = vector.extract_strided_slice %303 {offsets = [40, 0], sizes = [8, 8], strides = [1, 1]} : vector<64x8xf32> to vector<8x8xf32>
    %470 = arith.mulf %460, %452 : vector<8x8xf32>
    %cst_132 = arith.constant dense<0.000000e+00> : vector<8x8xf32>
    %471 = tpu.matmul %470, %306, %cst_132 {dimension_numbers = #tpu.dot_dimension_numbers<[1], [0], [0], [1], [0, 0, 1, 1], [], []>} : vector<8x8xf32>, vector<8x8xf32>, vector<8x8xf32> -> vector<8x8xf32>
    %472 = arith.addf %469, %471 : vector<8x8xf32>
    %473 = math.tanh %472 : vector<8x8xf32>
    %474 = vector.extract_strided_slice %288 {offsets = [40, 0], sizes = [8, 1], strides = [1, 1]} : vector<64x1xf32> to vector<8x1xf32>
    %475 = vector.broadcast %474 : vector<8x1xf32> to vector<8x8xf32>
    %476 = arith.mulf %475, %468 : vector<8x8xf32>
    %cst_133 = arith.constant 1.000000e+00 : f32
    %477 = vector.broadcast %cst_133 : f32 to vector<8x8xf32>
    %478 = arith.subf %477, %476 : vector<8x8xf32>
    %479 = arith.mulf %478, %452 : vector<8x8xf32>
    %480 = arith.mulf %476, %473 : vector<8x8xf32>
    %481 = arith.addf %479, %480 : vector<8x8xf32>
    %482 = vector.extract_strided_slice %293 {offsets = [48, 0], sizes = [8, 8], strides = [1, 1]} : vector<64x8xf32> to vector<8x8xf32>
    %cst_134 = arith.constant dense<0.000000e+00> : vector<8x8xf32>
    %483 = tpu.matmul %481, %304, %cst_134 {dimension_numbers = #tpu.dot_dimension_numbers<[1], [0], [0], [1], [0, 0, 1, 1], [], []>} : vector<8x8xf32>, vector<8x8xf32>, vector<8x8xf32> -> vector<8x8xf32>
    %484 = arith.addf %482, %483 : vector<8x8xf32>
    %485 = arith.negf %484 : vector<8x8xf32>
    %486 = math.exp %485 : vector<8x8xf32>
    %cst_135 = arith.constant 1.000000e+00 : f32
    %487 = vector.broadcast %cst_135 : f32 to vector<8x8xf32>
    %488 = arith.addf %487, %486 : vector<8x8xf32>
    %489 = arith.divf %487, %488 : vector<8x8xf32>
    %490 = vector.extract_strided_slice %298 {offsets = [48, 0], sizes = [8, 8], strides = [1, 1]} : vector<64x8xf32> to vector<8x8xf32>
    %cst_136 = arith.constant dense<0.000000e+00> : vector<8x8xf32>
    %491 = tpu.matmul %481, %305, %cst_136 {dimension_numbers = #tpu.dot_dimension_numbers<[1], [0], [0], [1], [0, 0, 1, 1], [], []>} : vector<8x8xf32>, vector<8x8xf32>, vector<8x8xf32> -> vector<8x8xf32>
    %492 = arith.addf %490, %491 : vector<8x8xf32>
    %493 = arith.negf %492 : vector<8x8xf32>
    %494 = math.exp %493 : vector<8x8xf32>
    %cst_137 = arith.constant 1.000000e+00 : f32
    %495 = vector.broadcast %cst_137 : f32 to vector<8x8xf32>
    %496 = arith.addf %495, %494 : vector<8x8xf32>
    %497 = arith.divf %495, %496 : vector<8x8xf32>
    %498 = vector.extract_strided_slice %303 {offsets = [48, 0], sizes = [8, 8], strides = [1, 1]} : vector<64x8xf32> to vector<8x8xf32>
    %499 = arith.mulf %489, %481 : vector<8x8xf32>
    %cst_138 = arith.constant dense<0.000000e+00> : vector<8x8xf32>
    %500 = tpu.matmul %499, %306, %cst_138 {dimension_numbers = #tpu.dot_dimension_numbers<[1], [0], [0], [1], [0, 0, 1, 1], [], []>} : vector<8x8xf32>, vector<8x8xf32>, vector<8x8xf32> -> vector<8x8xf32>
    %501 = arith.addf %498, %500 : vector<8x8xf32>
    %502 = math.tanh %501 : vector<8x8xf32>
    %503 = vector.extract_strided_slice %288 {offsets = [48, 0], sizes = [8, 1], strides = [1, 1]} : vector<64x1xf32> to vector<8x1xf32>
    %504 = vector.broadcast %503 : vector<8x1xf32> to vector<8x8xf32>
    %505 = arith.mulf %504, %497 : vector<8x8xf32>
    %cst_139 = arith.constant 1.000000e+00 : f32
    %506 = vector.broadcast %cst_139 : f32 to vector<8x8xf32>
    %507 = arith.subf %506, %505 : vector<8x8xf32>
    %508 = arith.mulf %507, %481 : vector<8x8xf32>
    %509 = arith.mulf %505, %502 : vector<8x8xf32>
    %510 = arith.addf %508, %509 : vector<8x8xf32>
    %511 = vector.extract_strided_slice %293 {offsets = [56, 0], sizes = [8, 8], strides = [1, 1]} : vector<64x8xf32> to vector<8x8xf32>
    %cst_140 = arith.constant dense<0.000000e+00> : vector<8x8xf32>
    %512 = tpu.matmul %510, %304, %cst_140 {dimension_numbers = #tpu.dot_dimension_numbers<[1], [0], [0], [1], [0, 0, 1, 1], [], []>} : vector<8x8xf32>, vector<8x8xf32>, vector<8x8xf32> -> vector<8x8xf32>
    %513 = arith.addf %511, %512 : vector<8x8xf32>
    %514 = arith.negf %513 : vector<8x8xf32>
    %515 = math.exp %514 : vector<8x8xf32>
    %cst_141 = arith.constant 1.000000e+00 : f32
    %516 = vector.broadcast %cst_141 : f32 to vector<8x8xf32>
    %517 = arith.addf %516, %515 : vector<8x8xf32>
    %518 = arith.divf %516, %517 : vector<8x8xf32>
    %519 = vector.extract_strided_slice %298 {offsets = [56, 0], sizes = [8, 8], strides = [1, 1]} : vector<64x8xf32> to vector<8x8xf32>
    %cst_142 = arith.constant dense<0.000000e+00> : vector<8x8xf32>
    %520 = tpu.matmul %510, %305, %cst_142 {dimension_numbers = #tpu.dot_dimension_numbers<[1], [0], [0], [1], [0, 0, 1, 1], [], []>} : vector<8x8xf32>, vector<8x8xf32>, vector<8x8xf32> -> vector<8x8xf32>
    %521 = arith.addf %519, %520 : vector<8x8xf32>
    %522 = arith.negf %521 : vector<8x8xf32>
    %523 = math.exp %522 : vector<8x8xf32>
    %cst_143 = arith.constant 1.000000e+00 : f32
    %524 = vector.broadcast %cst_143 : f32 to vector<8x8xf32>
    %525 = arith.addf %524, %523 : vector<8x8xf32>
    %526 = arith.divf %524, %525 : vector<8x8xf32>
    %527 = vector.extract_strided_slice %303 {offsets = [56, 0], sizes = [8, 8], strides = [1, 1]} : vector<64x8xf32> to vector<8x8xf32>
    %528 = arith.mulf %518, %510 : vector<8x8xf32>
    %cst_144 = arith.constant dense<0.000000e+00> : vector<8x8xf32>
    %529 = tpu.matmul %528, %306, %cst_144 {dimension_numbers = #tpu.dot_dimension_numbers<[1], [0], [0], [1], [0, 0, 1, 1], [], []>} : vector<8x8xf32>, vector<8x8xf32>, vector<8x8xf32> -> vector<8x8xf32>
    %530 = arith.addf %527, %529 : vector<8x8xf32>
    %531 = math.tanh %530 : vector<8x8xf32>
    %532 = vector.extract_strided_slice %288 {offsets = [56, 0], sizes = [8, 1], strides = [1, 1]} : vector<64x1xf32> to vector<8x1xf32>
    %533 = vector.broadcast %532 : vector<8x1xf32> to vector<8x8xf32>
    %534 = arith.mulf %533, %526 : vector<8x8xf32>
    %cst_145 = arith.constant 1.000000e+00 : f32
    %535 = vector.broadcast %cst_145 : f32 to vector<8x8xf32>
    %536 = arith.subf %535, %534 : vector<8x8xf32>
    %537 = arith.mulf %536, %510 : vector<8x8xf32>
    %538 = arith.mulf %534, %531 : vector<8x8xf32>
    %539 = arith.addf %537, %538 : vector<8x8xf32>
    %c376 = arith.constant 376 : index
    %c0_146 = arith.constant 0 : index
    %540 = vector.load %arg3[%c376, %c0_146] : memref<536x128xf32, #tpu.memory_space<vmem>>, vector<16x32xf32>
    %cst_147 = arith.constant dense<0.000000e+00> : vector<8x32xf32>
    %541 = tpu.matmul %0, %540, %cst_147 {dimension_numbers = #tpu.dot_dimension_numbers<[1], [0], [0], [1], [0, 0, 1, 1], [], []>} : vector<8x16xf32>, vector<16x32xf32>, vector<8x32xf32> -> vector<8x32xf32>
    %c392 = arith.constant 392 : index
    %c0_148 = arith.constant 0 : index
    %542 = vector.load %arg3[%c392, %c0_148] : memref<536x128xf32, #tpu.memory_space<vmem>>, vector<16x32xf32>
    %cst_149 = arith.constant dense<0.000000e+00> : vector<8x32xf32>
    %543 = tpu.matmul %1, %542, %cst_149 {dimension_numbers = #tpu.dot_dimension_numbers<[1], [0], [0], [1], [0, 0, 1, 1], [], []>} : vector<8x16xf32>, vector<16x32xf32>, vector<8x32xf32> -> vector<8x32xf32>
    %544 = arith.addf %541, %543 : vector<8x32xf32>
    %c408 = arith.constant 408 : index
    %c0_150 = arith.constant 0 : index
    %545 = vector.load %arg3[%c408, %c0_150] : memref<536x128xf32, #tpu.memory_space<vmem>>, vector<8x32xf32>
    %cst_151 = arith.constant dense<0.000000e+00> : vector<8x32xf32>
    %546 = tpu.matmul %539, %545, %cst_151 {dimension_numbers = #tpu.dot_dimension_numbers<[1], [0], [0], [1], [0, 0, 1, 1], [], []>} : vector<8x8xf32>, vector<8x32xf32>, vector<8x32xf32> -> vector<8x32xf32>
    %547 = arith.addf %544, %546 : vector<8x32xf32>
    %c416 = arith.constant 416 : index
    %c0_152 = arith.constant 0 : index
    %548 = vector.load %arg3[%c416, %c0_152] : memref<536x128xf32, #tpu.memory_space<vmem>>, vector<1x32xf32>
    %549 = vector.broadcast %548 : vector<1x32xf32> to vector<8x32xf32>
    %550 = arith.addf %547, %549 : vector<8x32xf32>
    %c424 = arith.constant 424 : index
    %c0_153 = arith.constant 0 : index
    %551 = vector.load %arg3[%c424, %c0_153] : memref<536x128xf32, #tpu.memory_space<vmem>>, vector<1x32xf32>
    %c432 = arith.constant 432 : index
    %c0_154 = arith.constant 0 : index
    %552 = vector.load %arg3[%c432, %c0_154] : memref<536x128xf32, #tpu.memory_space<vmem>>, vector<1x32xf32>
    %cst_155 = arith.constant dense<0.000000e+00> : vector<32xf32>
    %553 = vector.multi_reduction <add>, %550, %cst_155 [0] : vector<8x32xf32> to vector<32xf32>
    %554 = vector.shape_cast %553 : vector<32xf32> to vector<1x32xf32>
    %cst_156 = arith.constant 8.000000e+00 : f32
    %555 = vector.broadcast %cst_156 : f32 to vector<1x32xf32>
    %556 = arith.divf %554, %555 : vector<1x32xf32>
    %557 = vector.broadcast %556 : vector<1x32xf32> to vector<8x32xf32>
    %558 = arith.subf %550, %557 : vector<8x32xf32>
    %559 = arith.mulf %558, %558 : vector<8x32xf32>
    %cst_157 = arith.constant dense<0.000000e+00> : vector<32xf32>
    %560 = vector.multi_reduction <add>, %559, %cst_157 [0] : vector<8x32xf32> to vector<32xf32>
    %561 = vector.shape_cast %560 : vector<32xf32> to vector<1x32xf32>
    %cst_158 = arith.constant 8.000000e+00 : f32
    %562 = vector.broadcast %cst_158 : f32 to vector<1x32xf32>
    %563 = arith.divf %561, %562 : vector<1x32xf32>
    %564 = vector.broadcast %556 : vector<1x32xf32> to vector<8x32xf32>
    %565 = arith.subf %550, %564 : vector<8x32xf32>
    %cst_159 = arith.constant 9.99999974E-6 : f32
    %566 = vector.broadcast %cst_159 : f32 to vector<1x32xf32>
    %567 = arith.addf %563, %566 : vector<1x32xf32>
    %568 = math.rsqrt %567 : vector<1x32xf32>
    %569 = vector.broadcast %568 : vector<1x32xf32> to vector<8x32xf32>
    %570 = arith.mulf %565, %569 : vector<8x32xf32>
    %571 = vector.broadcast %551 : vector<1x32xf32> to vector<8x32xf32>
    %572 = arith.mulf %570, %571 : vector<8x32xf32>
    %573 = vector.broadcast %552 : vector<1x32xf32> to vector<8x32xf32>
    %574 = arith.addf %572, %573 : vector<8x32xf32>
    %c440 = arith.constant 440 : index
    %c0_160 = arith.constant 0 : index
    %575 = vector.load %arg3[%c440, %c0_160] : memref<536x128xf32, #tpu.memory_space<vmem>>, vector<1x1xf32>
    %cst_161 = arith.constant 0.000000e+00 : f32
    %576 = vector.broadcast %cst_161 : f32 to vector<8x32xf32>
    %577 = arith.cmpf oge, %574, %576 : vector<8x32xf32>
    %578 = vector.broadcast %575 : vector<1x1xf32> to vector<8x32xf32>
    %579 = arith.mulf %578, %574 : vector<8x32xf32>
    %580 = arith.select %577, %574, %579 : vector<8x32xi1>, vector<8x32xf32>
    %c448 = arith.constant 448 : index
    %c0_162 = arith.constant 0 : index
    %581 = vector.load %arg3[%c448, %c0_162] : memref<536x128xf32, #tpu.memory_space<vmem>>, vector<32x16xf32>
    %cst_163 = arith.constant dense<0.000000e+00> : vector<8x16xf32>
    %582 = tpu.matmul %580, %581, %cst_163 {dimension_numbers = #tpu.dot_dimension_numbers<[1], [0], [0], [1], [0, 0, 1, 1], [], []>} : vector<8x32xf32>, vector<32x16xf32>, vector<8x16xf32> -> vector<8x16xf32>
    %c480 = arith.constant 480 : index
    %c0_164 = arith.constant 0 : index
    %583 = vector.load %arg3[%c480, %c0_164] : memref<536x128xf32, #tpu.memory_space<vmem>>, vector<1x16xf32>
    %584 = vector.broadcast %583 : vector<1x16xf32> to vector<8x16xf32>
    %585 = arith.addf %582, %584 : vector<8x16xf32>
    %c488 = arith.constant 488 : index
    %c0_165 = arith.constant 0 : index
    %586 = vector.load %arg3[%c488, %c0_165] : memref<536x128xf32, #tpu.memory_space<vmem>>, vector<1x16xf32>
    %c496 = arith.constant 496 : index
    %c0_166 = arith.constant 0 : index
    %587 = vector.load %arg3[%c496, %c0_166] : memref<536x128xf32, #tpu.memory_space<vmem>>, vector<1x16xf32>
    %cst_167 = arith.constant dense<0.000000e+00> : vector<16xf32>
    %588 = vector.multi_reduction <add>, %585, %cst_167 [0] : vector<8x16xf32> to vector<16xf32>
    %589 = vector.shape_cast %588 : vector<16xf32> to vector<1x16xf32>
    %cst_168 = arith.constant 8.000000e+00 : f32
    %590 = vector.broadcast %cst_168 : f32 to vector<1x16xf32>
    %591 = arith.divf %589, %590 : vector<1x16xf32>
    %592 = vector.broadcast %591 : vector<1x16xf32> to vector<8x16xf32>
    %593 = arith.subf %585, %592 : vector<8x16xf32>
    %594 = arith.mulf %593, %593 : vector<8x16xf32>
    %cst_169 = arith.constant dense<0.000000e+00> : vector<16xf32>
    %595 = vector.multi_reduction <add>, %594, %cst_169 [0] : vector<8x16xf32> to vector<16xf32>
    %596 = vector.shape_cast %595 : vector<16xf32> to vector<1x16xf32>
    %cst_170 = arith.constant 8.000000e+00 : f32
    %597 = vector.broadcast %cst_170 : f32 to vector<1x16xf32>
    %598 = arith.divf %596, %597 : vector<1x16xf32>
    %599 = vector.broadcast %591 : vector<1x16xf32> to vector<8x16xf32>
    %600 = arith.subf %585, %599 : vector<8x16xf32>
    %cst_171 = arith.constant 9.99999974E-6 : f32
    %601 = vector.broadcast %cst_171 : f32 to vector<1x16xf32>
    %602 = arith.addf %598, %601 : vector<1x16xf32>
    %603 = math.rsqrt %602 : vector<1x16xf32>
    %604 = vector.broadcast %603 : vector<1x16xf32> to vector<8x16xf32>
    %605 = arith.mulf %600, %604 : vector<8x16xf32>
    %606 = vector.broadcast %586 : vector<1x16xf32> to vector<8x16xf32>
    %607 = arith.mulf %605, %606 : vector<8x16xf32>
    %608 = vector.broadcast %587 : vector<1x16xf32> to vector<8x16xf32>
    %609 = arith.addf %607, %608 : vector<8x16xf32>
    %c504 = arith.constant 504 : index
    %c0_172 = arith.constant 0 : index
    %610 = vector.load %arg3[%c504, %c0_172] : memref<536x128xf32, #tpu.memory_space<vmem>>, vector<1x1xf32>
    %cst_173 = arith.constant 0.000000e+00 : f32
    %611 = vector.broadcast %cst_173 : f32 to vector<8x16xf32>
    %612 = arith.cmpf oge, %609, %611 : vector<8x16xf32>
    %613 = vector.broadcast %610 : vector<1x1xf32> to vector<8x16xf32>
    %614 = arith.mulf %613, %609 : vector<8x16xf32>
    %615 = arith.select %612, %609, %614 : vector<8x16xi1>, vector<8x16xf32>
    %c512 = arith.constant 512 : index
    %c0_174 = arith.constant 0 : index
    %616 = vector.load %arg3[%c512, %c0_174] : memref<536x128xf32, #tpu.memory_space<vmem>>, vector<16x1xf32>
    %cst_175 = arith.constant dense<0.000000e+00> : vector<8x1xf32>
    %617 = tpu.matmul %615, %616, %cst_175 {dimension_numbers = #tpu.dot_dimension_numbers<[1], [0], [0], [1], [0, 0, 1, 1], [], []>} : vector<8x16xf32>, vector<16x1xf32>, vector<8x1xf32> -> vector<8x1xf32>
    %c528 = arith.constant 528 : index
    %c0_176 = arith.constant 0 : index
    %618 = vector.load %arg3[%c528, %c0_176] : memref<536x128xf32, #tpu.memory_space<vmem>>, vector<1x1xf32>
    %619 = vector.broadcast %618 : vector<1x1xf32> to vector<8x1xf32>
    %620 = arith.addf %617, %619 : vector<8x1xf32>
    %c0_177 = arith.constant 0 : index
    %c0_178 = arith.constant 0 : index
    %621 = vector.load %arg4[%c0_177, %c0_178] : memref<8x1xf32, #tpu.memory_space<vmem>>, vector<8x1xf32>
    tpu.vector_store %arg4[%c0_177, %c0_178], %620 {strides = array<i32>} : memref<8x1xf32, #tpu.memory_space<vmem>>, vector<8x1xf32>,
    return
  }
}

</mosaic_0001>

<llo_original>
// kernel: tpu_custom_call.1
$region0: #{tpu_custom_call.1}
  #allocation0 [shape = 'u32[]', space=smem, size = 0x4, offset = 0x4, fixed_abs, tag = 'smem constant byte address 0x4 - core index']
  #allocation1 [shape = 'u32[144,128]{1,0:T(1,128)}', space=vmem, size = 0x12000, scoped, tag = 'internal scratch']
  %s0 = inlined_call_operand.vmem [shape: f32[8,16], index: 0, kind: input, shape index: {}]
  %s1 = inlined_call_operand.vmem [shape: f32[8,16], index: 1, kind: input, shape index: {}]
  %s2 = inlined_call_operand.vmem [shape: f32[64,16], index: 2, kind: input, shape index: {}]
  %s3 = inlined_call_operand.hbm [shape: f32[536,128], index: 3, kind: input, shape index: {}]
  %s4 = inlined_call_operand.vmem [shape: f32[8,1], index: 4, kind: output, shape index: {}]
  %s5 = sld [smem:[#allocation0]]
  $region30: #{tpu_custom_call.1} parent=0
    _
  %s7 = ssub.s32 1, %s5
  %s8 = scalar_select 0, %s7, %s5
  $region1: #{tpu_custom_call.1} parent=0
    #allocation2 [shape = 'u8[274432]{0}', space=vmem, size = 0x43000, scoped, tag = 'input window, operand 3, single buffered']
    #allocation3 [shape = 's32[1]{0}', space=sflag, size = 0x4, scoped, tag = 'scoped memory for tpu_custom_call.1']
    %9 = vsyncpa [#allocation3], 0
    // Predicated region
    $region2: #{tpu_custom_call.1} parent=1 // pred_check
      _
    $region3: #{tpu_custom_call.1} parent=1 // pred_check_branch
      %11 = sbr.rel (0) target = $region5
    $region4: #{tpu_custom_call.1} parent=1 // pred_region
      _
    $region5: #{tpu_custom_call.1} parent=1 // pred_fallthru
      _
    // Predicated region
    $region6: #{tpu_custom_call.1} parent=1 // pred_check
      _
    $region7: #{tpu_custom_call.1} parent=1 // pred_check_branch
      %13 = sbr.rel (0) target = $region9
    $region8: #{tpu_custom_call.1} parent=1 // pred_region
      _
    $region9: #{tpu_custom_call.1} parent=1 // pred_fallthru
      _
    // Predicated region
    $region10: #{tpu_custom_call.1} parent=1 // pred_check
      _
    $region11: #{tpu_custom_call.1} parent=1 // pred_check_branch
      %15 = sbr.rel (0) target = $region13
    $region12: #{tpu_custom_call.1} parent=1 // pred_region
      _
    $region13: #{tpu_custom_call.1} parent=1 // pred_fallthru
      _
    // Predicated region
    $region14: #{tpu_custom_call.1} parent=1 // pred_check
      _
    $region15: #{tpu_custom_call.1} parent=1 // pred_check_branch
      %17 = sbr.rel (0) target = $region17
    $region16: #{tpu_custom_call.1} parent=1 // pred_region
      %s19 = ssub.s32 8576, 8576
      %20 = vsyncadd [#allocation3], %s19
      %s21 = sshll.u32 [#allocation2], 4
      %s22 = int_to_ptr.vmem [resolvable:$true] %s21
      %27 = dma.hbm_to_vmem [thread:$0]  %s3, 8576, %s22, [#allocation3], 128, 128, 8
    $region17: #{tpu_custom_call.1} parent=1 // pred_fallthru
      _
    // Predicated region
    $region18: #{tpu_custom_call.1} parent=1 // pred_check
      _
    $region19: #{tpu_custom_call.1} parent=1 // pred_check_branch
      %29 = sbr.rel (0) target = $region21
    $region20: #{tpu_custom_call.1} parent=1 // pred_region
      %30 = dma.done [#allocation3], 8576
    $region21: #{tpu_custom_call.1} parent=1 // pred_fallthru
      _
    %v31 = vld [vmem:[%s0] sm:$0xff]
    %v32 = vld [vmem:[%s1] sm:$0xff]
    %v33 = vld [vmem:[%s2] sm:$0xff]
    %v34 = vld [vmem:[%s2 + $0x8] sm:$0xff]
    %v35 = vld [vmem:[%s2 + $0x10] sm:$0xff]
    %v36 = vld [vmem:[%s2 + $0x18] sm:$0xff]
    %v37 = vld [vmem:[%s2 + $0x20] sm:$0xff]
    %v38 = vld [vmem:[%s2 + $0x28] sm:$0xff]
    %v39 = vld [vmem:[%s2 + $0x30] sm:$0xff]
    %v40 = vld [vmem:[%s2 + $0x38] sm:$0xff]
    %v41 = vld [vmem:[#allocation2] sm:$0xff]
    %v42 = vld [vmem:[#allocation2 + $0x8] sm:$0xff]
    %v43 = vld [vmem:[#allocation2 + $0x60] sm:$0x1]
    %v44 = vlaneseq
    %v45 = vshrl.u32 %v44, 7
    %v46 = vsub.s32 0, %v45
    %v47 = vrot.slane %v43, %v46
    %vm48 = vcmask 130048
    %v50 = vsel %vm48, %v33, 0
    %v53 = vsel %vm48, %v34, 0
    %v56 = vsel %vm48, %v35, 0
    %v59 = vsel %vm48, %v36, 0
    %v62 = vsel %vm48, %v37, 0
    %v65 = vsel %vm48, %v38, 0
    %v68 = vsel %vm48, %v39, 0
    %v71 = vsel %vm48, %v40, 0
    %73 = vmatprep.subr.mxu0 0.0
    %74 = vmatpush1.msra.mxu0 0.0
    %75 = vmatprep.subr.mxu0 0.0
    %76 = vmatpush1.msra.mxu0 0.0
    %77 = vmatprep.subr.mxu0 0.0
    %78 = vmatpush1.msra.mxu0 0.0
    %79 = vmatprep.subr.mxu0 0.0
    %80 = vmatpush1.msra.mxu0 0.0
    %81 = vmatprep.subr.mxu0 0.0
    %82 = vmatpush1.msra.mxu0 0.0
    %83 = vmatprep.subr.mxu0 0.0
    %84 = vmatpush1.msra.mxu0 0.0
    %85 = vmatprep.subr.mxu0 0.0
    %86 = vmatpush1.msra.mxu0 0.0
    %87 = vmatprep.subr.mxu0 0.0
    %88 = vmatpush1.msra.mxu0 0.0
    %89 = vmatprep.subr.mxu0 0.0
    %90 = vmatpush1.msra.mxu0 0.0
    %91 = vmatprep.subr.mxu0 0.0
    %92 = vmatpush1.msra.mxu0 0.0
    %93 = vmatprep.subr.mxu0 0.0
    %94 = vmatpush1.msra.mxu0 0.0
    %95 = vmatprep.subr.mxu0 0.0
    %96 = vmatpush1.msra.mxu0 0.0
    %97 = vmatprep.subr.mxu0 0.0
    %98 = vmatpush1.msra.mxu0 0.0
    %99 = vmatprep.subr.mxu0 0.0
    %100 = vmatpush1.msra.mxu0 0.0
    %101 = vmatprep.subr.mxu0 0.0
    %102 = vmatpush1.msra.mxu0 %v42
    %103 = vmatprep.subr.mxu0 0.0
    %104 = vmatpush1.msra.mxu0 %v41
    %105 = vmatprep.subr.mxu0 0.0
    %106 = vmatpush2.msra.mxu0 0.0
    %107 = vmatprep.subr.mxu0 0.0
    %108 = vmatpush2.msra.mxu0 0.0
    %109 = vmatprep.subr.mxu0 0.0
    %110 = vmatpush2.msra.mxu0 0.0
    %111 = vmatprep.subr.mxu0 0.0
    %112 = vmatpush2.msra.mxu0 0.0
    %113 = vmatprep.subr.mxu0 0.0
    %114 = vmatpush2.msra.mxu0 0.0
    %115 = vmatprep.subr.mxu0 0.0
    %116 = vmatpush2.msra.mxu0 0.0
    %117 = vmatprep.subr.mxu0 0.0
    %118 = vmatpush2.msra.mxu0 0.0
    %119 = vmatprep.subr.mxu0 0.0
    %120 = vmatpush2.msra.mxu0 0.0
    %121 = vmatprep.subr.mxu0 0.0
    %122 = vmatpush2.msra.mxu0 0.0
    %123 = vmatprep.subr.mxu0 0.0
    %124 = vmatpush2.msra.mxu0 0.0
    %125 = vmatprep.subr.mxu0 0.0
    %126 = vmatpush2.msra.mxu0 0.0
    %127 = vmatprep.subr.mxu0 0.0
    %128 = vmatpush2.msra.mxu0 0.0
    %129 = vmatprep.subr.mxu0 0.0
    %130 = vmatpush2.msra.mxu0 0.0
    %131 = vmatprep.subr.mxu0 0.0
    %132 = vmatpush2.msra.mxu0 0.0
    %133 = vmatprep.subr.mxu0 0.0
    %134 = vmatpush2.msra.mxu0 0.0
    %135 = vmatprep.subr.mxu0 0.0
    %136 = vmatpush2.msra.mxu0 0.0
    %137 = vmatprep.mubr.f32.mxu0 0.0
    %138 = vmatmul.mubr.f32.gmra.mxu0 %v50
    %v139 = vpop.f32.mrf.mxu0
    %v140 = vadd.f32 %v47, %v139
    %v141 = vpop.f32.mrf.mxu0
    %142 = vmatprep.mubr.f32.mxu0 0.0
    %143 = vmatmul.mubr.f32.gmra.mxu0 %v53
    %v144 = vpop.f32.mrf.mxu0
    %v145 = vadd.f32 %v47, %v144
    %v146 = vpop.f32.mrf.mxu0
    %147 = vmatprep.mubr.f32.mxu0 0.0
    %148 = vmatmul.mubr.f32.gmra.mxu0 %v56
    %v149 = vpop.f32.mrf.mxu0
    %v150 = vadd.f32 %v47, %v149
    %v151 = vpop.f32.mrf.mxu0
    %152 = vmatprep.mubr.f32.mxu0 0.0
    %153 = vmatmul.mubr.f32.gmra.mxu0 %v59
    %v154 = vpop.f32.mrf.mxu0
    %v155 = vadd.f32 %v47, %v154
    %v156 = vpop.f32.mrf.mxu0
    %157 = vmatprep.mubr.f32.mxu0 0.0
    %158 = vmatmul.mubr.f32.gmra.mxu0 %v62
    %v159 = vpop.f32.mrf.mxu0
    %v160 = vadd.f32 %v47, %v159
    %v161 = vpop.f32.mrf.mxu0
    %162 = vmatprep.mubr.f32.mxu0 0.0
    %163 = vmatmul.mubr.f32.gmra.mxu0 %v65
    %v164 = vpop.f32.mrf.mxu0
    %v165 = vadd.f32 %v47, %v164
    %v166 = vpop.f32.mrf.mxu0
    %167 = vmatprep.mubr.f32.mxu0 0.0
    %168 = vmatmul.mubr.f32.gmra.mxu0 %v68
    %v169 = vpop.f32.mrf.mxu0
    %v170 = vadd.f32 %v47, %v169
    %v171 = vpop.f32.mrf.mxu0
    %172 = vmatprep.mubr.f32.mxu0 0.0
    %173 = vmatmul.mubr.f32.gmra.mxu0 %v71
    %v174 = vpop.f32.mrf.mxu0
    %v175 = vadd.f32 %v47, %v174
    %v176 = vpop.f32.mrf.mxu0
    %177 = vdwg.mxu0
    %v178 = vld [vmem:[#allocation2 + $0x10] sm:$0xff]
    %v179 = vld [vmem:[#allocation2 + $0x18] sm:$0xff]
    %v180 = vld [vmem:[#allocation2 + $0x68] sm:$0x1]
    %v181 = vlaneseq
    %v182 = vshrl.u32 %v181, 7
    %v183 = vsub.s32 0, %v182
    %v184 = vrot.slane %v180, %v183
    %185 = vmatprep.subr.mxu0 0.0
    %186 = vmatpush1.msra.mxu0 0.0
    %187 = vmatprep.subr.mxu0 0.0
    %188 = vmatpush1.msra.mxu0 0.0
    %189 = vmatprep.subr.mxu0 0.0
    %190 = vmatpush1.msra.mxu0 0.0
    %191 = vmatprep.subr.mxu0 0.0
    %192 = vmatpush1.msra.mxu0 0.0
    %193 = vmatprep.subr.mxu0 0.0
    %194 = vmatpush1.msra.mxu0 0.0
    %195 = vmatprep.subr.mxu0 0.0
    %196 = vmatpush1.msra.mxu0 0.0
    %197 = vmatprep.subr.mxu0 0.0
    %198 = vmatpush1.msra.mxu0 0.0
    %199 = vmatprep.subr.mxu0 0.0
    %200 = vmatpush1.msra.mxu0 0.0
    %201 = vmatprep.subr.mxu0 0.0
    %202 = vmatpush1.msra.mxu0 0.0
    %203 = vmatprep.subr.mxu0 0.0
    %204 = vmatpush1.msra.mxu0 0.0
    %205 = vmatprep.subr.mxu0 0.0
    %206 = vmatpush1.msra.mxu0 0.0
    %207 = vmatprep.subr.mxu0 0.0
    %208 = vmatpush1.msra.mxu0 0.0
    %209 = vmatprep.subr.mxu0 0.0
    %210 = vmatpush1.msra.mxu0 0.0
    %211 = vmatprep.subr.mxu0 0.0
    %212 = vmatpush1.msra.mxu0 0.0
    %213 = vmatprep.subr.mxu0 0.0
    %214 = vmatpush1.msra.mxu0 %v179
    %215 = vmatprep.subr.mxu0 0.0
    %216 = vmatpush1.msra.mxu0 %v178
    %217 = vmatprep.subr.mxu0 0.0
    %218 = vmatpush2.msra.mxu0 0.0
    %219 = vmatprep.subr.mxu0 0.0
    %220 = vmatpush2.msra.mxu0 0.0
    %221 = vmatprep.subr.mxu0 0.0
    %222 = vmatpush2.msra.mxu0 0.0
    %223 = vmatprep.subr.mxu0 0.0
    %224 = vmatpush2.msra.mxu0 0.0
    %225 = vmatprep.subr.mxu0 0.0
    %226 = vmatpush2.msra.mxu0 0.0
    %227 = vmatprep.subr.mxu0 0.0
    %228 = vmatpush2.msra.mxu0 0.0
    %229 = vmatprep.subr.mxu0 0.0
    %230 = vmatpush2.msra.mxu0 0.0
    %231 = vmatprep.subr.mxu0 0.0
    %232 = vmatpush2.msra.mxu0 0.0
    %233 = vmatprep.subr.mxu0 0.0
    %234 = vmatpush2.msra.mxu0 0.0
    %235 = vmatprep.subr.mxu0 0.0
    %236 = vmatpush2.msra.mxu0 0.0
    %237 = vmatprep.subr.mxu0 0.0
    %238 = vmatpush2.msra.mxu0 0.0
    %239 = vmatprep.subr.mxu0 0.0
    %240 = vmatpush2.msra.mxu0 0.0
    %241 = vmatprep.subr.mxu0 0.0
    %242 = vmatpush2.msra.mxu0 0.0
    %243 = vmatprep.subr.mxu0 0.0
    %244 = vmatpush2.msra.mxu0 0.0
    %245 = vmatprep.subr.mxu0 0.0
    %246 = vmatpush2.msra.mxu0 0.0
    %247 = vmatprep.subr.mxu0 0.0
    %248 = vmatpush2.msra.mxu0 0.0
    %249 = vmatprep.mubr.f32.mxu0 0.0
    %250 = vmatmul.mubr.f32.gmra.mxu0 %v50
    %v251 = vpop.f32.mrf.mxu0
    %v252 = vadd.f32 %v184, %v251
    %v253 = vpop.f32.mrf.mxu0
    %254 = vmatprep.mubr.f32.mxu0 0.0
    %255 = vmatmul.mubr.f32.gmra.mxu0 %v53
    %v256 = vpop.f32.mrf.mxu0
    %v257 = vadd.f32 %v184, %v256
    %v258 = vpop.f32.mrf.mxu0
    %259 = vmatprep.mubr.f32.mxu0 0.0
    %260 = vmatmul.mubr.f32.gmra.mxu0 %v56
    %v261 = vpop.f32.mrf.mxu0
    %v262 = vadd.f32 %v184, %v261
    %v263 = vpop.f32.mrf.mxu0
    %264 = vmatprep.mubr.f32.mxu0 0.0
    %265 = vmatmul.mubr.f32.gmra.mxu0 %v59
    %v266 = vpop.f32.mrf.mxu0
    %v267 = vadd.f32 %v184, %v266
    %v268 = vpop.f32.mrf.mxu0
    %269 = vmatprep.mubr.f32.mxu0 0.0
    %270 = vmatmul.mubr.f32.gmra.mxu0 %v62
    %v271 = vpop.f32.mrf.mxu0
    %v272 = vadd.f32 %v184, %v271
    %v273 = vpop.f32.mrf.mxu0
    %274 = vmatprep.mubr.f32.mxu0 0.0
    %275 = vmatmul.mubr.f32.gmra.mxu0 %v65
    %v276 = vpop.f32.mrf.mxu0
    %v277 = vadd.f32 %v184, %v276
    %v278 = vpop.f32.mrf.mxu0
    %279 = vmatprep.mubr.f32.mxu0 0.0
    %280 = vmatmul.mubr.f32.gmra.mxu0 %v68
    %v281 = vpop.f32.mrf.mxu0
    %v282 = vadd.f32 %v184, %v281
    %v283 = vpop.f32.mrf.mxu0
    %284 = vmatprep.mubr.f32.mxu0 0.0
    %285 = vmatmul.mubr.f32.gmra.mxu0 %v71
    %v286 = vpop.f32.mrf.mxu0
    %v287 = vadd.f32 %v184, %v286
    %v288 = vpop.f32.mrf.mxu0
    %289 = vdwg.mxu0
    %v290 = vld [vmem:[#allocation2 + $0x20] sm:$0xff]
    %v291 = vld [vmem:[#allocation2 + $0x28] sm:$0xff]
    %v292 = vld [vmem:[#allocation2 + $0x70] sm:$0x1]
    %v293 = vlaneseq
    %v294 = vshrl.u32 %v293, 7
    %v295 = vsub.s32 0, %v294
    %v296 = vrot.slane %v292, %v295
    %297 = vmatprep.subr.mxu0 0.0
    %298 = vmatpush1.msra.mxu0 0.0
    %299 = vmatprep.subr.mxu0 0.0
    %300 = vmatpush1.msra.mxu0 0.0
    %301 = vmatprep.subr.mxu0 0.0
    %302 = vmatpush1.msra.mxu0 0.0
    %303 = vmatprep.subr.mxu0 0.0
    %304 = vmatpush1.msra.mxu0 0.0
    %305 = vmatprep.subr.mxu0 0.0
    %306 = vmatpush1.msra.mxu0 0.0
    %307 = vmatprep.subr.mxu0 0.0
    %308 = vmatpush1.msra.mxu0 0.0
    %309 = vmatprep.subr.mxu0 0.0
    %310 = vmatpush1.msra.mxu0 0.0
    %311 = vmatprep.subr.mxu0 0.0
    %312 = vmatpush1.msra.mxu0 0.0
    %313 = vmatprep.subr.mxu0 0.0
    %314 = vmatpush1.msra.mxu0 0.0
    %315 = vmatprep.subr.mxu0 0.0
    %316 = vmatpush1.msra.mxu0 0.0
    %317 = vmatprep.subr.mxu0 0.0
    %318 = vmatpush1.msra.mxu0 0.0
    %319 = vmatprep.subr.mxu0 0.0
    %320 = vmatpush1.msra.mxu0 0.0
    %321 = vmatprep.subr.mxu0 0.0
    %322 = vmatpush1.msra.mxu0 0.0
    %323 = vmatprep.subr.mxu0 0.0
    %324 = vmatpush1.msra.mxu0 0.0
    %325 = vmatprep.subr.mxu0 0.0
    %326 = vmatpush1.msra.mxu0 %v291
    %327 = vmatprep.subr.mxu0 0.0
    %328 = vmatpush1.msra.mxu0 %v290
    %329 = vmatprep.subr.mxu0 0.0
    %330 = vmatpush2.msra.mxu0 0.0
    %331 = vmatprep.subr.mxu0 0.0
    %332 = vmatpush2.msra.mxu0 0.0
    %333 = vmatprep.subr.mxu0 0.0
    %334 = vmatpush2.msra.mxu0 0.0
    %335 = vmatprep.subr.mxu0 0.0
    %336 = vmatpush2.msra.mxu0 0.0
    %337 = vmatprep.subr.mxu0 0.0
    %338 = vmatpush2.msra.mxu0 0.0
    %339 = vmatprep.subr.mxu0 0.0
    %340 = vmatpush2.msra.mxu0 0.0
    %341 = vmatprep.subr.mxu0 0.0
    %342 = vmatpush2.msra.mxu0 0.0
    %343 = vmatprep.subr.mxu0 0.0
    %344 = vmatpush2.msra.mxu0 0.0
    %345 = vmatprep.subr.mxu0 0.0
    %346 = vmatpush2.msra.mxu0 0.0
    %347 = vmatprep.subr.mxu0 0.0
    %348 = vmatpush2.msra.mxu0 0.0
    %349 = vmatprep.subr.mxu0 0.0
    %350 = vmatpush2.msra.mxu0 0.0
    %351 = vmatprep.subr.mxu0 0.0
    %352 = vmatpush2.msra.mxu0 0.0
    %353 = vmatprep.subr.mxu0 0.0
    %354 = vmatpush2.msra.mxu0 0.0
    %355 = vmatprep.subr.mxu0 0.0
    %356 = vmatpush2.msra.mxu0 0.0
    %357 = vmatprep.subr.mxu0 0.0
    %358 = vmatpush2.msra.mxu0 0.0
    %359 = vmatprep.subr.mxu0 0.0
    %360 = vmatpush2.msra.mxu0 0.0
    %361 = vmatprep.mubr.f32.mxu0 0.0
    %362 = vmatmul.mubr.f32.gmra.mxu0 %v50
    %v363 = vpop.f32.mrf.mxu0
    %v364 = vadd.f32 %v296, %v363
    %v365 = vpop.f32.mrf.mxu0
    %366 = vmatprep.mubr.f32.mxu0 0.0
    %367 = vmatmul.mubr.f32.gmra.mxu0 %v53
    %v368 = vpop.f32.mrf.mxu0
    %v369 = vadd.f32 %v296, %v368
    %v370 = vpop.f32.mrf.mxu0
    %371 = vmatprep.mubr.f32.mxu0 0.0
    %372 = vmatmul.mubr.f32.gmra.mxu0 %v56
    %v373 = vpop.f32.mrf.mxu0
    %v374 = vadd.f32 %v296, %v373
    %v375 = vpop.f32.mrf.mxu0
    %376 = vmatprep.mubr.f32.mxu0 0.0
    %377 = vmatmul.mubr.f32.gmra.mxu0 %v59
    %v378 = vpop.f32.mrf.mxu0
    %v379 = vadd.f32 %v296, %v378
    %v380 = vpop.f32.mrf.mxu0
    %381 = vmatprep.mubr.f32.mxu0 0.0
    %382 = vmatmul.mubr.f32.gmra.mxu0 %v62
    %v383 = vpop.f32.mrf.mxu0
    %v384 = vadd.f32 %v296, %v383
    %v385 = vpop.f32.mrf.mxu0
    %386 = vmatprep.mubr.f32.mxu0 0.0
    %387 = vmatmul.mubr.f32.gmra.mxu0 %v65
    %v388 = vpop.f32.mrf.mxu0
    %v389 = vadd.f32 %v296, %v388
    %v390 = vpop.f32.mrf.mxu0
    %391 = vmatprep.mubr.f32.mxu0 0.0
    %392 = vmatmul.mubr.f32.gmra.mxu0 %v68
    %v393 = vpop.f32.mrf.mxu0
    %v394 = vadd.f32 %v296, %v393
    %v395 = vpop.f32.mrf.mxu0
    %396 = vmatprep.mubr.f32.mxu0 0.0
    %397 = vmatmul.mubr.f32.gmra.mxu0 %v71
    %v398 = vpop.f32.mrf.mxu0
    %v399 = vadd.f32 %v296, %v398
    %v400 = vpop.f32.mrf.mxu0
    %401 = vdwg.mxu0
    %v402 = vld [vmem:[#allocation2 + $0x30] sm:$0xff]
    %v403 = vld [vmem:[#allocation2 + $0x38] sm:$0xff]
    %v404 = vld [vmem:[#allocation2 + $0x40] sm:$0xff]
    %v405 = vld [vmem:[#allocation2 + $0x48] sm:$0xff]
    %v406 = vld [vmem:[#allocation2 + $0x50] sm:$0xff]
    %v407 = vld [vmem:[#allocation2 + $0x58] sm:$0xff]
    %v408 = vld [vmem:[#allocation2 + $0x78] sm:$0x1]
    %v410 = vsel %vm48, 0.0, 0
    %412 = vmatprep.subr.mxu0 0.0
    %413 = vmatpush1.msra.mxu0 0.0
    %414 = vmatprep.subr.mxu0 0.0
    %415 = vmatpush1.msra.mxu0 0.0
    %416 = vmatprep.subr.mxu0 0.0
    %417 = vmatpush1.msra.mxu0 0.0
    %418 = vmatprep.subr.mxu0 0.0
    %419 = vmatpush1.msra.mxu0 0.0
    %420 = vmatprep.subr.mxu0 0.0
    %421 = vmatpush1.msra.mxu0 0.0
    %422 = vmatprep.subr.mxu0 0.0
    %423 = vmatpush1.msra.mxu0 0.0
    %424 = vmatprep.subr.mxu0 0.0
    %425 = vmatpush1.msra.mxu0 0.0
    %426 = vmatprep.subr.mxu0 0.0
    %427 = vmatpush1.msra.mxu0 0.0
    %428 = vmatprep.subr.mxu0 0.0
    %429 = vmatpush1.msra.mxu0 0.0
    %430 = vmatprep.subr.mxu0 0.0
    %431 = vmatpush1.msra.mxu0 0.0
    %432 = vmatprep.subr.mxu0 0.0
    %433 = vmatpush1.msra.mxu0 0.0
    %434 = vmatprep.subr.mxu0 0.0
    %435 = vmatpush1.msra.mxu0 0.0
    %436 = vmatprep.subr.mxu0 0.0
    %437 = vmatpush1.msra.mxu0 0.0
    %438 = vmatprep.subr.mxu0 0.0
    %439 = vmatpush1.msra.mxu0 0.0
    %440 = vmatprep.subr.mxu0 0.0
    %441 = vmatpush1.msra.mxu0 %v403
    %442 = vmatprep.subr.mxu0 0.0
    %443 = vmatpush1.msra.mxu0 %v402
    %444 = vmatprep.subr.mxu0 0.0
    %445 = vmatpush2.msra.mxu0 0.0
    %446 = vmatprep.subr.mxu0 0.0
    %447 = vmatpush2.msra.mxu0 0.0
    %448 = vmatprep.subr.mxu0 0.0
    %449 = vmatpush2.msra.mxu0 0.0
    %450 = vmatprep.subr.mxu0 0.0
    %451 = vmatpush2.msra.mxu0 0.0
    %452 = vmatprep.subr.mxu0 0.0
    %453 = vmatpush2.msra.mxu0 0.0
    %454 = vmatprep.subr.mxu0 0.0
    %455 = vmatpush2.msra.mxu0 0.0
    %456 = vmatprep.subr.mxu0 0.0
    %457 = vmatpush2.msra.mxu0 0.0
    %458 = vmatprep.subr.mxu0 0.0
    %459 = vmatpush2.msra.mxu0 0.0
    %460 = vmatprep.subr.mxu0 0.0
    %461 = vmatpush2.msra.mxu0 0.0
    %462 = vmatprep.subr.mxu0 0.0
    %463 = vmatpush2.msra.mxu0 0.0
    %464 = vmatprep.subr.mxu0 0.0
    %465 = vmatpush2.msra.mxu0 0.0
    %466 = vmatprep.subr.mxu0 0.0
    %467 = vmatpush2.msra.mxu0 0.0
    %468 = vmatprep.subr.mxu0 0.0
    %469 = vmatpush2.msra.mxu0 0.0
    %470 = vmatprep.subr.mxu0 0.0
    %471 = vmatpush2.msra.mxu0 0.0
    %472 = vmatprep.subr.mxu0 0.0
    %473 = vmatpush2.msra.mxu0 0.0
    %474 = vmatprep.subr.mxu0 0.0
    %475 = vmatpush2.msra.mxu0 0.0
    %476 = vmatprep.mubr.f32.mxu0 0.0
    %477 = vmatmul.mubr.f32.gmra.mxu0 %v410
    %v478 = vpop.f32.mrf.mxu0
    %v479 = vadd.f32 0.0, %v478
    %v480 = vpop.f32.mrf.mxu0
    %481 = vdwg.mxu0
    %482 = vmatprep.subr.mxu0 0.0
    %483 = vmatpush1.msra.mxu0 0.0
    %484 = vmatprep.subr.mxu0 0.0
    %485 = vmatpush1.msra.mxu0 0.0
    %486 = vmatprep.subr.mxu0 0.0
    %487 = vmatpush1.msra.mxu0 0.0
    %488 = vmatprep.subr.mxu0 0.0
    %489 = vmatpush1.msra.mxu0 0.0
    %490 = vmatprep.subr.mxu0 0.0
    %491 = vmatpush1.msra.mxu0 0.0
    %492 = vmatprep.subr.mxu0 0.0
    %493 = vmatpush1.msra.mxu0 0.0
    %494 = vmatprep.subr.mxu0 0.0
    %495 = vmatpush1.msra.mxu0 0.0
    %496 = vmatprep.subr.mxu0 0.0
    %497 = vmatpush1.msra.mxu0 0.0
    %498 = vmatprep.subr.mxu0 0.0
    %499 = vmatpush1.msra.mxu0 0.0
    %500 = vmatprep.subr.mxu0 0.0
    %501 = vmatpush1.msra.mxu0 0.0
    %502 = vmatprep.subr.mxu0 0.0
    %503 = vmatpush1.msra.mxu0 0.0
    %504 = vmatprep.subr.mxu0 0.0
    %505 = vmatpush1.msra.mxu0 0.0
    %506 = vmatprep.subr.mxu0 0.0
    %507 = vmatpush1.msra.mxu0 0.0
    %508 = vmatprep.subr.mxu0 0.0
    %509 = vmatpush1.msra.mxu0 0.0
    %510 = vmatprep.subr.mxu0 0.0
    %511 = vmatpush1.msra.mxu0 %v405
    %512 = vmatprep.subr.mxu0 0.0
    %513 = vmatpush1.msra.mxu0 %v404
    %514 = vmatprep.subr.mxu0 0.0
    %515 = vmatpush2.msra.mxu0 0.0
    %516 = vmatprep.subr.mxu0 0.0
    %517 = vmatpush2.msra.mxu0 0.0
    %518 = vmatprep.subr.mxu0 0.0
    %519 = vmatpush2.msra.mxu0 0.0
    %520 = vmatprep.subr.mxu0 0.0
    %521 = vmatpush2.msra.mxu0 0.0
    %522 = vmatprep.subr.mxu0 0.0
    %523 = vmatpush2.msra.mxu0 0.0
    %524 = vmatprep.subr.mxu0 0.0
    %525 = vmatpush2.msra.mxu0 0.0
    %526 = vmatprep.subr.mxu0 0.0
    %527 = vmatpush2.msra.mxu0 0.0
    %528 = vmatprep.subr.mxu0 0.0
    %529 = vmatpush2.msra.mxu0 0.0
    %530 = vmatprep.subr.mxu0 0.0
    %531 = vmatpush2.msra.mxu0 0.0
    %532 = vmatprep.subr.mxu0 0.0
    %533 = vmatpush2.msra.mxu0 0.0
    %534 = vmatprep.subr.mxu0 0.0
    %535 = vmatpush2.msra.mxu0 0.0
    %536 = vmatprep.subr.mxu0 0.0
    %537 = vmatpush2.msra.mxu0 0.0
    %538 = vmatprep.subr.mxu0 0.0
    %539 = vmatpush2.msra.mxu0 0.0
    %540 = vmatprep.subr.mxu0 0.0
    %541 = vmatpush2.msra.mxu0 0.0
    %542 = vmatprep.subr.mxu0 0.0
    %543 = vmatpush2.msra.mxu0 0.0
    %544 = vmatprep.subr.mxu0 0.0
    %545 = vmatpush2.msra.mxu0 0.0
    %546 = vmatprep.mubr.f32.mxu0 0.0
    %547 = vmatmul.mubr.f32.gmra.mxu0 %v410
    %v548 = vpop.f32.mrf.mxu0
    %v549 = vadd.f32 0.0, %v548
    %v550 = vpop.f32.mrf.mxu0
    %551 = vdwg.mxu0
    %v552 = vlaneseq
    %v553 = vshrl.u32 %v552, 7
    %v554 = vsub.s32 0, %v553
    %v555 = vrot.slane %v408, %v554
    %556 = vmatprep.subr.mxu0 0.0
    %557 = vmatpush1.msra.mxu0 0.0
    %558 = vmatprep.subr.mxu0 0.0
    %559 = vmatpush1.msra.mxu0 0.0
    %560 = vmatprep.subr.mxu0 0.0
    %561 = vmatpush1.msra.mxu0 0.0
    %562 = vmatprep.subr.mxu0 0.0
    %563 = vmatpush1.msra.mxu0 0.0
    %564 = vmatprep.subr.mxu0 0.0
    %565 = vmatpush1.msra.mxu0 0.0
    %566 = vmatprep.subr.mxu0 0.0
    %567 = vmatpush1.msra.mxu0 0.0
    %568 = vmatprep.subr.mxu0 0.0
    %569 = vmatpush1.msra.mxu0 0.0
    %570 = vmatprep.subr.mxu0 0.0
    %571 = vmatpush1.msra.mxu0 0.0
    %572 = vmatprep.subr.mxu0 0.0
    %573 = vmatpush1.msra.mxu0 0.0
    %574 = vmatprep.subr.mxu0 0.0
    %575 = vmatpush1.msra.mxu0 0.0
    %576 = vmatprep.subr.mxu0 0.0
    %577 = vmatpush1.msra.mxu0 0.0
    %578 = vmatprep.subr.mxu0 0.0
    %579 = vmatpush1.msra.mxu0 0.0
    %580 = vmatprep.subr.mxu0 0.0
    %581 = vmatpush1.msra.mxu0 0.0
    %582 = vmatprep.subr.mxu0 0.0
    %583 = vmatpush1.msra.mxu0 0.0
    %584 = vmatprep.subr.mxu0 0.0
    %585 = vmatpush1.msra.mxu0 %v407
    %586 = vmatprep.subr.mxu0 0.0
    %587 = vmatpush1.msra.mxu0 %v406
    %588 = vmatprep.subr.mxu0 0.0
    %589 = vmatpush2.msra.mxu0 0.0
    %590 = vmatprep.subr.mxu0 0.0
    %591 = vmatpush2.msra.mxu0 0.0
    %592 = vmatprep.subr.mxu0 0.0
    %593 = vmatpush2.msra.mxu0 0.0
    %594 = vmatprep.subr.mxu0 0.0
    %595 = vmatpush2.msra.mxu0 0.0
    %596 = vmatprep.subr.mxu0 0.0
    %597 = vmatpush2.msra.mxu0 0.0
    %598 = vmatprep.subr.mxu0 0.0
    %599 = vmatpush2.msra.mxu0 0.0
    %600 = vmatprep.subr.mxu0 0.0
    %601 = vmatpush2.msra.mxu0 0.0
    %602 = vmatprep.subr.mxu0 0.0
    %603 = vmatpush2.msra.mxu0 0.0
    %604 = vmatprep.subr.mxu0 0.0
    %605 = vmatpush2.msra.mxu0 0.0
    %606 = vmatprep.subr.mxu0 0.0
    %607 = vmatpush2.msra.mxu0 0.0
    %608 = vmatprep.subr.mxu0 0.0
    %609 = vmatpush2.msra.mxu0 0.0
    %610 = vmatprep.subr.mxu0 0.0
    %611 = vmatpush2.msra.mxu0 0.0
    %612 = vmatprep.subr.mxu0 0.0
    %613 = vmatpush2.msra.mxu0 0.0
    %614 = vmatprep.subr.mxu0 0.0
    %615 = vmatpush2.msra.mxu0 0.0
    %616 = vmatprep.subr.mxu0 0.0
    %617 = vmatpush2.msra.mxu0 0.0
    %618 = vmatprep.subr.mxu0 0.0
    %619 = vmatpush2.msra.mxu0 0.0
    %620 = vmatprep.mubr.f32.mxu0 0.0
    %621 = vmatmul.mubr.f32.gmra.mxu0 %v410
    %v622 = vpop.f32.mrf.mxu0
    %v623 = vadd.f32 %v555, %v622
    %v624 = vpop.f32.mrf.mxu0
    %625 = vdwg.mxu0
    %v626 = vadd.f32 %v140, %v479
    %v627 = vxor.u32 %v626, 2147483648
    %v628 = vmul.f32 %v627, 1.442695
    %v629 = vpow.pop %v628
    %v630 = vadd.f32 %v629, 1.0
    %v631 = vrcp.pop %v630
    %v632 = vmul.f32 1.0, %v631
    %v633 = vadd.f32 %v252, %v549
    %v634 = vxor.u32 %v633, 2147483648
    %v635 = vmul.f32 %v634, 1.442695
    %v636 = vpow.pop %v635
    %v637 = vadd.f32 %v636, 1.0
    %v638 = vrcp.pop %v637
    %v639 = vmul.f32 1.0, %v638
    %v640 = vmul.f32 %v632, %v623
    %v641 = vadd.f32 %v364, %v640
    %v642 = vtanh.pop %v641
    %v643 = vsub.f32 1.0, %v639
    %v644 = vmul.f32 %v643, %v642
    %v645 = vmul.f32 %v639, 0.0
    %v646 = vadd.f32 %v644, %v645
    %v648 = vsel %vm48, %v646, 0
    %650 = vmatprep.subr.mxu0 0.0
    %651 = vmatpush1.msra.mxu0 0.0
    %652 = vmatprep.subr.mxu0 0.0
    %653 = vmatpush1.msra.mxu0 0.0
    %654 = vmatprep.subr.mxu0 0.0
    %655 = vmatpush1.msra.mxu0 0.0
    %656 = vmatprep.subr.mxu0 0.0
    %657 = vmatpush1.msra.mxu0 0.0
    %658 = vmatprep.subr.mxu0 0.0
    %659 = vmatpush1.msra.mxu0 0.0
    %660 = vmatprep.subr.mxu0 0.0
    %661 = vmatpush1.msra.mxu0 0.0
    %662 = vmatprep.subr.mxu0 0.0
    %663 = vmatpush1.msra.mxu0 0.0
    %664 = vmatprep.subr.mxu0 0.0
    %665 = vmatpush1.msra.mxu0 0.0
    %666 = vmatprep.subr.mxu0 0.0
    %667 = vmatpush1.msra.mxu0 0.0
    %668 = vmatprep.subr.mxu0 0.0
    %669 = vmatpush1.msra.mxu0 0.0
    %670 = vmatprep.subr.mxu0 0.0
    %671 = vmatpush1.msra.mxu0 0.0
    %672 = vmatprep.subr.mxu0 0.0
    %673 = vmatpush1.msra.mxu0 0.0
    %674 = vmatprep.subr.mxu0 0.0
    %675 = vmatpush1.msra.mxu0 0.0
    %676 = vmatprep.subr.mxu0 0.0
    %677 = vmatpush1.msra.mxu0 0.0
    %678 = vmatprep.subr.mxu0 0.0
    %679 = vmatpush1.msra.mxu0 %v403
    %680 = vmatprep.subr.mxu0 0.0
    %681 = vmatpush1.msra.mxu0 %v402
    %682 = vmatprep.subr.mxu0 0.0
    %683 = vmatpush2.msra.mxu0 0.0
    %684 = vmatprep.subr.mxu0 0.0
    %685 = vmatpush2.msra.mxu0 0.0
    %686 = vmatprep.subr.mxu0 0.0
    %687 = vmatpush2.msra.mxu0 0.0
    %688 = vmatprep.subr.mxu0 0.0
    %689 = vmatpush2.msra.mxu0 0.0
    %690 = vmatprep.subr.mxu0 0.0
    %691 = vmatpush2.msra.mxu0 0.0
    %692 = vmatprep.subr.mxu0 0.0
    %693 = vmatpush2.msra.mxu0 0.0
    %694 = vmatprep.subr.mxu0 0.0
    %695 = vmatpush2.msra.mxu0 0.0
    %696 = vmatprep.subr.mxu0 0.0
    %697 = vmatpush2.msra.mxu0 0.0
    %698 = vmatprep.subr.mxu0 0.0
    %699 = vmatpush2.msra.mxu0 0.0
    %700 = vmatprep.subr.mxu0 0.0
    %701 = vmatpush2.msra.mxu0 0.0
    %702 = vmatprep.subr.mxu0 0.0
    %703 = vmatpush2.msra.mxu0 0.0
    %704 = vmatprep.subr.mxu0 0.0
    %705 = vmatpush2.msra.mxu0 0.0
    %706 = vmatprep.subr.mxu0 0.0
    %707 = vmatpush2.msra.mxu0 0.0
    %708 = vmatprep.subr.mxu0 0.0
    %709 = vmatpush2.msra.mxu0 0.0
    %710 = vmatprep.subr.mxu0 0.0
    %711 = vmatpush2.msra.mxu0 0.0
    %712 = vmatprep.subr.mxu0 0.0
    %713 = vmatpush2.msra.mxu0 0.0
    %714 = vmatprep.mubr.f32.mxu0 0.0
    %715 = vmatmul.mubr.f32.gmra.mxu0 %v648
    %v716 = vpop.f32.mrf.mxu0
    %v717 = vadd.f32 0.0, %v716
    %v718 = vpop.f32.mrf.mxu0
    %719 = vdwg.mxu0
    %720 = vmatprep.subr.mxu0 0.0
    %721 = vmatpush1.msra.mxu0 0.0
    %722 = vmatprep.subr.mxu0 0.0
    %723 = vmatpush1.msra.mxu0 0.0
    %724 = vmatprep.subr.mxu0 0.0
    %725 = vmatpush1.msra.mxu0 0.0
    %726 = vmatprep.subr.mxu0 0.0
    %727 = vmatpush1.msra.mxu0 0.0
    %728 = vmatprep.subr.mxu0 0.0
    %729 = vmatpush1.msra.mxu0 0.0
    %730 = vmatprep.subr.mxu0 0.0
    %731 = vmatpush1.msra.mxu0 0.0
    %732 = vmatprep.subr.mxu0 0.0
    %733 = vmatpush1.msra.mxu0 0.0
    %734 = vmatprep.subr.mxu0 0.0
    %735 = vmatpush1.msra.mxu0 0.0
    %736 = vmatprep.subr.mxu0 0.0
    %737 = vmatpush1.msra.mxu0 0.0
    %738 = vmatprep.subr.mxu0 0.0
    %739 = vmatpush1.msra.mxu0 0.0
    %740 = vmatprep.subr.mxu0 0.0
    %741 = vmatpush1.msra.mxu0 0.0
    %742 = vmatprep.subr.mxu0 0.0
    %743 = vmatpush1.msra.mxu0 0.0
    %744 = vmatprep.subr.mxu0 0.0
    %745 = vmatpush1.msra.mxu0 0.0
    %746 = vmatprep.subr.mxu0 0.0
    %747 = vmatpush1.msra.mxu0 0.0
    %748 = vmatprep.subr.mxu0 0.0
    %749 = vmatpush1.msra.mxu0 %v405
    %750 = vmatprep.subr.mxu0 0.0
    %751 = vmatpush1.msra.mxu0 %v404
    %752 = vmatprep.subr.mxu0 0.0
    %753 = vmatpush2.msra.mxu0 0.0
    %754 = vmatprep.subr.mxu0 0.0
    %755 = vmatpush2.msra.mxu0 0.0
    %756 = vmatprep.subr.mxu0 0.0
    %757 = vmatpush2.msra.mxu0 0.0
    %758 = vmatprep.subr.mxu0 0.0
    %759 = vmatpush2.msra.mxu0 0.0
    %760 = vmatprep.subr.mxu0 0.0
    %761 = vmatpush2.msra.mxu0 0.0
    %762 = vmatprep.subr.mxu0 0.0
    %763 = vmatpush2.msra.mxu0 0.0
    %764 = vmatprep.subr.mxu0 0.0
    %765 = vmatpush2.msra.mxu0 0.0
    %766 = vmatprep.subr.mxu0 0.0
    %767 = vmatpush2.msra.mxu0 0.0
    %768 = vmatprep.subr.mxu0 0.0
    %769 = vmatpush2.msra.mxu0 0.0
    %770 = vmatprep.subr.mxu0 0.0
    %771 = vmatpush2.msra.mxu0 0.0
    %772 = vmatprep.subr.mxu0 0.0
    %773 = vmatpush2.msra.mxu0 0.0
    %774 = vmatprep.subr.mxu0 0.0
    %775 = vmatpush2.msra.mxu0 0.0
    %776 = vmatprep.subr.mxu0 0.0
    %777 = vmatpush2.msra.mxu0 0.0
    %778 = vmatprep.subr.mxu0 0.0
    %779 = vmatpush2.msra.mxu0 0.0
    %780 = vmatprep.subr.mxu0 0.0
    %781 = vmatpush2.msra.mxu0 0.0
    %782 = vmatprep.subr.mxu0 0.0
    %783 = vmatpush2.msra.mxu0 0.0
    %784 = vmatprep.mubr.f32.mxu0 0.0
    %785 = vmatmul.mubr.f32.gmra.mxu0 %v648
    %v786 = vpop.f32.mrf.mxu0
    %v787 = vadd.f32 0.0, %v786
    %v788 = vpop.f32.mrf.mxu0
    %789 = vdwg.mxu0
    %790 = vmatprep.subr.mxu0 0.0
    %791 = vmatpush1.msra.mxu0 0.0
    %792 = vmatprep.subr.mxu0 0.0
    %793 = vmatpush1.msra.mxu0 0.0
    %794 = vmatprep.subr.mxu0 0.0
    %795 = vmatpush1.msra.mxu0 0.0
    %796 = vmatprep.subr.mxu0 0.0
    %797 = vmatpush1.msra.mxu0 0.0
    %798 = vmatprep.subr.mxu0 0.0
    %799 = vmatpush1.msra.mxu0 0.0
    %800 = vmatprep.subr.mxu0 0.0
    %801 = vmatpush1.msra.mxu0 0.0
    %802 = vmatprep.subr.mxu0 0.0
    %803 = vmatpush1.msra.mxu0 0.0
    %804 = vmatprep.subr.mxu0 0.0
    %805 = vmatpush1.msra.mxu0 0.0
    %806 = vmatprep.subr.mxu0 0.0
    %807 = vmatpush1.msra.mxu0 0.0
    %808 = vmatprep.subr.mxu0 0.0
    %809 = vmatpush1.msra.mxu0 0.0
    %810 = vmatprep.subr.mxu0 0.0
    %811 = vmatpush1.msra.mxu0 0.0
    %812 = vmatprep.subr.mxu0 0.0
    %813 = vmatpush1.msra.mxu0 0.0
    %814 = vmatprep.subr.mxu0 0.0
    %815 = vmatpush1.msra.mxu0 0.0
    %816 = vmatprep.subr.mxu0 0.0
    %817 = vmatpush1.msra.mxu0 0.0
    %818 = vmatprep.subr.mxu0 0.0
    %819 = vmatpush1.msra.mxu0 %v407
    %820 = vmatprep.subr.mxu0 0.0
    %821 = vmatpush1.msra.mxu0 %v406
    %822 = vmatprep.subr.mxu0 0.0
    %823 = vmatpush2.msra.mxu0 0.0
    %824 = vmatprep.subr.mxu0 0.0
    %825 = vmatpush2.msra.mxu0 0.0
    %826 = vmatprep.subr.mxu0 0.0
    %827 = vmatpush2.msra.mxu0 0.0
    %828 = vmatprep.subr.mxu0 0.0
    %829 = vmatpush2.msra.mxu0 0.0
    %830 = vmatprep.subr.mxu0 0.0
    %831 = vmatpush2.msra.mxu0 0.0
    %832 = vmatprep.subr.mxu0 0.0
    %833 = vmatpush2.msra.mxu0 0.0
    %834 = vmatprep.subr.mxu0 0.0
    %835 = vmatpush2.msra.mxu0 0.0
    %836 = vmatprep.subr.mxu0 0.0
    %837 = vmatpush2.msra.mxu0 0.0
    %838 = vmatprep.subr.mxu0 0.0
    %839 = vmatpush2.msra.mxu0 0.0
    %840 = vmatprep.subr.mxu0 0.0
    %841 = vmatpush2.msra.mxu0 0.0
    %842 = vmatprep.subr.mxu0 0.0
    %843 = vmatpush2.msra.mxu0 0.0
    %844 = vmatprep.subr.mxu0 0.0
    %845 = vmatpush2.msra.mxu0 0.0
    %846 = vmatprep.subr.mxu0 0.0
    %847 = vmatpush2.msra.mxu0 0.0
    %848 = vmatprep.subr.mxu0 0.0
    %849 = vmatpush2.msra.mxu0 0.0
    %850 = vmatprep.subr.mxu0 0.0
    %851 = vmatpush2.msra.mxu0 0.0
    %852 = vmatprep.subr.mxu0 0.0
    %853 = vmatpush2.msra.mxu0 0.0
    %854 = vmatprep.mubr.f32.mxu0 0.0
    %855 = vmatmul.mubr.f32.gmra.mxu0 %v648
    %v856 = vpop.f32.mrf.mxu0
    %v857 = vadd.f32 %v555, %v856
    %v858 = vpop.f32.mrf.mxu0
    %859 = vdwg.mxu0
    %v860 = vadd.f32 %v145, %v717
    %v861 = vxor.u32 %v860, 2147483648
    %v862 = vmul.f32 %v861, 1.442695
    %v863 = vpow.pop %v862
    %v864 = vadd.f32 %v863, 1.0
    %v865 = vrcp.pop %v864
    %v866 = vmul.f32 1.0, %v865
    %v867 = vadd.f32 %v257, %v787
    %v868 = vxor.u32 %v867, 2147483648
    %v869 = vmul.f32 %v868, 1.442695
    %v870 = vpow.pop %v869
    %v871 = vadd.f32 %v870, 1.0
    %v872 = vrcp.pop %v871
    %v873 = vmul.f32 1.0, %v872
    %v874 = vmul.f32 %v866, %v857
    %v875 = vadd.f32 %v369, %v874
    %v876 = vtanh.pop %v875
    %v877 = vsub.f32 1.0, %v873
    %v878 = vmul.f32 %v877, %v876
    %v879 = vmul.f32 %v873, %v646
    %v880 = vadd.f32 %v878, %v879
    %v882 = vsel %vm48, %v880, 0
    %884 = vmatprep.subr.mxu0 0.0
    %885 = vmatpush1.msra.mxu0 0.0
    %886 = vmatprep.subr.mxu0 0.0
    %887 = vmatpush1.msra.mxu0 0.0
    %888 = vmatprep.subr.mxu0 0.0
    %889 = vmatpush1.msra.mxu0 0.0
    %890 = vmatprep.subr.mxu0 0.0
    %891 = vmatpush1.msra.mxu0 0.0
    %892 = vmatprep.subr.mxu0 0.0
    %893 = vmatpush1.msra.mxu0 0.0
    %894 = vmatprep.subr.mxu0 0.0
    %895 = vmatpush1.msra.mxu0 0.0
    %896 = vmatprep.subr.mxu0 0.0
    %897 = vmatpush1.msra.mxu0 0.0
    %898 = vmatprep.subr.mxu0 0.0
    %899 = vmatpush1.msra.mxu0 0.0
    %900 = vmatprep.subr.mxu0 0.0
    %901 = vmatpush1.msra.mxu0 0.0
    %902 = vmatprep.subr.mxu0 0.0
    %903 = vmatpush1.msra.mxu0 0.0
    %904 = vmatprep.subr.mxu0 0.0
    %905 = vmatpush1.msra.mxu0 0.0
    %906 = vmatprep.subr.mxu0 0.0
    %907 = vmatpush1.msra.mxu0 0.0
    %908 = vmatprep.subr.mxu0 0.0
    %909 = vmatpush1.msra.mxu0 0.0
    %910 = vmatprep.subr.mxu0 0.0
    %911 = vmatpush1.msra.mxu0 0.0
    %912 = vmatprep.subr.mxu0 0.0
    %913 = vmatpush1.msra.mxu0 %v403
    %914 = vmatprep.subr.mxu0 0.0
    %915 = vmatpush1.msra.mxu0 %v402
    %916 = vmatprep.subr.mxu0 0.0
    %917 = vmatpush2.msra.mxu0 0.0
    %918 = vmatprep.subr.mxu0 0.0
    %919 = vmatpush2.msra.mxu0 0.0
    %920 = vmatprep.subr.mxu0 0.0
    %921 = vmatpush2.msra.mxu0 0.0
    %922 = vmatprep.subr.mxu0 0.0
    %923 = vmatpush2.msra.mxu0 0.0
    %924 = vmatprep.subr.mxu0 0.0
    %925 = vmatpush2.msra.mxu0 0.0
    %926 = vmatprep.subr.mxu0 0.0
    %927 = vmatpush2.msra.mxu0 0.0
    %928 = vmatprep.subr.mxu0 0.0
    %929 = vmatpush2.msra.mxu0 0.0
    %930 = vmatprep.subr.mxu0 0.0
    %931 = vmatpush2.msra.mxu0 0.0
    %932 = vmatprep.subr.mxu0 0.0
    %933 = vmatpush2.msra.mxu0 0.0
    %934 = vmatprep.subr.mxu0 0.0
    %935 = vmatpush2.msra.mxu0 0.0
    %936 = vmatprep.subr.mxu0 0.0
    %937 = vmatpush2.msra.mxu0 0.0
    %938 = vmatprep.subr.mxu0 0.0
    %939 = vmatpush2.msra.mxu0 0.0
    %940 = vmatprep.subr.mxu0 0.0
    %941 = vmatpush2.msra.mxu0 0.0
    %942 = vmatprep.subr.mxu0 0.0
    %943 = vmatpush2.msra.mxu0 0.0
    %944 = vmatprep.subr.mxu0 0.0
    %945 = vmatpush2.msra.mxu0 0.0
    %946 = vmatprep.subr.mxu0 0.0
    %947 = vmatpush2.msra.mxu0 0.0
    %948 = vmatprep.mubr.f32.mxu0 0.0
    %949 = vmatmul.mubr.f32.gmra.mxu0 %v882
    %v950 = vpop.f32.mrf.mxu0
    %v951 = vadd.f32 0.0, %v950
    %v952 = vpop.f32.mrf.mxu0
    %953 = vdwg.mxu0
    %954 = vmatprep.subr.mxu0 0.0
    %955 = vmatpush1.msra.mxu0 0.0
    %956 = vmatprep.subr.mxu0 0.0
    %957 = vmatpush1.msra.mxu0 0.0
    %958 = vmatprep.subr.mxu0 0.0
    %959 = vmatpush1.msra.mxu0 0.0
    %960 = vmatprep.subr.mxu0 0.0
    %961 = vmatpush1.msra.mxu0 0.0
    %962 = vmatprep.subr.mxu0 0.0
    %963 = vmatpush1.msra.mxu0 0.0
    %964 = vmatprep.subr.mxu0 0.0
    %965 = vmatpush1.msra.mxu0 0.0
    %966 = vmatprep.subr.mxu0 0.0
    %967 = vmatpush1.msra.mxu0 0.0
    %968 = vmatprep.subr.mxu0 0.0
    %969 = vmatpush1.msra.mxu0 0.0
    %970 = vmatprep.subr.mxu0 0.0
    %971 = vmatpush1.msra.mxu0 0.0
    %972 = vmatprep.subr.mxu0 0.0
    %973 = vmatpush1.msra.mxu0 0.0
    %974 = vmatprep.subr.mxu0 0.0
    %975 = vmatpush1.msra.mxu0 0.0
    %976 = vmatprep.subr.mxu0 0.0
    %977 = vmatpush1.msra.mxu0 0.0
    %978 = vmatprep.subr.mxu0 0.0
    %979 = vmatpush1.msra.mxu0 0.0
    %980 = vmatprep.subr.mxu0 0.0
    %981 = vmatpush1.msra.mxu0 0.0
    %982 = vmatprep.subr.mxu0 0.0
    %983 = vmatpush1.msra.mxu0 %v405
    %984 = vmatprep.subr.mxu0 0.0
    %985 = vmatpush1.msra.mxu0 %v404
    %986 = vmatprep.subr.mxu0 0.0
    %987 = vmatpush2.msra.mxu0 0.0
    %988 = vmatprep.subr.mxu0 0.0
    %989 = vmatpush2.msra.mxu0 0.0
    %990 = vmatprep.subr.mxu0 0.0
    %991 = vmatpush2.msra.mxu0 0.0
    %992 = vmatprep.subr.mxu0 0.0
    %993 = vmatpush2.msra.mxu0 0.0
    %994 = vmatprep.subr.mxu0 0.0
    %995 = vmatpush2.msra.mxu0 0.0
    %996 = vmatprep.subr.mxu0 0.0
    %997 = vmatpush2.msra.mxu0 0.0
    %998 = vmatprep.subr.mxu0 0.0
    %999 = vmatpush2.msra.mxu0 0.0
    %1000 = vmatprep.subr.mxu0 0.0
    %1001 = vmatpush2.msra.mxu0 0.0
    %1002 = vmatprep.subr.mxu0 0.0
    %1003 = vmatpush2.msra.mxu0 0.0
    %1004 = vmatprep.subr.mxu0 0.0
    %1005 = vmatpush2.msra.mxu0 0.0
    %1006 = vmatprep.subr.mxu0 0.0
    %1007 = vmatpush2.msra.mxu0 0.0
    %1008 = vmatprep.subr.mxu0 0.0
    %1009 = vmatpush2.msra.mxu0 0.0
    %1010 = vmatprep.subr.mxu0 0.0
    %1011 = vmatpush2.msra.mxu0 0.0
    %1012 = vmatprep.subr.mxu0 0.0
    %1013 = vmatpush2.msra.mxu0 0.0
    %1014 = vmatprep.subr.mxu0 0.0
    %1015 = vmatpush2.msra.mxu0 0.0
    %1016 = vmatprep.subr.mxu0 0.0
    %1017 = vmatpush2.msra.mxu0 0.0
    %1018 = vmatprep.mubr.f32.mxu0 0.0
    %1019 = vmatmul.mubr.f32.gmra.mxu0 %v882
    %v1020 = vpop.f32.mrf.mxu0
    %v1021 = vadd.f32 0.0, %v1020
    %v1022 = vpop.f32.mrf.mxu0
    %1023 = vdwg.mxu0
    %1024 = vmatprep.subr.mxu0 0.0
    %1025 = vmatpush1.msra.mxu0 0.0
    %1026 = vmatprep.subr.mxu0 0.0
    %1027 = vmatpush1.msra.mxu0 0.0
    %1028 = vmatprep.subr.mxu0 0.0
    %1029 = vmatpush1.msra.mxu0 0.0
    %1030 = vmatprep.subr.mxu0 0.0
    %1031 = vmatpush1.msra.mxu0 0.0
    %1032 = vmatprep.subr.mxu0 0.0
    %1033 = vmatpush1.msra.mxu0 0.0
    %1034 = vmatprep.subr.mxu0 0.0
    %1035 = vmatpush1.msra.mxu0 0.0
    %1036 = vmatprep.subr.mxu0 0.0
    %1037 = vmatpush1.msra.mxu0 0.0
    %1038 = vmatprep.subr.mxu0 0.0
    %1039 = vmatpush1.msra.mxu0 0.0
    %1040 = vmatprep.subr.mxu0 0.0
    %1041 = vmatpush1.msra.mxu0 0.0
    %1042 = vmatprep.subr.mxu0 0.0
    %1043 = vmatpush1.msra.mxu0 0.0
    %1044 = vmatprep.subr.mxu0 0.0
    %1045 = vmatpush1.msra.mxu0 0.0
    %1046 = vmatprep.subr.mxu0 0.0
    %1047 = vmatpush1.msra.mxu0 0.0
    %1048 = vmatprep.subr.mxu0 0.0
    %1049 = vmatpush1.msra.mxu0 0.0
    %1050 = vmatprep.subr.mxu0 0.0
    %1051 = vmatpush1.msra.mxu0 0.0
    %1052 = vmatprep.subr.mxu0 0.0
    %1053 = vmatpush1.msra.mxu0 %v407
    %1054 = vmatprep.subr.mxu0 0.0
    %1055 = vmatpush1.msra.mxu0 %v406
    %1056 = vmatprep.subr.mxu0 0.0
    %1057 = vmatpush2.msra.mxu0 0.0
    %1058 = vmatprep.subr.mxu0 0.0
    %1059 = vmatpush2.msra.mxu0 0.0
    %1060 = vmatprep.subr.mxu0 0.0
    %1061 = vmatpush2.msra.mxu0 0.0
    %1062 = vmatprep.subr.mxu0 0.0
    %1063 = vmatpush2.msra.mxu0 0.0
    %1064 = vmatprep.subr.mxu0 0.0
    %1065 = vmatpush2.msra.mxu0 0.0
    %1066 = vmatprep.subr.mxu0 0.0
    %1067 = vmatpush2.msra.mxu0 0.0
    %1068 = vmatprep.subr.mxu0 0.0
    %1069 = vmatpush2.msra.mxu0 0.0
    %1070 = vmatprep.subr.mxu0 0.0
    %1071 = vmatpush2.msra.mxu0 0.0
    %1072 = vmatprep.subr.mxu0 0.0
    %1073 = vmatpush2.msra.mxu0 0.0
    %1074 = vmatprep.subr.mxu0 0.0
    %1075 = vmatpush2.msra.mxu0 0.0
    %1076 = vmatprep.subr.mxu0 0.0
    %1077 = vmatpush2.msra.mxu0 0.0
    %1078 = vmatprep.subr.mxu0 0.0
    %1079 = vmatpush2.msra.mxu0 0.0
    %1080 = vmatprep.subr.mxu0 0.0
    %1081 = vmatpush2.msra.mxu0 0.0
    %1082 = vmatprep.subr.mxu0 0.0
    %1083 = vmatpush2.msra.mxu0 0.0
    %1084 = vmatprep.subr.mxu0 0.0
    %1085 = vmatpush2.msra.mxu0 0.0
    %1086 = vmatprep.subr.mxu0 0.0
    %1087 = vmatpush2.msra.mxu0 0.0
    %1088 = vmatprep.mubr.f32.mxu0 0.0
    %1089 = vmatmul.mubr.f32.gmra.mxu0 %v882
    %v1090 = vpop.f32.mrf.mxu0
    %v1091 = vadd.f32 %v555, %v1090
    %v1092 = vpop.f32.mrf.mxu0
    %1093 = vdwg.mxu0
    %v1094 = vadd.f32 %v150, %v951
    %v1095 = vxor.u32 %v1094, 2147483648
    %v1096 = vmul.f32 %v1095, 1.442695
    %v1097 = vpow.pop %v1096
    %v1098 = vadd.f32 %v1097, 1.0
    %v1099 = vrcp.pop %v1098
    %v1100 = vmul.f32 1.0, %v1099
    %v1101 = vadd.f32 %v262, %v1021
    %v1102 = vxor.u32 %v1101, 2147483648
    %v1103 = vmul.f32 %v1102, 1.442695
    %v1104 = vpow.pop %v1103
    %v1105 = vadd.f32 %v1104, 1.0
    %v1106 = vrcp.pop %v1105
    %v1107 = vmul.f32 1.0, %v1106
    %v1108 = vmul.f32 %v1100, %v1091
    %v1109 = vadd.f32 %v374, %v1108
    %v1110 = vtanh.pop %v1109
    %v1111 = vsub.f32 1.0, %v1107
    %v1112 = vmul.f32 %v1111, %v1110
    %v1113 = vmul.f32 %v1107, %v880
    %v1114 = vadd.f32 %v1112, %v1113
    %v1116 = vsel %vm48, %v1114, 0
    %1118 = vmatprep.subr.mxu0 0.0
    %1119 = vmatpush1.msra.mxu0 0.0
    %1120 = vmatprep.subr.mxu0 0.0
    %1121 = vmatpush1.msra.mxu0 0.0
    %1122 = vmatprep.subr.mxu0 0.0
    %1123 = vmatpush1.msra.mxu0 0.0
    %1124 = vmatprep.subr.mxu0 0.0
    %1125 = vmatpush1.msra.mxu0 0.0
    %1126 = vmatprep.subr.mxu0 0.0
    %1127 = vmatpush1.msra.mxu0 0.0
    %1128 = vmatprep.subr.mxu0 0.0
    %1129 = vmatpush1.msra.mxu0 0.0
    %1130 = vmatprep.subr.mxu0 0.0
    %1131 = vmatpush1.msra.mxu0 0.0
    %1132 = vmatprep.subr.mxu0 0.0
    %1133 = vmatpush1.msra.mxu0 0.0
    %1134 = vmatprep.subr.mxu0 0.0
    %1135 = vmatpush1.msra.mxu0 0.0
    %1136 = vmatprep.subr.mxu0 0.0
    %1137 = vmatpush1.msra.mxu0 0.0
    %1138 = vmatprep.subr.mxu0 0.0
    %1139 = vmatpush1.msra.mxu0 0.0
    %1140 = vmatprep.subr.mxu0 0.0
    %1141 = vmatpush1.msra.mxu0 0.0
    %1142 = vmatprep.subr.mxu0 0.0
    %1143 = vmatpush1.msra.mxu0 0.0
    %1144 = vmatprep.subr.mxu0 0.0
    %1145 = vmatpush1.msra.mxu0 0.0
    %1146 = vmatprep.subr.mxu0 0.0
    %1147 = vmatpush1.msra.mxu0 %v403
    %1148 = vmatprep.subr.mxu0 0.0
    %1149 = vmatpush1.msra.mxu0 %v402
    %1150 = vmatprep.subr.mxu0 0.0
    %1151 = vmatpush2.msra.mxu0 0.0
    %1152 = vmatprep.subr.mxu0 0.0
    %1153 = vmatpush2.msra.mxu0 0.0
    %1154 = vmatprep.subr.mxu0 0.0
    %1155 = vmatpush2.msra.mxu0 0.0
    %1156 = vmatprep.subr.mxu0 0.0
    %1157 = vmatpush2.msra.mxu0 0.0
    %1158 = vmatprep.subr.mxu0 0.0
    %1159 = vmatpush2.msra.mxu0 0.0
    %1160 = vmatprep.subr.mxu0 0.0
    %1161 = vmatpush2.msra.mxu0 0.0
    %1162 = vmatprep.subr.mxu0 0.0
    %1163 = vmatpush2.msra.mxu0 0.0
    %1164 = vmatprep.subr.mxu0 0.0
    %1165 = vmatpush2.msra.mxu0 0.0
    %1166 = vmatprep.subr.mxu0 0.0
    %1167 = vmatpush2.msra.mxu0 0.0
    %1168 = vmatprep.subr.mxu0 0.0
    %1169 = vmatpush2.msra.mxu0 0.0
    %1170 = vmatprep.subr.mxu0 0.0
    %1171 = vmatpush2.msra.mxu0 0.0
    %1172 = vmatprep.subr.mxu0 0.0
    %1173 = vmatpush2.msra.mxu0 0.0
    %1174 = vmatprep.subr.mxu0 0.0
    %1175 = vmatpush2.msra.mxu0 0.0
    %1176 = vmatprep.subr.mxu0 0.0
    %1177 = vmatpush2.msra.mxu0 0.0
    %1178 = vmatprep.subr.mxu0 0.0
    %1179 = vmatpush2.msra.mxu0 0.0
    %1180 = vmatprep.subr.mxu0 0.0
    %1181 = vmatpush2.msra.mxu0 0.0
    %1182 = vmatprep.mubr.f32.mxu0 0.0
    %1183 = vmatmul.mubr.f32.gmra.mxu0 %v1116
    %v1184 = vpop.f32.mrf.mxu0
    %v1185 = vadd.f32 0.0, %v1184
    %v1186 = vpop.f32.mrf.mxu0
    %1187 = vdwg.mxu0
    %1188 = vmatprep.subr.mxu0 0.0
    %1189 = vmatpush1.msra.mxu0 0.0
    %1190 = vmatprep.subr.mxu0 0.0
    %1191 = vmatpush1.msra.mxu0 0.0
    %1192 = vmatprep.subr.mxu0 0.0
    %1193 = vmatpush1.msra.mxu0 0.0
    %1194 = vmatprep.subr.mxu0 0.0
    %1195 = vmatpush1.msra.mxu0 0.0
    %1196 = vmatprep.subr.mxu0 0.0
    %1197 = vmatpush1.msra.mxu0 0.0
    %1198 = vmatprep.subr.mxu0 0.0
    %1199 = vmatpush1.msra.mxu0 0.0
    %1200 = vmatprep.subr.mxu0 0.0
    %1201 = vmatpush1.msra.mxu0 0.0
    %1202 = vmatprep.subr.mxu0 0.0
    %1203 = vmatpush1.msra.mxu0 0.0
    %1204 = vmatprep.subr.mxu0 0.0
    %1205 = vmatpush1.msra.mxu0 0.0
    %1206 = vmatprep.subr.mxu0 0.0
    %1207 = vmatpush1.msra.mxu0 0.0
    %1208 = vmatprep.subr.mxu0 0.0
    %1209 = vmatpush1.msra.mxu0 0.0
    %1210 = vmatprep.subr.mxu0 0.0
    %1211 = vmatpush1.msra.mxu0 0.0
    %1212 = vmatprep.subr.mxu0 0.0
    %1213 = vmatpush1.msra.mxu0 0.0
    %1214 = vmatprep.subr.mxu0 0.0
    %1215 = vmatpush1.msra.mxu0 0.0
    %1216 = vmatprep.subr.mxu0 0.0
    %1217 = vmatpush1.msra.mxu0 %v405
    %1218 = vmatprep.subr.mxu0 0.0
    %1219 = vmatpush1.msra.mxu0 %v404
    %1220 = vmatprep.subr.mxu0 0.0
    %1221 = vmatpush2.msra.mxu0 0.0
    %1222 = vmatprep.subr.mxu0 0.0
    %1223 = vmatpush2.msra.mxu0 0.0
    %1224 = vmatprep.subr.mxu0 0.0
    %1225 = vmatpush2.msra.mxu0 0.0
    %1226 = vmatprep.subr.mxu0 0.0
    %1227 = vmatpush2.msra.mxu0 0.0
    %1228 = vmatprep.subr.mxu0 0.0
    %1229 = vmatpush2.msra.mxu0 0.0
    %1230 = vmatprep.subr.mxu0 0.0
    %1231 = vmatpush2.msra.mxu0 0.0
    %1232 = vmatprep.subr.mxu0 0.0
    %1233 = vmatpush2.msra.mxu0 0.0
    %1234 = vmatprep.subr.mxu0 0.0
    %1235 = vmatpush2.msra.mxu0 0.0
    %1236 = vmatprep.subr.mxu0 0.0
    %1237 = vmatpush2.msra.mxu0 0.0
    %1238 = vmatprep.subr.mxu0 0.0
    %1239 = vmatpush2.msra.mxu0 0.0
    %1240 = vmatprep.subr.mxu0 0.0
    %1241 = vmatpush2.msra.mxu0 0.0
    %1242 = vmatprep.subr.mxu0 0.0
    %1243 = vmatpush2.msra.mxu0 0.0
    %1244 = vmatprep.subr.mxu0 0.0
    %1245 = vmatpush2.msra.mxu0 0.0
    %1246 = vmatprep.subr.mxu0 0.0
    %1247 = vmatpush2.msra.mxu0 0.0
    %1248 = vmatprep.subr.mxu0 0.0
    %1249 = vmatpush2.msra.mxu0 0.0
    %1250 = vmatprep.subr.mxu0 0.0
    %1251 = vmatpush2.msra.mxu0 0.0
    %1252 = vmatprep.mubr.f32.mxu0 0.0
    %1253 = vmatmul.mubr.f32.gmra.mxu0 %v1116
    %v1254 = vpop.f32.mrf.mxu0
    %v1255 = vadd.f32 0.0, %v1254
    %v1256 = vpop.f32.mrf.mxu0
    %1257 = vdwg.mxu0
    %1258 = vmatprep.subr.mxu0 0.0
    %1259 = vmatpush1.msra.mxu0 0.0
    %1260 = vmatprep.subr.mxu0 0.0
    %1261 = vmatpush1.msra.mxu0 0.0
    %1262 = vmatprep.subr.mxu0 0.0
    %1263 = vmatpush1.msra.mxu0 0.0
    %1264 = vmatprep.subr.mxu0 0.0
    %1265 = vmatpush1.msra.mxu0 0.0
    %1266 = vmatprep.subr.mxu0 0.0
    %1267 = vmatpush1.msra.mxu0 0.0
    %1268 = vmatprep.subr.mxu0 0.0
    %1269 = vmatpush1.msra.mxu0 0.0
    %1270 = vmatprep.subr.mxu0 0.0
    %1271 = vmatpush1.msra.mxu0 0.0
    %1272 = vmatprep.subr.mxu0 0.0
    %1273 = vmatpush1.msra.mxu0 0.0
    %1274 = vmatprep.subr.mxu0 0.0
    %1275 = vmatpush1.msra.mxu0 0.0
    %1276 = vmatprep.subr.mxu0 0.0
    %1277 = vmatpush1.msra.mxu0 0.0
    %1278 = vmatprep.subr.mxu0 0.0
    %1279 = vmatpush1.msra.mxu0 0.0
    %1280 = vmatprep.subr.mxu0 0.0
    %1281 = vmatpush1.msra.mxu0 0.0
    %1282 = vmatprep.subr.mxu0 0.0
    %1283 = vmatpush1.msra.mxu0 0.0
    %1284 = vmatprep.subr.mxu0 0.0
    %1285 = vmatpush1.msra.mxu0 0.0
    %1286 = vmatprep.subr.mxu0 0.0
    %1287 = vmatpush1.msra.mxu0 %v407
    %1288 = vmatprep.subr.mxu0 0.0
    %1289 = vmatpush1.msra.mxu0 %v406
    %1290 = vmatprep.subr.mxu0 0.0
    %1291 = vmatpush2.msra.mxu0 0.0
    %1292 = vmatprep.subr.mxu0 0.0
    %1293 = vmatpush2.msra.mxu0 0.0
    %1294 = vmatprep.subr.mxu0 0.0
    %1295 = vmatpush2.msra.mxu0 0.0
    %1296 = vmatprep.subr.mxu0 0.0
    %1297 = vmatpush2.msra.mxu0 0.0
    %1298 = vmatprep.subr.mxu0 0.0
    %1299 = vmatpush2.msra.mxu0 0.0
    %1300 = vmatprep.subr.mxu0 0.0
    %1301 = vmatpush2.msra.mxu0 0.0
    %1302 = vmatprep.subr.mxu0 0.0
    %1303 = vmatpush2.msra.mxu0 0.0
    %1304 = vmatprep.subr.mxu0 0.0
    %1305 = vmatpush2.msra.mxu0 0.0
    %1306 = vmatprep.subr.mxu0 0.0
    %1307 = vmatpush2.msra.mxu0 0.0
    %1308 = vmatprep.subr.mxu0 0.0
    %1309 = vmatpush2.msra.mxu0 0.0
    %1310 = vmatprep.subr.mxu0 0.0
    %1311 = vmatpush2.msra.mxu0 0.0
    %1312 = vmatprep.subr.mxu0 0.0
    %1313 = vmatpush2.msra.mxu0 0.0
    %1314 = vmatprep.subr.mxu0 0.0
    %1315 = vmatpush2.msra.mxu0 0.0
    %1316 = vmatprep.subr.mxu0 0.0
    %1317 = vmatpush2.msra.mxu0 0.0
    %1318 = vmatprep.subr.mxu0 0.0
    %1319 = vmatpush2.msra.mxu0 0.0
    %1320 = vmatprep.subr.mxu0 0.0
    %1321 = vmatpush2.msra.mxu0 0.0
    %1322 = vmatprep.mubr.f32.mxu0 0.0
    %1323 = vmatmul.mubr.f32.gmra.mxu0 %v1116
    %v1324 = vpop.f32.mrf.mxu0
    %v1325 = vadd.f32 %v555, %v1324
    %v1326 = vpop.f32.mrf.mxu0
    %1327 = vdwg.mxu0
    %v1328 = vadd.f32 %v155, %v1185
    %v1329 = vxor.u32 %v1328, 2147483648
    %v1330 = vmul.f32 %v1329, 1.442695
    %v1331 = vpow.pop %v1330
    %v1332 = vadd.f32 %v1331, 1.0
    %v1333 = vrcp.pop %v1332
    %v1334 = vmul.f32 1.0, %v1333
    %v1335 = vadd.f32 %v267, %v1255
    %v1336 = vxor.u32 %v1335, 2147483648
    %v1337 = vmul.f32 %v1336, 1.442695
    %v1338 = vpow.pop %v1337
    %v1339 = vadd.f32 %v1338, 1.0
    %v1340 = vrcp.pop %v1339
    %v1341 = vmul.f32 1.0, %v1340
    %v1342 = vmul.f32 %v1334, %v1325
    %v1343 = vadd.f32 %v379, %v1342
    %v1344 = vtanh.pop %v1343
    %v1345 = vsub.f32 1.0, %v1341
    %v1346 = vmul.f32 %v1345, %v1344
    %v1347 = vmul.f32 %v1341, %v1114
    %v1348 = vadd.f32 %v1346, %v1347
    %v1350 = vsel %vm48, %v1348, 0
    %1352 = vmatprep.subr.mxu0 0.0
    %1353 = vmatpush1.msra.mxu0 0.0
    %1354 = vmatprep.subr.mxu0 0.0
    %1355 = vmatpush1.msra.mxu0 0.0
    %1356 = vmatprep.subr.mxu0 0.0
    %1357 = vmatpush1.msra.mxu0 0.0
    %1358 = vmatprep.subr.mxu0 0.0
    %1359 = vmatpush1.msra.mxu0 0.0
    %1360 = vmatprep.subr.mxu0 0.0
    %1361 = vmatpush1.msra.mxu0 0.0
    %1362 = vmatprep.subr.mxu0 0.0
    %1363 = vmatpush1.msra.mxu0 0.0
    %1364 = vmatprep.subr.mxu0 0.0
    %1365 = vmatpush1.msra.mxu0 0.0
    %1366 = vmatprep.subr.mxu0 0.0
    %1367 = vmatpush1.msra.mxu0 0.0
    %1368 = vmatprep.subr.mxu0 0.0
    %1369 = vmatpush1.msra.mxu0 0.0
    %1370 = vmatprep.subr.mxu0 0.0
    %1371 = vmatpush1.msra.mxu0 0.0
    %1372 = vmatprep.subr.mxu0 0.0
    %1373 = vmatpush1.msra.mxu0 0.0
    %1374 = vmatprep.subr.mxu0 0.0
    %1375 = vmatpush1.msra.mxu0 0.0
    %1376 = vmatprep.subr.mxu0 0.0
    %1377 = vmatpush1.msra.mxu0 0.0
    %1378 = vmatprep.subr.mxu0 0.0
    %1379 = vmatpush1.msra.mxu0 0.0
    %1380 = vmatprep.subr.mxu0 0.0
    %1381 = vmatpush1.msra.mxu0 %v403
    %1382 = vmatprep.subr.mxu0 0.0
    %1383 = vmatpush1.msra.mxu0 %v402
    %1384 = vmatprep.subr.mxu0 0.0
    %1385 = vmatpush2.msra.mxu0 0.0
    %1386 = vmatprep.subr.mxu0 0.0
    %1387 = vmatpush2.msra.mxu0 0.0
    %1388 = vmatprep.subr.mxu0 0.0
    %1389 = vmatpush2.msra.mxu0 0.0
    %1390 = vmatprep.subr.mxu0 0.0
    %1391 = vmatpush2.msra.mxu0 0.0
    %1392 = vmatprep.subr.mxu0 0.0
    %1393 = vmatpush2.msra.mxu0 0.0
    %1394 = vmatprep.subr.mxu0 0.0
    %1395 = vmatpush2.msra.mxu0 0.0
    %1396 = vmatprep.subr.mxu0 0.0
    %1397 = vmatpush2.msra.mxu0 0.0
    %1398 = vmatprep.subr.mxu0 0.0
    %1399 = vmatpush2.msra.mxu0 0.0
    %1400 = vmatprep.subr.mxu0 0.0
    %1401 = vmatpush2.msra.mxu0 0.0
    %1402 = vmatprep.subr.mxu0 0.0
    %1403 = vmatpush2.msra.mxu0 0.0
    %1404 = vmatprep.subr.mxu0 0.0
    %1405 = vmatpush2.msra.mxu0 0.0
    %1406 = vmatprep.subr.mxu0 0.0
    %1407 = vmatpush2.msra.mxu0 0.0
    %1408 = vmatprep.subr.mxu0 0.0
    %1409 = vmatpush2.msra.mxu0 0.0
    %1410 = vmatprep.subr.mxu0 0.0
    %1411 = vmatpush2.msra.mxu0 0.0
    %1412 = vmatprep.subr.mxu0 0.0
    %1413 = vmatpush2.msra.mxu0 0.0
    %1414 = vmatprep.subr.mxu0 0.0
    %1415 = vmatpush2.msra.mxu0 0.0
    %1416 = vmatprep.mubr.f32.mxu0 0.0
    %1417 = vmatmul.mubr.f32.gmra.mxu0 %v1350
    %v1418 = vpop.f32.mrf.mxu0
    %v1419 = vadd.f32 0.0, %v1418
    %v1420 = vpop.f32.mrf.mxu0
    %1421 = vdwg.mxu0
    %1422 = vmatprep.subr.mxu0 0.0
    %1423 = vmatpush1.msra.mxu0 0.0
    %1424 = vmatprep.subr.mxu0 0.0
    %1425 = vmatpush1.msra.mxu0 0.0
    %1426 = vmatprep.subr.mxu0 0.0
    %1427 = vmatpush1.msra.mxu0 0.0
    %1428 = vmatprep.subr.mxu0 0.0
    %1429 = vmatpush1.msra.mxu0 0.0
    %1430 = vmatprep.subr.mxu0 0.0
    %1431 = vmatpush1.msra.mxu0 0.0
    %1432 = vmatprep.subr.mxu0 0.0
    %1433 = vmatpush1.msra.mxu0 0.0
    %1434 = vmatprep.subr.mxu0 0.0
    %1435 = vmatpush1.msra.mxu0 0.0
    %1436 = vmatprep.subr.mxu0 0.0
    %1437 = vmatpush1.msra.mxu0 0.0
    %1438 = vmatprep.subr.mxu0 0.0
    %1439 = vmatpush1.msra.mxu0 0.0
    %1440 = vmatprep.subr.mxu0 0.0
    %1441 = vmatpush1.msra.mxu0 0.0
    %1442 = vmatprep.subr.mxu0 0.0
    %1443 = vmatpush1.msra.mxu0 0.0
    %1444 = vmatprep.subr.mxu0 0.0
    %1445 = vmatpush1.msra.mxu0 0.0
    %1446 = vmatprep.subr.mxu0 0.0
    %1447 = vmatpush1.msra.mxu0 0.0
    %1448 = vmatprep.subr.mxu0 0.0
    %1449 = vmatpush1.msra.mxu0 0.0
    %1450 = vmatprep.subr.mxu0 0.0
    %1451 = vmatpush1.msra.mxu0 %v405
    %1452 = vmatprep.subr.mxu0 0.0
    %1453 = vmatpush1.msra.mxu0 %v404
    %1454 = vmatprep.subr.mxu0 0.0
    %1455 = vmatpush2.msra.mxu0 0.0
    %1456 = vmatprep.subr.mxu0 0.0
    %1457 = vmatpush2.msra.mxu0 0.0
    %1458 = vmatprep.subr.mxu0 0.0
    %1459 = vmatpush2.msra.mxu0 0.0
    %1460 = vmatprep.subr.mxu0 0.0
    %1461 = vmatpush2.msra.mxu0 0.0
    %1462 = vmatprep.subr.mxu0 0.0
    %1463 = vmatpush2.msra.mxu0 0.0
    %1464 = vmatprep.subr.mxu0 0.0
    %1465 = vmatpush2.msra.mxu0 0.0
    %1466 = vmatprep.subr.mxu0 0.0
    %1467 = vmatpush2.msra.mxu0 0.0
    %1468 = vmatprep.subr.mxu0 0.0
    %1469 = vmatpush2.msra.mxu0 0.0
    %1470 = vmatprep.subr.mxu0 0.0
    %1471 = vmatpush2.msra.mxu0 0.0
    %1472 = vmatprep.subr.mxu0 0.0
    %1473 = vmatpush2.msra.mxu0 0.0
    %1474 = vmatprep.subr.mxu0 0.0
    %1475 = vmatpush2.msra.mxu0 0.0
    %1476 = vmatprep.subr.mxu0 0.0
    %1477 = vmatpush2.msra.mxu0 0.0
    %1478 = vmatprep.subr.mxu0 0.0
    %1479 = vmatpush2.msra.mxu0 0.0
    %1480 = vmatprep.subr.mxu0 0.0
    %1481 = vmatpush2.msra.mxu0 0.0
    %1482 = vmatprep.subr.mxu0 0.0
    %1483 = vmatpush2.msra.mxu0 0.0
    %1484 = vmatprep.subr.mxu0 0.0
    %1485 = vmatpush2.msra.mxu0 0.0
    %1486 = vmatprep.mubr.f32.mxu0 0.0
    %1487 = vmatmul.mubr.f32.gmra.mxu0 %v1350
    %v1488 = vpop.f32.mrf.mxu0
    %v1489 = vadd.f32 0.0, %v1488
    %v1490 = vpop.f32.mrf.mxu0
    %1491 = vdwg.mxu0
    %1492 = vmatprep.subr.mxu0 0.0
    %1493 = vmatpush1.msra.mxu0 0.0
    %1494 = vmatprep.subr.mxu0 0.0
    %1495 = vmatpush1.msra.mxu0 0.0
    %1496 = vmatprep.subr.mxu0 0.0
    %1497 = vmatpush1.msra.mxu0 0.0
    %1498 = vmatprep.subr.mxu0 0.0
    %1499 = vmatpush1.msra.mxu0 0.0
    %1500 = vmatprep.subr.mxu0 0.0
    %1501 = vmatpush1.msra.mxu0 0.0
    %1502 = vmatprep.subr.mxu0 0.0
    %1503 = vmatpush1.msra.mxu0 0.0
    %1504 = vmatprep.subr.mxu0 0.0
    %1505 = vmatpush1.msra.mxu0 0.0
    %1506 = vmatprep.subr.mxu0 0.0
    %1507 = vmatpush1.msra.mxu0 0.0
    %1508 = vmatprep.subr.mxu0 0.0
    %1509 = vmatpush1.msra.mxu0 0.0
    %1510 = vmatprep.subr.mxu0 0.0
    %1511 = vmatpush1.msra.mxu0 0.0
    %1512 = vmatprep.subr.mxu0 0.0
    %1513 = vmatpush1.msra.mxu0 0.0
    %1514 = vmatprep.subr.mxu0 0.0
    %1515 = vmatpush1.msra.mxu0 0.0
    %1516 = vmatprep.subr.mxu0 0.0
    %1517 = vmatpush1.msra.mxu0 0.0
    %1518 = vmatprep.subr.mxu0 0.0
    %1519 = vmatpush1.msra.mxu0 0.0
    %1520 = vmatprep.subr.mxu0 0.0
    %1521 = vmatpush1.msra.mxu0 %v407
    %1522 = vmatprep.subr.mxu0 0.0
    %1523 = vmatpush1.msra.mxu0 %v406
    %1524 = vmatprep.subr.mxu0 0.0
    %1525 = vmatpush2.msra.mxu0 0.0
    %1526 = vmatprep.subr.mxu0 0.0
    %1527 = vmatpush2.msra.mxu0 0.0
    %1528 = vmatprep.subr.mxu0 0.0
    %1529 = vmatpush2.msra.mxu0 0.0
    %1530 = vmatprep.subr.mxu0 0.0
    %1531 = vmatpush2.msra.mxu0 0.0
    %1532 = vmatprep.subr.mxu0 0.0
    %1533 = vmatpush2.msra.mxu0 0.0
    %1534 = vmatprep.subr.mxu0 0.0
    %1535 = vmatpush2.msra.mxu0 0.0
    %1536 = vmatprep.subr.mxu0 0.0
    %1537 = vmatpush2.msra.mxu0 0.0
    %1538 = vmatprep.subr.mxu0 0.0
    %1539 = vmatpush2.msra.mxu0 0.0
    %1540 = vmatprep.subr.mxu0 0.0
    %1541 = vmatpush2.msra.mxu0 0.0
    %1542 = vmatprep.subr.mxu0 0.0
    %1543 = vmatpush2.msra.mxu0 0.0
    %1544 = vmatprep.subr.mxu0 0.0
    %1545 = vmatpush2.msra.mxu0 0.0
    %1546 = vmatprep.subr.mxu0 0.0
    %1547 = vmatpush2.msra.mxu0 0.0
    %1548 = vmatprep.subr.mxu0 0.0
    %1549 = vmatpush2.msra.mxu0 0.0
    %1550 = vmatprep.subr.mxu0 0.0
    %1551 = vmatpush2.msra.mxu0 0.0
    %1552 = vmatprep.subr.mxu0 0.0
    %1553 = vmatpush2.msra.mxu0 0.0
    %1554 = vmatprep.subr.mxu0 0.0
    %1555 = vmatpush2.msra.mxu0 0.0
    %1556 = vmatprep.mubr.f32.mxu0 0.0
    %1557 = vmatmul.mubr.f32.gmra.mxu0 %v1350
    %v1558 = vpop.f32.mrf.mxu0
    %v1559 = vadd.f32 %v555, %v1558
    %v1560 = vpop.f32.mrf.mxu0
    %1561 = vdwg.mxu0
    %v1562 = vadd.f32 %v160, %v1419
    %v1563 = vxor.u32 %v1562, 2147483648
    %v1564 = vmul.f32 %v1563, 1.442695
    %v1565 = vpow.pop %v1564
    %v1566 = vadd.f32 %v1565, 1.0
    %v1567 = vrcp.pop %v1566
    %v1568 = vmul.f32 1.0, %v1567
    %v1569 = vadd.f32 %v272, %v1489
    %v1570 = vxor.u32 %v1569, 2147483648
    %v1571 = vmul.f32 %v1570, 1.442695
    %v1572 = vpow.pop %v1571
    %v1573 = vadd.f32 %v1572, 1.0
    %v1574 = vrcp.pop %v1573
    %v1575 = vmul.f32 1.0, %v1574
    %v1576 = vmul.f32 %v1568, %v1559
    %v1577 = vadd.f32 %v384, %v1576
    %v1578 = vtanh.pop %v1577
    %v1579 = vsub.f32 1.0, %v1575
    %v1580 = vmul.f32 %v1579, %v1578
    %v1581 = vmul.f32 %v1575, %v1348
    %v1582 = vadd.f32 %v1580, %v1581
    %v1584 = vsel %vm48, %v1582, 0
    %1586 = vmatprep.subr.mxu0 0.0
    %1587 = vmatpush1.msra.mxu0 0.0
    %1588 = vmatprep.subr.mxu0 0.0
    %1589 = vmatpush1.msra.mxu0 0.0
    %1590 = vmatprep.subr.mxu0 0.0
    %1591 = vmatpush1.msra.mxu0 0.0
    %1592 = vmatprep.subr.mxu0 0.0
    %1593 = vmatpush1.msra.mxu0 0.0
    %1594 = vmatprep.subr.mxu0 0.0
    %1595 = vmatpush1.msra.mxu0 0.0
    %1596 = vmatprep.subr.mxu0 0.0
    %1597 = vmatpush1.msra.mxu0 0.0
    %1598 = vmatprep.subr.mxu0 0.0
    %1599 = vmatpush1.msra.mxu0 0.0
    %1600 = vmatprep.subr.mxu0 0.0
    %1601 = vmatpush1.msra.mxu0 0.0
    %1602 = vmatprep.subr.mxu0 0.0
    %1603 = vmatpush1.msra.mxu0 0.0
    %1604 = vmatprep.subr.mxu0 0.0
    %1605 = vmatpush1.msra.mxu0 0.0
    %1606 = vmatprep.subr.mxu0 0.0
    %1607 = vmatpush1.msra.mxu0 0.0
    %1608 = vmatprep.subr.mxu0 0.0
    %1609 = vmatpush1.msra.mxu0 0.0
    %1610 = vmatprep.subr.mxu0 0.0
    %1611 = vmatpush1.msra.mxu0 0.0
    %1612 = vmatprep.subr.mxu0 0.0
    %1613 = vmatpush1.msra.mxu0 0.0
    %1614 = vmatprep.subr.mxu0 0.0
    %1615 = vmatpush1.msra.mxu0 %v403
    %1616 = vmatprep.subr.mxu0 0.0
    %1617 = vmatpush1.msra.mxu0 %v402
    %1618 = vmatprep.subr.mxu0 0.0
    %1619 = vmatpush2.msra.mxu0 0.0
    %1620 = vmatprep.subr.mxu0 0.0
    %1621 = vmatpush2.msra.mxu0 0.0
    %1622 = vmatprep.subr.mxu0 0.0
    %1623 = vmatpush2.msra.mxu0 0.0
    %1624 = vmatprep.subr.mxu0 0.0
    %1625 = vmatpush2.msra.mxu0 0.0
    %1626 = vmatprep.subr.mxu0 0.0
    %1627 = vmatpush2.msra.mxu0 0.0
    %1628 = vmatprep.subr.mxu0 0.0
    %1629 = vmatpush2.msra.mxu0 0.0
    %1630 = vmatprep.subr.mxu0 0.0
    %1631 = vmatpush2.msra.mxu0 0.0
    %1632 = vmatprep.subr.mxu0 0.0
    %1633 = vmatpush2.msra.mxu0 0.0
    %1634 = vmatprep.subr.mxu0 0.0
    %1635 = vmatpush2.msra.mxu0 0.0
    %1636 = vmatprep.subr.mxu0 0.0
    %1637 = vmatpush2.msra.mxu0 0.0
    %1638 = vmatprep.subr.mxu0 0.0
    %1639 = vmatpush2.msra.mxu0 0.0
    %1640 = vmatprep.subr.mxu0 0.0
    %1641 = vmatpush2.msra.mxu0 0.0
    %1642 = vmatprep.subr.mxu0 0.0
    %1643 = vmatpush2.msra.mxu0 0.0
    %1644 = vmatprep.subr.mxu0 0.0
    %1645 = vmatpush2.msra.mxu0 0.0
    %1646 = vmatprep.subr.mxu0 0.0
    %1647 = vmatpush2.msra.mxu0 0.0
    %1648 = vmatprep.subr.mxu0 0.0
    %1649 = vmatpush2.msra.mxu0 0.0
    %1650 = vmatprep.mubr.f32.mxu0 0.0
    %1651 = vmatmul.mubr.f32.gmra.mxu0 %v1584
    %v1652 = vpop.f32.mrf.mxu0
    %v1653 = vadd.f32 0.0, %v1652
    %v1654 = vpop.f32.mrf.mxu0
    %1655 = vdwg.mxu0
    %1656 = vmatprep.subr.mxu0 0.0
    %1657 = vmatpush1.msra.mxu0 0.0
    %1658 = vmatprep.subr.mxu0 0.0
    %1659 = vmatpush1.msra.mxu0 0.0
    %1660 = vmatprep.subr.mxu0 0.0
    %1661 = vmatpush1.msra.mxu0 0.0
    %1662 = vmatprep.subr.mxu0 0.0
    %1663 = vmatpush1.msra.mxu0 0.0
    %1664 = vmatprep.subr.mxu0 0.0
    %1665 = vmatpush1.msra.mxu0 0.0
    %1666 = vmatprep.subr.mxu0 0.0
    %1667 = vmatpush1.msra.mxu0 0.0
    %1668 = vmatprep.subr.mxu0 0.0
    %1669 = vmatpush1.msra.mxu0 0.0
    %1670 = vmatprep.subr.mxu0 0.0
    %1671 = vmatpush1.msra.mxu0 0.0
    %1672 = vmatprep.subr.mxu0 0.0
    %1673 = vmatpush1.msra.mxu0 0.0
    %1674 = vmatprep.subr.mxu0 0.0
    %1675 = vmatpush1.msra.mxu0 0.0
    %1676 = vmatprep.subr.mxu0 0.0
    %1677 = vmatpush1.msra.mxu0 0.0
    %1678 = vmatprep.subr.mxu0 0.0
    %1679 = vmatpush1.msra.mxu0 0.0
    %1680 = vmatprep.subr.mxu0 0.0
    %1681 = vmatpush1.msra.mxu0 0.0
    %1682 = vmatprep.subr.mxu0 0.0
    %1683 = vmatpush1.msra.mxu0 0.0
    %1684 = vmatprep.subr.mxu0 0.0
    %1685 = vmatpush1.msra.mxu0 %v405
    %1686 = vmatprep.subr.mxu0 0.0
    %1687 = vmatpush1.msra.mxu0 %v404
    %1688 = vmatprep.subr.mxu0 0.0
    %1689 = vmatpush2.msra.mxu0 0.0
    %1690 = vmatprep.subr.mxu0 0.0
    %1691 = vmatpush2.msra.mxu0 0.0
    %1692 = vmatprep.subr.mxu0 0.0
    %1693 = vmatpush2.msra.mxu0 0.0
    %1694 = vmatprep.subr.mxu0 0.0
    %1695 = vmatpush2.msra.mxu0 0.0
    %1696 = vmatprep.subr.mxu0 0.0
    %1697 = vmatpush2.msra.mxu0 0.0
    %1698 = vmatprep.subr.mxu0 0.0
    %1699 = vmatpush2.msra.mxu0 0.0
    %1700 = vmatprep.subr.mxu0 0.0
    %1701 = vmatpush2.msra.mxu0 0.0
    %1702 = vmatprep.subr.mxu0 0.0
    %1703 = vmatpush2.msra.mxu0 0.0
    %1704 = vmatprep.subr.mxu0 0.0
    %1705 = vmatpush2.msra.mxu0 0.0
    %1706 = vmatprep.subr.mxu0 0.0
    %1707 = vmatpush2.msra.mxu0 0.0
    %1708 = vmatprep.subr.mxu0 0.0
    %1709 = vmatpush2.msra.mxu0 0.0
    %1710 = vmatprep.subr.mxu0 0.0
    %1711 = vmatpush2.msra.mxu0 0.0
    %1712 = vmatprep.subr.mxu0 0.0
    %1713 = vmatpush2.msra.mxu0 0.0
    %1714 = vmatprep.subr.mxu0 0.0
    %1715 = vmatpush2.msra.mxu0 0.0
    %1716 = vmatprep.subr.mxu0 0.0
    %1717 = vmatpush2.msra.mxu0 0.0
    %1718 = vmatprep.subr.mxu0 0.0
    %1719 = vmatpush2.msra.mxu0 0.0
    %1720 = vmatprep.mubr.f32.mxu0 0.0
    %1721 = vmatmul.mubr.f32.gmra.mxu0 %v1584
    %v1722 = vpop.f32.mrf.mxu0
    %v1723 = vadd.f32 0.0, %v1722
    %v1724 = vpop.f32.mrf.mxu0
    %1725 = vdwg.mxu0
    %1726 = vmatprep.subr.mxu0 0.0
    %1727 = vmatpush1.msra.mxu0 0.0
    %1728 = vmatprep.subr.mxu0 0.0
    %1729 = vmatpush1.msra.mxu0 0.0
    %1730 = vmatprep.subr.mxu0 0.0
    %1731 = vmatpush1.msra.mxu0 0.0
    %1732 = vmatprep.subr.mxu0 0.0
    %1733 = vmatpush1.msra.mxu0 0.0
    %1734 = vmatprep.subr.mxu0 0.0
    %1735 = vmatpush1.msra.mxu0 0.0
    %1736 = vmatprep.subr.mxu0 0.0
    %1737 = vmatpush1.msra.mxu0 0.0
    %1738 = vmatprep.subr.mxu0 0.0
    %1739 = vmatpush1.msra.mxu0 0.0
    %1740 = vmatprep.subr.mxu0 0.0
    %1741 = vmatpush1.msra.mxu0 0.0
    %1742 = vmatprep.subr.mxu0 0.0
    %1743 = vmatpush1.msra.mxu0 0.0
    %1744 = vmatprep.subr.mxu0 0.0
    %1745 = vmatpush1.msra.mxu0 0.0
    %1746 = vmatprep.subr.mxu0 0.0
    %1747 = vmatpush1.msra.mxu0 0.0
    %1748 = vmatprep.subr.mxu0 0.0
    %1749 = vmatpush1.msra.mxu0 0.0
    %1750 = vmatprep.subr.mxu0 0.0
    %1751 = vmatpush1.msra.mxu0 0.0
    %1752 = vmatprep.subr.mxu0 0.0
    %1753 = vmatpush1.msra.mxu0 0.0
    %1754 = vmatprep.subr.mxu0 0.0
    %1755 = vmatpush1.msra.mxu0 %v407
    %1756 = vmatprep.subr.mxu0 0.0
    %1757 = vmatpush1.msra.mxu0 %v406
    %1758 = vmatprep.subr.mxu0 0.0
    %1759 = vmatpush2.msra.mxu0 0.0
    %1760 = vmatprep.subr.mxu0 0.0
    %1761 = vmatpush2.msra.mxu0 0.0
    %1762 = vmatprep.subr.mxu0 0.0
    %1763 = vmatpush2.msra.mxu0 0.0
    %1764 = vmatprep.subr.mxu0 0.0
    %1765 = vmatpush2.msra.mxu0 0.0
    %1766 = vmatprep.subr.mxu0 0.0
    %1767 = vmatpush2.msra.mxu0 0.0
    %1768 = vmatprep.subr.mxu0 0.0
    %1769 = vmatpush2.msra.mxu0 0.0
    %1770 = vmatprep.subr.mxu0 0.0
    %1771 = vmatpush2.msra.mxu0 0.0
    %1772 = vmatprep.subr.mxu0 0.0
    %1773 = vmatpush2.msra.mxu0 0.0
    %1774 = vmatprep.subr.mxu0 0.0
    %1775 = vmatpush2.msra.mxu0 0.0
    %1776 = vmatprep.subr.mxu0 0.0
    %1777 = vmatpush2.msra.mxu0 0.0
    %1778 = vmatprep.subr.mxu0 0.0
    %1779 = vmatpush2.msra.mxu0 0.0
    %1780 = vmatprep.subr.mxu0 0.0
    %1781 = vmatpush2.msra.mxu0 0.0
    %1782 = vmatprep.subr.mxu0 0.0
    %1783 = vmatpush2.msra.mxu0 0.0
    %1784 = vmatprep.subr.mxu0 0.0
    %1785 = vmatpush2.msra.mxu0 0.0
    %1786 = vmatprep.subr.mxu0 0.0
    %1787 = vmatpush2.msra.mxu0 0.0
    %1788 = vmatprep.subr.mxu0 0.0
    %1789 = vmatpush2.msra.mxu0 0.0
    %1790 = vmatprep.mubr.f32.mxu0 0.0
    %1791 = vmatmul.mubr.f32.gmra.mxu0 %v1584
    %v1792 = vpop.f32.mrf.mxu0
    %v1793 = vadd.f32 %v555, %v1792
    %v1794 = vpop.f32.mrf.mxu0
    %1795 = vdwg.mxu0
    %v1796 = vadd.f32 %v165, %v1653
    %v1797 = vxor.u32 %v1796, 2147483648
    %v1798 = vmul.f32 %v1797, 1.442695
    %v1799 = vpow.pop %v1798
    %v1800 = vadd.f32 %v1799, 1.0
    %v1801 = vrcp.pop %v1800
    %v1802 = vmul.f32 1.0, %v1801
    %v1803 = vadd.f32 %v277, %v1723
    %v1804 = vxor.u32 %v1803, 2147483648
    %v1805 = vmul.f32 %v1804, 1.442695
    %v1806 = vpow.pop %v1805
    %v1807 = vadd.f32 %v1806, 1.0
    %v1808 = vrcp.pop %v1807
    %v1809 = vmul.f32 1.0, %v1808
    %v1810 = vmul.f32 %v1802, %v1793
    %v1811 = vadd.f32 %v389, %v1810
    %v1812 = vtanh.pop %v1811
    %v1813 = vsub.f32 1.0, %v1809
    %v1814 = vmul.f32 %v1813, %v1812
    %v1815 = vmul.f32 %v1809, %v1582
    %v1816 = vadd.f32 %v1814, %v1815
    %v1818 = vsel %vm48, %v1816, 0
    %1820 = vmatprep.subr.mxu0 0.0
    %1821 = vmatpush1.msra.mxu0 0.0
    %1822 = vmatprep.subr.mxu0 0.0
    %1823 = vmatpush1.msra.mxu0 0.0
    %1824 = vmatprep.subr.mxu0 0.0
    %1825 = vmatpush1.msra.mxu0 0.0
    %1826 = vmatprep.subr.mxu0 0.0
    %1827 = vmatpush1.msra.mxu0 0.0
    %1828 = vmatprep.subr.mxu0 0.0
    %1829 = vmatpush1.msra.mxu0 0.0
    %1830 = vmatprep.subr.mxu0 0.0
    %1831 = vmatpush1.msra.mxu0 0.0
    %1832 = vmatprep.subr.mxu0 0.0
    %1833 = vmatpush1.msra.mxu0 0.0
    %1834 = vmatprep.subr.mxu0 0.0
    %1835 = vmatpush1.msra.mxu0 0.0
    %1836 = vmatprep.subr.mxu0 0.0
    %1837 = vmatpush1.msra.mxu0 0.0
    %1838 = vmatprep.subr.mxu0 0.0
    %1839 = vmatpush1.msra.mxu0 0.0
    %1840 = vmatprep.subr.mxu0 0.0
    %1841 = vmatpush1.msra.mxu0 0.0
    %1842 = vmatprep.subr.mxu0 0.0
    %1843 = vmatpush1.msra.mxu0 0.0
    %1844 = vmatprep.subr.mxu0 0.0
    %1845 = vmatpush1.msra.mxu0 0.0
    %1846 = vmatprep.subr.mxu0 0.0
    %1847 = vmatpush1.msra.mxu0 0.0
    %1848 = vmatprep.subr.mxu0 0.0
    %1849 = vmatpush1.msra.mxu0 %v403
    %1850 = vmatprep.subr.mxu0 0.0
    %1851 = vmatpush1.msra.mxu0 %v402
    %1852 = vmatprep.subr.mxu0 0.0
    %1853 = vmatpush2.msra.mxu0 0.0
    %1854 = vmatprep.subr.mxu0 0.0
    %1855 = vmatpush2.msra.mxu0 0.0
    %1856 = vmatprep.subr.mxu0 0.0
    %1857 = vmatpush2.msra.mxu0 0.0
    %1858 = vmatprep.subr.mxu0 0.0
    %1859 = vmatpush2.msra.mxu0 0.0
    %1860 = vmatprep.subr.mxu0 0.0
    %1861 = vmatpush2.msra.mxu0 0.0
    %1862 = vmatprep.subr.mxu0 0.0
    %1863 = vmatpush2.msra.mxu0 0.0
    %1864 = vmatprep.subr.mxu0 0.0
    %1865 = vmatpush2.msra.mxu0 0.0
    %1866 = vmatprep.subr.mxu0 0.0
    %1867 = vmatpush2.msra.mxu0 0.0
    %1868 = vmatprep.subr.mxu0 0.0
    %1869 = vmatpush2.msra.mxu0 0.0
    %1870 = vmatprep.subr.mxu0 0.0
    %1871 = vmatpush2.msra.mxu0 0.0
    %1872 = vmatprep.subr.mxu0 0.0
    %1873 = vmatpush2.msra.mxu0 0.0
    %1874 = vmatprep.subr.mxu0 0.0
    %1875 = vmatpush2.msra.mxu0 0.0
    %1876 = vmatprep.subr.mxu0 0.0
    %1877 = vmatpush2.msra.mxu0 0.0
    %1878 = vmatprep.subr.mxu0 0.0
    %1879 = vmatpush2.msra.mxu0 0.0
    %1880 = vmatprep.subr.mxu0 0.0
    %1881 = vmatpush2.msra.mxu0 0.0
    %1882 = vmatprep.subr.mxu0 0.0
    %1883 = vmatpush2.msra.mxu0 0.0
    %1884 = vmatprep.mubr.f32.mxu0 0.0
    %1885 = vmatmul.mubr.f32.gmra.mxu0 %v1818
    %v1886 = vpop.f32.mrf.mxu0
    %v1887 = vadd.f32 0.0, %v1886
    %v1888 = vpop.f32.mrf.mxu0
    %1889 = vdwg.mxu0
    %1890 = vmatprep.subr.mxu0 0.0
    %1891 = vmatpush1.msra.mxu0 0.0
    %1892 = vmatprep.subr.mxu0 0.0
    %1893 = vmatpush1.msra.mxu0 0.0
    %1894 = vmatprep.subr.mxu0 0.0
    %1895 = vmatpush1.msra.mxu0 0.0
    %1896 = vmatprep.subr.mxu0 0.0
    %1897 = vmatpush1.msra.mxu0 0.0
    %1898 = vmatprep.subr.mxu0 0.0
    %1899 = vmatpush1.msra.mxu0 0.0
    %1900 = vmatprep.subr.mxu0 0.0
    %1901 = vmatpush1.msra.mxu0 0.0
    %1902 = vmatprep.subr.mxu0 0.0
    %1903 = vmatpush1.msra.mxu0 0.0
    %1904 = vmatprep.subr.mxu0 0.0
    %1905 = vmatpush1.msra.mxu0 0.0
    %1906 = vmatprep.subr.mxu0 0.0
    %1907 = vmatpush1.msra.mxu0 0.0
    %1908 = vmatprep.subr.mxu0 0.0
    %1909 = vmatpush1.msra.mxu0 0.0
    %1910 = vmatprep.subr.mxu0 0.0
    %1911 = vmatpush1.msra.mxu0 0.0
    %1912 = vmatprep.subr.mxu0 0.0
    %1913 = vmatpush1.msra.mxu0 0.0
    %1914 = vmatprep.subr.mxu0 0.0
    %1915 = vmatpush1.msra.mxu0 0.0
    %1916 = vmatprep.subr.mxu0 0.0
    %1917 = vmatpush1.msra.mxu0 0.0
    %1918 = vmatprep.subr.mxu0 0.0
    %1919 = vmatpush1.msra.mxu0 %v405
    %1920 = vmatprep.subr.mxu0 0.0
    %1921 = vmatpush1.msra.mxu0 %v404
    %1922 = vmatprep.subr.mxu0 0.0
    %1923 = vmatpush2.msra.mxu0 0.0
    %1924 = vmatprep.subr.mxu0 0.0
    %1925 = vmatpush2.msra.mxu0 0.0
    %1926 = vmatprep.subr.mxu0 0.0
    %1927 = vmatpush2.msra.mxu0 0.0
    %1928 = vmatprep.subr.mxu0 0.0
    %1929 = vmatpush2.msra.mxu0 0.0
    %1930 = vmatprep.subr.mxu0 0.0
    %1931 = vmatpush2.msra.mxu0 0.0
    %1932 = vmatprep.subr.mxu0 0.0
    %1933 = vmatpush2.msra.mxu0 0.0
    %1934 = vmatprep.subr.mxu0 0.0
    %1935 = vmatpush2.msra.mxu0 0.0
    %1936 = vmatprep.subr.mxu0 0.0
    %1937 = vmatpush2.msra.mxu0 0.0
    %1938 = vmatprep.subr.mxu0 0.0
    %1939 = vmatpush2.msra.mxu0 0.0
    %1940 = vmatprep.subr.mxu0 0.0
    %1941 = vmatpush2.msra.mxu0 0.0
    %1942 = vmatprep.subr.mxu0 0.0
    %1943 = vmatpush2.msra.mxu0 0.0
    %1944 = vmatprep.subr.mxu0 0.0
    %1945 = vmatpush2.msra.mxu0 0.0
    %1946 = vmatprep.subr.mxu0 0.0
    %1947 = vmatpush2.msra.mxu0 0.0
    %1948 = vmatprep.subr.mxu0 0.0
    %1949 = vmatpush2.msra.mxu0 0.0
    %1950 = vmatprep.subr.mxu0 0.0
    %1951 = vmatpush2.msra.mxu0 0.0
    %1952 = vmatprep.subr.mxu0 0.0
    %1953 = vmatpush2.msra.mxu0 0.0
    %1954 = vmatprep.mubr.f32.mxu0 0.0
    %1955 = vmatmul.mubr.f32.gmra.mxu0 %v1818
    %v1956 = vpop.f32.mrf.mxu0
    %v1957 = vadd.f32 0.0, %v1956
    %v1958 = vpop.f32.mrf.mxu0
    %1959 = vdwg.mxu0
    %1960 = vmatprep.subr.mxu0 0.0
    %1961 = vmatpush1.msra.mxu0 0.0
    %1962 = vmatprep.subr.mxu0 0.0
    %1963 = vmatpush1.msra.mxu0 0.0
    %1964 = vmatprep.subr.mxu0 0.0
    %1965 = vmatpush1.msra.mxu0 0.0
    %1966 = vmatprep.subr.mxu0 0.0
    %1967 = vmatpush1.msra.mxu0 0.0
    %1968 = vmatprep.subr.mxu0 0.0
    %1969 = vmatpush1.msra.mxu0 0.0
    %1970 = vmatprep.subr.mxu0 0.0
    %1971 = vmatpush1.msra.mxu0 0.0
    %1972 = vmatprep.subr.mxu0 0.0
    %1973 = vmatpush1.msra.mxu0 0.0
    %1974 = vmatprep.subr.mxu0 0.0
    %1975 = vmatpush1.msra.mxu0 0.0
    %1976 = vmatprep.subr.mxu0 0.0
    %1977 = vmatpush1.msra.mxu0 0.0
    %1978 = vmatprep.subr.mxu0 0.0
    %1979 = vmatpush1.msra.mxu0 0.0
    %1980 = vmatprep.subr.mxu0 0.0
    %1981 = vmatpush1.msra.mxu0 0.0
    %1982 = vmatprep.subr.mxu0 0.0
    %1983 = vmatpush1.msra.mxu0 0.0
    %1984 = vmatprep.subr.mxu0 0.0
    %1985 = vmatpush1.msra.mxu0 0.0
    %1986 = vmatprep.subr.mxu0 0.0
    %1987 = vmatpush1.msra.mxu0 0.0
    %1988 = vmatprep.subr.mxu0 0.0
    %1989 = vmatpush1.msra.mxu0 %v407
    %1990 = vmatprep.subr.mxu0 0.0
    %1991 = vmatpush1.msra.mxu0 %v406
    %1992 = vmatprep.subr.mxu0 0.0
    %1993 = vmatpush2.msra.mxu0 0.0
    %1994 = vmatprep.subr.mxu0 0.0
    %1995 = vmatpush2.msra.mxu0 0.0
    %1996 = vmatprep.subr.mxu0 0.0
    %1997 = vmatpush2.msra.mxu0 0.0
    %1998 = vmatprep.subr.mxu0 0.0
    %1999 = vmatpush2.msra.mxu0 0.0
    %2000 = vmatprep.subr.mxu0 0.0
    %2001 = vmatpush2.msra.mxu0 0.0
    %2002 = vmatprep.subr.mxu0 0.0
    %2003 = vmatpush2.msra.mxu0 0.0
    %2004 = vmatprep.subr.mxu0 0.0
    %2005 = vmatpush2.msra.mxu0 0.0
    %2006 = vmatprep.subr.mxu0 0.0
    %2007 = vmatpush2.msra.mxu0 0.0
    %2008 = vmatprep.subr.mxu0 0.0
    %2009 = vmatpush2.msra.mxu0 0.0
    %2010 = vmatprep.subr.mxu0 0.0
    %2011 = vmatpush2.msra.mxu0 0.0
    %2012 = vmatprep.subr.mxu0 0.0
    %2013 = vmatpush2.msra.mxu0 0.0
    %2014 = vmatprep.subr.mxu0 0.0
    %2015 = vmatpush2.msra.mxu0 0.0
    %2016 = vmatprep.subr.mxu0 0.0
    %2017 = vmatpush2.msra.mxu0 0.0
    %2018 = vmatprep.subr.mxu0 0.0
    %2019 = vmatpush2.msra.mxu0 0.0
    %2020 = vmatprep.subr.mxu0 0.0
    %2021 = vmatpush2.msra.mxu0 0.0
    %2022 = vmatprep.subr.mxu0 0.0
    %2023 = vmatpush2.msra.mxu0 0.0
    %2024 = vmatprep.mubr.f32.mxu0 0.0
    %2025 = vmatmul.mubr.f32.gmra.mxu0 %v1818
    %v2026 = vpop.f32.mrf.mxu0
    %v2027 = vadd.f32 %v555, %v2026
    %v2028 = vpop.f32.mrf.mxu0
    %2029 = vdwg.mxu0
    %v2030 = vadd.f32 %v170, %v1887
    %v2031 = vxor.u32 %v2030, 2147483648
    %v2032 = vmul.f32 %v2031, 1.442695
    %v2033 = vpow.pop %v2032
    %v2034 = vadd.f32 %v2033, 1.0
    %v2035 = vrcp.pop %v2034
    %v2036 = vmul.f32 1.0, %v2035
    %v2037 = vadd.f32 %v282, %v1957
    %v2038 = vxor.u32 %v2037, 2147483648
    %v2039 = vmul.f32 %v2038, 1.442695
    %v2040 = vpow.pop %v2039
    %v2041 = vadd.f32 %v2040, 1.0
    %v2042 = vrcp.pop %v2041
    %v2043 = vmul.f32 1.0, %v2042
    %v2044 = vmul.f32 %v2036, %v2027
    %v2045 = vadd.f32 %v394, %v2044
    %v2046 = vtanh.pop %v2045
    %v2047 = vsub.f32 1.0, %v2043
    %v2048 = vmul.f32 %v2047, %v2046
    %v2049 = vmul.f32 %v2043, %v1816
    %v2050 = vadd.f32 %v2048, %v2049
    %v2052 = vsel %vm48, %v2050, 0
    %2054 = vmatprep.subr.mxu0 0.0
    %2055 = vmatpush1.msra.mxu0 0.0
    %2056 = vmatprep.subr.mxu0 0.0
    %2057 = vmatpush1.msra.mxu0 0.0
    %2058 = vmatprep.subr.mxu0 0.0
    %2059 = vmatpush1.msra.mxu0 0.0
    %2060 = vmatprep.subr.mxu0 0.0
    %2061 = vmatpush1.msra.mxu0 0.0
    %2062 = vmatprep.subr.mxu0 0.0
    %2063 = vmatpush1.msra.mxu0 0.0
    %2064 = vmatprep.subr.mxu0 0.0
    %2065 = vmatpush1.msra.mxu0 0.0
    %2066 = vmatprep.subr.mxu0 0.0
    %2067 = vmatpush1.msra.mxu0 0.0
    %2068 = vmatprep.subr.mxu0 0.0
    %2069 = vmatpush1.msra.mxu0 0.0
    %2070 = vmatprep.subr.mxu0 0.0
    %2071 = vmatpush1.msra.mxu0 0.0
    %2072 = vmatprep.subr.mxu0 0.0
    %2073 = vmatpush1.msra.mxu0 0.0
    %2074 = vmatprep.subr.mxu0 0.0
    %2075 = vmatpush1.msra.mxu0 0.0
    %2076 = vmatprep.subr.mxu0 0.0
    %2077 = vmatpush1.msra.mxu0 0.0
    %2078 = vmatprep.subr.mxu0 0.0
    %2079 = vmatpush1.msra.mxu0 0.0
    %2080 = vmatprep.subr.mxu0 0.0
    %2081 = vmatpush1.msra.mxu0 0.0
    %2082 = vmatprep.subr.mxu0 0.0
    %2083 = vmatpush1.msra.mxu0 %v403
    %2084 = vmatprep.subr.mxu0 0.0
    %2085 = vmatpush1.msra.mxu0 %v402
    %2086 = vmatprep.subr.mxu0 0.0
    %2087 = vmatpush2.msra.mxu0 0.0
    %2088 = vmatprep.subr.mxu0 0.0
    %2089 = vmatpush2.msra.mxu0 0.0
    %2090 = vmatprep.subr.mxu0 0.0
    %2091 = vmatpush2.msra.mxu0 0.0
    %2092 = vmatprep.subr.mxu0 0.0
    %2093 = vmatpush2.msra.mxu0 0.0
    %2094 = vmatprep.subr.mxu0 0.0
    %2095 = vmatpush2.msra.mxu0 0.0
    %2096 = vmatprep.subr.mxu0 0.0
    %2097 = vmatpush2.msra.mxu0 0.0
    %2098 = vmatprep.subr.mxu0 0.0
    %2099 = vmatpush2.msra.mxu0 0.0
    %2100 = vmatprep.subr.mxu0 0.0
    %2101 = vmatpush2.msra.mxu0 0.0
    %2102 = vmatprep.subr.mxu0 0.0
    %2103 = vmatpush2.msra.mxu0 0.0
    %2104 = vmatprep.subr.mxu0 0.0
    %2105 = vmatpush2.msra.mxu0 0.0
    %2106 = vmatprep.subr.mxu0 0.0
    %2107 = vmatpush2.msra.mxu0 0.0
    %2108 = vmatprep.subr.mxu0 0.0
    %2109 = vmatpush2.msra.mxu0 0.0
    %2110 = vmatprep.subr.mxu0 0.0
    %2111 = vmatpush2.msra.mxu0 0.0
    %2112 = vmatprep.subr.mxu0 0.0
    %2113 = vmatpush2.msra.mxu0 0.0
    %2114 = vmatprep.subr.mxu0 0.0
    %2115 = vmatpush2.msra.mxu0 0.0
    %2116 = vmatprep.subr.mxu0 0.0
    %2117 = vmatpush2.msra.mxu0 0.0
    %2118 = vmatprep.mubr.f32.mxu0 0.0
    %2119 = vmatmul.mubr.f32.gmra.mxu0 %v2052
    %v2120 = vpop.f32.mrf.mxu0
    %v2121 = vadd.f32 0.0, %v2120
    %v2122 = vpop.f32.mrf.mxu0
    %2123 = vdwg.mxu0
    %2124 = vmatprep.subr.mxu0 0.0
    %2125 = vmatpush1.msra.mxu0 0.0
    %2126 = vmatprep.subr.mxu0 0.0
    %2127 = vmatpush1.msra.mxu0 0.0
    %2128 = vmatprep.subr.mxu0 0.0
    %2129 = vmatpush1.msra.mxu0 0.0
    %2130 = vmatprep.subr.mxu0 0.0
    %2131 = vmatpush1.msra.mxu0 0.0
    %2132 = vmatprep.subr.mxu0 0.0
    %2133 = vmatpush1.msra.mxu0 0.0
    %2134 = vmatprep.subr.mxu0 0.0
    %2135 = vmatpush1.msra.mxu0 0.0
    %2136 = vmatprep.subr.mxu0 0.0
    %2137 = vmatpush1.msra.mxu0 0.0
    %2138 = vmatprep.subr.mxu0 0.0
    %2139 = vmatpush1.msra.mxu0 0.0
    %2140 = vmatprep.subr.mxu0 0.0
    %2141 = vmatpush1.msra.mxu0 0.0
    %2142 = vmatprep.subr.mxu0 0.0
    %2143 = vmatpush1.msra.mxu0 0.0
    %2144 = vmatprep.subr.mxu0 0.0
    %2145 = vmatpush1.msra.mxu0 0.0
    %2146 = vmatprep.subr.mxu0 0.0
    %2147 = vmatpush1.msra.mxu0 0.0
    %2148 = vmatprep.subr.mxu0 0.0
    %2149 = vmatpush1.msra.mxu0 0.0
    %2150 = vmatprep.subr.mxu0 0.0
    %2151 = vmatpush1.msra.mxu0 0.0
    %2152 = vmatprep.subr.mxu0 0.0
    %2153 = vmatpush1.msra.mxu0 %v405
    %2154 = vmatprep.subr.mxu0 0.0
    %2155 = vmatpush1.msra.mxu0 %v404
    %2156 = vmatprep.subr.mxu0 0.0
    %2157 = vmatpush2.msra.mxu0 0.0
    %2158 = vmatprep.subr.mxu0 0.0
    %2159 = vmatpush2.msra.mxu0 0.0
    %2160 = vmatprep.subr.mxu0 0.0
    %2161 = vmatpush2.msra.mxu0 0.0
    %2162 = vmatprep.subr.mxu0 0.0
    %2163 = vmatpush2.msra.mxu0 0.0
    %2164 = vmatprep.subr.mxu0 0.0
    %2165 = vmatpush2.msra.mxu0 0.0
    %2166 = vmatprep.subr.mxu0 0.0
    %2167 = vmatpush2.msra.mxu0 0.0
    %2168 = vmatprep.subr.mxu0 0.0
    %2169 = vmatpush2.msra.mxu0 0.0
    %2170 = vmatprep.subr.mxu0 0.0
    %2171 = vmatpush2.msra.mxu0 0.0
    %2172 = vmatprep.subr.mxu0 0.0
    %2173 = vmatpush2.msra.mxu0 0.0
    %2174 = vmatprep.subr.mxu0 0.0
    %2175 = vmatpush2.msra.mxu0 0.0
    %2176 = vmatprep.subr.mxu0 0.0
    %2177 = vmatpush2.msra.mxu0 0.0
    %2178 = vmatprep.subr.mxu0 0.0
    %2179 = vmatpush2.msra.mxu0 0.0
    %2180 = vmatprep.subr.mxu0 0.0
    %2181 = vmatpush2.msra.mxu0 0.0
    %2182 = vmatprep.subr.mxu0 0.0
    %2183 = vmatpush2.msra.mxu0 0.0
    %2184 = vmatprep.subr.mxu0 0.0
    %2185 = vmatpush2.msra.mxu0 0.0
    %2186 = vmatprep.subr.mxu0 0.0
    %2187 = vmatpush2.msra.mxu0 0.0
    %2188 = vmatprep.mubr.f32.mxu0 0.0
    %2189 = vmatmul.mubr.f32.gmra.mxu0 %v2052
    %v2190 = vpop.f32.mrf.mxu0
    %v2191 = vadd.f32 0.0, %v2190
    %v2192 = vpop.f32.mrf.mxu0
    %2193 = vdwg.mxu0
    %2194 = vmatprep.subr.mxu0 0.0
    %2195 = vmatpush1.msra.mxu0 0.0
    %2196 = vmatprep.subr.mxu0 0.0
    %2197 = vmatpush1.msra.mxu0 0.0
    %2198 = vmatprep.subr.mxu0 0.0
    %2199 = vmatpush1.msra.mxu0 0.0
    %2200 = vmatprep.subr.mxu0 0.0
    %2201 = vmatpush1.msra.mxu0 0.0
    %2202 = vmatprep.subr.mxu0 0.0
    %2203 = vmatpush1.msra.mxu0 0.0
    %2204 = vmatprep.subr.mxu0 0.0
    %2205 = vmatpush1.msra.mxu0 0.0
    %2206 = vmatprep.subr.mxu0 0.0
    %2207 = vmatpush1.msra.mxu0 0.0
    %2208 = vmatprep.subr.mxu0 0.0
    %2209 = vmatpush1.msra.mxu0 0.0
    %2210 = vmatprep.subr.mxu0 0.0
    %2211 = vmatpush1.msra.mxu0 0.0
    %2212 = vmatprep.subr.mxu0 0.0
    %2213 = vmatpush1.msra.mxu0 0.0
    %2214 = vmatprep.subr.mxu0 0.0
    %2215 = vmatpush1.msra.mxu0 0.0
    %2216 = vmatprep.subr.mxu0 0.0
    %2217 = vmatpush1.msra.mxu0 0.0
    %2218 = vmatprep.subr.mxu0 0.0
    %2219 = vmatpush1.msra.mxu0 0.0
    %2220 = vmatprep.subr.mxu0 0.0
    %2221 = vmatpush1.msra.mxu0 0.0
    %2222 = vmatprep.subr.mxu0 0.0
    %2223 = vmatpush1.msra.mxu0 %v407
    %2224 = vmatprep.subr.mxu0 0.0
    %2225 = vmatpush1.msra.mxu0 %v406
    %2226 = vmatprep.subr.mxu0 0.0
    %2227 = vmatpush2.msra.mxu0 0.0
    %2228 = vmatprep.subr.mxu0 0.0
    %2229 = vmatpush2.msra.mxu0 0.0
    %2230 = vmatprep.subr.mxu0 0.0
    %2231 = vmatpush2.msra.mxu0 0.0
    %2232 = vmatprep.subr.mxu0 0.0
    %2233 = vmatpush2.msra.mxu0 0.0
    %2234 = vmatprep.subr.mxu0 0.0
    %2235 = vmatpush2.msra.mxu0 0.0
    %2236 = vmatprep.subr.mxu0 0.0
    %2237 = vmatpush2.msra.mxu0 0.0
    %2238 = vmatprep.subr.mxu0 0.0
    %2239 = vmatpush2.msra.mxu0 0.0
    %2240 = vmatprep.subr.mxu0 0.0
    %2241 = vmatpush2.msra.mxu0 0.0
    %2242 = vmatprep.subr.mxu0 0.0
    %2243 = vmatpush2.msra.mxu0 0.0
    %2244 = vmatprep.subr.mxu0 0.0
    %2245 = vmatpush2.msra.mxu0 0.0
    %2246 = vmatprep.subr.mxu0 0.0
    %2247 = vmatpush2.msra.mxu0 0.0
    %2248 = vmatprep.subr.mxu0 0.0
    %2249 = vmatpush2.msra.mxu0 0.0
    %2250 = vmatprep.subr.mxu0 0.0
    %2251 = vmatpush2.msra.mxu0 0.0
    %2252 = vmatprep.subr.mxu0 0.0
    %2253 = vmatpush2.msra.mxu0 0.0
    %2254 = vmatprep.subr.mxu0 0.0
    %2255 = vmatpush2.msra.mxu0 0.0
    %2256 = vmatprep.subr.mxu0 0.0
    %2257 = vmatpush2.msra.mxu0 0.0
    %2258 = vmatprep.mubr.f32.mxu0 0.0
    %2259 = vmatmul.mubr.f32.gmra.mxu0 %v2052
    %v2260 = vpop.f32.mrf.mxu0
    %v2261 = vadd.f32 %v555, %v2260
    %v2262 = vpop.f32.mrf.mxu0
    %2263 = vdwg.mxu0
    %v2264 = vadd.f32 %v175, %v2121
    %v2265 = vxor.u32 %v2264, 2147483648
    %v2266 = vmul.f32 %v2265, 1.442695
    %v2267 = vpow.pop %v2266
    %v2268 = vadd.f32 %v2267, 1.0
    %v2269 = vrcp.pop %v2268
    %v2270 = vmul.f32 1.0, %v2269
    %v2271 = vadd.f32 %v287, %v2191
    %v2272 = vxor.u32 %v2271, 2147483648
    %v2273 = vmul.f32 %v2272, 1.442695
    %v2274 = vpow.pop %v2273
    %v2275 = vadd.f32 %v2274, 1.0
    %v2276 = vrcp.pop %v2275
    %v2277 = vmul.f32 1.0, %v2276
    %v2278 = vmul.f32 %v2270, %v2261
    %v2279 = vadd.f32 %v399, %v2278
    %v2280 = vtanh.pop %v2279
    %v2281 = vsub.f32 1.0, %v2277
    %v2282 = vmul.f32 %v2281, %v2280
    %v2283 = vmul.f32 %v2277, %v2050
    %v2284 = vadd.f32 %v2282, %v2283
    %v2285 = vld [vmem:[#allocation2 + $0x90] sm:$0xff]
    %v2286 = vld [vmem:[#allocation2 + $0x98] sm:$0xff]
    %v2287 = vld [vmem:[#allocation2 + $0xb0] sm:$0x1]
    %v2288 = vlaneseq
    %v2289 = vshrl.u32 %v2288, 7
    %v2290 = vsub.s32 0, %v2289
    %v2291 = vrot.slane %v2287, %v2290
    %v2293 = vsel %vm48, %v32, 0
    %2295 = vmatprep.subr.mxu0 0.0
    %2296 = vmatpush1.msra.mxu0 0.0
    %2297 = vmatprep.subr.mxu0 0.0
    %2298 = vmatpush1.msra.mxu0 0.0
    %2299 = vmatprep.subr.mxu0 0.0
    %2300 = vmatpush1.msra.mxu0 0.0
    %2301 = vmatprep.subr.mxu0 0.0
    %2302 = vmatpush1.msra.mxu0 0.0
    %2303 = vmatprep.subr.mxu0 0.0
    %2304 = vmatpush1.msra.mxu0 0.0
    %2305 = vmatprep.subr.mxu0 0.0
    %2306 = vmatpush1.msra.mxu0 0.0
    %2307 = vmatprep.subr.mxu0 0.0
    %2308 = vmatpush1.msra.mxu0 0.0
    %2309 = vmatprep.subr.mxu0 0.0
    %2310 = vmatpush1.msra.mxu0 0.0
    %2311 = vmatprep.subr.mxu0 0.0
    %2312 = vmatpush1.msra.mxu0 0.0
    %2313 = vmatprep.subr.mxu0 0.0
    %2314 = vmatpush1.msra.mxu0 0.0
    %2315 = vmatprep.subr.mxu0 0.0
    %2316 = vmatpush1.msra.mxu0 0.0
    %2317 = vmatprep.subr.mxu0 0.0
    %2318 = vmatpush1.msra.mxu0 0.0
    %2319 = vmatprep.subr.mxu0 0.0
    %2320 = vmatpush1.msra.mxu0 0.0
    %2321 = vmatprep.subr.mxu0 0.0
    %2322 = vmatpush1.msra.mxu0 0.0
    %2323 = vmatprep.subr.mxu0 0.0
    %2324 = vmatpush1.msra.mxu0 %v2286
    %2325 = vmatprep.subr.mxu0 0.0
    %2326 = vmatpush1.msra.mxu0 %v2285
    %2327 = vmatprep.subr.mxu0 0.0
    %2328 = vmatpush2.msra.mxu0 0.0
    %2329 = vmatprep.subr.mxu0 0.0
    %2330 = vmatpush2.msra.mxu0 0.0
    %2331 = vmatprep.subr.mxu0 0.0
    %2332 = vmatpush2.msra.mxu0 0.0
    %2333 = vmatprep.subr.mxu0 0.0
    %2334 = vmatpush2.msra.mxu0 0.0
    %2335 = vmatprep.subr.mxu0 0.0
    %2336 = vmatpush2.msra.mxu0 0.0
    %2337 = vmatprep.subr.mxu0 0.0
    %2338 = vmatpush2.msra.mxu0 0.0
    %2339 = vmatprep.subr.mxu0 0.0
    %2340 = vmatpush2.msra.mxu0 0.0
    %2341 = vmatprep.subr.mxu0 0.0
    %2342 = vmatpush2.msra.mxu0 0.0
    %2343 = vmatprep.subr.mxu0 0.0
    %2344 = vmatpush2.msra.mxu0 0.0
    %2345 = vmatprep.subr.mxu0 0.0
    %2346 = vmatpush2.msra.mxu0 0.0
    %2347 = vmatprep.subr.mxu0 0.0
    %2348 = vmatpush2.msra.mxu0 0.0
    %2349 = vmatprep.subr.mxu0 0.0
    %2350 = vmatpush2.msra.mxu0 0.0
    %2351 = vmatprep.subr.mxu0 0.0
    %2352 = vmatpush2.msra.mxu0 0.0
    %2353 = vmatprep.subr.mxu0 0.0
    %2354 = vmatpush2.msra.mxu0 0.0
    %2355 = vmatprep.subr.mxu0 0.0
    %2356 = vmatpush2.msra.mxu0 0.0
    %2357 = vmatprep.subr.mxu0 0.0
    %2358 = vmatpush2.msra.mxu0 0.0
    %2359 = vmatprep.mubr.f32.mxu0 0.0
    %2360 = vmatmul.mubr.f32.gmra.mxu0 %v2293
    %v2361 = vpop.f32.mrf.mxu0
    %v2362 = vadd.f32 %v2291, %v2361
    %v2363 = vpop.f32.mrf.mxu0
    %2364 = vdwg.mxu0
    %v2365 = vld [vmem:[#allocation2 + $0x80] sm:$0xff]
    %v2366 = vld [vmem:[#allocation2 + $0x88] sm:$0xff]
    %v2367 = vmul.f32 %v646, %v32
    %v2368 = vmul.f32 %v880, %v32
    %v2369 = vmul.f32 %v1114, %v32
    %v2370 = vmul.f32 %v1348, %v32
    %v2371 = vmul.f32 %v1582, %v32
    %v2372 = vmul.f32 %v1816, %v32
    %v2373 = vmul.f32 %v2050, %v32
    %v2374 = vmul.f32 %v2284, %v32
    %v2375 = vld [vmem:[#allocation2 + $0xa0] sm:$0xff]
    %v2376 = vld [vmem:[#allocation2 + $0xa8] sm:$0xff]
    %v2378 = vsel %vm48, %v2367, 0
    %v2381 = vsel %vm48, %v2368, 0
    %v2384 = vsel %vm48, %v2369, 0
    %v2387 = vsel %vm48, %v2370, 0
    %v2390 = vsel %vm48, %v2371, 0
    %v2393 = vsel %vm48, %v2372, 0
    %v2396 = vsel %vm48, %v2373, 0
    %v2399 = vsel %vm48, %v2374, 0
    %2401 = vmatprep.subr.mxu0 0.0
    %2402 = vmatpush1.msra.mxu0 0.0
    %2403 = vmatprep.subr.mxu0 0.0
    %2404 = vmatpush1.msra.mxu0 0.0
    %2405 = vmatprep.subr.mxu0 0.0
    %2406 = vmatpush1.msra.mxu0 0.0
    %2407 = vmatprep.subr.mxu0 0.0
    %2408 = vmatpush1.msra.mxu0 0.0
    %2409 = vmatprep.subr.mxu0 0.0
    %2410 = vmatpush1.msra.mxu0 0.0
    %2411 = vmatprep.subr.mxu0 0.0
    %2412 = vmatpush1.msra.mxu0 0.0
    %2413 = vmatprep.subr.mxu0 0.0
    %2414 = vmatpush1.msra.mxu0 0.0
    %2415 = vmatprep.subr.mxu0 0.0
    %2416 = vmatpush1.msra.mxu0 0.0
    %2417 = vmatprep.subr.mxu0 0.0
    %2418 = vmatpush1.msra.mxu0 0.0
    %2419 = vmatprep.subr.mxu0 0.0
    %2420 = vmatpush1.msra.mxu0 0.0
    %2421 = vmatprep.subr.mxu0 0.0
    %2422 = vmatpush1.msra.mxu0 0.0
    %2423 = vmatprep.subr.mxu0 0.0
    %2424 = vmatpush1.msra.mxu0 0.0
    %2425 = vmatprep.subr.mxu0 0.0
    %2426 = vmatpush1.msra.mxu0 0.0
    %2427 = vmatprep.subr.mxu0 0.0
    %2428 = vmatpush1.msra.mxu0 0.0
    %2429 = vmatprep.subr.mxu0 0.0
    %2430 = vmatpush1.msra.mxu0 %v2376
    %2431 = vmatprep.subr.mxu0 0.0
    %2432 = vmatpush1.msra.mxu0 %v2375
    %2433 = vmatprep.subr.mxu0 0.0
    %2434 = vmatpush2.msra.mxu0 0.0
    %2435 = vmatprep.subr.mxu0 0.0
    %2436 = vmatpush2.msra.mxu0 0.0
    %2437 = vmatprep.subr.mxu0 0.0
    %2438 = vmatpush2.msra.mxu0 0.0
    %2439 = vmatprep.subr.mxu0 0.0
    %2440 = vmatpush2.msra.mxu0 0.0
    %2441 = vmatprep.subr.mxu0 0.0
    %2442 = vmatpush2.msra.mxu0 0.0
    %2443 = vmatprep.subr.mxu0 0.0
    %2444 = vmatpush2.msra.mxu0 0.0
    %2445 = vmatprep.subr.mxu0 0.0
    %2446 = vmatpush2.msra.mxu0 0.0
    %2447 = vmatprep.subr.mxu0 0.0
    %2448 = vmatpush2.msra.mxu0 0.0
    %2449 = vmatprep.subr.mxu0 0.0
    %2450 = vmatpush2.msra.mxu0 0.0
    %2451 = vmatprep.subr.mxu0 0.0
    %2452 = vmatpush2.msra.mxu0 0.0
    %2453 = vmatprep.subr.mxu0 0.0
    %2454 = vmatpush2.msra.mxu0 0.0
    %2455 = vmatprep.subr.mxu0 0.0
    %2456 = vmatpush2.msra.mxu0 0.0
    %2457 = vmatprep.subr.mxu0 0.0
    %2458 = vmatpush2.msra.mxu0 0.0
    %2459 = vmatprep.subr.mxu0 0.0
    %2460 = vmatpush2.msra.mxu0 0.0
    %2461 = vmatprep.subr.mxu0 0.0
    %2462 = vmatpush2.msra.mxu0 0.0
    %2463 = vmatprep.subr.mxu0 0.0
    %2464 = vmatpush2.msra.mxu0 0.0
    %2465 = vmatprep.mubr.f32.mxu0 0.0
    %2466 = vmatmul.mubr.f32.gmra.mxu0 %v2378
    %v2467 = vpop.f32.mrf.mxu0
    %v2468 = vadd.f32 0.0, %v2467
    %v2469 = vpop.f32.mrf.mxu0
    %2470 = vmatprep.mubr.f32.mxu0 0.0
    %2471 = vmatmul.mubr.f32.gmra.mxu0 %v2381
    %v2472 = vpop.f32.mrf.mxu0
    %v2473 = vadd.f32 0.0, %v2472
    %v2474 = vpop.f32.mrf.mxu0
    %2475 = vmatprep.mubr.f32.mxu0 0.0
    %2476 = vmatmul.mubr.f32.gmra.mxu0 %v2384
    %v2477 = vpop.f32.mrf.mxu0
    %v2478 = vadd.f32 0.0, %v2477
    %v2479 = vpop.f32.mrf.mxu0
    %2480 = vmatprep.mubr.f32.mxu0 0.0
    %2481 = vmatmul.mubr.f32.gmra.mxu0 %v2387
    %v2482 = vpop.f32.mrf.mxu0
    %v2483 = vadd.f32 0.0, %v2482
    %v2484 = vpop.f32.mrf.mxu0
    %2485 = vmatprep.mubr.f32.mxu0 0.0
    %2486 = vmatmul.mubr.f32.gmra.mxu0 %v2390
    %v2487 = vpop.f32.mrf.mxu0
    %v2488 = vadd.f32 0.0, %v2487
    %v2489 = vpop.f32.mrf.mxu0
    %2490 = vmatprep.mubr.f32.mxu0 0.0
    %2491 = vmatmul.mubr.f32.gmra.mxu0 %v2393
    %v2492 = vpop.f32.mrf.mxu0
    %v2493 = vadd.f32 0.0, %v2492
    %v2494 = vpop.f32.mrf.mxu0
    %2495 = vmatprep.mubr.f32.mxu0 0.0
    %2496 = vmatmul.mubr.f32.gmra.mxu0 %v2396
    %v2497 = vpop.f32.mrf.mxu0
    %v2498 = vadd.f32 0.0, %v2497
    %v2499 = vpop.f32.mrf.mxu0
    %2500 = vmatprep.mubr.f32.mxu0 0.0
    %2501 = vmatmul.mubr.f32.gmra.mxu0 %v2399
    %v2502 = vpop.f32.mrf.mxu0
    %v2503 = vadd.f32 0.0, %v2502
    %v2504 = vpop.f32.mrf.mxu0
    %2505 = vdwg.mxu0
    %v2507 = vsel %vm48, %v2284, 0
    %2509 = vmatprep.subr.mxu0 0.0
    %2510 = vmatpush1.msra.mxu0 0.0
    %2511 = vmatprep.subr.mxu0 0.0
    %2512 = vmatpush1.msra.mxu0 0.0
    %2513 = vmatprep.subr.mxu0 0.0
    %2514 = vmatpush1.msra.mxu0 0.0
    %2515 = vmatprep.subr.mxu0 0.0
    %2516 = vmatpush1.msra.mxu0 0.0
    %2517 = vmatprep.subr.mxu0 0.0
    %2518 = vmatpush1.msra.mxu0 0.0
    %2519 = vmatprep.subr.mxu0 0.0
    %2520 = vmatpush1.msra.mxu0 0.0
    %2521 = vmatprep.subr.mxu0 0.0
    %2522 = vmatpush1.msra.mxu0 0.0
    %2523 = vmatprep.subr.mxu0 0.0
    %2524 = vmatpush1.msra.mxu0 0.0
    %2525 = vmatprep.subr.mxu0 0.0
    %2526 = vmatpush1.msra.mxu0 0.0
    %2527 = vmatprep.subr.mxu0 0.0
    %2528 = vmatpush1.msra.mxu0 0.0
    %2529 = vmatprep.subr.mxu0 0.0
    %2530 = vmatpush1.msra.mxu0 0.0
    %2531 = vmatprep.subr.mxu0 0.0
    %2532 = vmatpush1.msra.mxu0 0.0
    %2533 = vmatprep.subr.mxu0 0.0
    %2534 = vmatpush1.msra.mxu0 0.0
    %2535 = vmatprep.subr.mxu0 0.0
    %2536 = vmatpush1.msra.mxu0 0.0
    %2537 = vmatprep.subr.mxu0 0.0
    %2538 = vmatpush1.msra.mxu0 %v2366
    %2539 = vmatprep.subr.mxu0 0.0
    %2540 = vmatpush1.msra.mxu0 %v2365
    %2541 = vmatprep.subr.mxu0 0.0
    %2542 = vmatpush2.msra.mxu0 0.0
    %2543 = vmatprep.subr.mxu0 0.0
    %2544 = vmatpush2.msra.mxu0 0.0
    %2545 = vmatprep.subr.mxu0 0.0
    %2546 = vmatpush2.msra.mxu0 0.0
    %2547 = vmatprep.subr.mxu0 0.0
    %2548 = vmatpush2.msra.mxu0 0.0
    %2549 = vmatprep.subr.mxu0 0.0
    %2550 = vmatpush2.msra.mxu0 0.0
    %2551 = vmatprep.subr.mxu0 0.0
    %2552 = vmatpush2.msra.mxu0 0.0
    %2553 = vmatprep.subr.mxu0 0.0
    %2554 = vmatpush2.msra.mxu0 0.0
    %2555 = vmatprep.subr.mxu0 0.0
    %2556 = vmatpush2.msra.mxu0 0.0
    %2557 = vmatprep.subr.mxu0 0.0
    %2558 = vmatpush2.msra.mxu0 0.0
    %2559 = vmatprep.subr.mxu0 0.0
    %2560 = vmatpush2.msra.mxu0 0.0
    %2561 = vmatprep.subr.mxu0 0.0
    %2562 = vmatpush2.msra.mxu0 0.0
    %2563 = vmatprep.subr.mxu0 0.0
    %2564 = vmatpush2.msra.mxu0 0.0
    %2565 = vmatprep.subr.mxu0 0.0
    %2566 = vmatpush2.msra.mxu0 0.0
    %2567 = vmatprep.subr.mxu0 0.0
    %2568 = vmatpush2.msra.mxu0 0.0
    %2569 = vmatprep.subr.mxu0 0.0
    %2570 = vmatpush2.msra.mxu0 0.0
    %2571 = vmatprep.subr.mxu0 0.0
    %2572 = vmatpush2.msra.mxu0 0.0
    %2573 = vmatprep.mubr.f32.mxu0 0.0
    %2574 = vmatmul.mubr.f32.gmra.mxu0 %v648
    %v2575 = vpop.f32.mrf.mxu0
    %v2576 = vadd.f32 %v2468, %v2575
    %v2577 = vpop.f32.mrf.mxu0
    %2578 = vmatprep.mubr.f32.mxu0 0.0
    %2579 = vmatmul.mubr.f32.gmra.mxu0 %v882
    %v2580 = vpop.f32.mrf.mxu0
    %v2581 = vadd.f32 %v2473, %v2580
    %v2582 = vpop.f32.mrf.mxu0
    %2583 = vmatprep.mubr.f32.mxu0 0.0
    %2584 = vmatmul.mubr.f32.gmra.mxu0 %v1116
    %v2585 = vpop.f32.mrf.mxu0
    %v2586 = vadd.f32 %v2478, %v2585
    %v2587 = vpop.f32.mrf.mxu0
    %2588 = vmatprep.mubr.f32.mxu0 0.0
    %2589 = vmatmul.mubr.f32.gmra.mxu0 %v1350
    %v2590 = vpop.f32.mrf.mxu0
    %v2591 = vadd.f32 %v2483, %v2590
    %v2592 = vpop.f32.mrf.mxu0
    %2593 = vmatprep.mubr.f32.mxu0 0.0
    %2594 = vmatmul.mubr.f32.gmra.mxu0 %v1584
    %v2595 = vpop.f32.mrf.mxu0
    %v2596 = vadd.f32 %v2488, %v2595
    %v2597 = vpop.f32.mrf.mxu0
    %2598 = vmatprep.mubr.f32.mxu0 0.0
    %2599 = vmatmul.mubr.f32.gmra.mxu0 %v1818
    %v2600 = vpop.f32.mrf.mxu0
    %v2601 = vadd.f32 %v2493, %v2600
    %v2602 = vpop.f32.mrf.mxu0
    %2603 = vmatprep.mubr.f32.mxu0 0.0
    %2604 = vmatmul.mubr.f32.gmra.mxu0 %v2052
    %v2605 = vpop.f32.mrf.mxu0
    %v2606 = vadd.f32 %v2498, %v2605
    %v2607 = vpop.f32.mrf.mxu0
    %2608 = vmatprep.mubr.f32.mxu0 0.0
    %2609 = vmatmul.mubr.f32.gmra.mxu0 %v2507
    %v2610 = vpop.f32.mrf.mxu0
    %v2611 = vadd.f32 %v2503, %v2610
    %v2612 = vpop.f32.mrf.mxu0
    %2613 = vdwg.mxu0
    %v2614 = vadd.f32 %v2576, %v2362
    %v2615 = vadd.f32 %v2581, %v2362
    %v2616 = vadd.f32 %v2586, %v2362
    %v2617 = vadd.f32 %v2591, %v2362
    %v2618 = vadd.f32 %v2596, %v2362
    %v2619 = vadd.f32 %v2601, %v2362
    %v2620 = vadd.f32 %v2606, %v2362
    %v2621 = vadd.f32 %v2611, %v2362
    %v2622 = vld [vmem:[#allocation2 + $0xb8] sm:$0x1]
    %vm2623 = vcmp.ge.f32.partialorder %v2614, 0.0
    %vm2624 = vcmp.ge.f32.partialorder %v2615, 0.0
    %vm2625 = vcmp.ge.f32.partialorder %v2616, 0.0
    %vm2626 = vcmp.ge.f32.partialorder %v2617, 0.0
    %vm2627 = vcmp.ge.f32.partialorder %v2618, 0.0
    %vm2628 = vcmp.ge.f32.partialorder %v2619, 0.0
    %vm2629 = vcmp.ge.f32.partialorder %v2620, 0.0
    %vm2630 = vcmp.ge.f32.partialorder %v2621, 0.0
    %s2632 = vtos %v2622
    %v2633 = vstv %s2632
    %v2635 = vmul.f32 %v2633, %v2614
    %v2636 = vmul.f32 %v2633, %v2615
    %v2637 = vmul.f32 %v2633, %v2616
    %v2638 = vmul.f32 %v2633, %v2617
    %v2639 = vmul.f32 %v2633, %v2618
    %v2640 = vmul.f32 %v2633, %v2619
    %v2641 = vmul.f32 %v2633, %v2620
    %v2642 = vmul.f32 %v2633, %v2621
    %v2643 = vsel %vm2623, %v2614, %v2635
    %v2644 = vsel %vm2624, %v2615, %v2636
    %v2645 = vsel %vm2625, %v2616, %v2637
    %v2646 = vsel %vm2626, %v2617, %v2638
    %v2647 = vsel %vm2627, %v2618, %v2639
    %v2648 = vsel %vm2628, %v2619, %v2640
    %v2649 = vsel %vm2629, %v2620, %v2641
    %v2650 = vsel %vm2630, %v2621, %v2642
    %v2651 = vld [vmem:[#allocation2 + $0xc0] sm:$0xff]
    %v2652 = vld [vmem:[#allocation2 + $0xc8] sm:$0xff]
    %v2653 = vld [vmem:[#allocation2 + $0xd0] sm:$0xff]
    %v2654 = vld [vmem:[#allocation2 + $0xd8] sm:$0xff]
    %v2655 = vld [vmem:[#allocation2 + $0xe0] sm:$0x1]
    %v2656 = vlaneseq
    %v2657 = vshrl.u32 %v2656, 7
    %v2658 = vsub.s32 0, %v2657
    %v2659 = vrot.slane %v2655, %v2658
    %vm2660 = vcmask 261120
    %v2662 = vsel %vm2660, %v2643, 0
    %v2665 = vsel %vm2660, %v2644, 0
    %v2668 = vsel %vm2660, %v2645, 0
    %v2671 = vsel %vm2660, %v2646, 0
    %v2674 = vsel %vm2660, %v2647, 0
    %v2677 = vsel %vm2660, %v2648, 0
    %v2680 = vsel %vm2660, %v2649, 0
    %v2683 = vsel %vm2660, %v2650, 0
    %2685 = vmatprep.subr.mxu0 0.0
    %2686 = vmatpush1.msra.mxu0 0.0
    %2687 = vmatprep.subr.mxu0 0.0
    %2688 = vmatpush1.msra.mxu0 0.0
    %2689 = vmatprep.subr.mxu0 0.0
    %2690 = vmatpush1.msra.mxu0 0.0
    %2691 = vmatprep.subr.mxu0 0.0
    %2692 = vmatpush1.msra.mxu0 0.0
    %2693 = vmatprep.subr.mxu0 0.0
    %2694 = vmatpush1.msra.mxu0 0.0
    %2695 = vmatprep.subr.mxu0 0.0
    %2696 = vmatpush1.msra.mxu0 0.0
    %2697 = vmatprep.subr.mxu0 0.0
    %2698 = vmatpush1.msra.mxu0 0.0
    %2699 = vmatprep.subr.mxu0 0.0
    %2700 = vmatpush1.msra.mxu0 0.0
    %2701 = vmatprep.subr.mxu0 0.0
    %2702 = vmatpush1.msra.mxu0 0.0
    %2703 = vmatprep.subr.mxu0 0.0
    %2704 = vmatpush1.msra.mxu0 0.0
    %2705 = vmatprep.subr.mxu0 0.0
    %2706 = vmatpush1.msra.mxu0 0.0
    %2707 = vmatprep.subr.mxu0 0.0
    %2708 = vmatpush1.msra.mxu0 0.0
    %2709 = vmatprep.subr.mxu0 0.0
    %2710 = vmatpush1.msra.mxu0 %v2654
    %2711 = vmatprep.subr.mxu0 0.0
    %2712 = vmatpush1.msra.mxu0 %v2653
    %2713 = vmatprep.subr.mxu0 0.0
    %2714 = vmatpush1.msra.mxu0 %v2652
    %2715 = vmatprep.subr.mxu0 0.0
    %2716 = vmatpush1.msra.mxu0 %v2651
    %2717 = vmatprep.subr.mxu0 0.0
    %2718 = vmatpush2.msra.mxu0 0.0
    %2719 = vmatprep.subr.mxu0 0.0
    %2720 = vmatpush2.msra.mxu0 0.0
    %2721 = vmatprep.subr.mxu0 0.0
    %2722 = vmatpush2.msra.mxu0 0.0
    %2723 = vmatprep.subr.mxu0 0.0
    %2724 = vmatpush2.msra.mxu0 0.0
    %2725 = vmatprep.subr.mxu0 0.0
    %2726 = vmatpush2.msra.mxu0 0.0
    %2727 = vmatprep.subr.mxu0 0.0
    %2728 = vmatpush2.msra.mxu0 0.0
    %2729 = vmatprep.subr.mxu0 0.0
    %2730 = vmatpush2.msra.mxu0 0.0
    %2731 = vmatprep.subr.mxu0 0.0
    %2732 = vmatpush2.msra.mxu0 0.0
    %2733 = vmatprep.subr.mxu0 0.0
    %2734 = vmatpush2.msra.mxu0 0.0
    %2735 = vmatprep.subr.mxu0 0.0
    %2736 = vmatpush2.msra.mxu0 0.0
    %2737 = vmatprep.subr.mxu0 0.0
    %2738 = vmatpush2.msra.mxu0 0.0
    %2739 = vmatprep.subr.mxu0 0.0
    %2740 = vmatpush2.msra.mxu0 0.0
    %2741 = vmatprep.subr.mxu0 0.0
    %2742 = vmatpush2.msra.mxu0 0.0
    %2743 = vmatprep.subr.mxu0 0.0
    %2744 = vmatpush2.msra.mxu0 0.0
    %2745 = vmatprep.subr.mxu0 0.0
    %2746 = vmatpush2.msra.mxu0 0.0
    %2747 = vmatprep.subr.mxu0 0.0
    %2748 = vmatpush2.msra.mxu0 0.0
    %2749 = vmatprep.mubr.f32.mxu0 0.0
    %2750 = vmatmul.mubr.f32.gmra.mxu0 %v2662
    %v2751 = vpop.f32.mrf.mxu0
    %v2752 = vadd.f32 %v2659, %v2751
    %v2753 = vpop.f32.mrf.mxu0
    %2754 = vmatprep.mubr.f32.mxu0 0.0
    %2755 = vmatmul.mubr.f32.gmra.mxu0 %v2665
    %v2756 = vpop.f32.mrf.mxu0
    %v2757 = vadd.f32 %v2659, %v2756
    %v2758 = vpop.f32.mrf.mxu0
    %2759 = vmatprep.mubr.f32.mxu0 0.0
    %2760 = vmatmul.mubr.f32.gmra.mxu0 %v2668
    %v2761 = vpop.f32.mrf.mxu0
    %v2762 = vadd.f32 %v2659, %v2761
    %v2763 = vpop.f32.mrf.mxu0
    %2764 = vmatprep.mubr.f32.mxu0 0.0
    %2765 = vmatmul.mubr.f32.gmra.mxu0 %v2671
    %v2766 = vpop.f32.mrf.mxu0
    %v2767 = vadd.f32 %v2659, %v2766
    %v2768 = vpop.f32.mrf.mxu0
    %2769 = vmatprep.mubr.f32.mxu0 0.0
    %2770 = vmatmul.mubr.f32.gmra.mxu0 %v2674
    %v2771 = vpop.f32.mrf.mxu0
    %v2772 = vadd.f32 %v2659, %v2771
    %v2773 = vpop.f32.mrf.mxu0
    %2774 = vmatprep.mubr.f32.mxu0 0.0
    %2775 = vmatmul.mubr.f32.gmra.mxu0 %v2677
    %v2776 = vpop.f32.mrf.mxu0
    %v2777 = vadd.f32 %v2659, %v2776
    %v2778 = vpop.f32.mrf.mxu0
    %2779 = vmatprep.mubr.f32.mxu0 0.0
    %2780 = vmatmul.mubr.f32.gmra.mxu0 %v2680
    %v2781 = vpop.f32.mrf.mxu0
    %v2782 = vadd.f32 %v2659, %v2781
    %v2783 = vpop.f32.mrf.mxu0
    %2784 = vmatprep.mubr.f32.mxu0 0.0
    %2785 = vmatmul.mubr.f32.gmra.mxu0 %v2683
    %v2786 = vpop.f32.mrf.mxu0
    %v2787 = vadd.f32 %v2659, %v2786
    %v2788 = vpop.f32.mrf.mxu0
    %2789 = vdwg.mxu0
    %v2790 = vld [vmem:[#allocation2 + $0xe8] sm:$0x1]
    %vm2791 = vcmp.ge.f32.partialorder %v2752, 0.0
    %vm2792 = vcmp.ge.f32.partialorder %v2757, 0.0
    %vm2793 = vcmp.ge.f32.partialorder %v2762, 0.0
    %vm2794 = vcmp.ge.f32.partialorder %v2767, 0.0
    %vm2795 = vcmp.ge.f32.partialorder %v2772, 0.0
    %vm2796 = vcmp.ge.f32.partialorder %v2777, 0.0
    %vm2797 = vcmp.ge.f32.partialorder %v2782, 0.0
    %vm2798 = vcmp.ge.f32.partialorder %v2787, 0.0
    %s2800 = vtos %v2790
    %v2801 = vstv %s2800
    %v2803 = vmul.f32 %v2801, %v2752
    %v2804 = vmul.f32 %v2801, %v2757
    %v2805 = vmul.f32 %v2801, %v2762
    %v2806 = vmul.f32 %v2801, %v2767
    %v2807 = vmul.f32 %v2801, %v2772
    %v2808 = vmul.f32 %v2801, %v2777
    %v2809 = vmul.f32 %v2801, %v2782
    %v2810 = vmul.f32 %v2801, %v2787
    %v2811 = vsel %vm2791, %v2752, %v2803
    %v2812 = vsel %vm2792, %v2757, %v2804
    %v2813 = vsel %vm2793, %v2762, %v2805
    %v2814 = vsel %vm2794, %v2767, %v2806
    %v2815 = vsel %vm2795, %v2772, %v2807
    %v2816 = vsel %vm2796, %v2777, %v2808
    %v2817 = vsel %vm2797, %v2782, %v2809
    %v2818 = vsel %vm2798, %v2787, %v2810
    %v2819 = vld [vmem:[#allocation2 + $0xf0] sm:$0xff]
    %v2820 = vld [vmem:[#allocation2 + $0xf8] sm:$0xff]
    %v2821 = vld [vmem:[#allocation2 + $0x100] sm:$0xff]
    %v2822 = vld [vmem:[#allocation2 + $0x108] sm:$0xff]
    %v2823 = vld [vmem:[#allocation2 + $0x110] sm:$0x1]
    %v2824 = vlaneseq
    %v2825 = vshrl.u32 %v2824, 7
    %v2826 = vsub.s32 0, %v2825
    %v2827 = vrot.slane %v2823, %v2826
    %v2829 = vsel %vm2660, %v2811, 0
    %v2832 = vsel %vm2660, %v2812, 0
    %v2835 = vsel %vm2660, %v2813, 0
    %v2838 = vsel %vm2660, %v2814, 0
    %v2841 = vsel %vm2660, %v2815, 0
    %v2844 = vsel %vm2660, %v2816, 0
    %v2847 = vsel %vm2660, %v2817, 0
    %v2850 = vsel %vm2660, %v2818, 0
    %2852 = vmatprep.subr.mxu0 0.0
    %2853 = vmatpush1.msra.mxu0 0.0
    %2854 = vmatprep.subr.mxu0 0.0
    %2855 = vmatpush1.msra.mxu0 0.0
    %2856 = vmatprep.subr.mxu0 0.0
    %2857 = vmatpush1.msra.mxu0 0.0
    %2858 = vmatprep.subr.mxu0 0.0
    %2859 = vmatpush1.msra.mxu0 0.0
    %2860 = vmatprep.subr.mxu0 0.0
    %2861 = vmatpush1.msra.mxu0 0.0
    %2862 = vmatprep.subr.mxu0 0.0
    %2863 = vmatpush1.msra.mxu0 0.0
    %2864 = vmatprep.subr.mxu0 0.0
    %2865 = vmatpush1.msra.mxu0 0.0
    %2866 = vmatprep.subr.mxu0 0.0
    %2867 = vmatpush1.msra.mxu0 0.0
    %2868 = vmatprep.subr.mxu0 0.0
    %2869 = vmatpush1.msra.mxu0 0.0
    %2870 = vmatprep.subr.mxu0 0.0
    %2871 = vmatpush1.msra.mxu0 0.0
    %2872 = vmatprep.subr.mxu0 0.0
    %2873 = vmatpush1.msra.mxu0 0.0
    %2874 = vmatprep.subr.mxu0 0.0
    %2875 = vmatpush1.msra.mxu0 0.0
    %2876 = vmatprep.subr.mxu0 0.0
    %2877 = vmatpush1.msra.mxu0 %v2822
    %2878 = vmatprep.subr.mxu0 0.0
    %2879 = vmatpush1.msra.mxu0 %v2821
    %2880 = vmatprep.subr.mxu0 0.0
    %2881 = vmatpush1.msra.mxu0 %v2820
    %2882 = vmatprep.subr.mxu0 0.0
    %2883 = vmatpush1.msra.mxu0 %v2819
    %2884 = vmatprep.subr.mxu0 0.0
    %2885 = vmatpush2.msra.mxu0 0.0
    %2886 = vmatprep.subr.mxu0 0.0
    %2887 = vmatpush2.msra.mxu0 0.0
    %2888 = vmatprep.subr.mxu0 0.0
    %2889 = vmatpush2.msra.mxu0 0.0
    %2890 = vmatprep.subr.mxu0 0.0
    %2891 = vmatpush2.msra.mxu0 0.0
    %2892 = vmatprep.subr.mxu0 0.0
    %2893 = vmatpush2.msra.mxu0 0.0
    %2894 = vmatprep.subr.mxu0 0.0
    %2895 = vmatpush2.msra.mxu0 0.0
    %2896 = vmatprep.subr.mxu0 0.0
    %2897 = vmatpush2.msra.mxu0 0.0
    %2898 = vmatprep.subr.mxu0 0.0
    %2899 = vmatpush2.msra.mxu0 0.0
    %2900 = vmatprep.subr.mxu0 0.0
    %2901 = vmatpush2.msra.mxu0 0.0
    %2902 = vmatprep.subr.mxu0 0.0
    %2903 = vmatpush2.msra.mxu0 0.0
    %2904 = vmatprep.subr.mxu0 0.0
    %2905 = vmatpush2.msra.mxu0 0.0
    %2906 = vmatprep.subr.mxu0 0.0
    %2907 = vmatpush2.msra.mxu0 0.0
    %2908 = vmatprep.subr.mxu0 0.0
    %2909 = vmatpush2.msra.mxu0 0.0
    %2910 = vmatprep.subr.mxu0 0.0
    %2911 = vmatpush2.msra.mxu0 0.0
    %2912 = vmatprep.subr.mxu0 0.0
    %2913 = vmatpush2.msra.mxu0 0.0
    %2914 = vmatprep.subr.mxu0 0.0
    %2915 = vmatpush2.msra.mxu0 0.0
    %2916 = vmatprep.mubr.f32.mxu0 0.0
    %2917 = vmatmul.mubr.f32.gmra.mxu0 %v2829
    %v2918 = vpop.f32.mrf.mxu0
    %v2919 = vadd.f32 %v2827, %v2918
    %v2920 = vpop.f32.mrf.mxu0
    %2921 = vmatprep.mubr.f32.mxu0 0.0
    %2922 = vmatmul.mubr.f32.gmra.mxu0 %v2832
    %v2923 = vpop.f32.mrf.mxu0
    %v2924 = vadd.f32 %v2827, %v2923
    %v2925 = vpop.f32.mrf.mxu0
    %2926 = vmatprep.mubr.f32.mxu0 0.0
    %2927 = vmatmul.mubr.f32.gmra.mxu0 %v2835
    %v2928 = vpop.f32.mrf.mxu0
    %v2929 = vadd.f32 %v2827, %v2928
    %v2930 = vpop.f32.mrf.mxu0
    %2931 = vmatprep.mubr.f32.mxu0 0.0
    %2932 = vmatmul.mubr.f32.gmra.mxu0 %v2838
    %v2933 = vpop.f32.mrf.mxu0
    %v2934 = vadd.f32 %v2827, %v2933
    %v2935 = vpop.f32.mrf.mxu0
    %2936 = vmatprep.mubr.f32.mxu0 0.0
    %2937 = vmatmul.mubr.f32.gmra.mxu0 %v2841
    %v2938 = vpop.f32.mrf.mxu0
    %v2939 = vadd.f32 %v2827, %v2938
    %v2940 = vpop.f32.mrf.mxu0
    %2941 = vmatprep.mubr.f32.mxu0 0.0
    %2942 = vmatmul.mubr.f32.gmra.mxu0 %v2844
    %v2943 = vpop.f32.mrf.mxu0
    %v2944 = vadd.f32 %v2827, %v2943
    %v2945 = vpop.f32.mrf.mxu0
    %2946 = vmatprep.mubr.f32.mxu0 0.0
    %2947 = vmatmul.mubr.f32.gmra.mxu0 %v2847
    %v2948 = vpop.f32.mrf.mxu0
    %v2949 = vadd.f32 %v2827, %v2948
    %v2950 = vpop.f32.mrf.mxu0
    %2951 = vmatprep.mubr.f32.mxu0 0.0
    %2952 = vmatmul.mubr.f32.gmra.mxu0 %v2850
    %v2953 = vpop.f32.mrf.mxu0
    %v2954 = vadd.f32 %v2827, %v2953
    %v2955 = vpop.f32.mrf.mxu0
    %2956 = vdwg.mxu0
    %v2957 = vxor.u32 %v2919, 2147483648
    %v2958 = vxor.u32 %v2924, 2147483648
    %v2959 = vxor.u32 %v2929, 2147483648
    %v2960 = vxor.u32 %v2934, 2147483648
    %v2961 = vxor.u32 %v2939, 2147483648
    %v2962 = vxor.u32 %v2944, 2147483648
    %v2963 = vxor.u32 %v2949, 2147483648
    %v2964 = vxor.u32 %v2954, 2147483648
    %v2965 = vmul.f32 %v2957, 1.442695
    %v2966 = vpow.pop %v2965
    %v2967 = vmul.f32 %v2958, 1.442695
    %v2968 = vpow.pop %v2967
    %v2969 = vmul.f32 %v2959, 1.442695
    %v2970 = vpow.pop %v2969
    %v2971 = vmul.f32 %v2960, 1.442695
    %v2972 = vpow.pop %v2971
    %v2973 = vmul.f32 %v2961, 1.442695
    %v2974 = vpow.pop %v2973
    %v2975 = vmul.f32 %v2962, 1.442695
    %v2976 = vpow.pop %v2975
    %v2977 = vmul.f32 %v2963, 1.442695
    %v2978 = vpow.pop %v2977
    %v2979 = vmul.f32 %v2964, 1.442695
    %v2980 = vpow.pop %v2979
    %v2981 = vadd.f32 %v2966, 1.0
    %v2982 = vadd.f32 %v2968, 1.0
    %v2983 = vadd.f32 %v2970, 1.0
    %v2984 = vadd.f32 %v2972, 1.0
    %v2985 = vadd.f32 %v2974, 1.0
    %v2986 = vadd.f32 %v2976, 1.0
    %v2987 = vadd.f32 %v2978, 1.0
    %v2988 = vadd.f32 %v2980, 1.0
    %v2989 = vrcp.pop %v2981
    %v2990 = vmul.f32 1.0, %v2989
    %v2991 = vrcp.pop %v2982
    %v2992 = vmul.f32 1.0, %v2991
    %v2993 = vrcp.pop %v2983
    %v2994 = vmul.f32 1.0, %v2993
    %v2995 = vrcp.pop %v2984
    %v2996 = vmul.f32 1.0, %v2995
    %v2997 = vrcp.pop %v2985
    %v2998 = vmul.f32 1.0, %v2997
    %v2999 = vrcp.pop %v2986
    %v3000 = vmul.f32 1.0, %v2999
    %v3001 = vrcp.pop %v2987
    %v3002 = vmul.f32 1.0, %v3001
    %v3003 = vrcp.pop %v2988
    %v3004 = vmul.f32 1.0, %v3003
    %v3005 = vld [vmem:[#allocation2 + $0x118] sm:$0xff]
    %v3006 = vld [vmem:[#allocation2 + $0x120] sm:$0xff]
    %v3007 = vld [vmem:[#allocation2 + $0x160] sm:$0x1]
    %v3008 = vlaneseq
    %v3009 = vshrl.u32 %v3008, 7
    %v3010 = vsub.s32 0, %v3009
    %v3011 = vrot.slane %v3007, %v3010
    %3012 = vmatprep.subr.mxu0 0.0
    %3013 = vmatpush1.msra.mxu0 0.0
    %3014 = vmatprep.subr.mxu0 0.0
    %3015 = vmatpush1.msra.mxu0 0.0
    %3016 = vmatprep.subr.mxu0 0.0
    %3017 = vmatpush1.msra.mxu0 0.0
    %3018 = vmatprep.subr.mxu0 0.0
    %3019 = vmatpush1.msra.mxu0 0.0
    %3020 = vmatprep.subr.mxu0 0.0
    %3021 = vmatpush1.msra.mxu0 0.0
    %3022 = vmatprep.subr.mxu0 0.0
    %3023 = vmatpush1.msra.mxu0 0.0
    %3024 = vmatprep.subr.mxu0 0.0
    %3025 = vmatpush1.msra.mxu0 0.0
    %3026 = vmatprep.subr.mxu0 0.0
    %3027 = vmatpush1.msra.mxu0 0.0
    %3028 = vmatprep.subr.mxu0 0.0
    %3029 = vmatpush1.msra.mxu0 0.0
    %3030 = vmatprep.subr.mxu0 0.0
    %3031 = vmatpush1.msra.mxu0 0.0
    %3032 = vmatprep.subr.mxu0 0.0
    %3033 = vmatpush1.msra.mxu0 0.0
    %3034 = vmatprep.subr.mxu0 0.0
    %3035 = vmatpush1.msra.mxu0 0.0
    %3036 = vmatprep.subr.mxu0 0.0
    %3037 = vmatpush1.msra.mxu0 0.0
    %3038 = vmatprep.subr.mxu0 0.0
    %3039 = vmatpush1.msra.mxu0 0.0
    %3040 = vmatprep.subr.mxu0 0.0
    %3041 = vmatpush1.msra.mxu0 %v3006
    %3042 = vmatprep.subr.mxu0 0.0
    %3043 = vmatpush1.msra.mxu0 %v3005
    %3044 = vmatprep.subr.mxu0 0.0
    %3045 = vmatpush2.msra.mxu0 0.0
    %3046 = vmatprep.subr.mxu0 0.0
    %3047 = vmatpush2.msra.mxu0 0.0
    %3048 = vmatprep.subr.mxu0 0.0
    %3049 = vmatpush2.msra.mxu0 0.0
    %3050 = vmatprep.subr.mxu0 0.0
    %3051 = vmatpush2.msra.mxu0 0.0
    %3052 = vmatprep.subr.mxu0 0.0
    %3053 = vmatpush2.msra.mxu0 0.0
    %3054 = vmatprep.subr.mxu0 0.0
    %3055 = vmatpush2.msra.mxu0 0.0
    %3056 = vmatprep.subr.mxu0 0.0
    %3057 = vmatpush2.msra.mxu0 0.0
    %3058 = vmatprep.subr.mxu0 0.0
    %3059 = vmatpush2.msra.mxu0 0.0
    %3060 = vmatprep.subr.mxu0 0.0
    %3061 = vmatpush2.msra.mxu0 0.0
    %3062 = vmatprep.subr.mxu0 0.0
    %3063 = vmatpush2.msra.mxu0 0.0
    %3064 = vmatprep.subr.mxu0 0.0
    %3065 = vmatpush2.msra.mxu0 0.0
    %3066 = vmatprep.subr.mxu0 0.0
    %3067 = vmatpush2.msra.mxu0 0.0
    %3068 = vmatprep.subr.mxu0 0.0
    %3069 = vmatpush2.msra.mxu0 0.0
    %3070 = vmatprep.subr.mxu0 0.0
    %3071 = vmatpush2.msra.mxu0 0.0
    %3072 = vmatprep.subr.mxu0 0.0
    %3073 = vmatpush2.msra.mxu0 0.0
    %3074 = vmatprep.subr.mxu0 0.0
    %3075 = vmatpush2.msra.mxu0 0.0
    %3076 = vmatprep.mubr.f32.mxu0 0.0
    %3077 = vmatmul.mubr.f32.gmra.mxu0 %v648
    %v3078 = vpop.f32.mrf.mxu0
    %v3079 = vadd.f32 %v3011, %v3078
    %v3080 = vpop.f32.mrf.mxu0
    %3081 = vmatprep.mubr.f32.mxu0 0.0
    %3082 = vmatmul.mubr.f32.gmra.mxu0 %v882
    %v3083 = vpop.f32.mrf.mxu0
    %v3084 = vadd.f32 %v3011, %v3083
    %v3085 = vpop.f32.mrf.mxu0
    %3086 = vmatprep.mubr.f32.mxu0 0.0
    %3087 = vmatmul.mubr.f32.gmra.mxu0 %v1116
    %v3088 = vpop.f32.mrf.mxu0
    %v3089 = vadd.f32 %v3011, %v3088
    %v3090 = vpop.f32.mrf.mxu0
    %3091 = vmatprep.mubr.f32.mxu0 0.0
    %3092 = vmatmul.mubr.f32.gmra.mxu0 %v1350
    %v3093 = vpop.f32.mrf.mxu0
    %v3094 = vadd.f32 %v3011, %v3093
    %v3095 = vpop.f32.mrf.mxu0
    %3096 = vmatprep.mubr.f32.mxu0 0.0
    %3097 = vmatmul.mubr.f32.gmra.mxu0 %v1584
    %v3098 = vpop.f32.mrf.mxu0
    %v3099 = vadd.f32 %v3011, %v3098
    %v3100 = vpop.f32.mrf.mxu0
    %3101 = vmatprep.mubr.f32.mxu0 0.0
    %3102 = vmatmul.mubr.f32.gmra.mxu0 %v1818
    %v3103 = vpop.f32.mrf.mxu0
    %v3104 = vadd.f32 %v3011, %v3103
    %v3105 = vpop.f32.mrf.mxu0
    %3106 = vmatprep.mubr.f32.mxu0 0.0
    %3107 = vmatmul.mubr.f32.gmra.mxu0 %v2052
    %v3108 = vpop.f32.mrf.mxu0
    %v3109 = vadd.f32 %v3011, %v3108
    %v3110 = vpop.f32.mrf.mxu0
    %3111 = vmatprep.mubr.f32.mxu0 0.0
    %3112 = vmatmul.mubr.f32.gmra.mxu0 %v2507
    %v3113 = vpop.f32.mrf.mxu0
    %v3114 = vadd.f32 %v3011, %v3113
    %v3115 = vpop.f32.mrf.mxu0
    %3116 = vdwg.mxu0
    %v3117 = vld [vmem:[#allocation2 + $0x128] sm:$0xff]
    %v3118 = vld [vmem:[#allocation2 + $0x130] sm:$0xff]
    %v3119 = vld [vmem:[#allocation2 + $0x168] sm:$0x1]
    %v3120 = vlaneseq
    %v3121 = vshrl.u32 %v3120, 7
    %v3122 = vsub.s32 0, %v3121
    %v3123 = vrot.slane %v3119, %v3122
    %3124 = vmatprep.subr.mxu0 0.0
    %3125 = vmatpush1.msra.mxu0 0.0
    %3126 = vmatprep.subr.mxu0 0.0
    %3127 = vmatpush1.msra.mxu0 0.0
    %3128 = vmatprep.subr.mxu0 0.0
    %3129 = vmatpush1.msra.mxu0 0.0
    %3130 = vmatprep.subr.mxu0 0.0
    %3131 = vmatpush1.msra.mxu0 0.0
    %3132 = vmatprep.subr.mxu0 0.0
    %3133 = vmatpush1.msra.mxu0 0.0
    %3134 = vmatprep.subr.mxu0 0.0
    %3135 = vmatpush1.msra.mxu0 0.0
    %3136 = vmatprep.subr.mxu0 0.0
    %3137 = vmatpush1.msra.mxu0 0.0
    %3138 = vmatprep.subr.mxu0 0.0
    %3139 = vmatpush1.msra.mxu0 0.0
    %3140 = vmatprep.subr.mxu0 0.0
    %3141 = vmatpush1.msra.mxu0 0.0
    %3142 = vmatprep.subr.mxu0 0.0
    %3143 = vmatpush1.msra.mxu0 0.0
    %3144 = vmatprep.subr.mxu0 0.0
    %3145 = vmatpush1.msra.mxu0 0.0
    %3146 = vmatprep.subr.mxu0 0.0
    %3147 = vmatpush1.msra.mxu0 0.0
    %3148 = vmatprep.subr.mxu0 0.0
    %3149 = vmatpush1.msra.mxu0 0.0
    %3150 = vmatprep.subr.mxu0 0.0
    %3151 = vmatpush1.msra.mxu0 0.0
    %3152 = vmatprep.subr.mxu0 0.0
    %3153 = vmatpush1.msra.mxu0 %v3118
    %3154 = vmatprep.subr.mxu0 0.0
    %3155 = vmatpush1.msra.mxu0 %v3117
    %3156 = vmatprep.subr.mxu0 0.0
    %3157 = vmatpush2.msra.mxu0 0.0
    %3158 = vmatprep.subr.mxu0 0.0
    %3159 = vmatpush2.msra.mxu0 0.0
    %3160 = vmatprep.subr.mxu0 0.0
    %3161 = vmatpush2.msra.mxu0 0.0
    %3162 = vmatprep.subr.mxu0 0.0
    %3163 = vmatpush2.msra.mxu0 0.0
    %3164 = vmatprep.subr.mxu0 0.0
    %3165 = vmatpush2.msra.mxu0 0.0
    %3166 = vmatprep.subr.mxu0 0.0
    %3167 = vmatpush2.msra.mxu0 0.0
    %3168 = vmatprep.subr.mxu0 0.0
    %3169 = vmatpush2.msra.mxu0 0.0
    %3170 = vmatprep.subr.mxu0 0.0
    %3171 = vmatpush2.msra.mxu0 0.0
    %3172 = vmatprep.subr.mxu0 0.0
    %3173 = vmatpush2.msra.mxu0 0.0
    %3174 = vmatprep.subr.mxu0 0.0
    %3175 = vmatpush2.msra.mxu0 0.0
    %3176 = vmatprep.subr.mxu0 0.0
    %3177 = vmatpush2.msra.mxu0 0.0
    %3178 = vmatprep.subr.mxu0 0.0
    %3179 = vmatpush2.msra.mxu0 0.0
    %3180 = vmatprep.subr.mxu0 0.0
    %3181 = vmatpush2.msra.mxu0 0.0
    %3182 = vmatprep.subr.mxu0 0.0
    %3183 = vmatpush2.msra.mxu0 0.0
    %3184 = vmatprep.subr.mxu0 0.0
    %3185 = vmatpush2.msra.mxu0 0.0
    %3186 = vmatprep.subr.mxu0 0.0
    %3187 = vmatpush2.msra.mxu0 0.0
    %3188 = vmatprep.mubr.f32.mxu0 0.0
    %3189 = vmatmul.mubr.f32.gmra.mxu0 %v648
    %v3190 = vpop.f32.mrf.mxu0
    %v3191 = vadd.f32 %v3123, %v3190
    %v3192 = vpop.f32.mrf.mxu0
    %3193 = vmatprep.mubr.f32.mxu0 0.0
    %3194 = vmatmul.mubr.f32.gmra.mxu0 %v882
    %v3195 = vpop.f32.mrf.mxu0
    %v3196 = vadd.f32 %v3123, %v3195
    %v3197 = vpop.f32.mrf.mxu0
    %3198 = vmatprep.mubr.f32.mxu0 0.0
    %3199 = vmatmul.mubr.f32.gmra.mxu0 %v1116
    %v3200 = vpop.f32.mrf.mxu0
    %v3201 = vadd.f32 %v3123, %v3200
    %v3202 = vpop.f32.mrf.mxu0
    %3203 = vmatprep.mubr.f32.mxu0 0.0
    %3204 = vmatmul.mubr.f32.gmra.mxu0 %v1350
    %v3205 = vpop.f32.mrf.mxu0
    %v3206 = vadd.f32 %v3123, %v3205
    %v3207 = vpop.f32.mrf.mxu0
    %3208 = vmatprep.mubr.f32.mxu0 0.0
    %3209 = vmatmul.mubr.f32.gmra.mxu0 %v1584
    %v3210 = vpop.f32.mrf.mxu0
    %v3211 = vadd.f32 %v3123, %v3210
    %v3212 = vpop.f32.mrf.mxu0
    %3213 = vmatprep.mubr.f32.mxu0 0.0
    %3214 = vmatmul.mubr.f32.gmra.mxu0 %v1818
    %v3215 = vpop.f32.mrf.mxu0
    %v3216 = vadd.f32 %v3123, %v3215
    %v3217 = vpop.f32.mrf.mxu0
    %3218 = vmatprep.mubr.f32.mxu0 0.0
    %3219 = vmatmul.mubr.f32.gmra.mxu0 %v2052
    %v3220 = vpop.f32.mrf.mxu0
    %v3221 = vadd.f32 %v3123, %v3220
    %v3222 = vpop.f32.mrf.mxu0
    %3223 = vmatprep.mubr.f32.mxu0 0.0
    %3224 = vmatmul.mubr.f32.gmra.mxu0 %v2507
    %v3225 = vpop.f32.mrf.mxu0
    %v3226 = vadd.f32 %v3123, %v3225
    %v3227 = vpop.f32.mrf.mxu0
    %3228 = vdwg.mxu0
    %v3229 = vld [vmem:[#allocation2 + $0x138] sm:$0xff]
    %v3230 = vld [vmem:[#allocation2 + $0x140] sm:$0xff]
    %v3231 = vld [vmem:[#allocation2 + $0x170] sm:$0x1]
    %v3232 = vlaneseq
    %v3233 = vshrl.u32 %v3232, 7
    %v3234 = vsub.s32 0, %v3233
    %v3235 = vrot.slane %v3231, %v3234
    %3236 = vmatprep.subr.mxu0 0.0
    %3237 = vmatpush1.msra.mxu0 0.0
    %3238 = vmatprep.subr.mxu0 0.0
    %3239 = vmatpush1.msra.mxu0 0.0
    %3240 = vmatprep.subr.mxu0 0.0
    %3241 = vmatpush1.msra.mxu0 0.0
    %3242 = vmatprep.subr.mxu0 0.0
    %3243 = vmatpush1.msra.mxu0 0.0
    %3244 = vmatprep.subr.mxu0 0.0
    %3245 = vmatpush1.msra.mxu0 0.0
    %3246 = vmatprep.subr.mxu0 0.0
    %3247 = vmatpush1.msra.mxu0 0.0
    %3248 = vmatprep.subr.mxu0 0.0
    %3249 = vmatpush1.msra.mxu0 0.0
    %3250 = vmatprep.subr.mxu0 0.0
    %3251 = vmatpush1.msra.mxu0 0.0
    %3252 = vmatprep.subr.mxu0 0.0
    %3253 = vmatpush1.msra.mxu0 0.0
    %3254 = vmatprep.subr.mxu0 0.0
    %3255 = vmatpush1.msra.mxu0 0.0
    %3256 = vmatprep.subr.mxu0 0.0
    %3257 = vmatpush1.msra.mxu0 0.0
    %3258 = vmatprep.subr.mxu0 0.0
    %3259 = vmatpush1.msra.mxu0 0.0
    %3260 = vmatprep.subr.mxu0 0.0
    %3261 = vmatpush1.msra.mxu0 0.0
    %3262 = vmatprep.subr.mxu0 0.0
    %3263 = vmatpush1.msra.mxu0 0.0
    %3264 = vmatprep.subr.mxu0 0.0
    %3265 = vmatpush1.msra.mxu0 %v3230
    %3266 = vmatprep.subr.mxu0 0.0
    %3267 = vmatpush1.msra.mxu0 %v3229
    %3268 = vmatprep.subr.mxu0 0.0
    %3269 = vmatpush2.msra.mxu0 0.0
    %3270 = vmatprep.subr.mxu0 0.0
    %3271 = vmatpush2.msra.mxu0 0.0
    %3272 = vmatprep.subr.mxu0 0.0
    %3273 = vmatpush2.msra.mxu0 0.0
    %3274 = vmatprep.subr.mxu0 0.0
    %3275 = vmatpush2.msra.mxu0 0.0
    %3276 = vmatprep.subr.mxu0 0.0
    %3277 = vmatpush2.msra.mxu0 0.0
    %3278 = vmatprep.subr.mxu0 0.0
    %3279 = vmatpush2.msra.mxu0 0.0
    %3280 = vmatprep.subr.mxu0 0.0
    %3281 = vmatpush2.msra.mxu0 0.0
    %3282 = vmatprep.subr.mxu0 0.0
    %3283 = vmatpush2.msra.mxu0 0.0
    %3284 = vmatprep.subr.mxu0 0.0
    %3285 = vmatpush2.msra.mxu0 0.0
    %3286 = vmatprep.subr.mxu0 0.0
    %3287 = vmatpush2.msra.mxu0 0.0
    %3288 = vmatprep.subr.mxu0 0.0
    %3289 = vmatpush2.msra.mxu0 0.0
    %3290 = vmatprep.subr.mxu0 0.0
    %3291 = vmatpush2.msra.mxu0 0.0
    %3292 = vmatprep.subr.mxu0 0.0
    %3293 = vmatpush2.msra.mxu0 0.0
    %3294 = vmatprep.subr.mxu0 0.0
    %3295 = vmatpush2.msra.mxu0 0.0
    %3296 = vmatprep.subr.mxu0 0.0
    %3297 = vmatpush2.msra.mxu0 0.0
    %3298 = vmatprep.subr.mxu0 0.0
    %3299 = vmatpush2.msra.mxu0 0.0
    %3300 = vmatprep.mubr.f32.mxu0 0.0
    %3301 = vmatmul.mubr.f32.gmra.mxu0 %v648
    %v3302 = vpop.f32.mrf.mxu0
    %v3303 = vadd.f32 %v3235, %v3302
    %v3304 = vpop.f32.mrf.mxu0
    %3305 = vmatprep.mubr.f32.mxu0 0.0
    %3306 = vmatmul.mubr.f32.gmra.mxu0 %v882
    %v3307 = vpop.f32.mrf.mxu0
    %v3308 = vadd.f32 %v3235, %v3307
    %v3309 = vpop.f32.mrf.mxu0
    %3310 = vmatprep.mubr.f32.mxu0 0.0
    %3311 = vmatmul.mubr.f32.gmra.mxu0 %v1116
    %v3312 = vpop.f32.mrf.mxu0
    %v3313 = vadd.f32 %v3235, %v3312
    %v3314 = vpop.f32.mrf.mxu0
    %3315 = vmatprep.mubr.f32.mxu0 0.0
    %3316 = vmatmul.mubr.f32.gmra.mxu0 %v1350
    %v3317 = vpop.f32.mrf.mxu0
    %v3318 = vadd.f32 %v3235, %v3317
    %v3319 = vpop.f32.mrf.mxu0
    %3320 = vmatprep.mubr.f32.mxu0 0.0
    %3321 = vmatmul.mubr.f32.gmra.mxu0 %v1584
    %v3322 = vpop.f32.mrf.mxu0
    %v3323 = vadd.f32 %v3235, %v3322
    %v3324 = vpop.f32.mrf.mxu0
    %3325 = vmatprep.mubr.f32.mxu0 0.0
    %3326 = vmatmul.mubr.f32.gmra.mxu0 %v1818
    %v3327 = vpop.f32.mrf.mxu0
    %v3328 = vadd.f32 %v3235, %v3327
    %v3329 = vpop.f32.mrf.mxu0
    %3330 = vmatprep.mubr.f32.mxu0 0.0
    %3331 = vmatmul.mubr.f32.gmra.mxu0 %v2052
    %v3332 = vpop.f32.mrf.mxu0
    %v3333 = vadd.f32 %v3235, %v3332
    %v3334 = vpop.f32.mrf.mxu0
    %3335 = vmatprep.mubr.f32.mxu0 0.0
    %3336 = vmatmul.mubr.f32.gmra.mxu0 %v2507
    %v3337 = vpop.f32.mrf.mxu0
    %v3338 = vadd.f32 %v3235, %v3337
    %v3339 = vpop.f32.mrf.mxu0
    %3340 = vdwg.mxu0
    %v3341 = vld [vmem:[#allocation2 + $0x148] sm:$0xff]
    %v3342 = vld [vmem:[#allocation2 + $0x150] sm:$0xff]
    %v3343 = vld [vmem:[#allocation2 + $0x158] sm:$0xff]
    %vm3344 = vcmask 64512
    %v3345 = vsel %vm3344, 0.0, 0
    %3347 = vmatprep.subr.mxu0 0.0
    %3348 = vmatpush1.msra.mxu0 0.0
    %3349 = vmatprep.subr.mxu0 0.0
    %3350 = vmatpush1.msra.mxu0 0.0
    %3351 = vmatprep.subr.mxu0 0.0
    %3352 = vmatpush1.msra.mxu0 0.0
    %3353 = vmatprep.subr.mxu0 0.0
    %3354 = vmatpush1.msra.mxu0 0.0
    %3355 = vmatprep.subr.mxu0 0.0
    %3356 = vmatpush1.msra.mxu0 0.0
    %3357 = vmatprep.subr.mxu0 0.0
    %3358 = vmatpush1.msra.mxu0 0.0
    %3359 = vmatprep.subr.mxu0 0.0
    %3360 = vmatpush1.msra.mxu0 0.0
    %3361 = vmatprep.subr.mxu0 0.0
    %3362 = vmatpush1.msra.mxu0 0.0
    %3363 = vmatprep.subr.mxu0 0.0
    %3364 = vmatpush1.msra.mxu0 0.0
    %3365 = vmatprep.subr.mxu0 0.0
    %3366 = vmatpush1.msra.mxu0 0.0
    %3367 = vmatprep.subr.mxu0 0.0
    %3368 = vmatpush1.msra.mxu0 0.0
    %3369 = vmatprep.subr.mxu0 0.0
    %3370 = vmatpush1.msra.mxu0 0.0
    %3371 = vmatprep.subr.mxu0 0.0
    %3372 = vmatpush1.msra.mxu0 0.0
    %3373 = vmatprep.subr.mxu0 0.0
    %3374 = vmatpush1.msra.mxu0 0.0
    %3375 = vmatprep.subr.mxu0 0.0
    %3376 = vmatpush1.msra.mxu0 0.0
    %3377 = vmatprep.subr.mxu0 0.0
    %3378 = vmatpush1.msra.mxu0 %v3341
    %3379 = vmatprep.subr.mxu0 0.0
    %3380 = vmatpush2.msra.mxu0 0.0
    %3381 = vmatprep.subr.mxu0 0.0
    %3382 = vmatpush2.msra.mxu0 0.0
    %3383 = vmatprep.subr.mxu0 0.0
    %3384 = vmatpush2.msra.mxu0 0.0
    %3385 = vmatprep.subr.mxu0 0.0
    %3386 = vmatpush2.msra.mxu0 0.0
    %3387 = vmatprep.subr.mxu0 0.0
    %3388 = vmatpush2.msra.mxu0 0.0
    %3389 = vmatprep.subr.mxu0 0.0
    %3390 = vmatpush2.msra.mxu0 0.0
    %3391 = vmatprep.subr.mxu0 0.0
    %3392 = vmatpush2.msra.mxu0 0.0
    %3393 = vmatprep.subr.mxu0 0.0
    %3394 = vmatpush2.msra.mxu0 0.0
    %3395 = vmatprep.subr.mxu0 0.0
    %3396 = vmatpush2.msra.mxu0 0.0
    %3397 = vmatprep.subr.mxu0 0.0
    %3398 = vmatpush2.msra.mxu0 0.0
    %3399 = vmatprep.subr.mxu0 0.0
    %3400 = vmatpush2.msra.mxu0 0.0
    %3401 = vmatprep.subr.mxu0 0.0
    %3402 = vmatpush2.msra.mxu0 0.0
    %3403 = vmatprep.subr.mxu0 0.0
    %3404 = vmatpush2.msra.mxu0 0.0
    %3405 = vmatprep.subr.mxu0 0.0
    %3406 = vmatpush2.msra.mxu0 0.0
    %3407 = vmatprep.subr.mxu0 0.0
    %3408 = vmatpush2.msra.mxu0 0.0
    %3409 = vmatprep.subr.mxu0 0.0
    %3410 = vmatpush2.msra.mxu0 0.0
    %3411 = vmatprep.mubr.f32.mxu0 0.0
    %3412 = vmatmul.mubr.f32.gmra.mxu0 %v3345
    %v3413 = vpop.f32.mrf.mxu0
    %v3414 = vadd.f32 0.0, %v3413
    %v3415 = vpop.f32.mrf.mxu0
    %3416 = vdwg.mxu0
    %v3417 = vadd.f32 %v3079, %v3414
    %v3418 = vxor.u32 %v3417, 2147483648
    %v3419 = vmul.f32 %v3418, 1.442695
    %v3420 = vpow.pop %v3419
    %v3421 = vadd.f32 %v3420, 1.0
    %v3422 = vrcp.pop %v3421
    %v3423 = vmul.f32 1.0, %v3422
    %3424 = vmatprep.subr.mxu0 0.0
    %3425 = vmatpush1.msra.mxu0 0.0
    %3426 = vmatprep.subr.mxu0 0.0
    %3427 = vmatpush1.msra.mxu0 0.0
    %3428 = vmatprep.subr.mxu0 0.0
    %3429 = vmatpush1.msra.mxu0 0.0
    %3430 = vmatprep.subr.mxu0 0.0
    %3431 = vmatpush1.msra.mxu0 0.0
    %3432 = vmatprep.subr.mxu0 0.0
    %3433 = vmatpush1.msra.mxu0 0.0
    %3434 = vmatprep.subr.mxu0 0.0
    %3435 = vmatpush1.msra.mxu0 0.0
    %3436 = vmatprep.subr.mxu0 0.0
    %3437 = vmatpush1.msra.mxu0 0.0
    %3438 = vmatprep.subr.mxu0 0.0
    %3439 = vmatpush1.msra.mxu0 0.0
    %3440 = vmatprep.subr.mxu0 0.0
    %3441 = vmatpush1.msra.mxu0 0.0
    %3442 = vmatprep.subr.mxu0 0.0
    %3443 = vmatpush1.msra.mxu0 0.0
    %3444 = vmatprep.subr.mxu0 0.0
    %3445 = vmatpush1.msra.mxu0 0.0
    %3446 = vmatprep.subr.mxu0 0.0
    %3447 = vmatpush1.msra.mxu0 0.0
    %3448 = vmatprep.subr.mxu0 0.0
    %3449 = vmatpush1.msra.mxu0 0.0
    %3450 = vmatprep.subr.mxu0 0.0
    %3451 = vmatpush1.msra.mxu0 0.0
    %3452 = vmatprep.subr.mxu0 0.0
    %3453 = vmatpush1.msra.mxu0 0.0
    %3454 = vmatprep.subr.mxu0 0.0
    %3455 = vmatpush1.msra.mxu0 %v3342
    %3456 = vmatprep.subr.mxu0 0.0
    %3457 = vmatpush2.msra.mxu0 0.0
    %3458 = vmatprep.subr.mxu0 0.0
    %3459 = vmatpush2.msra.mxu0 0.0
    %3460 = vmatprep.subr.mxu0 0.0
    %3461 = vmatpush2.msra.mxu0 0.0
    %3462 = vmatprep.subr.mxu0 0.0
    %3463 = vmatpush2.msra.mxu0 0.0
    %3464 = vmatprep.subr.mxu0 0.0
    %3465 = vmatpush2.msra.mxu0 0.0
    %3466 = vmatprep.subr.mxu0 0.0
    %3467 = vmatpush2.msra.mxu0 0.0
    %3468 = vmatprep.subr.mxu0 0.0
    %3469 = vmatpush2.msra.mxu0 0.0
    %3470 = vmatprep.subr.mxu0 0.0
    %3471 = vmatpush2.msra.mxu0 0.0
    %3472 = vmatprep.subr.mxu0 0.0
    %3473 = vmatpush2.msra.mxu0 0.0
    %3474 = vmatprep.subr.mxu0 0.0
    %3475 = vmatpush2.msra.mxu0 0.0
    %3476 = vmatprep.subr.mxu0 0.0
    %3477 = vmatpush2.msra.mxu0 0.0
    %3478 = vmatprep.subr.mxu0 0.0
    %3479 = vmatpush2.msra.mxu0 0.0
    %3480 = vmatprep.subr.mxu0 0.0
    %3481 = vmatpush2.msra.mxu0 0.0
    %3482 = vmatprep.subr.mxu0 0.0
    %3483 = vmatpush2.msra.mxu0 0.0
    %3484 = vmatprep.subr.mxu0 0.0
    %3485 = vmatpush2.msra.mxu0 0.0
    %3486 = vmatprep.subr.mxu0 0.0
    %3487 = vmatpush2.msra.mxu0 0.0
    %3488 = vmatprep.mubr.f32.mxu0 0.0
    %3489 = vmatmul.mubr.f32.gmra.mxu0 %v3345
    %v3490 = vpop.f32.mrf.mxu0
    %v3491 = vadd.f32 0.0, %v3490
    %v3492 = vpop.f32.mrf.mxu0
    %3493 = vdwg.mxu0
    %v3494 = vadd.f32 %v3191, %v3491
    %v3495 = vxor.u32 %v3494, 2147483648
    %v3496 = vmul.f32 %v3495, 1.442695
    %v3497 = vpow.pop %v3496
    %v3498 = vadd.f32 %v3497, 1.0
    %v3499 = vrcp.pop %v3498
    %v3500 = vmul.f32 1.0, %v3499
    %v3501 = vmul.f32 %v3423, 0.0
    %v3503 = vsel %vm3344, %v3501, 0
    %3505 = vmatprep.subr.mxu0 0.0
    %3506 = vmatpush1.msra.mxu0 0.0
    %3507 = vmatprep.subr.mxu0 0.0
    %3508 = vmatpush1.msra.mxu0 0.0
    %3509 = vmatprep.subr.mxu0 0.0
    %3510 = vmatpush1.msra.mxu0 0.0
    %3511 = vmatprep.subr.mxu0 0.0
    %3512 = vmatpush1.msra.mxu0 0.0
    %3513 = vmatprep.subr.mxu0 0.0
    %3514 = vmatpush1.msra.mxu0 0.0
    %3515 = vmatprep.subr.mxu0 0.0
    %3516 = vmatpush1.msra.mxu0 0.0
    %3517 = vmatprep.subr.mxu0 0.0
    %3518 = vmatpush1.msra.mxu0 0.0
    %3519 = vmatprep.subr.mxu0 0.0
    %3520 = vmatpush1.msra.mxu0 0.0
    %3521 = vmatprep.subr.mxu0 0.0
    %3522 = vmatpush1.msra.mxu0 0.0
    %3523 = vmatprep.subr.mxu0 0.0
    %3524 = vmatpush1.msra.mxu0 0.0
    %3525 = vmatprep.subr.mxu0 0.0
    %3526 = vmatpush1.msra.mxu0 0.0
    %3527 = vmatprep.subr.mxu0 0.0
    %3528 = vmatpush1.msra.mxu0 0.0
    %3529 = vmatprep.subr.mxu0 0.0
    %3530 = vmatpush1.msra.mxu0 0.0
    %3531 = vmatprep.subr.mxu0 0.0
    %3532 = vmatpush1.msra.mxu0 0.0
    %3533 = vmatprep.subr.mxu0 0.0
    %3534 = vmatpush1.msra.mxu0 0.0
    %3535 = vmatprep.subr.mxu0 0.0
    %3536 = vmatpush1.msra.mxu0 %v3343
    %3537 = vmatprep.subr.mxu0 0.0
    %3538 = vmatpush2.msra.mxu0 0.0
    %3539 = vmatprep.subr.mxu0 0.0
    %3540 = vmatpush2.msra.mxu0 0.0
    %3541 = vmatprep.subr.mxu0 0.0
    %3542 = vmatpush2.msra.mxu0 0.0
    %3543 = vmatprep.subr.mxu0 0.0
    %3544 = vmatpush2.msra.mxu0 0.0
    %3545 = vmatprep.subr.mxu0 0.0
    %3546 = vmatpush2.msra.mxu0 0.0
    %3547 = vmatprep.subr.mxu0 0.0
    %3548 = vmatpush2.msra.mxu0 0.0
    %3549 = vmatprep.subr.mxu0 0.0
    %3550 = vmatpush2.msra.mxu0 0.0
    %3551 = vmatprep.subr.mxu0 0.0
    %3552 = vmatpush2.msra.mxu0 0.0
    %3553 = vmatprep.subr.mxu0 0.0
    %3554 = vmatpush2.msra.mxu0 0.0
    %3555 = vmatprep.subr.mxu0 0.0
    %3556 = vmatpush2.msra.mxu0 0.0
    %3557 = vmatprep.subr.mxu0 0.0
    %3558 = vmatpush2.msra.mxu0 0.0
    %3559 = vmatprep.subr.mxu0 0.0
    %3560 = vmatpush2.msra.mxu0 0.0
    %3561 = vmatprep.subr.mxu0 0.0
    %3562 = vmatpush2.msra.mxu0 0.0
    %3563 = vmatprep.subr.mxu0 0.0
    %3564 = vmatpush2.msra.mxu0 0.0
    %3565 = vmatprep.subr.mxu0 0.0
    %3566 = vmatpush2.msra.mxu0 0.0
    %3567 = vmatprep.subr.mxu0 0.0
    %3568 = vmatpush2.msra.mxu0 0.0
    %3569 = vmatprep.mubr.f32.mxu0 0.0
    %3570 = vmatmul.mubr.f32.gmra.mxu0 %v3503
    %v3571 = vpop.f32.mrf.mxu0
    %v3572 = vadd.f32 0.0, %v3571
    %v3573 = vpop.f32.mrf.mxu0
    %3574 = vdwg.mxu0
    %v3575 = vadd.f32 %v3303, %v3572
    %v3576 = vtanh.pop %v3575
    %3578 = vset.pattern.permute.xlu0 0
    %3579 = vperm.xlu0 %3578, %v2990
    %v3580 = vpop.permute.xlu0 %3579
    %v3582 = vmul.f32 %v3580, %v3500
    %v3583 = vsub.f32 1.0, %v3582
    %v3584 = vmul.f32 %v3583, 0.0
    %v3585 = vmul.f32 %v3582, %v3576
    %v3586 = vadd.f32 %v3584, %v3585
    %v3588 = vsel %vm3344, %v3586, 0
    %3590 = vmatprep.subr.mxu0 0.0
    %3591 = vmatpush1.msra.mxu0 0.0
    %3592 = vmatprep.subr.mxu0 0.0
    %3593 = vmatpush1.msra.mxu0 0.0
    %3594 = vmatprep.subr.mxu0 0.0
    %3595 = vmatpush1.msra.mxu0 0.0
    %3596 = vmatprep.subr.mxu0 0.0
    %3597 = vmatpush1.msra.mxu0 0.0
    %3598 = vmatprep.subr.mxu0 0.0
    %3599 = vmatpush1.msra.mxu0 0.0
    %3600 = vmatprep.subr.mxu0 0.0
    %3601 = vmatpush1.msra.mxu0 0.0
    %3602 = vmatprep.subr.mxu0 0.0
    %3603 = vmatpush1.msra.mxu0 0.0
    %3604 = vmatprep.subr.mxu0 0.0
    %3605 = vmatpush1.msra.mxu0 0.0
    %3606 = vmatprep.subr.mxu0 0.0
    %3607 = vmatpush1.msra.mxu0 0.0
    %3608 = vmatprep.subr.mxu0 0.0
    %3609 = vmatpush1.msra.mxu0 0.0
    %3610 = vmatprep.subr.mxu0 0.0
    %3611 = vmatpush1.msra.mxu0 0.0
    %3612 = vmatprep.subr.mxu0 0.0
    %3613 = vmatpush1.msra.mxu0 0.0
    %3614 = vmatprep.subr.mxu0 0.0
    %3615 = vmatpush1.msra.mxu0 0.0
    %3616 = vmatprep.subr.mxu0 0.0
    %3617 = vmatpush1.msra.mxu0 0.0
    %3618 = vmatprep.subr.mxu0 0.0
    %3619 = vmatpush1.msra.mxu0 0.0
    %3620 = vmatprep.subr.mxu0 0.0
    %3621 = vmatpush1.msra.mxu0 %v3341
    %3622 = vmatprep.subr.mxu0 0.0
    %3623 = vmatpush2.msra.mxu0 0.0
    %3624 = vmatprep.subr.mxu0 0.0
    %3625 = vmatpush2.msra.mxu0 0.0
    %3626 = vmatprep.subr.mxu0 0.0
    %3627 = vmatpush2.msra.mxu0 0.0
    %3628 = vmatprep.subr.mxu0 0.0
    %3629 = vmatpush2.msra.mxu0 0.0
    %3630 = vmatprep.subr.mxu0 0.0
    %3631 = vmatpush2.msra.mxu0 0.0
    %3632 = vmatprep.subr.mxu0 0.0
    %3633 = vmatpush2.msra.mxu0 0.0
    %3634 = vmatprep.subr.mxu0 0.0
    %3635 = vmatpush2.msra.mxu0 0.0
    %3636 = vmatprep.subr.mxu0 0.0
    %3637 = vmatpush2.msra.mxu0 0.0
    %3638 = vmatprep.subr.mxu0 0.0
    %3639 = vmatpush2.msra.mxu0 0.0
    %3640 = vmatprep.subr.mxu0 0.0
    %3641 = vmatpush2.msra.mxu0 0.0
    %3642 = vmatprep.subr.mxu0 0.0
    %3643 = vmatpush2.msra.mxu0 0.0
    %3644 = vmatprep.subr.mxu0 0.0
    %3645 = vmatpush2.msra.mxu0 0.0
    %3646 = vmatprep.subr.mxu0 0.0
    %3647 = vmatpush2.msra.mxu0 0.0
    %3648 = vmatprep.subr.mxu0 0.0
    %3649 = vmatpush2.msra.mxu0 0.0
    %3650 = vmatprep.subr.mxu0 0.0
    %3651 = vmatpush2.msra.mxu0 0.0
    %3652 = vmatprep.subr.mxu0 0.0
    %3653 = vmatpush2.msra.mxu0 0.0
    %3654 = vmatprep.mubr.f32.mxu0 0.0
    %3655 = vmatmul.mubr.f32.gmra.mxu0 %v3588
    %v3656 = vpop.f32.mrf.mxu0
    %v3657 = vadd.f32 0.0, %v3656
    %v3658 = vpop.f32.mrf.mxu0
    %3659 = vdwg.mxu0
    %v3660 = vadd.f32 %v3084, %v3657
    %v3661 = vxor.u32 %v3660, 2147483648
    %v3662 = vmul.f32 %v3661, 1.442695
    %v3663 = vpow.pop %v3662
    %v3664 = vadd.f32 %v3663, 1.0
    %v3665 = vrcp.pop %v3664
    %v3666 = vmul.f32 1.0, %v3665
    %3667 = vmatprep.subr.mxu0 0.0
    %3668 = vmatpush1.msra.mxu0 0.0
    %3669 = vmatprep.subr.mxu0 0.0
    %3670 = vmatpush1.msra.mxu0 0.0
    %3671 = vmatprep.subr.mxu0 0.0
    %3672 = vmatpush1.msra.mxu0 0.0
    %3673 = vmatprep.subr.mxu0 0.0
    %3674 = vmatpush1.msra.mxu0 0.0
    %3675 = vmatprep.subr.mxu0 0.0
    %3676 = vmatpush1.msra.mxu0 0.0
    %3677 = vmatprep.subr.mxu0 0.0
    %3678 = vmatpush1.msra.mxu0 0.0
    %3679 = vmatprep.subr.mxu0 0.0
    %3680 = vmatpush1.msra.mxu0 0.0
    %3681 = vmatprep.subr.mxu0 0.0
    %3682 = vmatpush1.msra.mxu0 0.0
    %3683 = vmatprep.subr.mxu0 0.0
    %3684 = vmatpush1.msra.mxu0 0.0
    %3685 = vmatprep.subr.mxu0 0.0
    %3686 = vmatpush1.msra.mxu0 0.0
    %3687 = vmatprep.subr.mxu0 0.0
    %3688 = vmatpush1.msra.mxu0 0.0
    %3689 = vmatprep.subr.mxu0 0.0
    %3690 = vmatpush1.msra.mxu0 0.0
    %3691 = vmatprep.subr.mxu0 0.0
    %3692 = vmatpush1.msra.mxu0 0.0
    %3693 = vmatprep.subr.mxu0 0.0
    %3694 = vmatpush1.msra.mxu0 0.0
    %3695 = vmatprep.subr.mxu0 0.0
    %3696 = vmatpush1.msra.mxu0 0.0
    %3697 = vmatprep.subr.mxu0 0.0
    %3698 = vmatpush1.msra.mxu0 %v3342
    %3699 = vmatprep.subr.mxu0 0.0
    %3700 = vmatpush2.msra.mxu0 0.0
    %3701 = vmatprep.subr.mxu0 0.0
    %3702 = vmatpush2.msra.mxu0 0.0
    %3703 = vmatprep.subr.mxu0 0.0
    %3704 = vmatpush2.msra.mxu0 0.0
    %3705 = vmatprep.subr.mxu0 0.0
    %3706 = vmatpush2.msra.mxu0 0.0
    %3707 = vmatprep.subr.mxu0 0.0
    %3708 = vmatpush2.msra.mxu0 0.0
    %3709 = vmatprep.subr.mxu0 0.0
    %3710 = vmatpush2.msra.mxu0 0.0
    %3711 = vmatprep.subr.mxu0 0.0
    %3712 = vmatpush2.msra.mxu0 0.0
    %3713 = vmatprep.subr.mxu0 0.0
    %3714 = vmatpush2.msra.mxu0 0.0
    %3715 = vmatprep.subr.mxu0 0.0
    %3716 = vmatpush2.msra.mxu0 0.0
    %3717 = vmatprep.subr.mxu0 0.0
    %3718 = vmatpush2.msra.mxu0 0.0
    %3719 = vmatprep.subr.mxu0 0.0
    %3720 = vmatpush2.msra.mxu0 0.0
    %3721 = vmatprep.subr.mxu0 0.0
    %3722 = vmatpush2.msra.mxu0 0.0
    %3723 = vmatprep.subr.mxu0 0.0
    %3724 = vmatpush2.msra.mxu0 0.0
    %3725 = vmatprep.subr.mxu0 0.0
    %3726 = vmatpush2.msra.mxu0 0.0
    %3727 = vmatprep.subr.mxu0 0.0
    %3728 = vmatpush2.msra.mxu0 0.0
    %3729 = vmatprep.subr.mxu0 0.0
    %3730 = vmatpush2.msra.mxu0 0.0
    %3731 = vmatprep.mubr.f32.mxu0 0.0
    %3732 = vmatmul.mubr.f32.gmra.mxu0 %v3588
    %v3733 = vpop.f32.mrf.mxu0
    %v3734 = vadd.f32 0.0, %v3733
    %v3735 = vpop.f32.mrf.mxu0
    %3736 = vdwg.mxu0
    %v3737 = vadd.f32 %v3196, %v3734
    %v3738 = vxor.u32 %v3737, 2147483648
    %v3739 = vmul.f32 %v3738, 1.442695
    %v3740 = vpow.pop %v3739
    %v3741 = vadd.f32 %v3740, 1.0
    %v3742 = vrcp.pop %v3741
    %v3743 = vmul.f32 1.0, %v3742
    %v3744 = vmul.f32 %v3666, %v3586
    %v3746 = vsel %vm3344, %v3744, 0
    %3748 = vmatprep.subr.mxu0 0.0
    %3749 = vmatpush1.msra.mxu0 0.0
    %3750 = vmatprep.subr.mxu0 0.0
    %3751 = vmatpush1.msra.mxu0 0.0
    %3752 = vmatprep.subr.mxu0 0.0
    %3753 = vmatpush1.msra.mxu0 0.0
    %3754 = vmatprep.subr.mxu0 0.0
    %3755 = vmatpush1.msra.mxu0 0.0
    %3756 = vmatprep.subr.mxu0 0.0
    %3757 = vmatpush1.msra.mxu0 0.0
    %3758 = vmatprep.subr.mxu0 0.0
    %3759 = vmatpush1.msra.mxu0 0.0
    %3760 = vmatprep.subr.mxu0 0.0
    %3761 = vmatpush1.msra.mxu0 0.0
    %3762 = vmatprep.subr.mxu0 0.0
    %3763 = vmatpush1.msra.mxu0 0.0
    %3764 = vmatprep.subr.mxu0 0.0
    %3765 = vmatpush1.msra.mxu0 0.0
    %3766 = vmatprep.subr.mxu0 0.0
    %3767 = vmatpush1.msra.mxu0 0.0
    %3768 = vmatprep.subr.mxu0 0.0
    %3769 = vmatpush1.msra.mxu0 0.0
    %3770 = vmatprep.subr.mxu0 0.0
    %3771 = vmatpush1.msra.mxu0 0.0
    %3772 = vmatprep.subr.mxu0 0.0
    %3773 = vmatpush1.msra.mxu0 0.0
    %3774 = vmatprep.subr.mxu0 0.0
    %3775 = vmatpush1.msra.mxu0 0.0
    %3776 = vmatprep.subr.mxu0 0.0
    %3777 = vmatpush1.msra.mxu0 0.0
    %3778 = vmatprep.subr.mxu0 0.0
    %3779 = vmatpush1.msra.mxu0 %v3343
    %3780 = vmatprep.subr.mxu0 0.0
    %3781 = vmatpush2.msra.mxu0 0.0
    %3782 = vmatprep.subr.mxu0 0.0
    %3783 = vmatpush2.msra.mxu0 0.0
    %3784 = vmatprep.subr.mxu0 0.0
    %3785 = vmatpush2.msra.mxu0 0.0
    %3786 = vmatprep.subr.mxu0 0.0
    %3787 = vmatpush2.msra.mxu0 0.0
    %3788 = vmatprep.subr.mxu0 0.0
    %3789 = vmatpush2.msra.mxu0 0.0
    %3790 = vmatprep.subr.mxu0 0.0
    %3791 = vmatpush2.msra.mxu0 0.0
    %3792 = vmatprep.subr.mxu0 0.0
    %3793 = vmatpush2.msra.mxu0 0.0
    %3794 = vmatprep.subr.mxu0 0.0
    %3795 = vmatpush2.msra.mxu0 0.0
    %3796 = vmatprep.subr.mxu0 0.0
    %3797 = vmatpush2.msra.mxu0 0.0
    %3798 = vmatprep.subr.mxu0 0.0
    %3799 = vmatpush2.msra.mxu0 0.0
    %3800 = vmatprep.subr.mxu0 0.0
    %3801 = vmatpush2.msra.mxu0 0.0
    %3802 = vmatprep.subr.mxu0 0.0
    %3803 = vmatpush2.msra.mxu0 0.0
    %3804 = vmatprep.subr.mxu0 0.0
    %3805 = vmatpush2.msra.mxu0 0.0
    %3806 = vmatprep.subr.mxu0 0.0
    %3807 = vmatpush2.msra.mxu0 0.0
    %3808 = vmatprep.subr.mxu0 0.0
    %3809 = vmatpush2.msra.mxu0 0.0
    %3810 = vmatprep.subr.mxu0 0.0
    %3811 = vmatpush2.msra.mxu0 0.0
    %3812 = vmatprep.mubr.f32.mxu0 0.0
    %3813 = vmatmul.mubr.f32.gmra.mxu0 %v3746
    %v3814 = vpop.f32.mrf.mxu0
    %v3815 = vadd.f32 0.0, %v3814
    %v3816 = vpop.f32.mrf.mxu0
    %3817 = vdwg.mxu0
    %v3818 = vadd.f32 %v3308, %v3815
    %v3819 = vtanh.pop %v3818
    %3821 = vset.pattern.permute.xlu0 0
    %3822 = vperm.xlu0 %3821, %v2992
    %v3823 = vpop.permute.xlu0 %3822
    %v3825 = vmul.f32 %v3823, %v3743
    %v3826 = vsub.f32 1.0, %v3825
    %v3827 = vmul.f32 %v3826, %v3586
    %v3828 = vmul.f32 %v3825, %v3819
    %v3829 = vadd.f32 %v3827, %v3828
    %v3831 = vsel %vm3344, %v3829, 0
    %3833 = vmatprep.subr.mxu0 0.0
    %3834 = vmatpush1.msra.mxu0 0.0
    %3835 = vmatprep.subr.mxu0 0.0
    %3836 = vmatpush1.msra.mxu0 0.0
    %3837 = vmatprep.subr.mxu0 0.0
    %3838 = vmatpush1.msra.mxu0 0.0
    %3839 = vmatprep.subr.mxu0 0.0
    %3840 = vmatpush1.msra.mxu0 0.0
    %3841 = vmatprep.subr.mxu0 0.0
    %3842 = vmatpush1.msra.mxu0 0.0
    %3843 = vmatprep.subr.mxu0 0.0
    %3844 = vmatpush1.msra.mxu0 0.0
    %3845 = vmatprep.subr.mxu0 0.0
    %3846 = vmatpush1.msra.mxu0 0.0
    %3847 = vmatprep.subr.mxu0 0.0
    %3848 = vmatpush1.msra.mxu0 0.0
    %3849 = vmatprep.subr.mxu0 0.0
    %3850 = vmatpush1.msra.mxu0 0.0
    %3851 = vmatprep.subr.mxu0 0.0
    %3852 = vmatpush1.msra.mxu0 0.0
    %3853 = vmatprep.subr.mxu0 0.0
    %3854 = vmatpush1.msra.mxu0 0.0
    %3855 = vmatprep.subr.mxu0 0.0
    %3856 = vmatpush1.msra.mxu0 0.0
    %3857 = vmatprep.subr.mxu0 0.0
    %3858 = vmatpush1.msra.mxu0 0.0
    %3859 = vmatprep.subr.mxu0 0.0
    %3860 = vmatpush1.msra.mxu0 0.0
    %3861 = vmatprep.subr.mxu0 0.0
    %3862 = vmatpush1.msra.mxu0 0.0
    %3863 = vmatprep.subr.mxu0 0.0
    %3864 = vmatpush1.msra.mxu0 %v3341
    %3865 = vmatprep.subr.mxu0 0.0
    %3866 = vmatpush2.msra.mxu0 0.0
    %3867 = vmatprep.subr.mxu0 0.0
    %3868 = vmatpush2.msra.mxu0 0.0
    %3869 = vmatprep.subr.mxu0 0.0
    %3870 = vmatpush2.msra.mxu0 0.0
    %3871 = vmatprep.subr.mxu0 0.0
    %3872 = vmatpush2.msra.mxu0 0.0
    %3873 = vmatprep.subr.mxu0 0.0
    %3874 = vmatpush2.msra.mxu0 0.0
    %3875 = vmatprep.subr.mxu0 0.0
    %3876 = vmatpush2.msra.mxu0 0.0
    %3877 = vmatprep.subr.mxu0 0.0
    %3878 = vmatpush2.msra.mxu0 0.0
    %3879 = vmatprep.subr.mxu0 0.0
    %3880 = vmatpush2.msra.mxu0 0.0
    %3881 = vmatprep.subr.mxu0 0.0
    %3882 = vmatpush2.msra.mxu0 0.0
    %3883 = vmatprep.subr.mxu0 0.0
    %3884 = vmatpush2.msra.mxu0 0.0
    %3885 = vmatprep.subr.mxu0 0.0
    %3886 = vmatpush2.msra.mxu0 0.0
    %3887 = vmatprep.subr.mxu0 0.0
    %3888 = vmatpush2.msra.mxu0 0.0
    %3889 = vmatprep.subr.mxu0 0.0
    %3890 = vmatpush2.msra.mxu0 0.0
    %3891 = vmatprep.subr.mxu0 0.0
    %3892 = vmatpush2.msra.mxu0 0.0
    %3893 = vmatprep.subr.mxu0 0.0
    %3894 = vmatpush2.msra.mxu0 0.0
    %3895 = vmatprep.subr.mxu0 0.0
    %3896 = vmatpush2.msra.mxu0 0.0
    %3897 = vmatprep.mubr.f32.mxu0 0.0
    %3898 = vmatmul.mubr.f32.gmra.mxu0 %v3831
    %v3899 = vpop.f32.mrf.mxu0
    %v3900 = vadd.f32 0.0, %v3899
    %v3901 = vpop.f32.mrf.mxu0
    %3902 = vdwg.mxu0
    %v3903 = vadd.f32 %v3089, %v3900
    %v3904 = vxor.u32 %v3903, 2147483648
    %v3905 = vmul.f32 %v3904, 1.442695
    %v3906 = vpow.pop %v3905
    %v3907 = vadd.f32 %v3906, 1.0
    %v3908 = vrcp.pop %v3907
    %v3909 = vmul.f32 1.0, %v3908
    %3910 = vmatprep.subr.mxu0 0.0
    %3911 = vmatpush1.msra.mxu0 0.0
    %3912 = vmatprep.subr.mxu0 0.0
    %3913 = vmatpush1.msra.mxu0 0.0
    %3914 = vmatprep.subr.mxu0 0.0
    %3915 = vmatpush1.msra.mxu0 0.0
    %3916 = vmatprep.subr.mxu0 0.0
    %3917 = vmatpush1.msra.mxu0 0.0
    %3918 = vmatprep.subr.mxu0 0.0
    %3919 = vmatpush1.msra.mxu0 0.0
    %3920 = vmatprep.subr.mxu0 0.0
    %3921 = vmatpush1.msra.mxu0 0.0
    %3922 = vmatprep.subr.mxu0 0.0
    %3923 = vmatpush1.msra.mxu0 0.0
    %3924 = vmatprep.subr.mxu0 0.0
    %3925 = vmatpush1.msra.mxu0 0.0
    %3926 = vmatprep.subr.mxu0 0.0
    %3927 = vmatpush1.msra.mxu0 0.0
    %3928 = vmatprep.subr.mxu0 0.0
    %3929 = vmatpush1.msra.mxu0 0.0
    %3930 = vmatprep.subr.mxu0 0.0
    %3931 = vmatpush1.msra.mxu0 0.0
    %3932 = vmatprep.subr.mxu0 0.0
    %3933 = vmatpush1.msra.mxu0 0.0
    %3934 = vmatprep.subr.mxu0 0.0
    %3935 = vmatpush1.msra.mxu0 0.0
    %3936 = vmatprep.subr.mxu0 0.0
    %3937 = vmatpush1.msra.mxu0 0.0
    %3938 = vmatprep.subr.mxu0 0.0
    %3939 = vmatpush1.msra.mxu0 0.0
    %3940 = vmatprep.subr.mxu0 0.0
    %3941 = vmatpush1.msra.mxu0 %v3342
    %3942 = vmatprep.subr.mxu0 0.0
    %3943 = vmatpush2.msra.mxu0 0.0
    %3944 = vmatprep.subr.mxu0 0.0
    %3945 = vmatpush2.msra.mxu0 0.0
    %3946 = vmatprep.subr.mxu0 0.0
    %3947 = vmatpush2.msra.mxu0 0.0
    %3948 = vmatprep.subr.mxu0 0.0
    %3949 = vmatpush2.msra.mxu0 0.0
    %3950 = vmatprep.subr.mxu0 0.0
    %3951 = vmatpush2.msra.mxu0 0.0
    %3952 = vmatprep.subr.mxu0 0.0
    %3953 = vmatpush2.msra.mxu0 0.0
    %3954 = vmatprep.subr.mxu0 0.0
    %3955 = vmatpush2.msra.mxu0 0.0
    %3956 = vmatprep.subr.mxu0 0.0
    %3957 = vmatpush2.msra.mxu0 0.0
    %3958 = vmatprep.subr.mxu0 0.0
    %3959 = vmatpush2.msra.mxu0 0.0
    %3960 = vmatprep.subr.mxu0 0.0
    %3961 = vmatpush2.msra.mxu0 0.0
    %3962 = vmatprep.subr.mxu0 0.0
    %3963 = vmatpush2.msra.mxu0 0.0
    %3964 = vmatprep.subr.mxu0 0.0
    %3965 = vmatpush2.msra.mxu0 0.0
    %3966 = vmatprep.subr.mxu0 0.0
    %3967 = vmatpush2.msra.mxu0 0.0
    %3968 = vmatprep.subr.mxu0 0.0
    %3969 = vmatpush2.msra.mxu0 0.0
    %3970 = vmatprep.subr.mxu0 0.0
    %3971 = vmatpush2.msra.mxu0 0.0
    %3972 = vmatprep.subr.mxu0 0.0
    %3973 = vmatpush2.msra.mxu0 0.0
    %3974 = vmatprep.mubr.f32.mxu0 0.0
    %3975 = vmatmul.mubr.f32.gmra.mxu0 %v3831
    %v3976 = vpop.f32.mrf.mxu0
    %v3977 = vadd.f32 0.0, %v3976
    %v3978 = vpop.f32.mrf.mxu0
    %3979 = vdwg.mxu0
    %v3980 = vadd.f32 %v3201, %v3977
    %v3981 = vxor.u32 %v3980, 2147483648
    %v3982 = vmul.f32 %v3981, 1.442695
    %v3983 = vpow.pop %v3982
    %v3984 = vadd.f32 %v3983, 1.0
    %v3985 = vrcp.pop %v3984
    %v3986 = vmul.f32 1.0, %v3985
    %v3987 = vmul.f32 %v3909, %v3829
    %v3989 = vsel %vm3344, %v3987, 0
    %3991 = vmatprep.subr.mxu0 0.0
    %3992 = vmatpush1.msra.mxu0 0.0
    %3993 = vmatprep.subr.mxu0 0.0
    %3994 = vmatpush1.msra.mxu0 0.0
    %3995 = vmatprep.subr.mxu0 0.0
    %3996 = vmatpush1.msra.mxu0 0.0
    %3997 = vmatprep.subr.mxu0 0.0
    %3998 = vmatpush1.msra.mxu0 0.0
    %3999 = vmatprep.subr.mxu0 0.0
    %4000 = vmatpush1.msra.mxu0 0.0
    %4001 = vmatprep.subr.mxu0 0.0
    %4002 = vmatpush1.msra.mxu0 0.0
    %4003 = vmatprep.subr.mxu0 0.0
    %4004 = vmatpush1.msra.mxu0 0.0
    %4005 = vmatprep.subr.mxu0 0.0
    %4006 = vmatpush1.msra.mxu0 0.0
    %4007 = vmatprep.subr.mxu0 0.0
    %4008 = vmatpush1.msra.mxu0 0.0
    %4009 = vmatprep.subr.mxu0 0.0
    %4010 = vmatpush1.msra.mxu0 0.0
    %4011 = vmatprep.subr.mxu0 0.0
    %4012 = vmatpush1.msra.mxu0 0.0
    %4013 = vmatprep.subr.mxu0 0.0
    %4014 = vmatpush1.msra.mxu0 0.0
    %4015 = vmatprep.subr.mxu0 0.0
    %4016 = vmatpush1.msra.mxu0 0.0
    %4017 = vmatprep.subr.mxu0 0.0
    %4018 = vmatpush1.msra.mxu0 0.0
    %4019 = vmatprep.subr.mxu0 0.0
    %4020 = vmatpush1.msra.mxu0 0.0
    %4021 = vmatprep.subr.mxu0 0.0
    %4022 = vmatpush1.msra.mxu0 %v3343
    %4023 = vmatprep.subr.mxu0 0.0
    %4024 = vmatpush2.msra.mxu0 0.0
    %4025 = vmatprep.subr.mxu0 0.0
    %4026 = vmatpush2.msra.mxu0 0.0
    %4027 = vmatprep.subr.mxu0 0.0
    %4028 = vmatpush2.msra.mxu0 0.0
    %4029 = vmatprep.subr.mxu0 0.0
    %4030 = vmatpush2.msra.mxu0 0.0
    %4031 = vmatprep.subr.mxu0 0.0
    %4032 = vmatpush2.msra.mxu0 0.0
    %4033 = vmatprep.subr.mxu0 0.0
    %4034 = vmatpush2.msra.mxu0 0.0
    %4035 = vmatprep.subr.mxu0 0.0
    %4036 = vmatpush2.msra.mxu0 0.0
    %4037 = vmatprep.subr.mxu0 0.0
    %4038 = vmatpush2.msra.mxu0 0.0
    %4039 = vmatprep.subr.mxu0 0.0
    %4040 = vmatpush2.msra.mxu0 0.0
    %4041 = vmatprep.subr.mxu0 0.0
    %4042 = vmatpush2.msra.mxu0 0.0
    %4043 = vmatprep.subr.mxu0 0.0
    %4044 = vmatpush2.msra.mxu0 0.0
    %4045 = vmatprep.subr.mxu0 0.0
    %4046 = vmatpush2.msra.mxu0 0.0
    %4047 = vmatprep.subr.mxu0 0.0
    %4048 = vmatpush2.msra.mxu0 0.0
    %4049 = vmatprep.subr.mxu0 0.0
    %4050 = vmatpush2.msra.mxu0 0.0
    %4051 = vmatprep.subr.mxu0 0.0
    %4052 = vmatpush2.msra.mxu0 0.0
    %4053 = vmatprep.subr.mxu0 0.0
    %4054 = vmatpush2.msra.mxu0 0.0
    %4055 = vmatprep.mubr.f32.mxu0 0.0
    %4056 = vmatmul.mubr.f32.gmra.mxu0 %v3989
    %v4057 = vpop.f32.mrf.mxu0
    %v4058 = vadd.f32 0.0, %v4057
    %v4059 = vpop.f32.mrf.mxu0
    %4060 = vdwg.mxu0
    %v4061 = vadd.f32 %v3313, %v4058
    %v4062 = vtanh.pop %v4061
    %4064 = vset.pattern.permute.xlu0 0
    %4065 = vperm.xlu0 %4064, %v2994
    %v4066 = vpop.permute.xlu0 %4065
    %v4068 = vmul.f32 %v4066, %v3986
    %v4069 = vsub.f32 1.0, %v4068
    %v4070 = vmul.f32 %v4069, %v3829
    %v4071 = vmul.f32 %v4068, %v4062
    %v4072 = vadd.f32 %v4070, %v4071
    %v4074 = vsel %vm3344, %v4072, 0
    %4076 = vmatprep.subr.mxu0 0.0
    %4077 = vmatpush1.msra.mxu0 0.0
    %4078 = vmatprep.subr.mxu0 0.0
    %4079 = vmatpush1.msra.mxu0 0.0
    %4080 = vmatprep.subr.mxu0 0.0
    %4081 = vmatpush1.msra.mxu0 0.0
    %4082 = vmatprep.subr.mxu0 0.0
    %4083 = vmatpush1.msra.mxu0 0.0
    %4084 = vmatprep.subr.mxu0 0.0
    %4085 = vmatpush1.msra.mxu0 0.0
    %4086 = vmatprep.subr.mxu0 0.0
    %4087 = vmatpush1.msra.mxu0 0.0
    %4088 = vmatprep.subr.mxu0 0.0
    %4089 = vmatpush1.msra.mxu0 0.0
    %4090 = vmatprep.subr.mxu0 0.0
    %4091 = vmatpush1.msra.mxu0 0.0
    %4092 = vmatprep.subr.mxu0 0.0
    %4093 = vmatpush1.msra.mxu0 0.0
    %4094 = vmatprep.subr.mxu0 0.0
    %4095 = vmatpush1.msra.mxu0 0.0
    %4096 = vmatprep.subr.mxu0 0.0
    %4097 = vmatpush1.msra.mxu0 0.0
    %4098 = vmatprep.subr.mxu0 0.0
    %4099 = vmatpush1.msra.mxu0 0.0
    %4100 = vmatprep.subr.mxu0 0.0
    %4101 = vmatpush1.msra.mxu0 0.0
    %4102 = vmatprep.subr.mxu0 0.0
    %4103 = vmatpush1.msra.mxu0 0.0
    %4104 = vmatprep.subr.mxu0 0.0
    %4105 = vmatpush1.msra.mxu0 0.0
    %4106 = vmatprep.subr.mxu0 0.0
    %4107 = vmatpush1.msra.mxu0 %v3341
    %4108 = vmatprep.subr.mxu0 0.0
    %4109 = vmatpush2.msra.mxu0 0.0
    %4110 = vmatprep.subr.mxu0 0.0
    %4111 = vmatpush2.msra.mxu0 0.0
    %4112 = vmatprep.subr.mxu0 0.0
    %4113 = vmatpush2.msra.mxu0 0.0
    %4114 = vmatprep.subr.mxu0 0.0
    %4115 = vmatpush2.msra.mxu0 0.0
    %4116 = vmatprep.subr.mxu0 0.0
    %4117 = vmatpush2.msra.mxu0 0.0
    %4118 = vmatprep.subr.mxu0 0.0
    %4119 = vmatpush2.msra.mxu0 0.0
    %4120 = vmatprep.subr.mxu0 0.0
    %4121 = vmatpush2.msra.mxu0 0.0
    %4122 = vmatprep.subr.mxu0 0.0
    %4123 = vmatpush2.msra.mxu0 0.0
    %4124 = vmatprep.subr.mxu0 0.0
    %4125 = vmatpush2.msra.mxu0 0.0
    %4126 = vmatprep.subr.mxu0 0.0
    %4127 = vmatpush2.msra.mxu0 0.0
    %4128 = vmatprep.subr.mxu0 0.0
    %4129 = vmatpush2.msra.mxu0 0.0
    %4130 = vmatprep.subr.mxu0 0.0
    %4131 = vmatpush2.msra.mxu0 0.0
    %4132 = vmatprep.subr.mxu0 0.0
    %4133 = vmatpush2.msra.mxu0 0.0
    %4134 = vmatprep.subr.mxu0 0.0
    %4135 = vmatpush2.msra.mxu0 0.0
    %4136 = vmatprep.subr.mxu0 0.0
    %4137 = vmatpush2.msra.mxu0 0.0
    %4138 = vmatprep.subr.mxu0 0.0
    %4139 = vmatpush2.msra.mxu0 0.0
    %4140 = vmatprep.mubr.f32.mxu0 0.0
    %4141 = vmatmul.mubr.f32.gmra.mxu0 %v4074
    %v4142 = vpop.f32.mrf.mxu0
    %v4143 = vadd.f32 0.0, %v4142
    %v4144 = vpop.f32.mrf.mxu0
    %4145 = vdwg.mxu0
    %v4146 = vadd.f32 %v3094, %v4143
    %v4147 = vxor.u32 %v4146, 2147483648
    %v4148 = vmul.f32 %v4147, 1.442695
    %v4149 = vpow.pop %v4148
    %v4150 = vadd.f32 %v4149, 1.0
    %v4151 = vrcp.pop %v4150
    %v4152 = vmul.f32 1.0, %v4151
    %4153 = vmatprep.subr.mxu0 0.0
    %4154 = vmatpush1.msra.mxu0 0.0
    %4155 = vmatprep.subr.mxu0 0.0
    %4156 = vmatpush1.msra.mxu0 0.0
    %4157 = vmatprep.subr.mxu0 0.0
    %4158 = vmatpush1.msra.mxu0 0.0
    %4159 = vmatprep.subr.mxu0 0.0
    %4160 = vmatpush1.msra.mxu0 0.0
    %4161 = vmatprep.subr.mxu0 0.0
    %4162 = vmatpush1.msra.mxu0 0.0
    %4163 = vmatprep.subr.mxu0 0.0
    %4164 = vmatpush1.msra.mxu0 0.0
    %4165 = vmatprep.subr.mxu0 0.0
    %4166 = vmatpush1.msra.mxu0 0.0
    %4167 = vmatprep.subr.mxu0 0.0
    %4168 = vmatpush1.msra.mxu0 0.0
    %4169 = vmatprep.subr.mxu0 0.0
    %4170 = vmatpush1.msra.mxu0 0.0
    %4171 = vmatprep.subr.mxu0 0.0
    %4172 = vmatpush1.msra.mxu0 0.0
    %4173 = vmatprep.subr.mxu0 0.0
    %4174 = vmatpush1.msra.mxu0 0.0
    %4175 = vmatprep.subr.mxu0 0.0
    %4176 = vmatpush1.msra.mxu0 0.0
    %4177 = vmatprep.subr.mxu0 0.0
    %4178 = vmatpush1.msra.mxu0 0.0
    %4179 = vmatprep.subr.mxu0 0.0
    %4180 = vmatpush1.msra.mxu0 0.0
    %4181 = vmatprep.subr.mxu0 0.0
    %4182 = vmatpush1.msra.mxu0 0.0
    %4183 = vmatprep.subr.mxu0 0.0
    %4184 = vmatpush1.msra.mxu0 %v3342
    %4185 = vmatprep.subr.mxu0 0.0
    %4186 = vmatpush2.msra.mxu0 0.0
    %4187 = vmatprep.subr.mxu0 0.0
    %4188 = vmatpush2.msra.mxu0 0.0
    %4189 = vmatprep.subr.mxu0 0.0
    %4190 = vmatpush2.msra.mxu0 0.0
    %4191 = vmatprep.subr.mxu0 0.0
    %4192 = vmatpush2.msra.mxu0 0.0
    %4193 = vmatprep.subr.mxu0 0.0
    %4194 = vmatpush2.msra.mxu0 0.0
    %4195 = vmatprep.subr.mxu0 0.0
    %4196 = vmatpush2.msra.mxu0 0.0
    %4197 = vmatprep.subr.mxu0 0.0
    %4198 = vmatpush2.msra.mxu0 0.0
    %4199 = vmatprep.subr.mxu0 0.0
    %4200 = vmatpush2.msra.mxu0 0.0
    %4201 = vmatprep.subr.mxu0 0.0
    %4202 = vmatpush2.msra.mxu0 0.0
    %4203 = vmatprep.subr.mxu0 0.0
    %4204 = vmatpush2.msra.mxu0 0.0
    %4205 = vmatprep.subr.mxu0 0.0
    %4206 = vmatpush2.msra.mxu0 0.0
    %4207 = vmatprep.subr.mxu0 0.0
    %4208 = vmatpush2.msra.mxu0 0.0
    %4209 = vmatprep.subr.mxu0 0.0
    %4210 = vmatpush2.msra.mxu0 0.0
    %4211 = vmatprep.subr.mxu0 0.0
    %4212 = vmatpush2.msra.mxu0 0.0
    %4213 = vmatprep.subr.mxu0 0.0
    %4214 = vmatpush2.msra.mxu0 0.0
    %4215 = vmatprep.subr.mxu0 0.0
    %4216 = vmatpush2.msra.mxu0 0.0
    %4217 = vmatprep.mubr.f32.mxu0 0.0
    %4218 = vmatmul.mubr.f32.gmra.mxu0 %v4074
    %v4219 = vpop.f32.mrf.mxu0
    %v4220 = vadd.f32 0.0, %v4219
    %v4221 = vpop.f32.mrf.mxu0
    %4222 = vdwg.mxu0
    %v4223 = vadd.f32 %v3206, %v4220
    %v4224 = vxor.u32 %v4223, 2147483648
    %v4225 = vmul.f32 %v4224, 1.442695
    %v4226 = vpow.pop %v4225
    %v4227 = vadd.f32 %v4226, 1.0
    %v4228 = vrcp.pop %v4227
    %v4229 = vmul.f32 1.0, %v4228
    %v4230 = vmul.f32 %v4152, %v4072
    %v4232 = vsel %vm3344, %v4230, 0
    %4234 = vmatprep.subr.mxu0 0.0
    %4235 = vmatpush1.msra.mxu0 0.0
    %4236 = vmatprep.subr.mxu0 0.0
    %4237 = vmatpush1.msra.mxu0 0.0
    %4238 = vmatprep.subr.mxu0 0.0
    %4239 = vmatpush1.msra.mxu0 0.0
    %4240 = vmatprep.subr.mxu0 0.0
    %4241 = vmatpush1.msra.mxu0 0.0
    %4242 = vmatprep.subr.mxu0 0.0
    %4243 = vmatpush1.msra.mxu0 0.0
    %4244 = vmatprep.subr.mxu0 0.0
    %4245 = vmatpush1.msra.mxu0 0.0
    %4246 = vmatprep.subr.mxu0 0.0
    %4247 = vmatpush1.msra.mxu0 0.0
    %4248 = vmatprep.subr.mxu0 0.0
    %4249 = vmatpush1.msra.mxu0 0.0
    %4250 = vmatprep.subr.mxu0 0.0
    %4251 = vmatpush1.msra.mxu0 0.0
    %4252 = vmatprep.subr.mxu0 0.0
    %4253 = vmatpush1.msra.mxu0 0.0
    %4254 = vmatprep.subr.mxu0 0.0
    %4255 = vmatpush1.msra.mxu0 0.0
    %4256 = vmatprep.subr.mxu0 0.0
    %4257 = vmatpush1.msra.mxu0 0.0
    %4258 = vmatprep.subr.mxu0 0.0
    %4259 = vmatpush1.msra.mxu0 0.0
    %4260 = vmatprep.subr.mxu0 0.0
    %4261 = vmatpush1.msra.mxu0 0.0
    %4262 = vmatprep.subr.mxu0 0.0
    %4263 = vmatpush1.msra.mxu0 0.0
    %4264 = vmatprep.subr.mxu0 0.0
    %4265 = vmatpush1.msra.mxu0 %v3343
    %4266 = vmatprep.subr.mxu0 0.0
    %4267 = vmatpush2.msra.mxu0 0.0
    %4268 = vmatprep.subr.mxu0 0.0
    %4269 = vmatpush2.msra.mxu0 0.0
    %4270 = vmatprep.subr.mxu0 0.0
    %4271 = vmatpush2.msra.mxu0 0.0
    %4272 = vmatprep.subr.mxu0 0.0
    %4273 = vmatpush2.msra.mxu0 0.0
    %4274 = vmatprep.subr.mxu0 0.0
    %4275 = vmatpush2.msra.mxu0 0.0
    %4276 = vmatprep.subr.mxu0 0.0
    %4277 = vmatpush2.msra.mxu0 0.0
    %4278 = vmatprep.subr.mxu0 0.0
    %4279 = vmatpush2.msra.mxu0 0.0
    %4280 = vmatprep.subr.mxu0 0.0
    %4281 = vmatpush2.msra.mxu0 0.0
    %4282 = vmatprep.subr.mxu0 0.0
    %4283 = vmatpush2.msra.mxu0 0.0
    %4284 = vmatprep.subr.mxu0 0.0
    %4285 = vmatpush2.msra.mxu0 0.0
    %4286 = vmatprep.subr.mxu0 0.0
    %4287 = vmatpush2.msra.mxu0 0.0
    %4288 = vmatprep.subr.mxu0 0.0
    %4289 = vmatpush2.msra.mxu0 0.0
    %4290 = vmatprep.subr.mxu0 0.0
    %4291 = vmatpush2.msra.mxu0 0.0
    %4292 = vmatprep.subr.mxu0 0.0
    %4293 = vmatpush2.msra.mxu0 0.0
    %4294 = vmatprep.subr.mxu0 0.0
    %4295 = vmatpush2.msra.mxu0 0.0
    %4296 = vmatprep.subr.mxu0 0.0
    %4297 = vmatpush2.msra.mxu0 0.0
    %4298 = vmatprep.mubr.f32.mxu0 0.0
    %4299 = vmatmul.mubr.f32.gmra.mxu0 %v4232
    %v4300 = vpop.f32.mrf.mxu0
    %v4301 = vadd.f32 0.0, %v4300
    %v4302 = vpop.f32.mrf.mxu0
    %4303 = vdwg.mxu0
    %v4304 = vadd.f32 %v3318, %v4301
    %v4305 = vtanh.pop %v4304
    %4307 = vset.pattern.permute.xlu0 0
    %4308 = vperm.xlu0 %4307, %v2996
    %v4309 = vpop.permute.xlu0 %4308
    %v4311 = vmul.f32 %v4309, %v4229
    %v4312 = vsub.f32 1.0, %v4311
    %v4313 = vmul.f32 %v4312, %v4072
    %v4314 = vmul.f32 %v4311, %v4305
    %v4315 = vadd.f32 %v4313, %v4314
    %v4317 = vsel %vm3344, %v4315, 0
    %4319 = vmatprep.subr.mxu0 0.0
    %4320 = vmatpush1.msra.mxu0 0.0
    %4321 = vmatprep.subr.mxu0 0.0
    %4322 = vmatpush1.msra.mxu0 0.0
    %4323 = vmatprep.subr.mxu0 0.0
    %4324 = vmatpush1.msra.mxu0 0.0
    %4325 = vmatprep.subr.mxu0 0.0
    %4326 = vmatpush1.msra.mxu0 0.0
    %4327 = vmatprep.subr.mxu0 0.0
    %4328 = vmatpush1.msra.mxu0 0.0
    %4329 = vmatprep.subr.mxu0 0.0
    %4330 = vmatpush1.msra.mxu0 0.0
    %4331 = vmatprep.subr.mxu0 0.0
    %4332 = vmatpush1.msra.mxu0 0.0
    %4333 = vmatprep.subr.mxu0 0.0
    %4334 = vmatpush1.msra.mxu0 0.0
    %4335 = vmatprep.subr.mxu0 0.0
    %4336 = vmatpush1.msra.mxu0 0.0
    %4337 = vmatprep.subr.mxu0 0.0
    %4338 = vmatpush1.msra.mxu0 0.0
    %4339 = vmatprep.subr.mxu0 0.0
    %4340 = vmatpush1.msra.mxu0 0.0
    %4341 = vmatprep.subr.mxu0 0.0
    %4342 = vmatpush1.msra.mxu0 0.0
    %4343 = vmatprep.subr.mxu0 0.0
    %4344 = vmatpush1.msra.mxu0 0.0
    %4345 = vmatprep.subr.mxu0 0.0
    %4346 = vmatpush1.msra.mxu0 0.0
    %4347 = vmatprep.subr.mxu0 0.0
    %4348 = vmatpush1.msra.mxu0 0.0
    %4349 = vmatprep.subr.mxu0 0.0
    %4350 = vmatpush1.msra.mxu0 %v3341
    %4351 = vmatprep.subr.mxu0 0.0
    %4352 = vmatpush2.msra.mxu0 0.0
    %4353 = vmatprep.subr.mxu0 0.0
    %4354 = vmatpush2.msra.mxu0 0.0
    %4355 = vmatprep.subr.mxu0 0.0
    %4356 = vmatpush2.msra.mxu0 0.0
    %4357 = vmatprep.subr.mxu0 0.0
    %4358 = vmatpush2.msra.mxu0 0.0
    %4359 = vmatprep.subr.mxu0 0.0
    %4360 = vmatpush2.msra.mxu0 0.0
    %4361 = vmatprep.subr.mxu0 0.0
    %4362 = vmatpush2.msra.mxu0 0.0
    %4363 = vmatprep.subr.mxu0 0.0
    %4364 = vmatpush2.msra.mxu0 0.0
    %4365 = vmatprep.subr.mxu0 0.0
    %4366 = vmatpush2.msra.mxu0 0.0
    %4367 = vmatprep.subr.mxu0 0.0
    %4368 = vmatpush2.msra.mxu0 0.0
    %4369 = vmatprep.subr.mxu0 0.0
    %4370 = vmatpush2.msra.mxu0 0.0
    %4371 = vmatprep.subr.mxu0 0.0
    %4372 = vmatpush2.msra.mxu0 0.0
    %4373 = vmatprep.subr.mxu0 0.0
    %4374 = vmatpush2.msra.mxu0 0.0
    %4375 = vmatprep.subr.mxu0 0.0
    %4376 = vmatpush2.msra.mxu0 0.0
    %4377 = vmatprep.subr.mxu0 0.0
    %4378 = vmatpush2.msra.mxu0 0.0
    %4379 = vmatprep.subr.mxu0 0.0
    %4380 = vmatpush2.msra.mxu0 0.0
    %4381 = vmatprep.subr.mxu0 0.0
    %4382 = vmatpush2.msra.mxu0 0.0
    %4383 = vmatprep.mubr.f32.mxu0 0.0
    %4384 = vmatmul.mubr.f32.gmra.mxu0 %v4317
    %v4385 = vpop.f32.mrf.mxu0
    %v4386 = vadd.f32 0.0, %v4385
    %v4387 = vpop.f32.mrf.mxu0
    %4388 = vdwg.mxu0
    %v4389 = vadd.f32 %v3099, %v4386
    %v4390 = vxor.u32 %v4389, 2147483648
    %v4391 = vmul.f32 %v4390, 1.442695
    %v4392 = vpow.pop %v4391
    %v4393 = vadd.f32 %v4392, 1.0
    %v4394 = vrcp.pop %v4393
    %v4395 = vmul.f32 1.0, %v4394
    %4396 = vmatprep.subr.mxu0 0.0
    %4397 = vmatpush1.msra.mxu0 0.0
    %4398 = vmatprep.subr.mxu0 0.0
    %4399 = vmatpush1.msra.mxu0 0.0
    %4400 = vmatprep.subr.mxu0 0.0
    %4401 = vmatpush1.msra.mxu0 0.0
    %4402 = vmatprep.subr.mxu0 0.0
    %4403 = vmatpush1.msra.mxu0 0.0
    %4404 = vmatprep.subr.mxu0 0.0
    %4405 = vmatpush1.msra.mxu0 0.0
    %4406 = vmatprep.subr.mxu0 0.0
    %4407 = vmatpush1.msra.mxu0 0.0
    %4408 = vmatprep.subr.mxu0 0.0
    %4409 = vmatpush1.msra.mxu0 0.0
    %4410 = vmatprep.subr.mxu0 0.0
    %4411 = vmatpush1.msra.mxu0 0.0
    %4412 = vmatprep.subr.mxu0 0.0
    %4413 = vmatpush1.msra.mxu0 0.0
    %4414 = vmatprep.subr.mxu0 0.0
    %4415 = vmatpush1.msra.mxu0 0.0
    %4416 = vmatprep.subr.mxu0 0.0
    %4417 = vmatpush1.msra.mxu0 0.0
    %4418 = vmatprep.subr.mxu0 0.0
    %4419 = vmatpush1.msra.mxu0 0.0
    %4420 = vmatprep.subr.mxu0 0.0
    %4421 = vmatpush1.msra.mxu0 0.0
    %4422 = vmatprep.subr.mxu0 0.0
    %4423 = vmatpush1.msra.mxu0 0.0
    %4424 = vmatprep.subr.mxu0 0.0
    %4425 = vmatpush1.msra.mxu0 0.0
    %4426 = vmatprep.subr.mxu0 0.0
    %4427 = vmatpush1.msra.mxu0 %v3342
    %4428 = vmatprep.subr.mxu0 0.0
    %4429 = vmatpush2.msra.mxu0 0.0
    %4430 = vmatprep.subr.mxu0 0.0
    %4431 = vmatpush2.msra.mxu0 0.0
    %4432 = vmatprep.subr.mxu0 0.0
    %4433 = vmatpush2.msra.mxu0 0.0
    %4434 = vmatprep.subr.mxu0 0.0
    %4435 = vmatpush2.msra.mxu0 0.0
    %4436 = vmatprep.subr.mxu0 0.0
    %4437 = vmatpush2.msra.mxu0 0.0
    %4438 = vmatprep.subr.mxu0 0.0
    %4439 = vmatpush2.msra.mxu0 0.0
    %4440 = vmatprep.subr.mxu0 0.0
    %4441 = vmatpush2.msra.mxu0 0.0
    %4442 = vmatprep.subr.mxu0 0.0
    %4443 = vmatpush2.msra.mxu0 0.0
    %4444 = vmatprep.subr.mxu0 0.0
    %4445 = vmatpush2.msra.mxu0 0.0
    %4446 = vmatprep.subr.mxu0 0.0
    %4447 = vmatpush2.msra.mxu0 0.0
    %4448 = vmatprep.subr.mxu0 0.0
    %4449 = vmatpush2.msra.mxu0 0.0
    %4450 = vmatprep.subr.mxu0 0.0
    %4451 = vmatpush2.msra.mxu0 0.0
    %4452 = vmatprep.subr.mxu0 0.0
    %4453 = vmatpush2.msra.mxu0 0.0
    %4454 = vmatprep.subr.mxu0 0.0
    %4455 = vmatpush2.msra.mxu0 0.0
    %4456 = vmatprep.subr.mxu0 0.0
    %4457 = vmatpush2.msra.mxu0 0.0
    %4458 = vmatprep.subr.mxu0 0.0
    %4459 = vmatpush2.msra.mxu0 0.0
    %4460 = vmatprep.mubr.f32.mxu0 0.0
    %4461 = vmatmul.mubr.f32.gmra.mxu0 %v4317
    %v4462 = vpop.f32.mrf.mxu0
    %v4463 = vadd.f32 0.0, %v4462
    %v4464 = vpop.f32.mrf.mxu0
    %4465 = vdwg.mxu0
    %v4466 = vadd.f32 %v3211, %v4463
    %v4467 = vxor.u32 %v4466, 2147483648
    %v4468 = vmul.f32 %v4467, 1.442695
    %v4469 = vpow.pop %v4468
    %v4470 = vadd.f32 %v4469, 1.0
    %v4471 = vrcp.pop %v4470
    %v4472 = vmul.f32 1.0, %v4471
    %v4473 = vmul.f32 %v4395, %v4315
    %v4475 = vsel %vm3344, %v4473, 0
    %4477 = vmatprep.subr.mxu0 0.0
    %4478 = vmatpush1.msra.mxu0 0.0
    %4479 = vmatprep.subr.mxu0 0.0
    %4480 = vmatpush1.msra.mxu0 0.0
    %4481 = vmatprep.subr.mxu0 0.0
    %4482 = vmatpush1.msra.mxu0 0.0
    %4483 = vmatprep.subr.mxu0 0.0
    %4484 = vmatpush1.msra.mxu0 0.0
    %4485 = vmatprep.subr.mxu0 0.0
    %4486 = vmatpush1.msra.mxu0 0.0
    %4487 = vmatprep.subr.mxu0 0.0
    %4488 = vmatpush1.msra.mxu0 0.0
    %4489 = vmatprep.subr.mxu0 0.0
    %4490 = vmatpush1.msra.mxu0 0.0
    %4491 = vmatprep.subr.mxu0 0.0
    %4492 = vmatpush1.msra.mxu0 0.0
    %4493 = vmatprep.subr.mxu0 0.0
    %4494 = vmatpush1.msra.mxu0 0.0
    %4495 = vmatprep.subr.mxu0 0.0
    %4496 = vmatpush1.msra.mxu0 0.0
    %4497 = vmatprep.subr.mxu0 0.0
    %4498 = vmatpush1.msra.mxu0 0.0
    %4499 = vmatprep.subr.mxu0 0.0
    %4500 = vmatpush1.msra.mxu0 0.0
    %4501 = vmatprep.subr.mxu0 0.0
    %4502 = vmatpush1.msra.mxu0 0.0
    %4503 = vmatprep.subr.mxu0 0.0
    %4504 = vmatpush1.msra.mxu0 0.0
    %4505 = vmatprep.subr.mxu0 0.0
    %4506 = vmatpush1.msra.mxu0 0.0
    %4507 = vmatprep.subr.mxu0 0.0
    %4508 = vmatpush1.msra.mxu0 %v3343
    %4509 = vmatprep.subr.mxu0 0.0
    %4510 = vmatpush2.msra.mxu0 0.0
    %4511 = vmatprep.subr.mxu0 0.0
    %4512 = vmatpush2.msra.mxu0 0.0
    %4513 = vmatprep.subr.mxu0 0.0
    %4514 = vmatpush2.msra.mxu0 0.0
    %4515 = vmatprep.subr.mxu0 0.0
    %4516 = vmatpush2.msra.mxu0 0.0
    %4517 = vmatprep.subr.mxu0 0.0
    %4518 = vmatpush2.msra.mxu0 0.0
    %4519 = vmatprep.subr.mxu0 0.0
    %4520 = vmatpush2.msra.mxu0 0.0
    %4521 = vmatprep.subr.mxu0 0.0
    %4522 = vmatpush2.msra.mxu0 0.0
    %4523 = vmatprep.subr.mxu0 0.0
    %4524 = vmatpush2.msra.mxu0 0.0
    %4525 = vmatprep.subr.mxu0 0.0
    %4526 = vmatpush2.msra.mxu0 0.0
    %4527 = vmatprep.subr.mxu0 0.0
    %4528 = vmatpush2.msra.mxu0 0.0
    %4529 = vmatprep.subr.mxu0 0.0
    %4530 = vmatpush2.msra.mxu0 0.0
    %4531 = vmatprep.subr.mxu0 0.0
    %4532 = vmatpush2.msra.mxu0 0.0
    %4533 = vmatprep.subr.mxu0 0.0
    %4534 = vmatpush2.msra.mxu0 0.0
    %4535 = vmatprep.subr.mxu0 0.0
    %4536 = vmatpush2.msra.mxu0 0.0
    %4537 = vmatprep.subr.mxu0 0.0
    %4538 = vmatpush2.msra.mxu0 0.0
    %4539 = vmatprep.subr.mxu0 0.0
    %4540 = vmatpush2.msra.mxu0 0.0
    %4541 = vmatprep.mubr.f32.mxu0 0.0
    %4542 = vmatmul.mubr.f32.gmra.mxu0 %v4475
    %v4543 = vpop.f32.mrf.mxu0
    %v4544 = vadd.f32 0.0, %v4543
    %v4545 = vpop.f32.mrf.mxu0
    %4546 = vdwg.mxu0
    %v4547 = vadd.f32 %v3323, %v4544
    %v4548 = vtanh.pop %v4547
    %4550 = vset.pattern.permute.xlu0 0
    %4551 = vperm.xlu0 %4550, %v2998
    %v4552 = vpop.permute.xlu0 %4551
    %v4554 = vmul.f32 %v4552, %v4472
    %v4555 = vsub.f32 1.0, %v4554
    %v4556 = vmul.f32 %v4555, %v4315
    %v4557 = vmul.f32 %v4554, %v4548
    %v4558 = vadd.f32 %v4556, %v4557
    %v4560 = vsel %vm3344, %v4558, 0
    %4562 = vmatprep.subr.mxu0 0.0
    %4563 = vmatpush1.msra.mxu0 0.0
    %4564 = vmatprep.subr.mxu0 0.0
    %4565 = vmatpush1.msra.mxu0 0.0
    %4566 = vmatprep.subr.mxu0 0.0
    %4567 = vmatpush1.msra.mxu0 0.0
    %4568 = vmatprep.subr.mxu0 0.0
    %4569 = vmatpush1.msra.mxu0 0.0
    %4570 = vmatprep.subr.mxu0 0.0
    %4571 = vmatpush1.msra.mxu0 0.0
    %4572 = vmatprep.subr.mxu0 0.0
    %4573 = vmatpush1.msra.mxu0 0.0
    %4574 = vmatprep.subr.mxu0 0.0
    %4575 = vmatpush1.msra.mxu0 0.0
    %4576 = vmatprep.subr.mxu0 0.0
    %4577 = vmatpush1.msra.mxu0 0.0
    %4578 = vmatprep.subr.mxu0 0.0
    %4579 = vmatpush1.msra.mxu0 0.0
    %4580 = vmatprep.subr.mxu0 0.0
    %4581 = vmatpush1.msra.mxu0 0.0
    %4582 = vmatprep.subr.mxu0 0.0
    %4583 = vmatpush1.msra.mxu0 0.0
    %4584 = vmatprep.subr.mxu0 0.0
    %4585 = vmatpush1.msra.mxu0 0.0
    %4586 = vmatprep.subr.mxu0 0.0
    %4587 = vmatpush1.msra.mxu0 0.0
    %4588 = vmatprep.subr.mxu0 0.0
    %4589 = vmatpush1.msra.mxu0 0.0
    %4590 = vmatprep.subr.mxu0 0.0
    %4591 = vmatpush1.msra.mxu0 0.0
    %4592 = vmatprep.subr.mxu0 0.0
    %4593 = vmatpush1.msra.mxu0 %v3341
    %4594 = vmatprep.subr.mxu0 0.0
    %4595 = vmatpush2.msra.mxu0 0.0
    %4596 = vmatprep.subr.mxu0 0.0
    %4597 = vmatpush2.msra.mxu0 0.0
    %4598 = vmatprep.subr.mxu0 0.0
    %4599 = vmatpush2.msra.mxu0 0.0
    %4600 = vmatprep.subr.mxu0 0.0
    %4601 = vmatpush2.msra.mxu0 0.0
    %4602 = vmatprep.subr.mxu0 0.0
    %4603 = vmatpush2.msra.mxu0 0.0
    %4604 = vmatprep.subr.mxu0 0.0
    %4605 = vmatpush2.msra.mxu0 0.0
    %4606 = vmatprep.subr.mxu0 0.0
    %4607 = vmatpush2.msra.mxu0 0.0
    %4608 = vmatprep.subr.mxu0 0.0
    %4609 = vmatpush2.msra.mxu0 0.0
    %4610 = vmatprep.subr.mxu0 0.0
    %4611 = vmatpush2.msra.mxu0 0.0
    %4612 = vmatprep.subr.mxu0 0.0
    %4613 = vmatpush2.msra.mxu0 0.0
    %4614 = vmatprep.subr.mxu0 0.0
    %4615 = vmatpush2.msra.mxu0 0.0
    %4616 = vmatprep.subr.mxu0 0.0
    %4617 = vmatpush2.msra.mxu0 0.0
    %4618 = vmatprep.subr.mxu0 0.0
    %4619 = vmatpush2.msra.mxu0 0.0
    %4620 = vmatprep.subr.mxu0 0.0
    %4621 = vmatpush2.msra.mxu0 0.0
    %4622 = vmatprep.subr.mxu0 0.0
    %4623 = vmatpush2.msra.mxu0 0.0
    %4624 = vmatprep.subr.mxu0 0.0
    %4625 = vmatpush2.msra.mxu0 0.0
    %4626 = vmatprep.mubr.f32.mxu0 0.0
    %4627 = vmatmul.mubr.f32.gmra.mxu0 %v4560
    %v4628 = vpop.f32.mrf.mxu0
    %v4629 = vadd.f32 0.0, %v4628
    %v4630 = vpop.f32.mrf.mxu0
    %4631 = vdwg.mxu0
    %v4632 = vadd.f32 %v3104, %v4629
    %v4633 = vxor.u32 %v4632, 2147483648
    %v4634 = vmul.f32 %v4633, 1.442695
    %v4635 = vpow.pop %v4634
    %v4636 = vadd.f32 %v4635, 1.0
    %v4637 = vrcp.pop %v4636
    %v4638 = vmul.f32 1.0, %v4637
    %4639 = vmatprep.subr.mxu0 0.0
    %4640 = vmatpush1.msra.mxu0 0.0
    %4641 = vmatprep.subr.mxu0 0.0
    %4642 = vmatpush1.msra.mxu0 0.0
    %4643 = vmatprep.subr.mxu0 0.0
    %4644 = vmatpush1.msra.mxu0 0.0
    %4645 = vmatprep.subr.mxu0 0.0
    %4646 = vmatpush1.msra.mxu0 0.0
    %4647 = vmatprep.subr.mxu0 0.0
    %4648 = vmatpush1.msra.mxu0 0.0
    %4649 = vmatprep.subr.mxu0 0.0
    %4650 = vmatpush1.msra.mxu0 0.0
    %4651 = vmatprep.subr.mxu0 0.0
    %4652 = vmatpush1.msra.mxu0 0.0
    %4653 = vmatprep.subr.mxu0 0.0
    %4654 = vmatpush1.msra.mxu0 0.0
    %4655 = vmatprep.subr.mxu0 0.0
    %4656 = vmatpush1.msra.mxu0 0.0
    %4657 = vmatprep.subr.mxu0 0.0
    %4658 = vmatpush1.msra.mxu0 0.0
    %4659 = vmatprep.subr.mxu0 0.0
    %4660 = vmatpush1.msra.mxu0 0.0
    %4661 = vmatprep.subr.mxu0 0.0
    %4662 = vmatpush1.msra.mxu0 0.0
    %4663 = vmatprep.subr.mxu0 0.0
    %4664 = vmatpush1.msra.mxu0 0.0
    %4665 = vmatprep.subr.mxu0 0.0
    %4666 = vmatpush1.msra.mxu0 0.0
    %4667 = vmatprep.subr.mxu0 0.0
    %4668 = vmatpush1.msra.mxu0 0.0
    %4669 = vmatprep.subr.mxu0 0.0
    %4670 = vmatpush1.msra.mxu0 %v3342
    %4671 = vmatprep.subr.mxu0 0.0
    %4672 = vmatpush2.msra.mxu0 0.0
    %4673 = vmatprep.subr.mxu0 0.0
    %4674 = vmatpush2.msra.mxu0 0.0
    %4675 = vmatprep.subr.mxu0 0.0
    %4676 = vmatpush2.msra.mxu0 0.0
    %4677 = vmatprep.subr.mxu0 0.0
    %4678 = vmatpush2.msra.mxu0 0.0
    %4679 = vmatprep.subr.mxu0 0.0
    %4680 = vmatpush2.msra.mxu0 0.0
    %4681 = vmatprep.subr.mxu0 0.0
    %4682 = vmatpush2.msra.mxu0 0.0
    %4683 = vmatprep.subr.mxu0 0.0
    %4684 = vmatpush2.msra.mxu0 0.0
    %4685 = vmatprep.subr.mxu0 0.0
    %4686 = vmatpush2.msra.mxu0 0.0
    %4687 = vmatprep.subr.mxu0 0.0
    %4688 = vmatpush2.msra.mxu0 0.0
    %4689 = vmatprep.subr.mxu0 0.0
    %4690 = vmatpush2.msra.mxu0 0.0
    %4691 = vmatprep.subr.mxu0 0.0
    %4692 = vmatpush2.msra.mxu0 0.0
    %4693 = vmatprep.subr.mxu0 0.0
    %4694 = vmatpush2.msra.mxu0 0.0
    %4695 = vmatprep.subr.mxu0 0.0
    %4696 = vmatpush2.msra.mxu0 0.0
    %4697 = vmatprep.subr.mxu0 0.0
    %4698 = vmatpush2.msra.mxu0 0.0
    %4699 = vmatprep.subr.mxu0 0.0
    %4700 = vmatpush2.msra.mxu0 0.0
    %4701 = vmatprep.subr.mxu0 0.0
    %4702 = vmatpush2.msra.mxu0 0.0
    %4703 = vmatprep.mubr.f32.mxu0 0.0
    %4704 = vmatmul.mubr.f32.gmra.mxu0 %v4560
    %v4705 = vpop.f32.mrf.mxu0
    %v4706 = vadd.f32 0.0, %v4705
    %v4707 = vpop.f32.mrf.mxu0
    %4708 = vdwg.mxu0
    %v4709 = vadd.f32 %v3216, %v4706
    %v4710 = vxor.u32 %v4709, 2147483648
    %v4711 = vmul.f32 %v4710, 1.442695
    %v4712 = vpow.pop %v4711
    %v4713 = vadd.f32 %v4712, 1.0
    %v4714 = vrcp.pop %v4713
    %v4715 = vmul.f32 1.0, %v4714
    %v4716 = vmul.f32 %v4638, %v4558
    %v4718 = vsel %vm3344, %v4716, 0
    %4720 = vmatprep.subr.mxu0 0.0
    %4721 = vmatpush1.msra.mxu0 0.0
    %4722 = vmatprep.subr.mxu0 0.0
    %4723 = vmatpush1.msra.mxu0 0.0
    %4724 = vmatprep.subr.mxu0 0.0
    %4725 = vmatpush1.msra.mxu0 0.0
    %4726 = vmatprep.subr.mxu0 0.0
    %4727 = vmatpush1.msra.mxu0 0.0
    %4728 = vmatprep.subr.mxu0 0.0
    %4729 = vmatpush1.msra.mxu0 0.0
    %4730 = vmatprep.subr.mxu0 0.0
    %4731 = vmatpush1.msra.mxu0 0.0
    %4732 = vmatprep.subr.mxu0 0.0
    %4733 = vmatpush1.msra.mxu0 0.0
    %4734 = vmatprep.subr.mxu0 0.0
    %4735 = vmatpush1.msra.mxu0 0.0
    %4736 = vmatprep.subr.mxu0 0.0
    %4737 = vmatpush1.msra.mxu0 0.0
    %4738 = vmatprep.subr.mxu0 0.0
    %4739 = vmatpush1.msra.mxu0 0.0
    %4740 = vmatprep.subr.mxu0 0.0
    %4741 = vmatpush1.msra.mxu0 0.0
    %4742 = vmatprep.subr.mxu0 0.0
    %4743 = vmatpush1.msra.mxu0 0.0
    %4744 = vmatprep.subr.mxu0 0.0
    %4745 = vmatpush1.msra.mxu0 0.0
    %4746 = vmatprep.subr.mxu0 0.0
    %4747 = vmatpush1.msra.mxu0 0.0
    %4748 = vmatprep.subr.mxu0 0.0
    %4749 = vmatpush1.msra.mxu0 0.0
    %4750 = vmatprep.subr.mxu0 0.0
    %4751 = vmatpush1.msra.mxu0 %v3343
    %4752 = vmatprep.subr.mxu0 0.0
    %4753 = vmatpush2.msra.mxu0 0.0
    %4754 = vmatprep.subr.mxu0 0.0
    %4755 = vmatpush2.msra.mxu0 0.0
    %4756 = vmatprep.subr.mxu0 0.0
    %4757 = vmatpush2.msra.mxu0 0.0
    %4758 = vmatprep.subr.mxu0 0.0
    %4759 = vmatpush2.msra.mxu0 0.0
    %4760 = vmatprep.subr.mxu0 0.0
    %4761 = vmatpush2.msra.mxu0 0.0
    %4762 = vmatprep.subr.mxu0 0.0
    %4763 = vmatpush2.msra.mxu0 0.0
    %4764 = vmatprep.subr.mxu0 0.0
    %4765 = vmatpush2.msra.mxu0 0.0
    %4766 = vmatprep.subr.mxu0 0.0
    %4767 = vmatpush2.msra.mxu0 0.0
    %4768 = vmatprep.subr.mxu0 0.0
    %4769 = vmatpush2.msra.mxu0 0.0
    %4770 = vmatprep.subr.mxu0 0.0
    %4771 = vmatpush2.msra.mxu0 0.0
    %4772 = vmatprep.subr.mxu0 0.0
    %4773 = vmatpush2.msra.mxu0 0.0
    %4774 = vmatprep.subr.mxu0 0.0
    %4775 = vmatpush2.msra.mxu0 0.0
    %4776 = vmatprep.subr.mxu0 0.0
    %4777 = vmatpush2.msra.mxu0 0.0
    %4778 = vmatprep.subr.mxu0 0.0
    %4779 = vmatpush2.msra.mxu0 0.0
    %4780 = vmatprep.subr.mxu0 0.0
    %4781 = vmatpush2.msra.mxu0 0.0
    %4782 = vmatprep.subr.mxu0 0.0
    %4783 = vmatpush2.msra.mxu0 0.0
    %4784 = vmatprep.mubr.f32.mxu0 0.0
    %4785 = vmatmul.mubr.f32.gmra.mxu0 %v4718
    %v4786 = vpop.f32.mrf.mxu0
    %v4787 = vadd.f32 0.0, %v4786
    %v4788 = vpop.f32.mrf.mxu0
    %4789 = vdwg.mxu0
    %v4790 = vadd.f32 %v3328, %v4787
    %v4791 = vtanh.pop %v4790
    %4793 = vset.pattern.permute.xlu0 0
    %4794 = vperm.xlu0 %4793, %v3000
    %v4795 = vpop.permute.xlu0 %4794
    %v4797 = vmul.f32 %v4795, %v4715
    %v4798 = vsub.f32 1.0, %v4797
    %v4799 = vmul.f32 %v4798, %v4558
    %v4800 = vmul.f32 %v4797, %v4791
    %v4801 = vadd.f32 %v4799, %v4800
    %v4803 = vsel %vm3344, %v4801, 0
    %4805 = vmatprep.subr.mxu0 0.0
    %4806 = vmatpush1.msra.mxu0 0.0
    %4807 = vmatprep.subr.mxu0 0.0
    %4808 = vmatpush1.msra.mxu0 0.0
    %4809 = vmatprep.subr.mxu0 0.0
    %4810 = vmatpush1.msra.mxu0 0.0
    %4811 = vmatprep.subr.mxu0 0.0
    %4812 = vmatpush1.msra.mxu0 0.0
    %4813 = vmatprep.subr.mxu0 0.0
    %4814 = vmatpush1.msra.mxu0 0.0
    %4815 = vmatprep.subr.mxu0 0.0
    %4816 = vmatpush1.msra.mxu0 0.0
    %4817 = vmatprep.subr.mxu0 0.0
    %4818 = vmatpush1.msra.mxu0 0.0
    %4819 = vmatprep.subr.mxu0 0.0
    %4820 = vmatpush1.msra.mxu0 0.0
    %4821 = vmatprep.subr.mxu0 0.0
    %4822 = vmatpush1.msra.mxu0 0.0
    %4823 = vmatprep.subr.mxu0 0.0
    %4824 = vmatpush1.msra.mxu0 0.0
    %4825 = vmatprep.subr.mxu0 0.0
    %4826 = vmatpush1.msra.mxu0 0.0
    %4827 = vmatprep.subr.mxu0 0.0
    %4828 = vmatpush1.msra.mxu0 0.0
    %4829 = vmatprep.subr.mxu0 0.0
    %4830 = vmatpush1.msra.mxu0 0.0
    %4831 = vmatprep.subr.mxu0 0.0
    %4832 = vmatpush1.msra.mxu0 0.0
    %4833 = vmatprep.subr.mxu0 0.0
    %4834 = vmatpush1.msra.mxu0 0.0
    %4835 = vmatprep.subr.mxu0 0.0
    %4836 = vmatpush1.msra.mxu0 %v3341
    %4837 = vmatprep.subr.mxu0 0.0
    %4838 = vmatpush2.msra.mxu0 0.0
    %4839 = vmatprep.subr.mxu0 0.0
    %4840 = vmatpush2.msra.mxu0 0.0
    %4841 = vmatprep.subr.mxu0 0.0
    %4842 = vmatpush2.msra.mxu0 0.0
    %4843 = vmatprep.subr.mxu0 0.0
    %4844 = vmatpush2.msra.mxu0 0.0
    %4845 = vmatprep.subr.mxu0 0.0
    %4846 = vmatpush2.msra.mxu0 0.0
    %4847 = vmatprep.subr.mxu0 0.0
    %4848 = vmatpush2.msra.mxu0 0.0
    %4849 = vmatprep.subr.mxu0 0.0
    %4850 = vmatpush2.msra.mxu0 0.0
    %4851 = vmatprep.subr.mxu0 0.0
    %4852 = vmatpush2.msra.mxu0 0.0
    %4853 = vmatprep.subr.mxu0 0.0
    %4854 = vmatpush2.msra.mxu0 0.0
    %4855 = vmatprep.subr.mxu0 0.0
    %4856 = vmatpush2.msra.mxu0 0.0
    %4857 = vmatprep.subr.mxu0 0.0
    %4858 = vmatpush2.msra.mxu0 0.0
    %4859 = vmatprep.subr.mxu0 0.0
    %4860 = vmatpush2.msra.mxu0 0.0
    %4861 = vmatprep.subr.mxu0 0.0
    %4862 = vmatpush2.msra.mxu0 0.0
    %4863 = vmatprep.subr.mxu0 0.0
    %4864 = vmatpush2.msra.mxu0 0.0
    %4865 = vmatprep.subr.mxu0 0.0
    %4866 = vmatpush2.msra.mxu0 0.0
    %4867 = vmatprep.subr.mxu0 0.0
    %4868 = vmatpush2.msra.mxu0 0.0
    %4869 = vmatprep.mubr.f32.mxu0 0.0
    %4870 = vmatmul.mubr.f32.gmra.mxu0 %v4803
    %v4871 = vpop.f32.mrf.mxu0
    %v4872 = vadd.f32 0.0, %v4871
    %v4873 = vpop.f32.mrf.mxu0
    %4874 = vdwg.mxu0
    %v4875 = vadd.f32 %v3109, %v4872
    %v4876 = vxor.u32 %v4875, 2147483648
    %v4877 = vmul.f32 %v4876, 1.442695
    %v4878 = vpow.pop %v4877
    %v4879 = vadd.f32 %v4878, 1.0
    %v4880 = vrcp.pop %v4879
    %v4881 = vmul.f32 1.0, %v4880
    %4882 = vmatprep.subr.mxu0 0.0
    %4883 = vmatpush1.msra.mxu0 0.0
    %4884 = vmatprep.subr.mxu0 0.0
    %4885 = vmatpush1.msra.mxu0 0.0
    %4886 = vmatprep.subr.mxu0 0.0
    %4887 = vmatpush1.msra.mxu0 0.0
    %4888 = vmatprep.subr.mxu0 0.0
    %4889 = vmatpush1.msra.mxu0 0.0
    %4890 = vmatprep.subr.mxu0 0.0
    %4891 = vmatpush1.msra.mxu0 0.0
    %4892 = vmatprep.subr.mxu0 0.0
    %4893 = vmatpush1.msra.mxu0 0.0
    %4894 = vmatprep.subr.mxu0 0.0
    %4895 = vmatpush1.msra.mxu0 0.0
    %4896 = vmatprep.subr.mxu0 0.0
    %4897 = vmatpush1.msra.mxu0 0.0
    %4898 = vmatprep.subr.mxu0 0.0
    %4899 = vmatpush1.msra.mxu0 0.0
    %4900 = vmatprep.subr.mxu0 0.0
    %4901 = vmatpush1.msra.mxu0 0.0
    %4902 = vmatprep.subr.mxu0 0.0
    %4903 = vmatpush1.msra.mxu0 0.0
    %4904 = vmatprep.subr.mxu0 0.0
    %4905 = vmatpush1.msra.mxu0 0.0
    %4906 = vmatprep.subr.mxu0 0.0
    %4907 = vmatpush1.msra.mxu0 0.0
    %4908 = vmatprep.subr.mxu0 0.0
    %4909 = vmatpush1.msra.mxu0 0.0
    %4910 = vmatprep.subr.mxu0 0.0
    %4911 = vmatpush1.msra.mxu0 0.0
    %4912 = vmatprep.subr.mxu0 0.0
    %4913 = vmatpush1.msra.mxu0 %v3342
    %4914 = vmatprep.subr.mxu0 0.0
    %4915 = vmatpush2.msra.mxu0 0.0
    %4916 = vmatprep.subr.mxu0 0.0
    %4917 = vmatpush2.msra.mxu0 0.0
    %4918 = vmatprep.subr.mxu0 0.0
    %4919 = vmatpush2.msra.mxu0 0.0
    %4920 = vmatprep.subr.mxu0 0.0
    %4921 = vmatpush2.msra.mxu0 0.0
    %4922 = vmatprep.subr.mxu0 0.0
    %4923 = vmatpush2.msra.mxu0 0.0
    %4924 = vmatprep.subr.mxu0 0.0
    %4925 = vmatpush2.msra.mxu0 0.0
    %4926 = vmatprep.subr.mxu0 0.0
    %4927 = vmatpush2.msra.mxu0 0.0
    %4928 = vmatprep.subr.mxu0 0.0
    %4929 = vmatpush2.msra.mxu0 0.0
    %4930 = vmatprep.subr.mxu0 0.0
    %4931 = vmatpush2.msra.mxu0 0.0
    %4932 = vmatprep.subr.mxu0 0.0
    %4933 = vmatpush2.msra.mxu0 0.0
    %4934 = vmatprep.subr.mxu0 0.0
    %4935 = vmatpush2.msra.mxu0 0.0
    %4936 = vmatprep.subr.mxu0 0.0
    %4937 = vmatpush2.msra.mxu0 0.0
    %4938 = vmatprep.subr.mxu0 0.0
    %4939 = vmatpush2.msra.mxu0 0.0
    %4940 = vmatprep.subr.mxu0 0.0
    %4941 = vmatpush2.msra.mxu0 0.0
    %4942 = vmatprep.subr.mxu0 0.0
    %4943 = vmatpush2.msra.mxu0 0.0
    %4944 = vmatprep.subr.mxu0 0.0
    %4945 = vmatpush2.msra.mxu0 0.0
    %4946 = vmatprep.mubr.f32.mxu0 0.0
    %4947 = vmatmul.mubr.f32.gmra.mxu0 %v4803
    %v4948 = vpop.f32.mrf.mxu0
    %v4949 = vadd.f32 0.0, %v4948
    %v4950 = vpop.f32.mrf.mxu0
    %4951 = vdwg.mxu0
    %v4952 = vadd.f32 %v3221, %v4949
    %v4953 = vxor.u32 %v4952, 2147483648
    %v4954 = vmul.f32 %v4953, 1.442695
    %v4955 = vpow.pop %v4954
    %v4956 = vadd.f32 %v4955, 1.0
    %v4957 = vrcp.pop %v4956
    %v4958 = vmul.f32 1.0, %v4957
    %v4959 = vmul.f32 %v4881, %v4801
    %v4961 = vsel %vm3344, %v4959, 0
    %4963 = vmatprep.subr.mxu0 0.0
    %4964 = vmatpush1.msra.mxu0 0.0
    %4965 = vmatprep.subr.mxu0 0.0
    %4966 = vmatpush1.msra.mxu0 0.0
    %4967 = vmatprep.subr.mxu0 0.0
    %4968 = vmatpush1.msra.mxu0 0.0
    %4969 = vmatprep.subr.mxu0 0.0
    %4970 = vmatpush1.msra.mxu0 0.0
    %4971 = vmatprep.subr.mxu0 0.0
    %4972 = vmatpush1.msra.mxu0 0.0
    %4973 = vmatprep.subr.mxu0 0.0
    %4974 = vmatpush1.msra.mxu0 0.0
    %4975 = vmatprep.subr.mxu0 0.0
    %4976 = vmatpush1.msra.mxu0 0.0
    %4977 = vmatprep.subr.mxu0 0.0
    %4978 = vmatpush1.msra.mxu0 0.0
    %4979 = vmatprep.subr.mxu0 0.0
    %4980 = vmatpush1.msra.mxu0 0.0
    %4981 = vmatprep.subr.mxu0 0.0
    %4982 = vmatpush1.msra.mxu0 0.0
    %4983 = vmatprep.subr.mxu0 0.0
    %4984 = vmatpush1.msra.mxu0 0.0
    %4985 = vmatprep.subr.mxu0 0.0
    %4986 = vmatpush1.msra.mxu0 0.0
    %4987 = vmatprep.subr.mxu0 0.0
    %4988 = vmatpush1.msra.mxu0 0.0
    %4989 = vmatprep.subr.mxu0 0.0
    %4990 = vmatpush1.msra.mxu0 0.0
    %4991 = vmatprep.subr.mxu0 0.0
    %4992 = vmatpush1.msra.mxu0 0.0
    %4993 = vmatprep.subr.mxu0 0.0
    %4994 = vmatpush1.msra.mxu0 %v3343
    %4995 = vmatprep.subr.mxu0 0.0
    %4996 = vmatpush2.msra.mxu0 0.0
    %4997 = vmatprep.subr.mxu0 0.0
    %4998 = vmatpush2.msra.mxu0 0.0
    %4999 = vmatprep.subr.mxu0 0.0
    %5000 = vmatpush2.msra.mxu0 0.0
    %5001 = vmatprep.subr.mxu0 0.0
    %5002 = vmatpush2.msra.mxu0 0.0
    %5003 = vmatprep.subr.mxu0 0.0
    %5004 = vmatpush2.msra.mxu0 0.0
    %5005 = vmatprep.subr.mxu0 0.0
    %5006 = vmatpush2.msra.mxu0 0.0
    %5007 = vmatprep.subr.mxu0 0.0
    %5008 = vmatpush2.msra.mxu0 0.0
    %5009 = vmatprep.subr.mxu0 0.0
    %5010 = vmatpush2.msra.mxu0 0.0
    %5011 = vmatprep.subr.mxu0 0.0
    %5012 = vmatpush2.msra.mxu0 0.0
    %5013 = vmatprep.subr.mxu0 0.0
    %5014 = vmatpush2.msra.mxu0 0.0
    %5015 = vmatprep.subr.mxu0 0.0
    %5016 = vmatpush2.msra.mxu0 0.0
    %5017 = vmatprep.subr.mxu0 0.0
    %5018 = vmatpush2.msra.mxu0 0.0
    %5019 = vmatprep.subr.mxu0 0.0
    %5020 = vmatpush2.msra.mxu0 0.0
    %5021 = vmatprep.subr.mxu0 0.0
    %5022 = vmatpush2.msra.mxu0 0.0
    %5023 = vmatprep.subr.mxu0 0.0
    %5024 = vmatpush2.msra.mxu0 0.0
    %5025 = vmatprep.subr.mxu0 0.0
    %5026 = vmatpush2.msra.mxu0 0.0
    %5027 = vmatprep.mubr.f32.mxu0 0.0
    %5028 = vmatmul.mubr.f32.gmra.mxu0 %v4961
    %v5029 = vpop.f32.mrf.mxu0
    %v5030 = vadd.f32 0.0, %v5029
    %v5031 = vpop.f32.mrf.mxu0
    %5032 = vdwg.mxu0
    %v5033 = vadd.f32 %v3333, %v5030
    %v5034 = vtanh.pop %v5033
    %5036 = vset.pattern.permute.xlu0 0
    %5037 = vperm.xlu0 %5036, %v3002
    %v5038 = vpop.permute.xlu0 %5037
    %v5040 = vmul.f32 %v5038, %v4958
    %v5041 = vsub.f32 1.0, %v5040
    %v5042 = vmul.f32 %v5041, %v4801
    %v5043 = vmul.f32 %v5040, %v5034
    %v5044 = vadd.f32 %v5042, %v5043
    %v5046 = vsel %vm3344, %v5044, 0
    %5048 = vmatprep.subr.mxu0 0.0
    %5049 = vmatpush1.msra.mxu0 0.0
    %5050 = vmatprep.subr.mxu0 0.0
    %5051 = vmatpush1.msra.mxu0 0.0
    %5052 = vmatprep.subr.mxu0 0.0
    %5053 = vmatpush1.msra.mxu0 0.0
    %5054 = vmatprep.subr.mxu0 0.0
    %5055 = vmatpush1.msra.mxu0 0.0
    %5056 = vmatprep.subr.mxu0 0.0
    %5057 = vmatpush1.msra.mxu0 0.0
    %5058 = vmatprep.subr.mxu0 0.0
    %5059 = vmatpush1.msra.mxu0 0.0
    %5060 = vmatprep.subr.mxu0 0.0
    %5061 = vmatpush1.msra.mxu0 0.0
    %5062 = vmatprep.subr.mxu0 0.0
    %5063 = vmatpush1.msra.mxu0 0.0
    %5064 = vmatprep.subr.mxu0 0.0
    %5065 = vmatpush1.msra.mxu0 0.0
    %5066 = vmatprep.subr.mxu0 0.0
    %5067 = vmatpush1.msra.mxu0 0.0
    %5068 = vmatprep.subr.mxu0 0.0
    %5069 = vmatpush1.msra.mxu0 0.0
    %5070 = vmatprep.subr.mxu0 0.0
    %5071 = vmatpush1.msra.mxu0 0.0
    %5072 = vmatprep.subr.mxu0 0.0
    %5073 = vmatpush1.msra.mxu0 0.0
    %5074 = vmatprep.subr.mxu0 0.0
    %5075 = vmatpush1.msra.mxu0 0.0
    %5076 = vmatprep.subr.mxu0 0.0
    %5077 = vmatpush1.msra.mxu0 0.0
    %5078 = vmatprep.subr.mxu0 0.0
    %5079 = vmatpush1.msra.mxu0 %v3341
    %5080 = vmatprep.subr.mxu0 0.0
    %5081 = vmatpush2.msra.mxu0 0.0
    %5082 = vmatprep.subr.mxu0 0.0
    %5083 = vmatpush2.msra.mxu0 0.0
    %5084 = vmatprep.subr.mxu0 0.0
    %5085 = vmatpush2.msra.mxu0 0.0
    %5086 = vmatprep.subr.mxu0 0.0
    %5087 = vmatpush2.msra.mxu0 0.0
    %5088 = vmatprep.subr.mxu0 0.0
    %5089 = vmatpush2.msra.mxu0 0.0
    %5090 = vmatprep.subr.mxu0 0.0
    %5091 = vmatpush2.msra.mxu0 0.0
    %5092 = vmatprep.subr.mxu0 0.0
    %5093 = vmatpush2.msra.mxu0 0.0
    %5094 = vmatprep.subr.mxu0 0.0
    %5095 = vmatpush2.msra.mxu0 0.0
    %5096 = vmatprep.subr.mxu0 0.0
    %5097 = vmatpush2.msra.mxu0 0.0
    %5098 = vmatprep.subr.mxu0 0.0
    %5099 = vmatpush2.msra.mxu0 0.0
    %5100 = vmatprep.subr.mxu0 0.0
    %5101 = vmatpush2.msra.mxu0 0.0
    %5102 = vmatprep.subr.mxu0 0.0
    %5103 = vmatpush2.msra.mxu0 0.0
    %5104 = vmatprep.subr.mxu0 0.0
    %5105 = vmatpush2.msra.mxu0 0.0
    %5106 = vmatprep.subr.mxu0 0.0
    %5107 = vmatpush2.msra.mxu0 0.0
    %5108 = vmatprep.subr.mxu0 0.0
    %5109 = vmatpush2.msra.mxu0 0.0
    %5110 = vmatprep.subr.mxu0 0.0
    %5111 = vmatpush2.msra.mxu0 0.0
    %5112 = vmatprep.mubr.f32.mxu0 0.0
    %5113 = vmatmul.mubr.f32.gmra.mxu0 %v5046
    %v5114 = vpop.f32.mrf.mxu0
    %v5115 = vadd.f32 0.0, %v5114
    %v5116 = vpop.f32.mrf.mxu0
    %5117 = vdwg.mxu0
    %v5118 = vadd.f32 %v3114, %v5115
    %v5119 = vxor.u32 %v5118, 2147483648
    %v5120 = vmul.f32 %v5119, 1.442695
    %v5121 = vpow.pop %v5120
    %v5122 = vadd.f32 %v5121, 1.0
    %v5123 = vrcp.pop %v5122
    %v5124 = vmul.f32 1.0, %v5123
    %5125 = vmatprep.subr.mxu0 0.0
    %5126 = vmatpush1.msra.mxu0 0.0
    %5127 = vmatprep.subr.mxu0 0.0
    %5128 = vmatpush1.msra.mxu0 0.0
    %5129 = vmatprep.subr.mxu0 0.0
    %5130 = vmatpush1.msra.mxu0 0.0
    %5131 = vmatprep.subr.mxu0 0.0
    %5132 = vmatpush1.msra.mxu0 0.0
    %5133 = vmatprep.subr.mxu0 0.0
    %5134 = vmatpush1.msra.mxu0 0.0
    %5135 = vmatprep.subr.mxu0 0.0
    %5136 = vmatpush1.msra.mxu0 0.0
    %5137 = vmatprep.subr.mxu0 0.0
    %5138 = vmatpush1.msra.mxu0 0.0
    %5139 = vmatprep.subr.mxu0 0.0
    %5140 = vmatpush1.msra.mxu0 0.0
    %5141 = vmatprep.subr.mxu0 0.0
    %5142 = vmatpush1.msra.mxu0 0.0
    %5143 = vmatprep.subr.mxu0 0.0
    %5144 = vmatpush1.msra.mxu0 0.0
    %5145 = vmatprep.subr.mxu0 0.0
    %5146 = vmatpush1.msra.mxu0 0.0
    %5147 = vmatprep.subr.mxu0 0.0
    %5148 = vmatpush1.msra.mxu0 0.0
    %5149 = vmatprep.subr.mxu0 0.0
    %5150 = vmatpush1.msra.mxu0 0.0
    %5151 = vmatprep.subr.mxu0 0.0
    %5152 = vmatpush1.msra.mxu0 0.0
    %5153 = vmatprep.subr.mxu0 0.0
    %5154 = vmatpush1.msra.mxu0 0.0
    %5155 = vmatprep.subr.mxu0 0.0
    %5156 = vmatpush1.msra.mxu0 %v3342
    %5157 = vmatprep.subr.mxu0 0.0
    %5158 = vmatpush2.msra.mxu0 0.0
    %5159 = vmatprep.subr.mxu0 0.0
    %5160 = vmatpush2.msra.mxu0 0.0
    %5161 = vmatprep.subr.mxu0 0.0
    %5162 = vmatpush2.msra.mxu0 0.0
    %5163 = vmatprep.subr.mxu0 0.0
    %5164 = vmatpush2.msra.mxu0 0.0
    %5165 = vmatprep.subr.mxu0 0.0
    %5166 = vmatpush2.msra.mxu0 0.0
    %5167 = vmatprep.subr.mxu0 0.0
    %5168 = vmatpush2.msra.mxu0 0.0
    %5169 = vmatprep.subr.mxu0 0.0
    %5170 = vmatpush2.msra.mxu0 0.0
    %5171 = vmatprep.subr.mxu0 0.0
    %5172 = vmatpush2.msra.mxu0 0.0
    %5173 = vmatprep.subr.mxu0 0.0
    %5174 = vmatpush2.msra.mxu0 0.0
    %5175 = vmatprep.subr.mxu0 0.0
    %5176 = vmatpush2.msra.mxu0 0.0
    %5177 = vmatprep.subr.mxu0 0.0
    %5178 = vmatpush2.msra.mxu0 0.0
    %5179 = vmatprep.subr.mxu0 0.0
    %5180 = vmatpush2.msra.mxu0 0.0
    %5181 = vmatprep.subr.mxu0 0.0
    %5182 = vmatpush2.msra.mxu0 0.0
    %5183 = vmatprep.subr.mxu0 0.0
    %5184 = vmatpush2.msra.mxu0 0.0
    %5185 = vmatprep.subr.mxu0 0.0
    %5186 = vmatpush2.msra.mxu0 0.0
    %5187 = vmatprep.subr.mxu0 0.0
    %5188 = vmatpush2.msra.mxu0 0.0
    %5189 = vmatprep.mubr.f32.mxu0 0.0
    %5190 = vmatmul.mubr.f32.gmra.mxu0 %v5046
    %v5191 = vpop.f32.mrf.mxu0
    %v5192 = vadd.f32 0.0, %v5191
    %v5193 = vpop.f32.mrf.mxu0
    %5194 = vdwg.mxu0
    %v5195 = vadd.f32 %v3226, %v5192
    %v5196 = vxor.u32 %v5195, 2147483648
    %v5197 = vmul.f32 %v5196, 1.442695
    %v5198 = vpow.pop %v5197
    %v5199 = vadd.f32 %v5198, 1.0
    %v5200 = vrcp.pop %v5199
    %v5201 = vmul.f32 1.0, %v5200
    %v5202 = vmul.f32 %v5124, %v5044
    %v5204 = vsel %vm3344, %v5202, 0
    %5206 = vmatprep.subr.mxu0 0.0
    %5207 = vmatpush1.msra.mxu0 0.0
    %5208 = vmatprep.subr.mxu0 0.0
    %5209 = vmatpush1.msra.mxu0 0.0
    %5210 = vmatprep.subr.mxu0 0.0
    %5211 = vmatpush1.msra.mxu0 0.0
    %5212 = vmatprep.subr.mxu0 0.0
    %5213 = vmatpush1.msra.mxu0 0.0
    %5214 = vmatprep.subr.mxu0 0.0
    %5215 = vmatpush1.msra.mxu0 0.0
    %5216 = vmatprep.subr.mxu0 0.0
    %5217 = vmatpush1.msra.mxu0 0.0
    %5218 = vmatprep.subr.mxu0 0.0
    %5219 = vmatpush1.msra.mxu0 0.0
    %5220 = vmatprep.subr.mxu0 0.0
    %5221 = vmatpush1.msra.mxu0 0.0
    %5222 = vmatprep.subr.mxu0 0.0
    %5223 = vmatpush1.msra.mxu0 0.0
    %5224 = vmatprep.subr.mxu0 0.0
    %5225 = vmatpush1.msra.mxu0 0.0
    %5226 = vmatprep.subr.mxu0 0.0
    %5227 = vmatpush1.msra.mxu0 0.0
    %5228 = vmatprep.subr.mxu0 0.0
    %5229 = vmatpush1.msra.mxu0 0.0
    %5230 = vmatprep.subr.mxu0 0.0
    %5231 = vmatpush1.msra.mxu0 0.0
    %5232 = vmatprep.subr.mxu0 0.0
    %5233 = vmatpush1.msra.mxu0 0.0
    %5234 = vmatprep.subr.mxu0 0.0
    %5235 = vmatpush1.msra.mxu0 0.0
    %5236 = vmatprep.subr.mxu0 0.0
    %5237 = vmatpush1.msra.mxu0 %v3343
    %5238 = vmatprep.subr.mxu0 0.0
    %5239 = vmatpush2.msra.mxu0 0.0
    %5240 = vmatprep.subr.mxu0 0.0
    %5241 = vmatpush2.msra.mxu0 0.0
    %5242 = vmatprep.subr.mxu0 0.0
    %5243 = vmatpush2.msra.mxu0 0.0
    %5244 = vmatprep.subr.mxu0 0.0
    %5245 = vmatpush2.msra.mxu0 0.0
    %5246 = vmatprep.subr.mxu0 0.0
    %5247 = vmatpush2.msra.mxu0 0.0
    %5248 = vmatprep.subr.mxu0 0.0
    %5249 = vmatpush2.msra.mxu0 0.0
    %5250 = vmatprep.subr.mxu0 0.0
    %5251 = vmatpush2.msra.mxu0 0.0
    %5252 = vmatprep.subr.mxu0 0.0
    %5253 = vmatpush2.msra.mxu0 0.0
    %5254 = vmatprep.subr.mxu0 0.0
    %5255 = vmatpush2.msra.mxu0 0.0
    %5256 = vmatprep.subr.mxu0 0.0
    %5257 = vmatpush2.msra.mxu0 0.0
    %5258 = vmatprep.subr.mxu0 0.0
    %5259 = vmatpush2.msra.mxu0 0.0
    %5260 = vmatprep.subr.mxu0 0.0
    %5261 = vmatpush2.msra.mxu0 0.0
    %5262 = vmatprep.subr.mxu0 0.0
    %5263 = vmatpush2.msra.mxu0 0.0
    %5264 = vmatprep.subr.mxu0 0.0
    %5265 = vmatpush2.msra.mxu0 0.0
    %5266 = vmatprep.subr.mxu0 0.0
    %5267 = vmatpush2.msra.mxu0 0.0
    %5268 = vmatprep.subr.mxu0 0.0
    %5269 = vmatpush2.msra.mxu0 0.0
    %5270 = vmatprep.mubr.f32.mxu0 0.0
    %5271 = vmatmul.mubr.f32.gmra.mxu0 %v5204
    %v5272 = vpop.f32.mrf.mxu0
    %v5273 = vadd.f32 0.0, %v5272
    %v5274 = vpop.f32.mrf.mxu0
    %5275 = vdwg.mxu0
    %v5276 = vadd.f32 %v3338, %v5273
    %v5277 = vtanh.pop %v5276
    %5279 = vset.pattern.permute.xlu0 0
    %5280 = vperm.xlu0 %5279, %v3004
    %v5281 = vpop.permute.xlu0 %5280
    %v5283 = vmul.f32 %v5281, %v5201
    %v5284 = vsub.f32 1.0, %v5283
    %v5285 = vmul.f32 %v5284, %v5044
    %v5286 = vmul.f32 %v5283, %v5277
    %v5287 = vadd.f32 %v5285, %v5286
    %v5288 = vld [vmem:[#allocation2 + $0x178] sm:$0xff]
    %v5289 = vld [vmem:[#allocation2 + $0x180] sm:$0xff]
    %v5290 = vld [vmem:[#allocation2 + $0x188] sm:$0xff]
    %v5291 = vld [vmem:[#allocation2 + $0x190] sm:$0xff]
    %5292 = vmatprep.subr.mxu0 0.0
    %5293 = vmatpush1.msra.mxu0 0.0
    %5294 = vmatprep.subr.mxu0 0.0
    %5295 = vmatpush1.msra.mxu0 0.0
    %5296 = vmatprep.subr.mxu0 0.0
    %5297 = vmatpush1.msra.mxu0 0.0
    %5298 = vmatprep.subr.mxu0 0.0
    %5299 = vmatpush1.msra.mxu0 0.0
    %5300 = vmatprep.subr.mxu0 0.0
    %5301 = vmatpush1.msra.mxu0 0.0
    %5302 = vmatprep.subr.mxu0 0.0
    %5303 = vmatpush1.msra.mxu0 0.0
    %5304 = vmatprep.subr.mxu0 0.0
    %5305 = vmatpush1.msra.mxu0 0.0
    %5306 = vmatprep.subr.mxu0 0.0
    %5307 = vmatpush1.msra.mxu0 0.0
    %5308 = vmatprep.subr.mxu0 0.0
    %5309 = vmatpush1.msra.mxu0 0.0
    %5310 = vmatprep.subr.mxu0 0.0
    %5311 = vmatpush1.msra.mxu0 0.0
    %5312 = vmatprep.subr.mxu0 0.0
    %5313 = vmatpush1.msra.mxu0 0.0
    %5314 = vmatprep.subr.mxu0 0.0
    %5315 = vmatpush1.msra.mxu0 0.0
    %5316 = vmatprep.subr.mxu0 0.0
    %5317 = vmatpush1.msra.mxu0 0.0
    %5318 = vmatprep.subr.mxu0 0.0
    %5319 = vmatpush1.msra.mxu0 0.0
    %5320 = vmatprep.subr.mxu0 0.0
    %5321 = vmatpush1.msra.mxu0 %v5291
    %5322 = vmatprep.subr.mxu0 0.0
    %5323 = vmatpush1.msra.mxu0 %v5290
    %5324 = vmatprep.subr.mxu0 0.0
    %5325 = vmatpush2.msra.mxu0 0.0
    %5326 = vmatprep.subr.mxu0 0.0
    %5327 = vmatpush2.msra.mxu0 0.0
    %5328 = vmatprep.subr.mxu0 0.0
    %5329 = vmatpush2.msra.mxu0 0.0
    %5330 = vmatprep.subr.mxu0 0.0
    %5331 = vmatpush2.msra.mxu0 0.0
    %5332 = vmatprep.subr.mxu0 0.0
    %5333 = vmatpush2.msra.mxu0 0.0
    %5334 = vmatprep.subr.mxu0 0.0
    %5335 = vmatpush2.msra.mxu0 0.0
    %5336 = vmatprep.subr.mxu0 0.0
    %5337 = vmatpush2.msra.mxu0 0.0
    %5338 = vmatprep.subr.mxu0 0.0
    %5339 = vmatpush2.msra.mxu0 0.0
    %5340 = vmatprep.subr.mxu0 0.0
    %5341 = vmatpush2.msra.mxu0 0.0
    %5342 = vmatprep.subr.mxu0 0.0
    %5343 = vmatpush2.msra.mxu0 0.0
    %5344 = vmatprep.subr.mxu0 0.0
    %5345 = vmatpush2.msra.mxu0 0.0
    %5346 = vmatprep.subr.mxu0 0.0
    %5347 = vmatpush2.msra.mxu0 0.0
    %5348 = vmatprep.subr.mxu0 0.0
    %5349 = vmatpush2.msra.mxu0 0.0
    %5350 = vmatprep.subr.mxu0 0.0
    %5351 = vmatpush2.msra.mxu0 0.0
    %5352 = vmatprep.subr.mxu0 0.0
    %5353 = vmatpush2.msra.mxu0 0.0
    %5354 = vmatprep.subr.mxu0 0.0
    %5355 = vmatpush2.msra.mxu0 0.0
    %5356 = vmatprep.mubr.f32.mxu0 0.0
    %5357 = vmatmul.mubr.f32.gmra.mxu0 %v2293
    %v5358 = vpop.f32.mrf.mxu0
    %v5359 = vadd.f32 0.0, %v5358
    %v5360 = vpop.f32.mrf.mxu0
    %5361 = vdwg.mxu0
    %v5363 = vsel %vm48, %v31, 0
    %5365 = vmatprep.subr.mxu0 0.0
    %5366 = vmatpush1.msra.mxu0 0.0
    %5367 = vmatprep.subr.mxu0 0.0
    %5368 = vmatpush1.msra.mxu0 0.0
    %5369 = vmatprep.subr.mxu0 0.0
    %5370 = vmatpush1.msra.mxu0 0.0
    %5371 = vmatprep.subr.mxu0 0.0
    %5372 = vmatpush1.msra.mxu0 0.0
    %5373 = vmatprep.subr.mxu0 0.0
    %5374 = vmatpush1.msra.mxu0 0.0
    %5375 = vmatprep.subr.mxu0 0.0
    %5376 = vmatpush1.msra.mxu0 0.0
    %5377 = vmatprep.subr.mxu0 0.0
    %5378 = vmatpush1.msra.mxu0 0.0
    %5379 = vmatprep.subr.mxu0 0.0
    %5380 = vmatpush1.msra.mxu0 0.0
    %5381 = vmatprep.subr.mxu0 0.0
    %5382 = vmatpush1.msra.mxu0 0.0
    %5383 = vmatprep.subr.mxu0 0.0
    %5384 = vmatpush1.msra.mxu0 0.0
    %5385 = vmatprep.subr.mxu0 0.0
    %5386 = vmatpush1.msra.mxu0 0.0
    %5387 = vmatprep.subr.mxu0 0.0
    %5388 = vmatpush1.msra.mxu0 0.0
    %5389 = vmatprep.subr.mxu0 0.0
    %5390 = vmatpush1.msra.mxu0 0.0
    %5391 = vmatprep.subr.mxu0 0.0
    %5392 = vmatpush1.msra.mxu0 0.0
    %5393 = vmatprep.subr.mxu0 0.0
    %5394 = vmatpush1.msra.mxu0 %v5289
    %5395 = vmatprep.subr.mxu0 0.0
    %5396 = vmatpush1.msra.mxu0 %v5288
    %5397 = vmatprep.subr.mxu0 0.0
    %5398 = vmatpush2.msra.mxu0 0.0
    %5399 = vmatprep.subr.mxu0 0.0
    %5400 = vmatpush2.msra.mxu0 0.0
    %5401 = vmatprep.subr.mxu0 0.0
    %5402 = vmatpush2.msra.mxu0 0.0
    %5403 = vmatprep.subr.mxu0 0.0
    %5404 = vmatpush2.msra.mxu0 0.0
    %5405 = vmatprep.subr.mxu0 0.0
    %5406 = vmatpush2.msra.mxu0 0.0
    %5407 = vmatprep.subr.mxu0 0.0
    %5408 = vmatpush2.msra.mxu0 0.0
    %5409 = vmatprep.subr.mxu0 0.0
    %5410 = vmatpush2.msra.mxu0 0.0
    %5411 = vmatprep.subr.mxu0 0.0
    %5412 = vmatpush2.msra.mxu0 0.0
    %5413 = vmatprep.subr.mxu0 0.0
    %5414 = vmatpush2.msra.mxu0 0.0
    %5415 = vmatprep.subr.mxu0 0.0
    %5416 = vmatpush2.msra.mxu0 0.0
    %5417 = vmatprep.subr.mxu0 0.0
    %5418 = vmatpush2.msra.mxu0 0.0
    %5419 = vmatprep.subr.mxu0 0.0
    %5420 = vmatpush2.msra.mxu0 0.0
    %5421 = vmatprep.subr.mxu0 0.0
    %5422 = vmatpush2.msra.mxu0 0.0
    %5423 = vmatprep.subr.mxu0 0.0
    %5424 = vmatpush2.msra.mxu0 0.0
    %5425 = vmatprep.subr.mxu0 0.0
    %5426 = vmatpush2.msra.mxu0 0.0
    %5427 = vmatprep.subr.mxu0 0.0
    %5428 = vmatpush2.msra.mxu0 0.0
    %5429 = vmatprep.mubr.f32.mxu0 0.0
    %5430 = vmatmul.mubr.f32.gmra.mxu0 %v5363
    %v5431 = vpop.f32.mrf.mxu0
    %v5432 = vadd.f32 %v5359, %v5431
    %v5433 = vpop.f32.mrf.mxu0
    %5434 = vdwg.mxu0
    %v5435 = vld [vmem:[#allocation2 + $0x198] sm:$0xff]
    %v5437 = vsel %vm3344, %v5287, 0
    %5439 = vmatprep.subr.mxu0 0.0
    %5440 = vmatpush1.msra.mxu0 0.0
    %5441 = vmatprep.subr.mxu0 0.0
    %5442 = vmatpush1.msra.mxu0 0.0
    %5443 = vmatprep.subr.mxu0 0.0
    %5444 = vmatpush1.msra.mxu0 0.0
    %5445 = vmatprep.subr.mxu0 0.0
    %5446 = vmatpush1.msra.mxu0 0.0
    %5447 = vmatprep.subr.mxu0 0.0
    %5448 = vmatpush1.msra.mxu0 0.0
    %5449 = vmatprep.subr.mxu0 0.0
    %5450 = vmatpush1.msra.mxu0 0.0
    %5451 = vmatprep.subr.mxu0 0.0
    %5452 = vmatpush1.msra.mxu0 0.0
    %5453 = vmatprep.subr.mxu0 0.0
    %5454 = vmatpush1.msra.mxu0 0.0
    %5455 = vmatprep.subr.mxu0 0.0
    %5456 = vmatpush1.msra.mxu0 0.0
    %5457 = vmatprep.subr.mxu0 0.0
    %5458 = vmatpush1.msra.mxu0 0.0
    %5459 = vmatprep.subr.mxu0 0.0
    %5460 = vmatpush1.msra.mxu0 0.0
    %5461 = vmatprep.subr.mxu0 0.0
    %5462 = vmatpush1.msra.mxu0 0.0
    %5463 = vmatprep.subr.mxu0 0.0
    %5464 = vmatpush1.msra.mxu0 0.0
    %5465 = vmatprep.subr.mxu0 0.0
    %5466 = vmatpush1.msra.mxu0 0.0
    %5467 = vmatprep.subr.mxu0 0.0
    %5468 = vmatpush1.msra.mxu0 0.0
    %5469 = vmatprep.subr.mxu0 0.0
    %5470 = vmatpush1.msra.mxu0 %v5435
    %5471 = vmatprep.subr.mxu0 0.0
    %5472 = vmatpush2.msra.mxu0 0.0
    %5473 = vmatprep.subr.mxu0 0.0
    %5474 = vmatpush2.msra.mxu0 0.0
    %5475 = vmatprep.subr.mxu0 0.0
    %5476 = vmatpush2.msra.mxu0 0.0
    %5477 = vmatprep.subr.mxu0 0.0
    %5478 = vmatpush2.msra.mxu0 0.0
    %5479 = vmatprep.subr.mxu0 0.0
    %5480 = vmatpush2.msra.mxu0 0.0
    %5481 = vmatprep.subr.mxu0 0.0
    %5482 = vmatpush2.msra.mxu0 0.0
    %5483 = vmatprep.subr.mxu0 0.0
    %5484 = vmatpush2.msra.mxu0 0.0
    %5485 = vmatprep.subr.mxu0 0.0
    %5486 = vmatpush2.msra.mxu0 0.0
    %5487 = vmatprep.subr.mxu0 0.0
    %5488 = vmatpush2.msra.mxu0 0.0
    %5489 = vmatprep.subr.mxu0 0.0
    %5490 = vmatpush2.msra.mxu0 0.0
    %5491 = vmatprep.subr.mxu0 0.0
    %5492 = vmatpush2.msra.mxu0 0.0
    %5493 = vmatprep.subr.mxu0 0.0
    %5494 = vmatpush2.msra.mxu0 0.0
    %5495 = vmatprep.subr.mxu0 0.0
    %5496 = vmatpush2.msra.mxu0 0.0
    %5497 = vmatprep.subr.mxu0 0.0
    %5498 = vmatpush2.msra.mxu0 0.0
    %5499 = vmatprep.subr.mxu0 0.0
    %5500 = vmatpush2.msra.mxu0 0.0
    %5501 = vmatprep.subr.mxu0 0.0
    %5502 = vmatpush2.msra.mxu0 0.0
    %5503 = vmatprep.mubr.f32.mxu0 0.0
    %5504 = vmatmul.mubr.f32.gmra.mxu0 %v5437
    %v5505 = vpop.f32.mrf.mxu0
    %v5506 = vadd.f32 0.0, %v5505
    %v5507 = vpop.f32.mrf.mxu0
    %5508 = vdwg.mxu0
    %v5509 = vadd.f32 %v5432, %v5506
    %v5510 = vld [vmem:[#allocation2 + $0x1a0] sm:$0x1]
    %v5511 = vlaneseq
    %v5512 = vshrl.u32 %v5511, 7
    %v5513 = vsub.s32 0, %v5512
    %v5514 = vrot.slane %v5510, %v5513
    %v5515 = vadd.f32 %v5509, %v5514
    %v5516 = vld [vmem:[#allocation2 + $0x1a8] sm:$0x1]
    %v5517 = vld [vmem:[#allocation2 + $0x1b0] sm:$0x1]
    %v5518 = vsel %vm2660, %v5515, 0.0
    %v5519 = vrot.slane %v5518, 4
    %v5520 = vadd.f32 %v5518, %v5519
    %v5521 = vrot.slane %v5520, 2
    %v5522 = vadd.f32 %v5520, %v5521
    %v5523 = vrot.slane %v5522, 1
    %v5524 = vadd.f32 %v5522, %v5523
    %v5525 = vrcp.pop 8.0
    %v5526 = vmul.f32 %v5524, %v5525
    %v5527 = vsub.f32 %v5515, %v5526
    %v5528 = vmul.f32 %v5527, %v5527
    %v5529 = vsel %vm2660, %v5528, 0.0
    %v5530 = vrot.slane %v5529, 4
    %v5531 = vadd.f32 %v5529, %v5530
    %v5532 = vrot.slane %v5531, 2
    %v5533 = vadd.f32 %v5531, %v5532
    %v5534 = vrot.slane %v5533, 1
    %v5535 = vadd.f32 %v5533, %v5534
    %v5536 = vmul.f32 %v5535, %v5525
    %v5537 = vadd.f32 %v5536, 1e-05
    %v5538 = vrsqrt.pop %v5537
    %v5539 = vmul.f32 %v5527, %v5538
    %v5540 = vlaneseq
    %v5541 = vshrl.u32 %v5540, 7
    %v5542 = vsub.s32 0, %v5541
    %v5543 = vrot.slane %v5516, %v5542
    %v5544 = vmul.f32 %v5539, %v5543
    %v5545 = vlaneseq
    %v5546 = vshrl.u32 %v5545, 7
    %v5547 = vsub.s32 0, %v5546
    %v5548 = vrot.slane %v5517, %v5547
    %v5549 = vadd.f32 %v5544, %v5548
    %v5550 = vld [vmem:[#allocation2 + $0x1b8] sm:$0x1]
    %vm5551 = vcmp.ge.f32.partialorder %v5549, 0.0
    %s5553 = vtos %v5550
    %v5554 = vstv %s5553
    %v5556 = vmul.f32 %v5554, %v5549
    %v5557 = vsel %vm5551, %v5549, %v5556
    %v5558 = vld [vmem:[#allocation2 + $0x1c0] sm:$0xff]
    %v5559 = vld [vmem:[#allocation2 + $0x1c8] sm:$0xff]
    %v5560 = vld [vmem:[#allocation2 + $0x1d0] sm:$0xff]
    %v5561 = vld [vmem:[#allocation2 + $0x1d8] sm:$0xff]
    %v5562 = vld [vmem:[#allocation2 + $0x1e0] sm:$0x1]
    %v5563 = vlaneseq
    %v5564 = vshrl.u32 %v5563, 7
    %v5565 = vsub.s32 0, %v5564
    %v5566 = vrot.slane %v5562, %v5565
    %v5568 = vsel %vm2660, %v5557, 0
    %5570 = vmatprep.subr.mxu0 0.0
    %5571 = vmatpush1.msra.mxu0 0.0
    %5572 = vmatprep.subr.mxu0 0.0
    %5573 = vmatpush1.msra.mxu0 0.0
    %5574 = vmatprep.subr.mxu0 0.0
    %5575 = vmatpush1.msra.mxu0 0.0
    %5576 = vmatprep.subr.mxu0 0.0
    %5577 = vmatpush1.msra.mxu0 0.0
    %5578 = vmatprep.subr.mxu0 0.0
    %5579 = vmatpush1.msra.mxu0 0.0
    %5580 = vmatprep.subr.mxu0 0.0
    %5581 = vmatpush1.msra.mxu0 0.0
    %5582 = vmatprep.subr.mxu0 0.0
    %5583 = vmatpush1.msra.mxu0 0.0
    %5584 = vmatprep.subr.mxu0 0.0
    %5585 = vmatpush1.msra.mxu0 0.0
    %5586 = vmatprep.subr.mxu0 0.0
    %5587 = vmatpush1.msra.mxu0 0.0
    %5588 = vmatprep.subr.mxu0 0.0
    %5589 = vmatpush1.msra.mxu0 0.0
    %5590 = vmatprep.subr.mxu0 0.0
    %5591 = vmatpush1.msra.mxu0 0.0
    %5592 = vmatprep.subr.mxu0 0.0
    %5593 = vmatpush1.msra.mxu0 0.0
    %5594 = vmatprep.subr.mxu0 0.0
    %5595 = vmatpush1.msra.mxu0 %v5561
    %5596 = vmatprep.subr.mxu0 0.0
    %5597 = vmatpush1.msra.mxu0 %v5560
    %5598 = vmatprep.subr.mxu0 0.0
    %5599 = vmatpush1.msra.mxu0 %v5559
    %5600 = vmatprep.subr.mxu0 0.0
    %5601 = vmatpush1.msra.mxu0 %v5558
    %5602 = vmatprep.subr.mxu0 0.0
    %5603 = vmatpush2.msra.mxu0 0.0
    %5604 = vmatprep.subr.mxu0 0.0
    %5605 = vmatpush2.msra.mxu0 0.0
    %5606 = vmatprep.subr.mxu0 0.0
    %5607 = vmatpush2.msra.mxu0 0.0
    %5608 = vmatprep.subr.mxu0 0.0
    %5609 = vmatpush2.msra.mxu0 0.0
    %5610 = vmatprep.subr.mxu0 0.0
    %5611 = vmatpush2.msra.mxu0 0.0
    %5612 = vmatprep.subr.mxu0 0.0
    %5613 = vmatpush2.msra.mxu0 0.0
    %5614 = vmatprep.subr.mxu0 0.0
    %5615 = vmatpush2.msra.mxu0 0.0
    %5616 = vmatprep.subr.mxu0 0.0
    %5617 = vmatpush2.msra.mxu0 0.0
    %5618 = vmatprep.subr.mxu0 0.0
    %5619 = vmatpush2.msra.mxu0 0.0
    %5620 = vmatprep.subr.mxu0 0.0
    %5621 = vmatpush2.msra.mxu0 0.0
    %5622 = vmatprep.subr.mxu0 0.0
    %5623 = vmatpush2.msra.mxu0 0.0
    %5624 = vmatprep.subr.mxu0 0.0
    %5625 = vmatpush2.msra.mxu0 0.0
    %5626 = vmatprep.subr.mxu0 0.0
    %5627 = vmatpush2.msra.mxu0 0.0
    %5628 = vmatprep.subr.mxu0 0.0
    %5629 = vmatpush2.msra.mxu0 0.0
    %5630 = vmatprep.subr.mxu0 0.0
    %5631 = vmatpush2.msra.mxu0 0.0
    %5632 = vmatprep.subr.mxu0 0.0
    %5633 = vmatpush2.msra.mxu0 0.0
    %5634 = vmatprep.mubr.f32.mxu0 0.0
    %5635 = vmatmul.mubr.f32.gmra.mxu0 %v5568
    %v5636 = vpop.f32.mrf.mxu0
    %v5637 = vadd.f32 %v5566, %v5636
    %v5638 = vpop.f32.mrf.mxu0
    %5639 = vdwg.mxu0
    %v5640 = vld [vmem:[#allocation2 + $0x1e8] sm:$0x1]
    %v5641 = vld [vmem:[#allocation2 + $0x1f0] sm:$0x1]
    %v5642 = vsel %vm48, %v5637, 0.0
    %v5643 = vrot.slane %v5642, 4
    %v5644 = vadd.f32 %v5642, %v5643
    %v5645 = vrot.slane %v5644, 2
    %v5646 = vadd.f32 %v5644, %v5645
    %v5647 = vrot.slane %v5646, 1
    %v5648 = vadd.f32 %v5646, %v5647
    %v5649 = vmul.f32 %v5648, %v5525
    %v5650 = vsub.f32 %v5637, %v5649
    %v5651 = vmul.f32 %v5650, %v5650
    %v5652 = vsel %vm48, %v5651, 0.0
    %v5653 = vrot.slane %v5652, 4
    %v5654 = vadd.f32 %v5652, %v5653
    %v5655 = vrot.slane %v5654, 2
    %v5656 = vadd.f32 %v5654, %v5655
    %v5657 = vrot.slane %v5656, 1
    %v5658 = vadd.f32 %v5656, %v5657
    %v5659 = vmul.f32 %v5658, %v5525
    %v5660 = vadd.f32 %v5659, 1e-05
    %v5661 = vrsqrt.pop %v5660
    %v5662 = vmul.f32 %v5650, %v5661
    %v5663 = vlaneseq
    %v5664 = vshrl.u32 %v5663, 7
    %v5665 = vsub.s32 0, %v5664
    %v5666 = vrot.slane %v5640, %v5665
    %v5667 = vmul.f32 %v5662, %v5666
    %v5668 = vlaneseq
    %v5669 = vshrl.u32 %v5668, 7
    %v5670 = vsub.s32 0, %v5669
    %v5671 = vrot.slane %v5641, %v5670
    %v5672 = vadd.f32 %v5667, %v5671
    %v5673 = vld [vmem:[#allocation2 + $0x1f8] sm:$0x1]
    %vm5674 = vcmp.ge.f32.partialorder %v5672, 0.0
    %s5676 = vtos %v5673
    %v5677 = vstv %s5676
    %v5679 = vmul.f32 %v5677, %v5672
    %v5680 = vsel %vm5674, %v5672, %v5679
    %v5681 = vld [vmem:[#allocation2 + $0x200] sm:$0xff]
    %v5682 = vld [vmem:[#allocation2 + $0x208] sm:$0xff]
    %v5683 = vld [vmem:[#allocation2 + $0x210] sm:$0x1]
    %v5684 = vlaneseq
    %v5685 = vshrl.u32 %v5684, 7
    %v5686 = vsub.s32 0, %v5685
    %v5687 = vrot.slane %v5683, %v5686
    %v5689 = vsel %vm48, %v5680, 0
    %5691 = vmatprep.subr.mxu0 0.0
    %5692 = vmatpush1.msra.mxu0 0.0
    %5693 = vmatprep.subr.mxu0 0.0
    %5694 = vmatpush1.msra.mxu0 0.0
    %5695 = vmatprep.subr.mxu0 0.0
    %5696 = vmatpush1.msra.mxu0 0.0
    %5697 = vmatprep.subr.mxu0 0.0
    %5698 = vmatpush1.msra.mxu0 0.0
    %5699 = vmatprep.subr.mxu0 0.0
    %5700 = vmatpush1.msra.mxu0 0.0
    %5701 = vmatprep.subr.mxu0 0.0
    %5702 = vmatpush1.msra.mxu0 0.0
    %5703 = vmatprep.subr.mxu0 0.0
    %5704 = vmatpush1.msra.mxu0 0.0
    %5705 = vmatprep.subr.mxu0 0.0
    %5706 = vmatpush1.msra.mxu0 0.0
    %5707 = vmatprep.subr.mxu0 0.0
    %5708 = vmatpush1.msra.mxu0 0.0
    %5709 = vmatprep.subr.mxu0 0.0
    %5710 = vmatpush1.msra.mxu0 0.0
    %5711 = vmatprep.subr.mxu0 0.0
    %5712 = vmatpush1.msra.mxu0 0.0
    %5713 = vmatprep.subr.mxu0 0.0
    %5714 = vmatpush1.msra.mxu0 0.0
    %5715 = vmatprep.subr.mxu0 0.0
    %5716 = vmatpush1.msra.mxu0 0.0
    %5717 = vmatprep.subr.mxu0 0.0
    %5718 = vmatpush1.msra.mxu0 0.0
    %5719 = vmatprep.subr.mxu0 0.0
    %5720 = vmatpush1.msra.mxu0 %v5682
    %5721 = vmatprep.subr.mxu0 0.0
    %5722 = vmatpush1.msra.mxu0 %v5681
    %5723 = vmatprep.subr.mxu0 0.0
    %5724 = vmatpush2.msra.mxu0 0.0
    %5725 = vmatprep.subr.mxu0 0.0
    %5726 = vmatpush2.msra.mxu0 0.0
    %5727 = vmatprep.subr.mxu0 0.0
    %5728 = vmatpush2.msra.mxu0 0.0
    %5729 = vmatprep.subr.mxu0 0.0
    %5730 = vmatpush2.msra.mxu0 0.0
    %5731 = vmatprep.subr.mxu0 0.0
    %5732 = vmatpush2.msra.mxu0 0.0
    %5733 = vmatprep.subr.mxu0 0.0
    %5734 = vmatpush2.msra.mxu0 0.0
    %5735 = vmatprep.subr.mxu0 0.0
    %5736 = vmatpush2.msra.mxu0 0.0
    %5737 = vmatprep.subr.mxu0 0.0
    %5738 = vmatpush2.msra.mxu0 0.0
    %5739 = vmatprep.subr.mxu0 0.0
    %5740 = vmatpush2.msra.mxu0 0.0
    %5741 = vmatprep.subr.mxu0 0.0
    %5742 = vmatpush2.msra.mxu0 0.0
    %5743 = vmatprep.subr.mxu0 0.0
    %5744 = vmatpush2.msra.mxu0 0.0
    %5745 = vmatprep.subr.mxu0 0.0
    %5746 = vmatpush2.msra.mxu0 0.0
    %5747 = vmatprep.subr.mxu0 0.0
    %5748 = vmatpush2.msra.mxu0 0.0
    %5749 = vmatprep.subr.mxu0 0.0
    %5750 = vmatpush2.msra.mxu0 0.0
    %5751 = vmatprep.subr.mxu0 0.0
    %5752 = vmatpush2.msra.mxu0 0.0
    %5753 = vmatprep.subr.mxu0 0.0
    %5754 = vmatpush2.msra.mxu0 0.0
    %5755 = vmatprep.mubr.f32.mxu0 0.0
    %5756 = vmatmul.mubr.f32.gmra.mxu0 %v5689
    %v5757 = vpop.f32.mrf.mxu0
    %v5758 = vadd.f32 %v5687, %v5757
    %v5759 = vpop.f32.mrf.mxu0
    %5760 = vdwg.mxu0
    %vm5761 = vcmask 7168
    %5762 = vst.msk [vmem:[%s4] sm:$0xff] %vm5761, %v5758
    // Predicated region
    $region22: #{tpu_custom_call.1} parent=1 // pred_check
      _
    $region23: #{tpu_custom_call.1} parent=1 // pred_check_branch
      %5764 = sbr.rel (0) target = $region25
    $region24: #{tpu_custom_call.1} parent=1 // pred_region
      _
    $region25: #{tpu_custom_call.1} parent=1 // pred_fallthru
      _
    // Predicated region
    $region26: #{tpu_custom_call.1} parent=1 // pred_check
      _
    $region27: #{tpu_custom_call.1} parent=1 // pred_check_branch
      %5766 = sbr.rel (0) target = $region29
    $region28: #{tpu_custom_call.1} parent=1 // pred_region
      _
    $region29: #{tpu_custom_call.1} parent=1 // pred_fallthru
      _
    %5767 = vsyncpa [#allocation3], 1

</llo_original>
